<compile_context>
chip_gen: v5e
topology: v5e:2x2
jax: 0.10.0
libtpu: 0.0.40
codegen_flags: <defaults>
</compile_context>

<pallas_src>
import functools

import jax
import jax.numpy as jnp
from jax.experimental import pallas as pl
from jax.experimental.pallas import tpu as pltpu

EPS = 1e-5
LANE = 128
NCORES = 2        # leading parallel grid axis; lets v7x's 2 TensorCores split M


# --------------------------------- helpers --------------------------------- #

def _round_up(n, m):
    return ((n + m - 1) // m) * m


def _pick_row_tile(M, pref=512):
    """Largest multiple-of-8 divisor of M that is <= pref and < M (if any)."""
    best = None
    t = 8
    limit = min(pref, M)
    while t <= limit:
        if M % t == 0 and t < M:
            best = t
        t += 8
    return best if best is not None else M


def _pad_lanes(x, cp):
    c = x.shape[-1]
    return x if c == cp else jnp.pad(x, ((0, 0), (0, cp - c)))


def _pad2(w, rp, cp):
    r, c = w.shape
    if r == rp and c == cp:
        return w
    return jnp.pad(w, ((0, rp - r), (0, cp - c)))


def _bn_affine(stats, gamma_p, beta_p, m):
    """Fold per-core partial (sum, sumsq) stats + gamma/beta into scale/bias."""
    st = stats.reshape(-1, 8, stats.shape[-1])      # (ncores, 8, C)
    s = jnp.sum(st[:, 0, :], axis=0)
    ss = jnp.sum(st[:, 1, :], axis=0)
    mean = s / m
    var = jnp.maximum(ss / m - mean * mean, 0.0)    # biased var (PyTorch BN train)
    scale = gamma_p * jax.lax.rsqrt(var + EPS)
    bias = beta_p - mean * scale
    return (scale.reshape(1, -1).astype(jnp.float32),
            bias.reshape(1, -1).astype(jnp.float32))


def _accumulate_stats(stats_ref, y):
    """stats rows 0/1 += per-channel sum / sum-of-squares of f32 y."""
    @pl.when(pl.program_id(1) == 0)
    def _init():
        stats_ref[...] = jnp.zeros_like(stats_ref)

    stats_ref[0:1, :] += jnp.sum(y, axis=0, keepdims=True)
    stats_ref[1:2, :] += jnp.sum(y * y, axis=0, keepdims=True)


# ------------------------------ Pallas kernels ------------------------------ #

def _conv1x1_stats_kernel(x_ref, w_ref, y_ref, stats_ref):
    """y = x @ w (bf16 MXU, f32 acc); bf16 store; accumulate BN stats from f32."""
    y = jnp.dot(x_ref[...].astype(jnp.bfloat16), w_ref[...],
                preferred_element_type=jnp.float32)
    y_ref[...] = y.astype(y_ref.dtype)
    _accumulate_stats(stats_ref, y)


def _bn_relu_conv1x1_stats_kernel(x_ref, sc_ref, bi_ref, w_ref, y_ref, stats_ref):
    """a = relu(BN_prev(upcast(x))) ; y = a @ w ; accumulate stats for next BN."""
    a = jnp.maximum(x_ref[...].astype(jnp.float32) * sc_ref[...] + bi_ref[...], 0.0)
    y = jnp.dot(a.astype(jnp.bfloat16), w_ref[...],
                preferred_element_type=jnp.float32)
    y_ref[...] = y.astype(y_ref.dtype)
    _accumulate_stats(stats_ref, y)


def _bn_relu_conv3x3_stats_kernel(x_ref, sc_ref, bi_ref, w_ref, y_ref, stats_ref,
                                  stage_ref, *, H, W):
    """Per-image tile: relu(BN1(x)); 3x3/s1/p1 conv as ONE (HW, 9*Cm) matmul."""
    HW, Cm = x_ref.shape

    # BN prologue in f32; hoisted W-boundary masks (depend only on dw), one
    # bf16 cast per masked variant.
    a = jnp.maximum(x_ref[...].astype(jnp.float32) * sc_ref[...] + bi_ref[...], 0.0)
    col = jax.lax.broadcasted_iota(jnp.int32, (HW, 1), 0) % W
    zero = jnp.zeros_like(a)
    a_c = a.astype(jnp.bfloat16)                                   # dw == 0
    a_l = jnp.where(col == (W - 1), zero, a).astype(jnp.bfloat16)  # dw == -1 taps
    a_r = jnp.where(col == 0, zero, a).astype(jnp.bfloat16)        # dw == +1 taps
    variants = (a_l, a_c, a_r)

    # Build the im2col staging buffer: column group t = kh*3+kw holds the tap
    # shifted by d = (kh-1)*W + (kw-1) rows, with zero fill at the H boundary.
    for kh in range(3):
        for kw in range(3):
            t = kh * 3 + kw
            d = (kh - 1) * W + (kw - 1)
            src = variants[kw]
            lo, hi = t * Cm, (t + 1) * Cm
            if d > 0:
                stage_ref[0:HW - d, lo:hi] = src[d:, :]
                stage_ref[HW - d:HW, lo:hi] = jnp.zeros((d, Cm), jnp.bfloat16)
            elif d < 0:
                stage_ref[0:-d, lo:hi] = jnp.zeros((-d, Cm), jnp.bfloat16)
                stage_ref[-d:HW, lo:hi] = src[:HW + d, :]
            else:
                stage_ref[:, lo:hi] = src

    # Single MXU matmul with K = 9*Cm (keeps the systolic array full, all
    # accumulation inside the MXU).
    y = jnp.dot(stage_ref[...], w_ref[...], preferred_element_type=jnp.float32)
    y_ref[...] = y.astype(y_ref.dtype)
    _accumulate_stats(stats_ref, y)


def _bn_add_relu_kernel(y_ref, r_ref, sc_ref, bi_ref, o_ref):
    o_ref[...] = jnp.maximum(
        y_ref[...] * sc_ref[...] + bi_ref[...] + r_ref[...], 0.0)


# ----------------------------- pallas_call wrappers ------------------------- #

def _conv1x1_stats(x, w):
    M, K = x.shape
    Cn = w.shape[1]
    tm = _pick_row_tile(M)
    nblk = M // tm
    nc = NCORES if nblk % NCORES == 0 else 1
    steps = nblk // nc
    row_idx = lambda c, i: (c * steps + i, 0)
    return pl.pallas_call(
        _conv1x1_stats_kernel,
        grid=(nc, steps),
        in_specs=[pl.BlockSpec((tm, K), row_idx),
                  pl.BlockSpec((K, Cn), lambda c, i: (0, 0))],
        out_specs=[pl.BlockSpec((tm, Cn), row_idx),
                   pl.BlockSpec((8, Cn), lambda c, i: (c, 0))],
        out_shape=[jax.ShapeDtypeStruct((M, Cn), jnp.bfloat16),
                   jax.ShapeDtypeStruct((nc * 8, Cn), jnp.float32)],
        compiler_params=pltpu.CompilerParams(
            dimension_semantics=("parallel", "arbitrary")),
        cost_estimate=pl.CostEstimate(
            flops=2 * M * K * Cn, transcendentals=0,
            bytes_accessed=4 * M * K + 2 * M * Cn + 2 * K * Cn),
    )(x, w)


def _bn_relu_conv1x1_stats(x, sc, bi, w, out_dtype=jnp.float32):
    M, K = x.shape
    Cn = w.shape[1]
    tm = _pick_row_tile(M)
    nblk = M // tm
    nc = NCORES if nblk % NCORES == 0 else 1
    steps = nblk // nc
    row_idx = lambda c, i: (c * steps + i, 0)
    out_bytes = 4 if out_dtype == jnp.float32 else 2
    return pl.pallas_call(
        _bn_relu_conv1x1_stats_kernel,
        grid=(nc, steps),
        in_specs=[pl.BlockSpec((tm, K), row_idx),
                  pl.BlockSpec((1, K), lambda c, i: (0, 0)),
                  pl.BlockSpec((1, K), lambda c, i: (0, 0)),
                  pl.BlockSpec((K, Cn), lambda c, i: (0, 0))],
        out_specs=[pl.BlockSpec((tm, Cn), row_idx),
                   pl.BlockSpec((8, Cn), lambda c, i: (c, 0))],
        out_shape=[jax.ShapeDtypeStruct((M, Cn), out_dtype),
                   jax.ShapeDtypeStruct((nc * 8, Cn), jnp.float32)],
        compiler_params=pltpu.CompilerParams(
            dimension_semantics=("parallel", "arbitrary")),
        cost_estimate=pl.CostEstimate(
            flops=2 * M * K * Cn + 3 * M * K, transcendentals=0,
            bytes_accessed=2 * M * K + out_bytes * M * Cn + 2 * K * Cn),
    )(x, sc, bi, w)


def _bn_relu_conv3x3_stats(x, sc, bi, w_mat, n_images, H, W):
    M, Cm = x.shape
    HW = H * W
    nc = NCORES if n_images % NCORES == 0 else 1
    steps = n_images // nc
    img_idx = lambda c, i: (c * steps + i, 0)
    kernel = functools.partial(_bn_relu_conv3x3_stats_kernel, H=H, W=W)
    return pl.pallas_call(
        kernel,
        grid=(nc, steps),
        in_specs=[pl.BlockSpec((HW, Cm), img_idx),
                  pl.BlockSpec((1, Cm), lambda c, i: (0, 0)),
                  pl.BlockSpec((1, Cm), lambda c, i: (0, 0)),
                  pl.BlockSpec((9 * Cm, Cm), lambda c, i: (0, 0))],
        out_specs=[pl.BlockSpec((HW, Cm), img_idx),
                   pl.BlockSpec((8, Cm), lambda c, i: (c, 0))],
        out_shape=[jax.ShapeDtypeStruct((M, Cm), jnp.bfloat16),
                   jax.ShapeDtypeStruct((nc * 8, Cm), jnp.float32)],
        scratch_shapes=[pltpu.VMEM((HW, 9 * Cm), jnp.bfloat16)],
        compiler_params=pltpu.CompilerParams(
            dimension_semantics=("parallel", "arbitrary")),
        cost_estimate=pl.CostEstimate(
            flops=2 * 9 * M * Cm * Cm, transcendentals=0,
            bytes_accessed=4 * M * Cm + 18 * Cm * Cm),
    )(x, sc, bi, w_mat)
    # TODO(synk): sub-tile along H with a +/-1-row halo per band when N is very
    # small, to restore pipelining depth for the 3x3 stage.


def _bn_add_relu(y, res, sc, bi):
    M, Cn = y.shape
    tm = _pick_row_tile(M)
    row_idx = lambda i: (i, 0)
    return pl.pallas_call(
        _bn_add_relu_kernel,
        grid=(M // tm,),
        in_specs=[pl.BlockSpec((tm, Cn), row_idx),
                  pl.BlockSpec((tm, Cn), row_idx),
                  pl.BlockSpec((1, Cn), lambda i: (0, 0)),
                  pl.BlockSpec((1, Cn), lambda i: (0, 0))],
        out_specs=pl.BlockSpec((tm, Cn), row_idx),
        out_shape=jax.ShapeDtypeStruct((M, Cn), jnp.float32),
        input_output_aliases={0: 0},          # write the result into y3's buffer
        compiler_params=pltpu.CompilerParams(
            dimension_semantics=("parallel",)),
        cost_estimate=pl.CostEstimate(
            flops=4 * M * Cn, transcendentals=0, bytes_accessed=12 * M * Cn),
    )(y, res, sc, bi)


# --------------------------------- forward ---------------------------------- #

def residual_block_forward(x_nchw, params):
    """ResidualBlock.forward (stride=1, downsample=None) on Pallas TPU kernels."""
    w1, g1, b1, w2, g2, b2, w3, g3, b3 = params
    N, Cin, H, W = x_nchw.shape
    Cmid = w1.shape[0]
    Cout = w3.shape[0]
    assert Cin == Cout, "identity-path block requires in_channels == out_channels"
    M = N * H * W
    Cp = _round_up(Cin, LANE)
    Cmp = _round_up(Cmid, LANE)

    # layout glue (plain JAX): NCHW -> lane-padded (M, Cp) slab
    x_flat = jnp.transpose(x_nchw, (0, 2, 3, 1)).reshape(M, Cin)
    x_flat = _pad_lanes(x_flat, Cp)

    # weights: lane-padded, bf16 MXU operands, resident in VMEM across the grid
    w1_mat = _pad2(jnp.transpose(w1[:, :, 0, 0], (1, 0)), Cp, Cmp).astype(jnp.bfloat16)
    w2_mat = jnp.transpose(w2, (2, 3, 1, 0)).reshape(9, Cmid, Cmid)       # (tap,in,out)
    w2_mat = jnp.pad(w2_mat, ((0, 0), (0, Cmp - Cmid), (0, Cmp - Cmid)))
    w2_mat = w2_mat.reshape(9 * Cmp, Cmp).astype(jnp.bfloat16)            # single-matmul K=9*Cm
    w3_mat = _pad2(jnp.transpose(w3[:, :, 0, 0], (1, 0)), Cmp, Cp).astype(jnp.bfloat16)

    # gamma padded with 0 so padded lanes stay exactly 0 through the whole block
    g1p, b1p = jnp.pad(g1, (0, Cmp - Cmid)), jnp.pad(b1, (0, Cmp - Cmid))
    g2p, b2p = jnp.pad(g2, (0, Cmp - Cmid)), jnp.pad(b2, (0, Cmp - Cmid))
    g3p, b3p = jnp.pad(g3, (0, Cp - Cout)), jnp.pad(b3, (0, Cp - Cout))

    # conv1 (1x1) + bn1 batch-stats accumulation (y1 stored bf16)
    y1, st1 = _conv1x1_stats(x_flat, w1_mat)
    sc1, bi1 = _bn_affine(st1, g1p, b1p, M)

    # bn1-apply + relu folded into conv2 (3x3, one im2col matmul) + bn2 stats
    y2, st2 = _bn_relu_conv3x3_stats(y1, sc1, bi1, w2_mat, N, H, W)
    sc2, bi2 = _bn_affine(st2, g2p, b2p, M)

    # bn2-apply + relu folded into conv3 (1x1) + bn3 stats (y3 kept f32 for the
    # aliased final add)
    y3, st3 = _bn_relu_conv1x1_stats(y2, sc2, bi2, w3_mat, out_dtype=jnp.float32)
    sc3, bi3 = _bn_affine(st3, g3p, b3p, M)

    # bn3-apply + residual add + relu (in-place into y3's buffer)
    out = _bn_add_relu(y3, x_flat, sc3, bi3)

    out = out[:, :Cout].reshape(N, H, W, Cout)
    return jnp.transpose(out, (0, 3, 1, 2))       # NHWC -> NCHW


# --------------------------- pure-JAX reference ----------------------------- #

def _ref_bn(y, g, b):
    mean = y.mean(axis=(0, 2, 3), keepdims=True)
    var = ((y - mean) ** 2).mean(axis=(0, 2, 3), keepdims=True)
    return (y - mean) / jnp.sqrt(var + EPS) * g.reshape(1, -1, 1, 1) \
        + b.reshape(1, -1, 1, 1)


def _ref_conv(y, w, pad):
    return jax.lax.conv_general_dilated(
        y, w, window_strides=(1, 1), padding=pad,
        dimension_numbers=("NCHW", "OIHW", "NCHW"))


def residual_block_ref(x, params):
    w1, g1, b1, w2, g2, b2, w3, g3, b3 = params
    out = jnp.maximum(_ref_bn(_ref_conv(x, w1, "VALID"), g1, b1), 0.0)
    out = jnp.maximum(_ref_bn(_ref_conv(out, w2, ((1, 1), (1, 1))), g2, b2), 0.0)
    out = _ref_bn(_ref_conv(out, w3, "VALID"), g3, b3)
    return jnp.maximum(out + x, 0.0)


# ----------------------------------- main ------------------------------------ #

if __name__ == "__main__":
    N, C, H, W = 2, 16, 16, 16          # in_channels == out_channels (no downsample)
    Cmid = C // 4                        # mid_channels = out_channels // 4

    key = jax.random.PRNGKey(0)
    ks = jax.random.split(key, 10)

    def kaiming(k, shape):
        fan_in = shape[1] * shape[2] * shape[3]
        return jax.random.normal(k, shape, jnp.float32) * jnp.sqrt(2.0 / fan_in)

    w1 = kaiming(ks[0], (Cmid, C, 1, 1))
    w2 = kaiming(ks[1], (Cmid, Cmid, 3, 3))
    w3 = kaiming(ks[2], (C, Cmid, 1, 1))
    g1 = 1.0 + 0.1 * jax.random.normal(ks[3], (Cmid,), jnp.float32)
    b1 = 0.1 * jax.random.normal(ks[4], (Cmid,), jnp.float32)
    g2 = 1.0 + 0.1 * jax.random.normal(ks[5], (Cmid,), jnp.float32)
    b2 = 0.1 * jax.random.normal(ks[6], (Cmid,), jnp.float32)
    g3 = 1.0 + 0.1 * jax.random.normal(ks[7], (C,), jnp.float32)
    b3 = 0.1 * jax.random.normal(ks[8], (C,), jnp.float32)
    params = (w1, g1, b1, w2, g2, b2, w3, g3, b3)

    x = jax.random.normal(ks[9], (N, C, H, W), jnp.float32)

    out = jax.jit(residual_block_forward)(x, params)
    out = jax.block_until_ready(out)

    ref = residual_block_ref(x, params)
    assert out.shape == ref.shape == (N, C, H, W)
    # kernels use bf16 MXU operands and bf16 intermediate activations (f32
    # accumulation / BN math); reference is pure f32
    assert jnp.allclose(out, ref, atol=5e-2, rtol=5e-2), (
        f"max abs diff {jnp.max(jnp.abs(out - ref))}")

    print("KERNEL_OK")
</pallas_src>

<mosaic_0001>
module attributes {stable_mosaic.version = 11 : i64} {
  func.func @_conv1x1_stats_kernel(%arg0: i32, %arg1: i32, %arg2: memref<256x128xf32, #tpu.memory_space<vmem>>, %arg3: memref<128x128xbf16, #tpu.memory_space<vmem>>, %arg4: memref<256x128xbf16, #tpu.memory_space<vmem>>, %arg5: memref<8x128xf32, #tpu.memory_space<vmem>>) attributes {dimension_semantics = [#tpu.dimension_semantics<parallel>, #tpu.dimension_semantics<arbitrary>], iteration_bounds = array<i64: 2, 1>, scalar_prefetch = 0 : i64, scratch_operands = 0 : i64, tpu.core_type = #tpu.core_type<tc>, window_params = [{transform_indices = @transform_0, window_bounds = array<i64: 256, 128>}, {pipeline_mode = #tpu.pipeline_mode<synchronous>, transform_indices = @transform_1, window_bounds = array<i64: 128, 128>}, {transform_indices = @transform_2, window_bounds = array<i64: 256, 128>}, {transform_indices = @transform_3, window_bounds = array<i64: 8, 128>}]} {
    %c0 = arith.constant 0 : index
    %c0_0 = arith.constant 0 : index
    %0 = vector.load %arg2[%c0, %c0_0] : memref<256x128xf32, #tpu.memory_space<vmem>>, vector<256x128xf32>
    %1 = arith.truncf %0 : vector<256x128xf32> to vector<256x128xbf16>
    %c0_1 = arith.constant 0 : index
    %c0_2 = arith.constant 0 : index
    %2 = vector.load %arg3[%c0_1, %c0_2] : memref<128x128xbf16, #tpu.memory_space<vmem>>, vector<128x128xbf16>
    %cst = arith.constant dense<0.000000e+00> : vector<256x128xf32>
    %3 = tpu.matmul %1, %2, %cst {dimension_numbers = #tpu.dot_dimension_numbers<[1], [0], [0], [1], [0, 0, 1, 1], [], []>} : vector<256x128xbf16>, vector<128x128xbf16>, vector<256x128xf32> -> vector<256x128xf32>
    %4 = arith.truncf %3 : vector<256x128xf32> to vector<256x128xbf16>
    %c0_3 = arith.constant 0 : index
    %c0_4 = arith.constant 0 : index
    %5 = vector.load %arg4[%c0_3, %c0_4] : memref<256x128xbf16, #tpu.memory_space<vmem>>, vector<256x128xbf16>
    tpu.vector_store %arg4[%c0_3, %c0_4], %4 {strides = array<i32>} : memref<256x128xbf16, #tpu.memory_space<vmem>>, vector<256x128xbf16>,
    %c0_i32 = arith.constant 0 : i32
    %6 = arith.cmpi eq, %arg1, %c0_i32 : i32
    %7 = arith.extui %6 : i1 to i32
    %c0_i32_5 = arith.constant 0 : i32
    %8 = arith.cmpi ne, %7, %c0_i32_5 : i32
    scf.if %8 {
      %cst_15 = arith.constant 0.000000e+00 : f32
      %20 = vector.broadcast %cst_15 : f32 to vector<8x128xf32>
      %c0_16 = arith.constant 0 : index
      %c0_17 = arith.constant 0 : index
      %21 = vector.load %arg5[%c0_16, %c0_17] : memref<8x128xf32, #tpu.memory_space<vmem>>, vector<8x128xf32>
      tpu.vector_store %arg5[%c0_16, %c0_17], %20 {strides = array<i32>} : memref<8x128xf32, #tpu.memory_space<vmem>>, vector<8x128xf32>,
    } else {
    }
    %c0_6 = arith.constant 0 : index
    %c0_7 = arith.constant 0 : index
    %9 = vector.load %arg5[%c0_6, %c0_7] : memref<8x128xf32, #tpu.memory_space<vmem>>, vector<1x128xf32>
    %cst_8 = arith.constant dense<0.000000e+00> : vector<128xf32>
    %10 = vector.multi_reduction <add>, %3, %cst_8 [0] : vector<256x128xf32> to vector<128xf32>
    %11 = vector.shape_cast %10 : vector<128xf32> to vector<1x128xf32>
    %12 = arith.addf %9, %11 : vector<1x128xf32>
    %c0_9 = arith.constant 0 : index
    %c0_10 = arith.constant 0 : index
    %13 = vector.load %arg5[%c0_9, %c0_10] : memref<8x128xf32, #tpu.memory_space<vmem>>, vector<1x128xf32>
    tpu.vector_store %arg5[%c0_9, %c0_10], %12 {strides = array<i32>} : memref<8x128xf32, #tpu.memory_space<vmem>>, vector<1x128xf32>,
    %c1 = arith.constant 1 : index
    %c0_11 = arith.constant 0 : index
    %14 = vector.load %arg5[%c1, %c0_11] : memref<8x128xf32, #tpu.memory_space<vmem>>, vector<1x128xf32>
    %15 = arith.mulf %3, %3 : vector<256x128xf32>
    %cst_12 = arith.constant dense<0.000000e+00> : vector<128xf32>
    %16 = vector.multi_reduction <add>, %15, %cst_12 [0] : vector<256x128xf32> to vector<128xf32>
    %17 = vector.shape_cast %16 : vector<128xf32> to vector<1x128xf32>
    %18 = arith.addf %14, %17 : vector<1x128xf32>
    %c1_13 = arith.constant 1 : index
    %c0_14 = arith.constant 0 : index
    %19 = vector.load %arg5[%c1_13, %c0_14] : memref<8x128xf32, #tpu.memory_space<vmem>>, vector<1x128xf32>
    tpu.vector_store %arg5[%c1_13, %c0_14], %18 {strides = array<i32>} : memref<8x128xf32, #tpu.memory_space<vmem>>, vector<1x128xf32>,
    return
  }
  func.func @transform_0(%arg0: i32, %arg1: i32) -> (i32, i32) {
    %c1_i32 = arith.constant 1 : i32
    %0 = arith.muli %arg0, %c1_i32 : i32
    %1 = arith.addi %0, %arg1 : i32
    %c0_i32 = arith.constant 0 : i32
    %c0_i32_0 = arith.constant 0 : i32
    return %1, %c0_i32 : i32, i32
  }
  func.func @transform_1(%arg0: i32, %arg1: i32) -> (i32, i32) {
    %c0_i32 = arith.constant 0 : i32
    %c0_i32_0 = arith.constant 0 : i32
    %c0_i32_1 = arith.constant 0 : i32
    return %c0_i32, %c0_i32_0 : i32, i32
  }
  func.func @transform_2(%arg0: i32, %arg1: i32) -> (i32, i32) {
    %c1_i32 = arith.constant 1 : i32
    %0 = arith.muli %arg0, %c1_i32 : i32
    %1 = arith.addi %0, %arg1 : i32
    %c0_i32 = arith.constant 0 : i32
    %c0_i32_0 = arith.constant 0 : i32
    return %1, %c0_i32 : i32, i32
  }
  func.func @transform_3(%arg0: i32, %arg1: i32) -> (i32, i32) {
    %c0_i32 = arith.constant 0 : i32
    %c0_i32_0 = arith.constant 0 : i32
    return %arg0, %c0_i32 : i32, i32
  }
}

module attributes {stable_mosaic.version = 11 : i64} {
  func.func @_bn_relu_conv3x3_stats_kernel(%arg0: i32, %arg1: i32, %arg2: memref<256x128xbf16, #tpu.memory_space<vmem>>, %arg3: memref<1x128xf32, #tpu.memory_space<vmem>>, %arg4: memref<1x128xf32, #tpu.memory_space<vmem>>, %arg5: memref<1152x128xbf16, #tpu.memory_space<vmem>>, %arg6: memref<256x128xbf16, #tpu.memory_space<vmem>>, %arg7: memref<8x128xf32, #tpu.memory_space<vmem>>, %arg8: memref<256x1152xbf16, #tpu.memory_space<vmem>>) attributes {dimension_semantics = [#tpu.dimension_semantics<parallel>, #tpu.dimension_semantics<arbitrary>], iteration_bounds = array<i64: 2, 1>, scalar_prefetch = 0 : i64, scratch_operands = 1 : i64, tpu.core_type = #tpu.core_type<tc>, window_params = [{transform_indices = @transform_0, window_bounds = array<i64: 256, 128>}, {pipeline_mode = #tpu.pipeline_mode<synchronous>, transform_indices = @transform_1, window_bounds = array<i64: 1, 128>}, {pipeline_mode = #tpu.pipeline_mode<synchronous>, transform_indices = @transform_2, window_bounds = array<i64: 1, 128>}, {pipeline_mode = #tpu.pipeline_mode<synchronous>, transform_indices = @transform_3, window_bounds = array<i64: 1152, 128>}, {transform_indices = @transform_4, window_bounds = array<i64: 256, 128>}, {transform_indices = @transform_5, window_bounds = array<i64: 8, 128>}]} {
    %c0 = arith.constant 0 : index
    %c0_0 = arith.constant 0 : index
    %0 = vector.load %arg2[%c0, %c0_0] : memref<256x128xbf16, #tpu.memory_space<vmem>>, vector<256x128xbf16>
    %1 = arith.extf %0 : vector<256x128xbf16> to vector<256x128xf32>
    %c0_1 = arith.constant 0 : index
    %c0_2 = arith.constant 0 : index
    %2 = vector.load %arg3[%c0_1, %c0_2] : memref<1x128xf32, #tpu.memory_space<vmem>>, vector<1x128xf32>
    %3 = vector.broadcast %2 : vector<1x128xf32> to vector<256x128xf32>
    %4 = arith.mulf %1, %3 : vector<256x128xf32>
    %c0_3 = arith.constant 0 : index
    %c0_4 = arith.constant 0 : index
    %5 = vector.load %arg4[%c0_3, %c0_4] : memref<1x128xf32, #tpu.memory_space<vmem>>, vector<1x128xf32>
    %6 = vector.broadcast %5 : vector<1x128xf32> to vector<256x128xf32>
    %7 = arith.addf %4, %6 : vector<256x128xf32>
    %cst = arith.constant 0.000000e+00 : f32
    %8 = vector.broadcast %cst : f32 to vector<256x128xf32>
    %9 = arith.maximumf %7, %8 : vector<256x128xf32>
    %10 = tpu.iota {dimensions = array<i32: 0>} : vector<256x1xi32>
    %c16_i32 = arith.constant 16 : i32
    %c0_i32 = arith.constant 0 : i32
    %11 = arith.cmpi eq, %c16_i32, %c0_i32 : i32
    %c1_i32 = arith.constant 1 : i32
    %12 = arith.select %11, %c1_i32, %c16_i32 : i32
    %13 = vector.broadcast %12 : i32 to vector<256x1xi32>
    %14 = arith.remsi %10, %13 : vector<256x1xi32>
    %c0_i32_5 = arith.constant 0 : i32
    %15 = vector.broadcast %c0_i32_5 : i32 to vector<256x1xi32>
    %16 = arith.cmpi ne, %14, %15 : vector<256x1xi32>
    %c0_i32_6 = arith.constant 0 : i32
    %17 = vector.broadcast %c0_i32_6 : i32 to vector<256x1xi32>
    %18 = arith.cmpi slt, %14, %17 : vector<256x1xi32>
    %c0_i32_7 = arith.constant 0 : i32
    %19 = arith.cmpi slt, %12, %c0_i32_7 : i32
    %20 = vector.broadcast %19 : i1 to vector<256x1xi1>
    %21 = vector.broadcast %20 : vector<256x1xi1> to vector<256x1xi1>
    %22 = arith.xori %18, %21 : vector<256x1xi1>
    %23 = arith.andi %22, %16 : vector<256x1xi1>
    %24 = vector.broadcast %12 : i32 to vector<256x1xi32>
    %25 = arith.addi %14, %24 : vector<256x1xi32>
    %26 = arith.select %23, %25, %14 : vector<256x1xi1>, vector<256x1xi32>
    %cst_8 = arith.constant 0.000000e+00 : f32
    %27 = vector.broadcast %cst_8 : f32 to vector<256x128xf32>
    %28 = arith.truncf %9 : vector<256x128xf32> to vector<256x128xbf16>
    %c15_i32 = arith.constant 15 : i32
    %29 = vector.broadcast %c15_i32 : i32 to vector<256x1xi32>
    %30 = arith.cmpi eq, %26, %29 : vector<256x1xi32>
    %31 = vector.shape_cast %30 : vector<256x1xi1> to vector<256x1xi1>
    %32 = vector.broadcast %31 : vector<256x1xi1> to vector<256x128xi1>
    %33 = arith.select %32, %27, %9 : vector<256x128xi1>, vector<256x128xf32>
    %34 = arith.truncf %33 : vector<256x128xf32> to vector<256x128xbf16>
    %c0_i32_9 = arith.constant 0 : i32
    %35 = vector.broadcast %c0_i32_9 : i32 to vector<256x1xi32>
    %36 = arith.cmpi eq, %26, %35 : vector<256x1xi32>
    %37 = vector.shape_cast %36 : vector<256x1xi1> to vector<256x1xi1>
    %38 = vector.broadcast %37 : vector<256x1xi1> to vector<256x128xi1>
    %39 = arith.select %38, %27, %9 : vector<256x128xi1>, vector<256x128xf32>
    %40 = arith.truncf %39 : vector<256x128xf32> to vector<256x128xbf16>
    %cst_10 = arith.constant 0.000000e+00 : bf16
    %41 = vector.broadcast %cst_10 : bf16 to vector<17x128xbf16>
    %c0_11 = arith.constant 0 : index
    %c0_12 = arith.constant 0 : index
    %42 = vector.load %arg8[%c0_11, %c0_12] : memref<256x1152xbf16, #tpu.memory_space<vmem>>, vector<17x128xbf16>
    tpu.vector_store %arg8[%c0_11, %c0_12], %41 {strides = array<i32>} : memref<256x1152xbf16, #tpu.memory_space<vmem>>, vector<17x128xbf16>,
    %43 = vector.extract_strided_slice %34 {offsets = [0, 0], sizes = [239, 128], strides = [1, 1]} : vector<256x128xbf16> to vector<239x128xbf16>
    %c17 = arith.constant 17 : index
    %c0_13 = arith.constant 0 : index
    %44 = vector.load %arg8[%c17, %c0_13] : memref<256x1152xbf16, #tpu.memory_space<vmem>>, vector<239x128xbf16>
    tpu.vector_store %arg8[%c17, %c0_13], %43 {strides = array<i32>} : memref<256x1152xbf16, #tpu.memory_space<vmem>>, vector<239x128xbf16>,
    %cst_14 = arith.constant 0.000000e+00 : bf16
    %45 = vector.broadcast %cst_14 : bf16 to vector<16x128xbf16>
    %c0_15 = arith.constant 0 : index
    %c128 = arith.constant 128 : index
    %46 = vector.load %arg8[%c0_15, %c128] : memref<256x1152xbf16, #tpu.memory_space<vmem>>, vector<16x128xbf16>
    tpu.vector_store %arg8[%c0_15, %c128], %45 {strides = array<i32>} : memref<256x1152xbf16, #tpu.memory_space<vmem>>, vector<16x128xbf16>,
    %47 = vector.extract_strided_slice %28 {offsets = [0, 0], sizes = [240, 128], strides = [1, 1]} : vector<256x128xbf16> to vector<240x128xbf16>
    %c16 = arith.constant 16 : index
    %c128_16 = arith.constant 128 : index
    %48 = vector.load %arg8[%c16, %c128_16] : memref<256x1152xbf16, #tpu.memory_space<vmem>>, vector<240x128xbf16>
    tpu.vector_store %arg8[%c16, %c128_16], %47 {strides = array<i32>} : memref<256x1152xbf16, #tpu.memory_space<vmem>>, vector<240x128xbf16>,
    %cst_17 = arith.constant 0.000000e+00 : bf16
    %49 = vector.broadcast %cst_17 : bf16 to vector<15x128xbf16>
    %c0_18 = arith.constant 0 : index
    %c256 = arith.constant 256 : index
    %50 = vector.load %arg8[%c0_18, %c256] : memref<256x1152xbf16, #tpu.memory_space<vmem>>, vector<15x128xbf16>
    tpu.vector_store %arg8[%c0_18, %c256], %49 {strides = array<i32>} : memref<256x1152xbf16, #tpu.memory_space<vmem>>, vector<15x128xbf16>,
    %51 = vector.extract_strided_slice %40 {offsets = [0, 0], sizes = [241, 128], strides = [1, 1]} : vector<256x128xbf16> to vector<241x128xbf16>
    %c15 = arith.constant 15 : index
    %c256_19 = arith.constant 256 : index
    %52 = vector.load %arg8[%c15, %c256_19] : memref<256x1152xbf16, #tpu.memory_space<vmem>>, vector<241x128xbf16>
    tpu.vector_store %arg8[%c15, %c256_19], %51 {strides = array<i32>} : memref<256x1152xbf16, #tpu.memory_space<vmem>>, vector<241x128xbf16>,
    %cst_20 = arith.constant 0.000000e+00 : bf16
    %53 = vector.broadcast %cst_20 : bf16 to vector<1x128xbf16>
    %c0_21 = arith.constant 0 : index
    %c384 = arith.constant 384 : index
    %54 = vector.load %arg8[%c0_21, %c384] : memref<256x1152xbf16, #tpu.memory_space<vmem>>, vector<1x128xbf16>
    tpu.vector_store %arg8[%c0_21, %c384], %53 {strides = array<i32>} : memref<256x1152xbf16, #tpu.memory_space<vmem>>, vector<1x128xbf16>,
    %55 = vector.extract_strided_slice %34 {offsets = [0, 0], sizes = [255, 128], strides = [1, 1]} : vector<256x128xbf16> to vector<255x128xbf16>
    %c1 = arith.constant 1 : index
    %c384_22 = arith.constant 384 : index
    %56 = vector.load %arg8[%c1, %c384_22] : memref<256x1152xbf16, #tpu.memory_space<vmem>>, vector<255x128xbf16>
    tpu.vector_store %arg8[%c1, %c384_22], %55 {strides = array<i32>} : memref<256x1152xbf16, #tpu.memory_space<vmem>>, vector<255x128xbf16>,
    %c0_23 = arith.constant 0 : index
    %c512 = arith.constant 512 : index
    %57 = vector.load %arg8[%c0_23, %c512] : memref<256x1152xbf16, #tpu.memory_space<vmem>>, vector<256x128xbf16>
    tpu.vector_store %arg8[%c0_23, %c512], %28 {strides = array<i32>} : memref<256x1152xbf16, #tpu.memory_space<vmem>>, vector<256x128xbf16>,
    %58 = vector.extract_strided_slice %40 {offsets = [1, 0], sizes = [255, 128], strides = [1, 1]} : vector<256x128xbf16> to vector<255x128xbf16>
    %c0_24 = arith.constant 0 : index
    %c640 = arith.constant 640 : index
    %59 = vector.load %arg8[%c0_24, %c640] : memref<256x1152xbf16, #tpu.memory_space<vmem>>, vector<255x128xbf16>
    tpu.vector_store %arg8[%c0_24, %c640], %58 {strides = array<i32>} : memref<256x1152xbf16, #tpu.memory_space<vmem>>, vector<255x128xbf16>,
    %cst_25 = arith.constant 0.000000e+00 : bf16
    %60 = vector.broadcast %cst_25 : bf16 to vector<1x128xbf16>
    %c255 = arith.constant 255 : index
    %c640_26 = arith.constant 640 : index
    %61 = vector.load %arg8[%c255, %c640_26] : memref<256x1152xbf16, #tpu.memory_space<vmem>>, vector<1x128xbf16>
    tpu.vector_store %arg8[%c255, %c640_26], %60 {strides = array<i32>} : memref<256x1152xbf16, #tpu.memory_space<vmem>>, vector<1x128xbf16>,
    %62 = vector.extract_strided_slice %34 {offsets = [15, 0], sizes = [241, 128], strides = [1, 1]} : vector<256x128xbf16> to vector<241x128xbf16>
    %c0_27 = arith.constant 0 : index
    %c768 = arith.constant 768 : index
    %63 = vector.load %arg8[%c0_27, %c768] : memref<256x1152xbf16, #tpu.memory_space<vmem>>, vector<241x128xbf16>
    tpu.vector_store %arg8[%c0_27, %c768], %62 {strides = array<i32>} : memref<256x1152xbf16, #tpu.memory_space<vmem>>, vector<241x128xbf16>,
    %cst_28 = arith.constant 0.000000e+00 : bf16
    %64 = vector.broadcast %cst_28 : bf16 to vector<15x128xbf16>
    %c241 = arith.constant 241 : index
    %c768_29 = arith.constant 768 : index
    %65 = vector.load %arg8[%c241, %c768_29] : memref<256x1152xbf16, #tpu.memory_space<vmem>>, vector<15x128xbf16>
    tpu.vector_store %arg8[%c241, %c768_29], %64 {strides = array<i32>} : memref<256x1152xbf16, #tpu.memory_space<vmem>>, vector<15x128xbf16>,
    %66 = vector.extract_strided_slice %28 {offsets = [16, 0], sizes = [240, 128], strides = [1, 1]} : vector<256x128xbf16> to vector<240x128xbf16>
    %c0_30 = arith.constant 0 : index
    %c896 = arith.constant 896 : index
    %67 = vector.load %arg8[%c0_30, %c896] : memref<256x1152xbf16, #tpu.memory_space<vmem>>, vector<240x128xbf16>
    tpu.vector_store %arg8[%c0_30, %c896], %66 {strides = array<i32>} : memref<256x1152xbf16, #tpu.memory_space<vmem>>, vector<240x128xbf16>,
    %cst_31 = arith.constant 0.000000e+00 : bf16
    %68 = vector.broadcast %cst_31 : bf16 to vector<16x128xbf16>
    %c240 = arith.constant 240 : index
    %c896_32 = arith.constant 896 : index
    %69 = vector.load %arg8[%c240, %c896_32] : memref<256x1152xbf16, #tpu.memory_space<vmem>>, vector<16x128xbf16>
    tpu.vector_store %arg8[%c240, %c896_32], %68 {strides = array<i32>} : memref<256x1152xbf16, #tpu.memory_space<vmem>>, vector<16x128xbf16>,
    %70 = vector.extract_strided_slice %40 {offsets = [17, 0], sizes = [239, 128], strides = [1, 1]} : vector<256x128xbf16> to vector<239x128xbf16>
    %c0_33 = arith.constant 0 : index
    %c1024 = arith.constant 1024 : index
    %71 = vector.load %arg8[%c0_33, %c1024] : memref<256x1152xbf16, #tpu.memory_space<vmem>>, vector<239x128xbf16>
    tpu.vector_store %arg8[%c0_33, %c1024], %70 {strides = array<i32>} : memref<256x1152xbf16, #tpu.memory_space<vmem>>, vector<239x128xbf16>,
    %cst_34 = arith.constant 0.000000e+00 : bf16
    %72 = vector.broadcast %cst_34 : bf16 to vector<17x128xbf16>
    %c239 = arith.constant 239 : index
    %c1024_35 = arith.constant 1024 : index
    %73 = vector.load %arg8[%c239, %c1024_35] : memref<256x1152xbf16, #tpu.memory_space<vmem>>, vector<17x128xbf16>
    tpu.vector_store %arg8[%c239, %c1024_35], %72 {strides = array<i32>} : memref<256x1152xbf16, #tpu.memory_space<vmem>>, vector<17x128xbf16>,
    %c0_36 = arith.constant 0 : index
    %c0_37 = arith.constant 0 : index
    %74 = vector.load %arg8[%c0_36, %c0_37] : memref<256x1152xbf16, #tpu.memory_space<vmem>>, vector<256x1152xbf16>
    %c0_38 = arith.constant 0 : index
    %c0_39 = arith.constant 0 : index
    %75 = vector.load %arg5[%c0_38, %c0_39] : memref<1152x128xbf16, #tpu.memory_space<vmem>>, vector<1152x128xbf16>
    %cst_40 = arith.constant dense<0.000000e+00> : vector<256x128xf32>
    %76 = tpu.matmul %74, %75, %cst_40 {dimension_numbers = #tpu.dot_dimension_numbers<[1], [0], [0], [1], [0, 0, 1, 1], [], []>} : vector<256x1152xbf16>, vector<1152x128xbf16>, vector<256x128xf32> -> vector<256x128xf32>
    %77 = arith.truncf %76 : vector<256x128xf32> to vector<256x128xbf16>
    %c0_41 = arith.constant 0 : index
    %c0_42 = arith.constant 0 : index
    %78 = vector.load %arg6[%c0_41, %c0_42] : memref<256x128xbf16, #tpu.memory_space<vmem>>, vector<256x128xbf16>
    tpu.vector_store %arg6[%c0_41, %c0_42], %77 {strides = array<i32>} : memref<256x128xbf16, #tpu.memory_space<vmem>>, vector<256x128xbf16>,
    %c0_i32_43 = arith.constant 0 : i32
    %79 = arith.cmpi eq, %arg1, %c0_i32_43 : i32
    %80 = arith.extui %79 : i1 to i32
    %c0_i32_44 = arith.constant 0 : i32
    %81 = arith.cmpi ne, %80, %c0_i32_44 : i32
    scf.if %81 {
      %cst_55 = arith.constant 0.000000e+00 : f32
      %93 = vector.broadcast %cst_55 : f32 to vector<8x128xf32>
      %c0_56 = arith.constant 0 : index
      %c0_57 = arith.constant 0 : index
      %94 = vector.load %arg7[%c0_56, %c0_57] : memref<8x128xf32, #tpu.memory_space<vmem>>, vector<8x128xf32>
      tpu.vector_store %arg7[%c0_56, %c0_57], %93 {strides = array<i32>} : memref<8x128xf32, #tpu.memory_space<vmem>>, vector<8x128xf32>,
    } else {
    }
    %c0_45 = arith.constant 0 : index
    %c0_46 = arith.constant 0 : index
    %82 = vector.load %arg7[%c0_45, %c0_46] : memref<8x128xf32, #tpu.memory_space<vmem>>, vector<1x128xf32>
    %cst_47 = arith.constant dense<0.000000e+00> : vector<128xf32>
    %83 = vector.multi_reduction <add>, %76, %cst_47 [0] : vector<256x128xf32> to vector<128xf32>
    %84 = vector.shape_cast %83 : vector<128xf32> to vector<1x128xf32>
    %85 = arith.addf %82, %84 : vector<1x128xf32>
    %c0_48 = arith.constant 0 : index
    %c0_49 = arith.constant 0 : index
    %86 = vector.load %arg7[%c0_48, %c0_49] : memref<8x128xf32, #tpu.memory_space<vmem>>, vector<1x128xf32>
    tpu.vector_store %arg7[%c0_48, %c0_49], %85 {strides = array<i32>} : memref<8x128xf32, #tpu.memory_space<vmem>>, vector<1x128xf32>,
    %c1_50 = arith.constant 1 : index
    %c0_51 = arith.constant 0 : index
    %87 = vector.load %arg7[%c1_50, %c0_51] : memref<8x128xf32, #tpu.memory_space<vmem>>, vector<1x128xf32>
    %88 = arith.mulf %76, %76 : vector<256x128xf32>
    %cst_52 = arith.constant dense<0.000000e+00> : vector<128xf32>
    %89 = vector.multi_reduction <add>, %88, %cst_52 [0] : vector<256x128xf32> to vector<128xf32>
    %90 = vector.shape_cast %89 : vector<128xf32> to vector<1x128xf32>
    %91 = arith.addf %87, %90 : vector<1x128xf32>
    %c1_53 = arith.constant 1 : index
    %c0_54 = arith.constant 0 : index
    %92 = vector.load %arg7[%c1_53, %c0_54] : memref<8x128xf32, #tpu.memory_space<vmem>>, vector<1x128xf32>
    tpu.vector_store %arg7[%c1_53, %c0_54], %91 {strides = array<i32>} : memref<8x128xf32, #tpu.memory_space<vmem>>, vector<1x128xf32>,
    return
  }
  func.func @transform_0(%arg0: i32, %arg1: i32) -> (i32, i32) {
    %c1_i32 = arith.constant 1 : i32
    %0 = arith.muli %arg0, %c1_i32 : i32
    %1 = arith.addi %0, %arg1 : i32
    %c0_i32 = arith.constant 0 : i32
    %c0_i32_0 = arith.constant 0 : i32
    return %1, %c0_i32 : i32, i32
  }
  func.func @transform_1(%arg0: i32, %arg1: i32) -> (i32, i32) {
    %c0_i32 = arith.constant 0 : i32
    %c0_i32_0 = arith.constant 0 : i32
    %c0_i32_1 = arith.constant 0 : i32
    return %c0_i32, %c0_i32_0 : i32, i32
  }
  func.func @transform_2(%arg0: i32, %arg1: i32) -> (i32, i32) {
    %c0_i32 = arith.constant 0 : i32
    %c0_i32_0 = arith.constant 0 : i32
    %c0_i32_1 = arith.constant 0 : i32
    return %c0_i32, %c0_i32_0 : i32, i32
  }
  func.func @transform_3(%arg0: i32, %arg1: i32) -> (i32, i32) {
    %c0_i32 = arith.constant 0 : i32
    %c0_i32_0 = arith.constant 0 : i32
    %c0_i32_1 = arith.constant 0 : i32
    return %c0_i32, %c0_i32_0 : i32, i32
  }
  func.func @transform_4(%arg0: i32, %arg1: i32) -> (i32, i32) {
    %c1_i32 = arith.constant 1 : i32
    %0 = arith.muli %arg0, %c1_i32 : i32
    %1 = arith.addi %0, %arg1 : i32
    %c0_i32 = arith.constant 0 : i32
    %c0_i32_0 = arith.constant 0 : i32
    return %1, %c0_i32 : i32, i32
  }
  func.func @transform_5(%arg0: i32, %arg1: i32) -> (i32, i32) {
    %c0_i32 = arith.constant 0 : i32
    %c0_i32_0 = arith.constant 0 : i32
    return %arg0, %c0_i32 : i32, i32
  }
}

module attributes {stable_mosaic.version = 11 : i64} {
  func.func @_bn_relu_conv1x1_stats_kernel(%arg0: i32, %arg1: i32, %arg2: memref<256x128xbf16, #tpu.memory_space<vmem>>, %arg3: memref<1x128xf32, #tpu.memory_space<vmem>>, %arg4: memref<1x128xf32, #tpu.memory_space<vmem>>, %arg5: memref<128x128xbf16, #tpu.memory_space<vmem>>, %arg6: memref<256x128xf32, #tpu.memory_space<vmem>>, %arg7: memref<8x128xf32, #tpu.memory_space<vmem>>) attributes {dimension_semantics = [#tpu.dimension_semantics<parallel>, #tpu.dimension_semantics<arbitrary>], iteration_bounds = array<i64: 2, 1>, scalar_prefetch = 0 : i64, scratch_operands = 0 : i64, tpu.core_type = #tpu.core_type<tc>, window_params = [{transform_indices = @transform_0, window_bounds = array<i64: 256, 128>}, {pipeline_mode = #tpu.pipeline_mode<synchronous>, transform_indices = @transform_1, window_bounds = array<i64: 1, 128>}, {pipeline_mode = #tpu.pipeline_mode<synchronous>, transform_indices = @transform_2, window_bounds = array<i64: 1, 128>}, {pipeline_mode = #tpu.pipeline_mode<synchronous>, transform_indices = @transform_3, window_bounds = array<i64: 128, 128>}, {transform_indices = @transform_4, window_bounds = array<i64: 256, 128>}, {transform_indices = @transform_5, window_bounds = array<i64: 8, 128>}]} {
    %c0 = arith.constant 0 : index
    %c0_0 = arith.constant 0 : index
    %0 = vector.load %arg2[%c0, %c0_0] : memref<256x128xbf16, #tpu.memory_space<vmem>>, vector<256x128xbf16>
    %1 = arith.extf %0 : vector<256x128xbf16> to vector<256x128xf32>
    %c0_1 = arith.constant 0 : index
    %c0_2 = arith.constant 0 : index
    %2 = vector.load %arg3[%c0_1, %c0_2] : memref<1x128xf32, #tpu.memory_space<vmem>>, vector<1x128xf32>
    %3 = vector.broadcast %2 : vector<1x128xf32> to vector<256x128xf32>
    %4 = arith.mulf %1, %3 : vector<256x128xf32>
    %c0_3 = arith.constant 0 : index
    %c0_4 = arith.constant 0 : index
    %5 = vector.load %arg4[%c0_3, %c0_4] : memref<1x128xf32, #tpu.memory_space<vmem>>, vector<1x128xf32>
    %6 = vector.broadcast %5 : vector<1x128xf32> to vector<256x128xf32>
    %7 = arith.addf %4, %6 : vector<256x128xf32>
    %cst = arith.constant 0.000000e+00 : f32
    %8 = vector.broadcast %cst : f32 to vector<256x128xf32>
    %9 = arith.maximumf %7, %8 : vector<256x128xf32>
    %10 = arith.truncf %9 : vector<256x128xf32> to vector<256x128xbf16>
    %c0_5 = arith.constant 0 : index
    %c0_6 = arith.constant 0 : index
    %11 = vector.load %arg5[%c0_5, %c0_6] : memref<128x128xbf16, #tpu.memory_space<vmem>>, vector<128x128xbf16>
    %cst_7 = arith.constant dense<0.000000e+00> : vector<256x128xf32>
    %12 = tpu.matmul %10, %11, %cst_7 {dimension_numbers = #tpu.dot_dimension_numbers<[1], [0], [0], [1], [0, 0, 1, 1], [], []>} : vector<256x128xbf16>, vector<128x128xbf16>, vector<256x128xf32> -> vector<256x128xf32>
    %c0_8 = arith.constant 0 : index
    %c0_9 = arith.constant 0 : index
    %13 = vector.load %arg6[%c0_8, %c0_9] : memref<256x128xf32, #tpu.memory_space<vmem>>, vector<256x128xf32>
    tpu.vector_store %arg6[%c0_8, %c0_9], %12 {strides = array<i32>} : memref<256x128xf32, #tpu.memory_space<vmem>>, vector<256x128xf32>,
    %c0_i32 = arith.constant 0 : i32
    %14 = arith.cmpi eq, %arg1, %c0_i32 : i32
    %15 = arith.extui %14 : i1 to i32
    %c0_i32_10 = arith.constant 0 : i32
    %16 = arith.cmpi ne, %15, %c0_i32_10 : i32
    scf.if %16 {
      %cst_20 = arith.constant 0.000000e+00 : f32
      %28 = vector.broadcast %cst_20 : f32 to vector<8x128xf32>
      %c0_21 = arith.constant 0 : index
      %c0_22 = arith.constant 0 : index
      %29 = vector.load %arg7[%c0_21, %c0_22] : memref<8x128xf32, #tpu.memory_space<vmem>>, vector<8x128xf32>
      tpu.vector_store %arg7[%c0_21, %c0_22], %28 {strides = array<i32>} : memref<8x128xf32, #tpu.memory_space<vmem>>, vector<8x128xf32>,
    } else {
    }
    %c0_11 = arith.constant 0 : index
    %c0_12 = arith.constant 0 : index
    %17 = vector.load %arg7[%c0_11, %c0_12] : memref<8x128xf32, #tpu.memory_space<vmem>>, vector<1x128xf32>
    %cst_13 = arith.constant dense<0.000000e+00> : vector<128xf32>
    %18 = vector.multi_reduction <add>, %12, %cst_13 [0] : vector<256x128xf32> to vector<128xf32>
    %19 = vector.shape_cast %18 : vector<128xf32> to vector<1x128xf32>
    %20 = arith.addf %17, %19 : vector<1x128xf32>
    %c0_14 = arith.constant 0 : index
    %c0_15 = arith.constant 0 : index
    %21 = vector.load %arg7[%c0_14, %c0_15] : memref<8x128xf32, #tpu.memory_space<vmem>>, vector<1x128xf32>
    tpu.vector_store %arg7[%c0_14, %c0_15], %20 {strides = array<i32>} : memref<8x128xf32, #tpu.memory_space<vmem>>, vector<1x128xf32>,
    %c1 = arith.constant 1 : index
    %c0_16 = arith.constant 0 : index
    %22 = vector.load %arg7[%c1, %c0_16] : memref<8x128xf32, #tpu.memory_space<vmem>>, vector<1x128xf32>
    %23 = arith.mulf %12, %12 : vector<256x128xf32>
    %cst_17 = arith.constant dense<0.000000e+00> : vector<128xf32>
    %24 = vector.multi_reduction <add>, %23, %cst_17 [0] : vector<256x128xf32> to vector<128xf32>
    %25 = vector.shape_cast %24 : vector<128xf32> to vector<1x128xf32>
    %26 = arith.addf %22, %25 : vector<1x128xf32>
    %c1_18 = arith.constant 1 : index
    %c0_19 = arith.constant 0 : index
    %27 = vector.load %arg7[%c1_18, %c0_19] : memref<8x128xf32, #tpu.memory_space<vmem>>, vector<1x128xf32>
    tpu.vector_store %arg7[%c1_18, %c0_19], %26 {strides = array<i32>} : memref<8x128xf32, #tpu.memory_space<vmem>>, vector<1x128xf32>,
    return
  }
  func.func @transform_0(%arg0: i32, %arg1: i32) -> (i32, i32) {
    %c1_i32 = arith.constant 1 : i32
    %0 = arith.muli %arg0, %c1_i32 : i32
    %1 = arith.addi %0, %arg1 : i32
    %c0_i32 = arith.constant 0 : i32
    %c0_i32_0 = arith.constant 0 : i32
    return %1, %c0_i32 : i32, i32
  }
  func.func @transform_1(%arg0: i32, %arg1: i32) -> (i32, i32) {
    %c0_i32 = arith.constant 0 : i32
    %c0_i32_0 = arith.constant 0 : i32
    %c0_i32_1 = arith.constant 0 : i32
    return %c0_i32, %c0_i32_0 : i32, i32
  }
  func.func @transform_2(%arg0: i32, %arg1: i32) -> (i32, i32) {
    %c0_i32 = arith.constant 0 : i32
    %c0_i32_0 = arith.constant 0 : i32
    %c0_i32_1 = arith.constant 0 : i32
    return %c0_i32, %c0_i32_0 : i32, i32
  }
  func.func @transform_3(%arg0: i32, %arg1: i32) -> (i32, i32) {
    %c0_i32 = arith.constant 0 : i32
    %c0_i32_0 = arith.constant 0 : i32
    %c0_i32_1 = arith.constant 0 : i32
    return %c0_i32, %c0_i32_0 : i32, i32
  }
  func.func @transform_4(%arg0: i32, %arg1: i32) -> (i32, i32) {
    %c1_i32 = arith.constant 1 : i32
    %0 = arith.muli %arg0, %c1_i32 : i32
    %1 = arith.addi %0, %arg1 : i32
    %c0_i32 = arith.constant 0 : i32
    %c0_i32_0 = arith.constant 0 : i32
    return %1, %c0_i32 : i32, i32
  }
  func.func @transform_5(%arg0: i32, %arg1: i32) -> (i32, i32) {
    %c0_i32 = arith.constant 0 : i32
    %c0_i32_0 = arith.constant 0 : i32
    return %arg0, %c0_i32 : i32, i32
  }
}

module attributes {stable_mosaic.version = 11 : i64} {
  func.func @_bn_add_relu_kernel(%arg0: i32, %arg1: memref<256x128xf32, #tpu.memory_space<vmem>>, %arg2: memref<256x128xf32, #tpu.memory_space<vmem>>, %arg3: memref<1x128xf32, #tpu.memory_space<vmem>>, %arg4: memref<1x128xf32, #tpu.memory_space<vmem>>, %arg5: memref<256x128xf32, #tpu.memory_space<vmem>>) attributes {dimension_semantics = [#tpu.dimension_semantics<parallel>], iteration_bounds = array<i64: 2>, scalar_prefetch = 0 : i64, scratch_operands = 0 : i64, tpu.core_type = #tpu.core_type<tc>, window_params = [{transform_indices = @transform_0, window_bounds = array<i64: 256, 128>}, {transform_indices = @transform_1, window_bounds = array<i64: 256, 128>}, {pipeline_mode = #tpu.pipeline_mode<synchronous>, transform_indices = @transform_2, window_bounds = array<i64: 1, 128>}, {pipeline_mode = #tpu.pipeline_mode<synchronous>, transform_indices = @transform_3, window_bounds = array<i64: 1, 128>}, {transform_indices = @transform_4, window_bounds = array<i64: 256, 128>}]} {
    %c0 = arith.constant 0 : index
    %c0_0 = arith.constant 0 : index
    %0 = vector.load %arg1[%c0, %c0_0] : memref<256x128xf32, #tpu.memory_space<vmem>>, vector<256x128xf32>
    %c0_1 = arith.constant 0 : index
    %c0_2 = arith.constant 0 : index
    %1 = vector.load %arg3[%c0_1, %c0_2] : memref<1x128xf32, #tpu.memory_space<vmem>>, vector<1x128xf32>
    %2 = vector.broadcast %1 : vector<1x128xf32> to vector<256x128xf32>
    %3 = arith.mulf %0, %2 : vector<256x128xf32>
    %c0_3 = arith.constant 0 : index
    %c0_4 = arith.constant 0 : index
    %4 = vector.load %arg4[%c0_3, %c0_4] : memref<1x128xf32, #tpu.memory_space<vmem>>, vector<1x128xf32>
    %5 = vector.broadcast %4 : vector<1x128xf32> to vector<256x128xf32>
    %6 = arith.addf %3, %5 : vector<256x128xf32>
    %c0_5 = arith.constant 0 : index
    %c0_6 = arith.constant 0 : index
    %7 = vector.load %arg2[%c0_5, %c0_6] : memref<256x128xf32, #tpu.memory_space<vmem>>, vector<256x128xf32>
    %8 = arith.addf %6, %7 : vector<256x128xf32>
    %cst = arith.constant 0.000000e+00 : f32
    %9 = vector.broadcast %cst : f32 to vector<256x128xf32>
    %10 = arith.maximumf %8, %9 : vector<256x128xf32>
    %c0_7 = arith.constant 0 : index
    %c0_8 = arith.constant 0 : index
    %11 = vector.load %arg5[%c0_7, %c0_8] : memref<256x128xf32, #tpu.memory_space<vmem>>, vector<256x128xf32>
    tpu.vector_store %arg5[%c0_7, %c0_8], %10 {strides = array<i32>} : memref<256x128xf32, #tpu.memory_space<vmem>>, vector<256x128xf32>,
    return
  }
  func.func @transform_0(%arg0: i32) -> (i32, i32) {
    %c0_i32 = arith.constant 0 : i32
    %c0_i32_0 = arith.constant 0 : i32
    return %arg0, %c0_i32 : i32, i32
  }
  func.func @transform_1(%arg0: i32) -> (i32, i32) {
    %c0_i32 = arith.constant 0 : i32
    %c0_i32_0 = arith.constant 0 : i32
    return %arg0, %c0_i32 : i32, i32
  }
  func.func @transform_2(%arg0: i32) -> (i32, i32) {
    %c0_i32 = arith.constant 0 : i32
    %c0_i32_0 = arith.constant 0 : i32
    %c0_i32_1 = arith.constant 0 : i32
    return %c0_i32, %c0_i32_0 : i32, i32
  }
  func.func @transform_3(%arg0: i32) -> (i32, i32) {
    %c0_i32 = arith.constant 0 : i32
    %c0_i32_0 = arith.constant 0 : i32
    %c0_i32_1 = arith.constant 0 : i32
    return %c0_i32, %c0_i32_0 : i32, i32
  }
  func.func @transform_4(%arg0: i32) -> (i32, i32) {
    %c0_i32 = arith.constant 0 : i32
    %c0_i32_0 = arith.constant 0 : i32
    return %arg0, %c0_i32 : i32, i32
  }
}

</mosaic_0001>

<llo_original>
// kernel: residual_block_forward.4
$region0: #{residual_block_forward.4}
  #allocation0 [shape = 'u32[]', space=smem, size = 0x4, offset = 0x4, fixed_abs, tag = 'smem constant byte address 0x4 - core index']
  #allocation1 [shape = 'u32[72,128]{1,0:T(1,128)}', space=vmem, size = 0x9000, scoped, tag = 'internal scratch']
  %s0 = inlined_call_operand.vmem [shape: f32[512,128], index: 0, kind: input, shape index: {}]
  %s1 = inlined_call_operand.vmem [shape: bf16[128,128], index: 1, kind: input, shape index: {}]
  %s2 = inlined_call_operand.vmem [shape: bf16[512,128], index: 2, kind: output, shape index: {0}]
  %s3 = inlined_call_operand.vmem [shape: f32[16,128], index: 3, kind: output, shape index: {1}]
  %4 = xla_tuple %s2, %s3
  %s5 = sld [smem:[#allocation0]]
  $region53: #{residual_block_forward.4} parent=0
    _
  %s7 = ssub.s32 1, %s5
  %s8 = scalar_select 0, %s7, %s5
  loop: start=0, step=1, limit=4
  $region2: #{residual_block_forward.4} parent=0 // loop_pre_header
    _
  $region3: #{residual_block_forward.4} parent=0 // loop_header
    %s10 = sphi 0, %s14
    %p11 = scmp.ge.s32.totalorder %s10, 4
    %s17 = sphi 0, %s29
    %s18 = sphi 0, %s25
    %s19 = sphi 0, %s17
    %s20 = sphi 0, %s18
    %s21 = sphi 0, %s19
    %s22 = sphi 0, %s20
    %s34 = sphi 0, %s36
    %s37 = sphi 0, %s34
    %s38 = sphi 0, %s37
    %s54 = sphi 0, %s38
    %s58 = sphi 0, %s58
    %s60 = sphi 0, %s58
    %s61 = sphi 0, %s60
    %s75 = sphi 0, %s61
    %s83 = sphi 0, %s85
    %s86 = sphi 0, %s83
    %s87 = sphi 0, %s86
    %s103 = sphi 0, %s87
    %s109 = sphi 0, %s111
    %s112 = sphi 0, %s109
    %s113 = sphi 0, %s112
    %s129 = sphi 0, %s113
  $region4: #{residual_block_forward.4} parent=0 // loop_header_branch
    %13 = sbr.rel (%p11) target = $region8
  $region5: #{residual_block_forward.4} parent=0 // loop_body
    %s15 = ssub.s32 %s10, 1
    %s16 = ssub.s32 %s10, 2
    %s23 = sadd.s32 1, %s18
    %p24 = scmp.ge.s32.totalorder %s23, 1
    %s25 = scalar_select %p24, 0, %s23
    %s26 = sadd.s32 1, %s17
    %s27 = scalar_select %p24, %s26, %s17
    %p28 = scmp.ge.s32.totalorder %s27, 2
    %s29 = scalar_select %p28, 0, %s27
    %s30 = sadd.s32 %s17, %s18
    %s31 = sadd.s32 %s29, %s25
    %s32 = ssub.s32 %s30, %s31
    %p33 = scmp.eq.s32.totalorder %s32, 0
    %s35 = sadd.s32 %s34, 1
    %s36 = scalar_select %p33, %s34, %s35
    %p39 = pneg %p33
    %p40 = scmp.eq.s32.totalorder %s10, 1
    %p41 = por %p39, %p40
    %p42 = scmp.ne.s32.totalorder %s34, %s37
    %p43 = scmp.eq.s32.totalorder %s10, 0
    %p44 = por %p42, %p43
    %p45 = scmp.ne.s32.totalorder %s34, %s37
    %p46 = scmp.eq.s32.totalorder %s15, 1
    %p47 = por %p45, %p46
    %p48 = scmp.ne.s32.totalorder %s37, %s38
    %p49 = scmp.eq.s32.totalorder %s15, 0
    %p50 = por %p48, %p49
    %p51 = scmp.ne.s32.totalorder %s37, %s38
    %p52 = scmp.eq.s32.totalorder %s16, 1
    %p53 = por %p51, %p52
    %p55 = scmp.ne.s32.totalorder %s38, %s54
    %p56 = scmp.eq.s32.totalorder %s16, 0
    %p57 = por %p55, %p56
    %s59 = sadd.s32 %s58, 1
    %p62 = scmp.eq.s32.totalorder %s10, 1
    %p63 = scmp.ne.s32.totalorder %s58, %s60
    %p64 = scmp.eq.s32.totalorder %s10, 0
    %p65 = por %p63, %p64
    %p66 = scmp.ne.s32.totalorder %s58, %s60
    %p67 = scmp.eq.s32.totalorder %s15, 1
    %p68 = por %p66, %p67
    %p69 = scmp.ne.s32.totalorder %s60, %s61
    %p70 = scmp.eq.s32.totalorder %s15, 0
    %p71 = por %p69, %p70
    %p72 = scmp.ne.s32.totalorder %s60, %s61
    %p73 = scmp.eq.s32.totalorder %s16, 1
    %p74 = por %p72, %p73
    %p76 = scmp.ne.s32.totalorder %s61, %s75
    %p77 = scmp.eq.s32.totalorder %s16, 0
    %p78 = por %p76, %p77
    %s79 = sadd.s32 %s17, %s18
    %s80 = sadd.s32 %s29, %s25
    %s81 = ssub.s32 %s79, %s80
    %p82 = scmp.eq.s32.totalorder %s81, 0
    %s84 = sadd.s32 %s83, 1
    %s85 = scalar_select %p82, %s83, %s84
    %p88 = pneg %p82
    %p89 = scmp.eq.s32.totalorder %s10, 1
    %p90 = por %p88, %p89
    %p91 = scmp.ne.s32.totalorder %s83, %s86
    %p92 = scmp.eq.s32.totalorder %s10, 0
    %p93 = por %p91, %p92
    %p94 = scmp.ne.s32.totalorder %s83, %s86
    %p95 = scmp.eq.s32.totalorder %s15, 1
    %p96 = por %p94, %p95
    %p97 = scmp.ne.s32.totalorder %s86, %s87
    %p98 = scmp.eq.s32.totalorder %s15, 0
    %p99 = por %p97, %p98
    %p100 = scmp.ne.s32.totalorder %s86, %s87
    %p101 = scmp.eq.s32.totalorder %s16, 1
    %p102 = por %p100, %p101
    %p104 = scmp.ne.s32.totalorder %s87, %s103
    %p105 = scmp.eq.s32.totalorder %s16, 0
    %p106 = por %p104, %p105
    %s107 = ssub.s32 %s17, %s29
    %p108 = scmp.eq.s32.totalorder %s107, 0
    %s110 = sadd.s32 %s109, 1
    %s111 = scalar_select %p108, %s109, %s110
    %p114 = pneg %p108
    %p115 = scmp.eq.s32.totalorder %s10, 1
    %p116 = por %p114, %p115
    %p117 = scmp.ne.s32.totalorder %s109, %s112
    %p118 = scmp.eq.s32.totalorder %s10, 0
    %p119 = por %p117, %p118
    %p120 = scmp.ne.s32.totalorder %s109, %s112
    %p121 = scmp.eq.s32.totalorder %s15, 1
    %p122 = por %p120, %p121
    %p123 = scmp.ne.s32.totalorder %s112, %s113
    %p124 = scmp.eq.s32.totalorder %s15, 0
    %p125 = por %p123, %p124
    %p126 = scmp.ne.s32.totalorder %s112, %s113
    %p127 = scmp.eq.s32.totalorder %s16, 1
    %p128 = por %p126, %p127
    %p130 = scmp.ne.s32.totalorder %s113, %s129
    %p131 = scmp.eq.s32.totalorder %s16, 0
    %p132 = por %p130, %p131
    %p133 = scmp.le.s32.totalorder 1, %s10
    %p134 = scmp.lt.s32.totalorder %s10, 3
    %p135 = pnand %p133, %p134
    %p136 = pneg %p135
    // Predicated region
    $region9: #{residual_block_forward.4} parent=5 // pred_check
      _
    $region10: #{residual_block_forward.4} parent=5 // pred_check_branch
      %138 = sbr.rel (%p135) target = $region12
    $region11: #{residual_block_forward.4} parent=5 // pred_region
      %s139 = ssub.s32 %s10, 1
      // Predicated region
      $region13: #{residual_block_forward.4} parent=11 // pred_check
        %p140 = pneg %p71
      $region14: #{residual_block_forward.4} parent=11 // pred_check_branch
        %142 = sbr.rel (%p140) target = $region16
      $region15: #{residual_block_forward.4} parent=11 // pred_region
        _
      $region16: #{residual_block_forward.4} parent=11 // pred_fallthru
        _
    $region12: #{residual_block_forward.4} parent=5 // pred_fallthru
      _
    %p143 = scmp.lt.s32.totalorder %s10, 2
    // Predicated region
    $region17: #{residual_block_forward.4} parent=5 // pred_check
      %p144 = pneg %p143
    $region18: #{residual_block_forward.4} parent=5 // pred_check_branch
      %146 = sbr.rel (%p144) target = $region20
    $region19: #{residual_block_forward.4} parent=5 // pred_region
      // Predicated region
      $region21: #{residual_block_forward.4} parent=19 // pred_check
        %p147 = pneg %p44
      $region22: #{residual_block_forward.4} parent=19 // pred_check_branch
        %149 = sbr.rel (%p147) target = $region24
      $region23: #{residual_block_forward.4} parent=19 // pred_region
        %s150 = sadd.s32 %s17, %s18
        %s151 = smul.u32 32, %s150
        %p152 = scmp.lt.s32.totalorder %s151, 63
        %s153 = scalar_select %p152, %s151, 63
        %s154 = smul.addr %s153, 8
        %s155 = scalar_lea.vmem %s0, %s154
        %s156 = sadd.s32 %s17, %s18
        %s157 = smul.u32 32, %s156
      $region24: #{residual_block_forward.4} parent=19 // pred_fallthru
        _
    $region20: #{residual_block_forward.4} parent=5 // pred_fallthru
      _
    %p158 = scmp.le.s32.totalorder 1, %s10
    %p159 = scmp.lt.s32.totalorder %s10, 3
    %p160 = pnand %p158, %p159
    %p161 = pneg %p160
    // Predicated region
    $region25: #{residual_block_forward.4} parent=5 // pred_check
      _
    $region26: #{residual_block_forward.4} parent=5 // pred_check_branch
      %163 = sbr.rel (%p160) target = $region28
    $region27: #{residual_block_forward.4} parent=5 // pred_region
      %s164 = ssub.s32 %s10, 1
      %s165 = sadd.s32 %s19, %s20
      %s166 = smul.u32 32, %s165
      %p167 = scmp.lt.s32.totalorder %s166, 63
      %s168 = scalar_select %p167, %s166, 63
      %s169 = smul.addr %s168, 8
      %s170 = scalar_lea.vmem %s0, %s169
      %p171 = pneg %p50
      %p172 = pneg %p47
      %p173 = pneg %p71
      %p174 = pneg %p68
      %p175 = pneg %p99
      %p176 = pneg %p96
      %s177 = sadd.s32 %s19, %s20
      %s178 = smul.u32 32, %s177
      %p179 = scmp.lt.s32.totalorder %s178, 63
      %s180 = scalar_select %p179, %s178, 63
      %s181 = smul.addr %s180, 4
      %s182 = scalar_lea.vmem %s2, %s181
      %p183 = pneg %p125
      %p184 = pneg %p122
      %p185 = scmp.lt.s32.totalorder %s19, 1
      %s186 = scalar_select %p185, %s19, 1
      %s187 = smul.addr %s186, 8
      %s188 = scalar_lea.vmem %s3, %s187
      %s189 = sadd.s32 %s19, %s20
      %s190 = smul.u32 32, %s189
      %p191 = scmp.lt.s32.totalorder %s190, 63
      %s192 = scalar_select %p191, %s190, 63
      %s193 = smul.addr %s192, 8
      %s194 = scalar_lea.vmem %s0, %s193
      %s195 = sadd.s32 %s19, %s20
      %s196 = smul.u32 32, %s195
      %s197 = sadd.s32 %s19, %s20
      %s198 = smul.u32 32, %s197
      %p199 = scmp.lt.s32.totalorder %s198, 63
      %s200 = scalar_select %p199, %s198, 63
      %s201 = smul.addr %s200, 4
      %s202 = scalar_lea.vmem %s2, %s201
      %s203 = sadd.s32 %s19, %s20
      %s204 = smul.u32 32, %s203
      %p205 = scmp.lt.s32.totalorder %s19, 1
      %s206 = scalar_select %p205, %s19, 1
      %s207 = smul.addr %s206, 8
      %s208 = scalar_lea.vmem %s3, %s207
      %v209 = vld [vmem:[%s194] sm:$0xff]
      %v210 = vld [vmem:[%s194 + $0x8] sm:$0xff]
      %v211 = vld [vmem:[%s194 + $0x10] sm:$0xff]
      %v212 = vld [vmem:[%s194 + $0x18] sm:$0xff]
      %v213 = vld [vmem:[%s194 + $0x20] sm:$0xff]
      %v214 = vld [vmem:[%s194 + $0x28] sm:$0xff]
      %v215 = vld [vmem:[%s194 + $0x30] sm:$0xff]
      %v216 = vld [vmem:[%s194 + $0x38] sm:$0xff]
      %v217 = vld [vmem:[%s194 + $0x40] sm:$0xff]
      %v218 = vld [vmem:[%s194 + $0x48] sm:$0xff]
      %v219 = vld [vmem:[%s194 + $0x50] sm:$0xff]
      %v220 = vld [vmem:[%s194 + $0x58] sm:$0xff]
      %v221 = vld [vmem:[%s194 + $0x60] sm:$0xff]
      %v222 = vld [vmem:[%s194 + $0x68] sm:$0xff]
      %v223 = vld [vmem:[%s194 + $0x70] sm:$0xff]
      %v224 = vld [vmem:[%s194 + $0x78] sm:$0xff]
      %v225 = vld [vmem:[%s194 + $0x80] sm:$0xff]
      %v226 = vld [vmem:[%s194 + $0x88] sm:$0xff]
      %v227 = vld [vmem:[%s194 + $0x90] sm:$0xff]
      %v228 = vld [vmem:[%s194 + $0x98] sm:$0xff]
      %v229 = vld [vmem:[%s194 + $0xa0] sm:$0xff]
      %v230 = vld [vmem:[%s194 + $0xa8] sm:$0xff]
      %v231 = vld [vmem:[%s194 + $0xb0] sm:$0xff]
      %v232 = vld [vmem:[%s194 + $0xb8] sm:$0xff]
      %v233 = vld [vmem:[%s194 + $0xc0] sm:$0xff]
      %v234 = vld [vmem:[%s194 + $0xc8] sm:$0xff]
      %v235 = vld [vmem:[%s194 + $0xd0] sm:$0xff]
      %v236 = vld [vmem:[%s194 + $0xd8] sm:$0xff]
      %v237 = vld [vmem:[%s194 + $0xe0] sm:$0xff]
      %v238 = vld [vmem:[%s194 + $0xe8] sm:$0xff]
      %v239 = vld [vmem:[%s194 + $0xf0] sm:$0xff]
      %v240 = vld [vmem:[%s194 + $0xf8] sm:$0xff]
      %v241 = vpack.c.bf16 %v210, %v209
      %v242 = vpack.c.bf16 %v212, %v211
      %v243 = vpack.c.bf16 %v214, %v213
      %v244 = vpack.c.bf16 %v216, %v215
      %v245 = vpack.c.bf16 %v218, %v217
      %v246 = vpack.c.bf16 %v220, %v219
      %v247 = vpack.c.bf16 %v222, %v221
      %v248 = vpack.c.bf16 %v224, %v223
      %v249 = vpack.c.bf16 %v226, %v225
      %v250 = vpack.c.bf16 %v228, %v227
      %v251 = vpack.c.bf16 %v230, %v229
      %v252 = vpack.c.bf16 %v232, %v231
      %v253 = vpack.c.bf16 %v234, %v233
      %v254 = vpack.c.bf16 %v236, %v235
      %v255 = vpack.c.bf16 %v238, %v237
      %v256 = vpack.c.bf16 %v240, %v239
      %v257 = vld [vmem:[%s1] sm:$0xf]
      %v258 = vld [vmem:[%s1 + $0x4] sm:$0xf]
      %v259 = vld [vmem:[%s1 + $0x8] sm:$0xf]
      %v260 = vld [vmem:[%s1 + $0xc] sm:$0xf]
      %v261 = vld [vmem:[%s1 + $0x10] sm:$0xf]
      %v262 = vld [vmem:[%s1 + $0x14] sm:$0xf]
      %v263 = vld [vmem:[%s1 + $0x18] sm:$0xf]
      %v264 = vld [vmem:[%s1 + $0x1c] sm:$0xf]
      %v265 = vld [vmem:[%s1 + $0x20] sm:$0xf]
      %v266 = vld [vmem:[%s1 + $0x24] sm:$0xf]
      %v267 = vld [vmem:[%s1 + $0x28] sm:$0xf]
      %v268 = vld [vmem:[%s1 + $0x2c] sm:$0xf]
      %v269 = vld [vmem:[%s1 + $0x30] sm:$0xf]
      %v270 = vld [vmem:[%s1 + $0x34] sm:$0xf]
      %v271 = vld [vmem:[%s1 + $0x38] sm:$0xf]
      %v272 = vld [vmem:[%s1 + $0x3c] sm:$0xf]
      %v289 = vunpack.c.l.b16 %v257
      %v290 = vunpack.c.l.b16 %v258
      %v291 = vunpack.c.l.b16 %v259
      %v292 = vunpack.c.l.b16 %v260
      %v293 = vunpack.c.l.b16 %v261
      %v294 = vunpack.c.l.b16 %v262
      %v295 = vunpack.c.l.b16 %v263
      %v296 = vunpack.c.l.b16 %v264
      %v297 = vunpack.c.l.b16 %v265
      %v298 = vunpack.c.l.b16 %v266
      %v299 = vunpack.c.l.b16 %v267
      %v300 = vunpack.c.l.b16 %v268
      %v301 = vunpack.c.l.b16 %v269
      %v302 = vunpack.c.l.b16 %v270
      %v303 = vunpack.c.l.b16 %v271
      %v304 = vunpack.c.l.b16 %v272
      %v305 = vpack.c.b16 %v290, %v289
      %v306 = vpack.c.b16 %v292, %v291
      %v307 = vpack.c.b16 %v294, %v293
      %v308 = vpack.c.b16 %v296, %v295
      %v309 = vpack.c.b16 %v298, %v297
      %v310 = vpack.c.b16 %v300, %v299
      %v311 = vpack.c.b16 %v302, %v301
      %v312 = vpack.c.b16 %v304, %v303
      %321 = vmatpush.bf16.msra.mxu0 %v312
      %322 = vmatpush.bf16.msra.mxu0 %v311
      %323 = vmatpush.bf16.msra.mxu0 %v310
      %324 = vmatpush.bf16.msra.mxu0 %v309
      %325 = vmatpush.bf16.msra.mxu0 %v308
      %326 = vmatpush.bf16.msra.mxu0 %v307
      %327 = vmatpush.bf16.msra.mxu0 %v306
      %328 = vmatpush.bf16.msra.mxu0 %v305
      %329 = vmatmul.bf16.gmra.mxu0 %v241
      %v330 = vpop.f32.mrf.mxu0
      %v331 = vadd.f32 0.0, %v330
      %v332 = vpop.f32.mrf.mxu0
      %v333 = vadd.f32 0.0, %v332
      %334 = vmatmul.bf16.gmra.mxu0 %v242
      %v335 = vpop.f32.mrf.mxu0
      %v336 = vadd.f32 0.0, %v335
      %v337 = vpop.f32.mrf.mxu0
      %v338 = vadd.f32 0.0, %v337
      %339 = vmatmul.bf16.gmra.mxu0 %v243
      %v340 = vpop.f32.mrf.mxu0
      %v341 = vadd.f32 0.0, %v340
      %v342 = vpop.f32.mrf.mxu0
      %v343 = vadd.f32 0.0, %v342
      %344 = vmatmul.bf16.gmra.mxu0 %v244
      %v345 = vpop.f32.mrf.mxu0
      %v346 = vadd.f32 0.0, %v345
      %v347 = vpop.f32.mrf.mxu0
      %v348 = vadd.f32 0.0, %v347
      %349 = vmatmul.bf16.gmra.mxu0 %v245
      %v350 = vpop.f32.mrf.mxu0
      %v351 = vadd.f32 0.0, %v350
      %v352 = vpop.f32.mrf.mxu0
      %v353 = vadd.f32 0.0, %v352
      %354 = vmatmul.bf16.gmra.mxu0 %v246
      %v355 = vpop.f32.mrf.mxu0
      %v356 = vadd.f32 0.0, %v355
      %v357 = vpop.f32.mrf.mxu0
      %v358 = vadd.f32 0.0, %v357
      %359 = vmatmul.bf16.gmra.mxu0 %v247
      %v360 = vpop.f32.mrf.mxu0
      %v361 = vadd.f32 0.0, %v360
      %v362 = vpop.f32.mrf.mxu0
      %v363 = vadd.f32 0.0, %v362
      %364 = vmatmul.bf16.gmra.mxu0 %v248
      %v365 = vpop.f32.mrf.mxu0
      %v366 = vadd.f32 0.0, %v365
      %v367 = vpop.f32.mrf.mxu0
      %v368 = vadd.f32 0.0, %v367
      %369 = vmatmul.bf16.gmra.mxu0 %v249
      %v370 = vpop.f32.mrf.mxu0
      %v371 = vadd.f32 0.0, %v370
      %v372 = vpop.f32.mrf.mxu0
      %v373 = vadd.f32 0.0, %v372
      %374 = vmatmul.bf16.gmra.mxu0 %v250
      %v375 = vpop.f32.mrf.mxu0
      %v376 = vadd.f32 0.0, %v375
      %v377 = vpop.f32.mrf.mxu0
      %v378 = vadd.f32 0.0, %v377
      %379 = vmatmul.bf16.gmra.mxu0 %v251
      %v380 = vpop.f32.mrf.mxu0
      %v381 = vadd.f32 0.0, %v380
      %v382 = vpop.f32.mrf.mxu0
      %v383 = vadd.f32 0.0, %v382
      %384 = vmatmul.bf16.gmra.mxu0 %v252
      %v385 = vpop.f32.mrf.mxu0
      %v386 = vadd.f32 0.0, %v385
      %v387 = vpop.f32.mrf.mxu0
      %v388 = vadd.f32 0.0, %v387
      %389 = vmatmul.bf16.gmra.mxu0 %v253
      %v390 = vpop.f32.mrf.mxu0
      %v391 = vadd.f32 0.0, %v390
      %v392 = vpop.f32.mrf.mxu0
      %v393 = vadd.f32 0.0, %v392
      %394 = vmatmul.bf16.gmra.mxu0 %v254
      %v395 = vpop.f32.mrf.mxu0
      %v396 = vadd.f32 0.0, %v395
      %v397 = vpop.f32.mrf.mxu0
      %v398 = vadd.f32 0.0, %v397
      %399 = vmatmul.bf16.gmra.mxu0 %v255
      %v400 = vpop.f32.mrf.mxu0
      %v401 = vadd.f32 0.0, %v400
      %v402 = vpop.f32.mrf.mxu0
      %v403 = vadd.f32 0.0, %v402
      %404 = vmatmul.bf16.gmra.mxu0 %v256
      %v405 = vpop.f32.mrf.mxu0
      %v406 = vadd.f32 0.0, %v405
      %v407 = vpop.f32.mrf.mxu0
      %v408 = vadd.f32 0.0, %v407
      %409 = vdwg.mxu0
      %v410 = vpack.c.bf16 %v331, %v331
      %v411 = vpack.c.bf16 %v333, %v333
      %v412 = vpack.c.bf16 %v336, %v336
      %v413 = vpack.c.bf16 %v338, %v338
      %v414 = vpack.c.bf16 %v341, %v341
      %v415 = vpack.c.bf16 %v343, %v343
      %v416 = vpack.c.bf16 %v346, %v346
      %v417 = vpack.c.bf16 %v348, %v348
      %v418 = vpack.c.bf16 %v351, %v351
      %v419 = vpack.c.bf16 %v353, %v353
      %v420 = vpack.c.bf16 %v356, %v356
      %v421 = vpack.c.bf16 %v358, %v358
      %v422 = vpack.c.bf16 %v361, %v361
      %v423 = vpack.c.bf16 %v363, %v363
      %v424 = vpack.c.bf16 %v366, %v366
      %v425 = vpack.c.bf16 %v368, %v368
      %v426 = vpack.c.bf16 %v371, %v371
      %v427 = vpack.c.bf16 %v373, %v373
      %v428 = vpack.c.bf16 %v376, %v376
      %v429 = vpack.c.bf16 %v378, %v378
      %v430 = vpack.c.bf16 %v381, %v381
      %v431 = vpack.c.bf16 %v383, %v383
      %v432 = vpack.c.bf16 %v386, %v386
      %v433 = vpack.c.bf16 %v388, %v388
      %v434 = vpack.c.bf16 %v391, %v391
      %v435 = vpack.c.bf16 %v393, %v393
      %v436 = vpack.c.bf16 %v396, %v396
      %v437 = vpack.c.bf16 %v398, %v398
      %v438 = vpack.c.bf16 %v401, %v401
      %v439 = vpack.c.bf16 %v403, %v403
      %v440 = vpack.c.bf16 %v406, %v406
      %v441 = vpack.c.bf16 %v408, %v408
      %442 = vst [vmem:[%s202] sm:$0xf] %v410
      %443 = vst [vmem:[%s202 + $0x4] sm:$0xf] %v411
      %444 = vst [vmem:[%s202 + $0x8] sm:$0xf] %v412
      %445 = vst [vmem:[%s202 + $0xc] sm:$0xf] %v413
      %446 = vst [vmem:[%s202 + $0x10] sm:$0xf] %v414
      %447 = vst [vmem:[%s202 + $0x14] sm:$0xf] %v415
      %448 = vst [vmem:[%s202 + $0x18] sm:$0xf] %v416
      %449 = vst [vmem:[%s202 + $0x1c] sm:$0xf] %v417
      %450 = vst [vmem:[%s202 + $0x20] sm:$0xf] %v418
      %451 = vst [vmem:[%s202 + $0x24] sm:$0xf] %v419
      %452 = vst [vmem:[%s202 + $0x28] sm:$0xf] %v420
      %453 = vst [vmem:[%s202 + $0x2c] sm:$0xf] %v421
      %454 = vst [vmem:[%s202 + $0x30] sm:$0xf] %v422
      %455 = vst [vmem:[%s202 + $0x34] sm:$0xf] %v423
      %456 = vst [vmem:[%s202 + $0x38] sm:$0xf] %v424
      %457 = vst [vmem:[%s202 + $0x3c] sm:$0xf] %v425
      %458 = vst [vmem:[%s202 + $0x40] sm:$0xf] %v426
      %459 = vst [vmem:[%s202 + $0x44] sm:$0xf] %v427
      %460 = vst [vmem:[%s202 + $0x48] sm:$0xf] %v428
      %461 = vst [vmem:[%s202 + $0x4c] sm:$0xf] %v429
      %462 = vst [vmem:[%s202 + $0x50] sm:$0xf] %v430
      %463 = vst [vmem:[%s202 + $0x54] sm:$0xf] %v431
      %464 = vst [vmem:[%s202 + $0x58] sm:$0xf] %v432
      %465 = vst [vmem:[%s202 + $0x5c] sm:$0xf] %v433
      %466 = vst [vmem:[%s202 + $0x60] sm:$0xf] %v434
      %467 = vst [vmem:[%s202 + $0x64] sm:$0xf] %v435
      %468 = vst [vmem:[%s202 + $0x68] sm:$0xf] %v436
      %469 = vst [vmem:[%s202 + $0x6c] sm:$0xf] %v437
      %470 = vst [vmem:[%s202 + $0x70] sm:$0xf] %v438
      %471 = vst [vmem:[%s202 + $0x74] sm:$0xf] %v439
      %472 = vst [vmem:[%s202 + $0x78] sm:$0xf] %v440
      %473 = vst [vmem:[%s202 + $0x7c] sm:$0xf] %v441
      %p474 = scmp.eq.s32.totalorder %s20, 0
      // Predicated region
      $region29: #{residual_block_forward.4} parent=27 // pred_check
        %p475 = pneg %p474
      $region30: #{residual_block_forward.4} parent=27 // pred_check_branch
        %477 = sbr.rel (%p475) target = $region32
      $region31: #{residual_block_forward.4} parent=27 // pred_region
        %478 = vst [vmem:[%s208] sm:$0xff] 0.0
      $region32: #{residual_block_forward.4} parent=27 // pred_fallthru
        _
      %v479 = vld [vmem:[%s208] sm:$0x1]
      %v480 = vadd.f32 %v331, %v333
      %v481 = vadd.f32 %v480, %v336
      %v482 = vadd.f32 %v481, %v338
      %v483 = vadd.f32 %v482, %v341
      %v484 = vadd.f32 %v483, %v343
      %v485 = vadd.f32 %v484, %v346
      %v486 = vadd.f32 %v485, %v348
      %v487 = vadd.f32 %v486, %v351
      %v488 = vadd.f32 %v487, %v353
      %v489 = vadd.f32 %v488, %v356
      %v490 = vadd.f32 %v489, %v358
      %v491 = vadd.f32 %v490, %v361
      %v492 = vadd.f32 %v491, %v363
      %v493 = vadd.f32 %v492, %v366
      %v494 = vadd.f32 %v493, %v368
      %v495 = vadd.f32 %v494, %v371
      %v496 = vadd.f32 %v495, %v373
      %v497 = vadd.f32 %v496, %v376
      %v498 = vadd.f32 %v497, %v378
      %v499 = vadd.f32 %v498, %v381
      %v500 = vadd.f32 %v499, %v383
      %v501 = vadd.f32 %v500, %v386
      %v502 = vadd.f32 %v501, %v388
      %v503 = vadd.f32 %v502, %v391
      %v504 = vadd.f32 %v503, %v393
      %v505 = vadd.f32 %v504, %v396
      %v506 = vadd.f32 %v505, %v398
      %v507 = vadd.f32 %v506, %v401
      %v508 = vadd.f32 %v507, %v403
      %v509 = vadd.f32 %v508, %v406
      %v510 = vadd.f32 %v509, %v408
      %v511 = vrot.slane %v510, 4
      %v512 = vadd.f32 %v510, %v511
      %v513 = vrot.slane %v512, 2
      %v514 = vadd.f32 %v512, %v513
      %v515 = vrot.slane %v514, 1
      %v516 = vadd.f32 %v514, %v515
      %v517 = vadd.f32 %v479, %v516
      %518 = vst [vmem:[%s208] sm:$0x1] %v517
      %v519 = vld [vmem:[%s208 + $0x1] sm:$0x1]
      %v520 = vmul.f32 %v331, %v331
      %v521 = vmul.f32 %v333, %v333
      %v522 = vmul.f32 %v336, %v336
      %v523 = vmul.f32 %v338, %v338
      %v524 = vmul.f32 %v341, %v341
      %v525 = vmul.f32 %v343, %v343
      %v526 = vmul.f32 %v346, %v346
      %v527 = vmul.f32 %v348, %v348
      %v528 = vmul.f32 %v351, %v351
      %v529 = vmul.f32 %v353, %v353
      %v530 = vmul.f32 %v356, %v356
      %v531 = vmul.f32 %v358, %v358
      %v532 = vmul.f32 %v361, %v361
      %v533 = vmul.f32 %v363, %v363
      %v534 = vmul.f32 %v366, %v366
      %v535 = vmul.f32 %v368, %v368
      %v536 = vmul.f32 %v371, %v371
      %v537 = vmul.f32 %v373, %v373
      %v538 = vmul.f32 %v376, %v376
      %v539 = vmul.f32 %v378, %v378
      %v540 = vmul.f32 %v381, %v381
      %v541 = vmul.f32 %v383, %v383
      %v542 = vmul.f32 %v386, %v386
      %v543 = vmul.f32 %v388, %v388
      %v544 = vmul.f32 %v391, %v391
      %v545 = vmul.f32 %v393, %v393
      %v546 = vmul.f32 %v396, %v396
      %v547 = vmul.f32 %v398, %v398
      %v548 = vmul.f32 %v401, %v401
      %v549 = vmul.f32 %v403, %v403
      %v550 = vmul.f32 %v406, %v406
      %v551 = vmul.f32 %v408, %v408
      %v552 = vadd.f32 %v520, %v521
      %v553 = vadd.f32 %v552, %v522
      %v554 = vadd.f32 %v553, %v523
      %v555 = vadd.f32 %v554, %v524
      %v556 = vadd.f32 %v555, %v525
      %v557 = vadd.f32 %v556, %v526
      %v558 = vadd.f32 %v557, %v527
      %v559 = vadd.f32 %v558, %v528
      %v560 = vadd.f32 %v559, %v529
      %v561 = vadd.f32 %v560, %v530
      %v562 = vadd.f32 %v561, %v531
      %v563 = vadd.f32 %v562, %v532
      %v564 = vadd.f32 %v563, %v533
      %v565 = vadd.f32 %v564, %v534
      %v566 = vadd.f32 %v565, %v535
      %v567 = vadd.f32 %v566, %v536
      %v568 = vadd.f32 %v567, %v537
      %v569 = vadd.f32 %v568, %v538
      %v570 = vadd.f32 %v569, %v539
      %v571 = vadd.f32 %v570, %v540
      %v572 = vadd.f32 %v571, %v541
      %v573 = vadd.f32 %v572, %v542
      %v574 = vadd.f32 %v573, %v543
      %v575 = vadd.f32 %v574, %v544
      %v576 = vadd.f32 %v575, %v545
      %v577 = vadd.f32 %v576, %v546
      %v578 = vadd.f32 %v577, %v547
      %v579 = vadd.f32 %v578, %v548
      %v580 = vadd.f32 %v579, %v549
      %v581 = vadd.f32 %v580, %v550
      %v582 = vadd.f32 %v581, %v551
      %v583 = vrot.slane %v582, 4
      %v584 = vadd.f32 %v582, %v583
      %v585 = vrot.slane %v584, 2
      %v586 = vadd.f32 %v584, %v585
      %v587 = vrot.slane %v586, 1
      %v588 = vadd.f32 %v586, %v587
      %v589 = vadd.f32 %v519, %v588
      %590 = vst [vmem:[%s208 + $0x1] sm:$0x1] %v589
      %s591 = sadd.s32 %s19, %s20
      %s592 = smul.u32 32, %s591
      %p593 = scmp.lt.s32.totalorder %s592, 63
      %s594 = scalar_select %p593, %s592, 63
      %s595 = smul.addr %s594, 4
      %s596 = scalar_lea.vmem %s2, %s595
      %p597 = scmp.lt.s32.totalorder %s19, 1
      %s598 = scalar_select %p597, %s19, 1
      %s599 = smul.addr %s598, 8
      %s600 = scalar_lea.vmem %s3, %s599
      // Predicated region
      $region33: #{residual_block_forward.4} parent=27 // pred_check
        %p601 = pneg %p96
      $region34: #{residual_block_forward.4} parent=27 // pred_check_branch
        %603 = sbr.rel (%p601) target = $region36
      $region35: #{residual_block_forward.4} parent=27 // pred_region
        %s604 = sadd.s32 %s19, %s20
        %s605 = smul.u32 32, %s604
      $region36: #{residual_block_forward.4} parent=27 // pred_fallthru
        _
      // Predicated region
      $region37: #{residual_block_forward.4} parent=27 // pred_check
        %p606 = pneg %p122
      $region38: #{residual_block_forward.4} parent=27 // pred_check_branch
        %608 = sbr.rel (%p606) target = $region40
      $region39: #{residual_block_forward.4} parent=27 // pred_region
        _
      $region40: #{residual_block_forward.4} parent=27 // pred_fallthru
        _
    $region28: #{residual_block_forward.4} parent=5 // pred_fallthru
      _
    %p609 = scmp.le.s32.totalorder 2, %s10
    // Predicated region
    $region41: #{residual_block_forward.4} parent=5 // pred_check
      %p610 = pneg %p609
    $region42: #{residual_block_forward.4} parent=5 // pred_check_branch
      %612 = sbr.rel (%p610) target = $region44
    $region43: #{residual_block_forward.4} parent=5 // pred_region
      %s613 = ssub.s32 %s10, 2
      // Predicated region
      $region45: #{residual_block_forward.4} parent=43 // pred_check
        %p614 = pneg %p102
      $region46: #{residual_block_forward.4} parent=43 // pred_check_branch
        %616 = sbr.rel (%p614) target = $region48
      $region47: #{residual_block_forward.4} parent=43 // pred_region
        %s617 = sadd.s32 %s21, %s22
        %s618 = smul.u32 32, %s617
        %p619 = scmp.lt.s32.totalorder %s618, 63
        %s620 = scalar_select %p619, %s618, 63
        %s621 = smul.addr %s620, 4
        %s622 = scalar_lea.vmem %s2, %s621
      $region48: #{residual_block_forward.4} parent=43 // pred_fallthru
        _
      // Predicated region
      $region49: #{residual_block_forward.4} parent=43 // pred_check
        %p623 = pneg %p128
      $region50: #{residual_block_forward.4} parent=43 // pred_check_branch
        %625 = sbr.rel (%p623) target = $region52
      $region51: #{residual_block_forward.4} parent=43 // pred_region
        %p626 = scmp.lt.s32.totalorder %s21, 1
        %s627 = scalar_select %p626, %s21, 1
        %s628 = smul.addr %s627, 8
        %s629 = scalar_lea.vmem %s3, %s628
      $region52: #{residual_block_forward.4} parent=43 // pred_fallthru
        _
    $region44: #{residual_block_forward.4} parent=5 // pred_fallthru
      _
  $region6: #{residual_block_forward.4} parent=0 // loop_footer
    %s14 = sadd.s32 1, %s10
  $region7: #{residual_block_forward.4} parent=0 // loop_footer_branch
    %9 = sbr.rel target = $region3
  $region8: #{residual_block_forward.4} parent=0 // loop_exit
    _

// kernel: residual_block_forward.7
$region0: #{residual_block_forward.7}
  #allocation0 [shape = 'u32[]', space=smem, size = 0x4, offset = 0x4, fixed_abs, tag = 'smem constant byte address 0x4 - core index']
  #allocation1 [shape = 'u32[72,128]{1,0:T(1,128)}', space=vmem, size = 0x9000, scoped, tag = 'internal scratch']
  %s0 = inlined_call_operand.vmem [shape: f32[512,128], index: 0, kind: input, shape index: {}, may-alias: {0,4}]
  %s1 = inlined_call_operand.vmem [shape: f32[512,128], index: 1, kind: input, shape index: {}]
  %s2 = inlined_call_operand.vmem [shape: f32[1,128], index: 2, kind: input, shape index: {}]
  %s3 = inlined_call_operand.vmem [shape: f32[1,128], index: 3, kind: input, shape index: {}]
  %s4 = inlined_call_operand.vmem [shape: f32[512,128], index: 4, kind: output, shape index: {}, may-alias: {0,4}]
  %s5 = sld [smem:[#allocation0]]
  $region49: #{residual_block_forward.7} parent=0
    _
  %s7 = ssub.s32 1, %s5
  %s8 = scalar_select 0, %s7, %s5
  loop: start=0, step=1, limit=4
  $region2: #{residual_block_forward.7} parent=0 // loop_pre_header
    _
  $region3: #{residual_block_forward.7} parent=0 // loop_header
    %s10 = sphi 0, %s14
    %p11 = scmp.ge.s32.totalorder %s10, 4
    %s20 = sphi 0, %s22
    %s23 = sphi 0, %s20
    %s24 = sphi 0, %s23
    %s40 = sphi 0, %s24
    %s46 = sphi 0, %s48
    %s49 = sphi 0, %s46
    %s50 = sphi 0, %s49
    %s66 = sphi 0, %s50
    %s70 = sphi 0, %s70
    %s72 = sphi 0, %s70
    %s73 = sphi 0, %s72
    %s87 = sphi 0, %s73
    %s91 = sphi 0, %s91
    %s93 = sphi 0, %s91
    %s94 = sphi 0, %s93
    %s108 = sphi 0, %s94
    %s114 = sphi 0, %s116
    %s117 = sphi 0, %s114
    %s118 = sphi 0, %s117
    %s134 = sphi 0, %s118
  $region4: #{residual_block_forward.7} parent=0 // loop_header_branch
    %13 = sbr.rel (%p11) target = $region8
  $region5: #{residual_block_forward.7} parent=0 // loop_body
    %s15 = ssub.s32 %s10, 1
    %s16 = ssub.s32 %s10, 2
    %s17 = sadd.s32 %s10, 1
    %s18 = ssub.s32 %s10, %s17
    %p19 = scmp.eq.s32.totalorder %s18, 0
    %s21 = sadd.s32 %s20, 1
    %s22 = scalar_select %p19, %s20, %s21
    %p25 = pneg %p19
    %p26 = scmp.eq.s32.totalorder %s10, 1
    %p27 = por %p25, %p26
    %p28 = scmp.ne.s32.totalorder %s20, %s23
    %p29 = scmp.eq.s32.totalorder %s10, 0
    %p30 = por %p28, %p29
    %p31 = scmp.ne.s32.totalorder %s20, %s23
    %p32 = scmp.eq.s32.totalorder %s15, 1
    %p33 = por %p31, %p32
    %p34 = scmp.ne.s32.totalorder %s23, %s24
    %p35 = scmp.eq.s32.totalorder %s15, 0
    %p36 = por %p34, %p35
    %p37 = scmp.ne.s32.totalorder %s23, %s24
    %p38 = scmp.eq.s32.totalorder %s16, 1
    %p39 = por %p37, %p38
    %p41 = scmp.ne.s32.totalorder %s24, %s40
    %p42 = scmp.eq.s32.totalorder %s16, 0
    %p43 = por %p41, %p42
    %s44 = ssub.s32 %s10, %s17
    %p45 = scmp.eq.s32.totalorder %s44, 0
    %s47 = sadd.s32 %s46, 1
    %s48 = scalar_select %p45, %s46, %s47
    %p51 = pneg %p45
    %p52 = scmp.eq.s32.totalorder %s10, 1
    %p53 = por %p51, %p52
    %p54 = scmp.ne.s32.totalorder %s46, %s49
    %p55 = scmp.eq.s32.totalorder %s10, 0
    %p56 = por %p54, %p55
    %p57 = scmp.ne.s32.totalorder %s46, %s49
    %p58 = scmp.eq.s32.totalorder %s15, 1
    %p59 = por %p57, %p58
    %p60 = scmp.ne.s32.totalorder %s49, %s50
    %p61 = scmp.eq.s32.totalorder %s15, 0
    %p62 = por %p60, %p61
    %p63 = scmp.ne.s32.totalorder %s49, %s50
    %p64 = scmp.eq.s32.totalorder %s16, 1
    %p65 = por %p63, %p64
    %p67 = scmp.ne.s32.totalorder %s50, %s66
    %p68 = scmp.eq.s32.totalorder %s16, 0
    %p69 = por %p67, %p68
    %s71 = sadd.s32 %s70, 1
    %p74 = scmp.eq.s32.totalorder %s10, 1
    %p75 = scmp.ne.s32.totalorder %s70, %s72
    %p76 = scmp.eq.s32.totalorder %s10, 0
    %p77 = por %p75, %p76
    %p78 = scmp.ne.s32.totalorder %s70, %s72
    %p79 = scmp.eq.s32.totalorder %s15, 1
    %p80 = por %p78, %p79
    %p81 = scmp.ne.s32.totalorder %s72, %s73
    %p82 = scmp.eq.s32.totalorder %s15, 0
    %p83 = por %p81, %p82
    %p84 = scmp.ne.s32.totalorder %s72, %s73
    %p85 = scmp.eq.s32.totalorder %s16, 1
    %p86 = por %p84, %p85
    %p88 = scmp.ne.s32.totalorder %s73, %s87
    %p89 = scmp.eq.s32.totalorder %s16, 0
    %p90 = por %p88, %p89
    %s92 = sadd.s32 %s91, 1
    %p95 = scmp.eq.s32.totalorder %s10, 1
    %p96 = scmp.ne.s32.totalorder %s91, %s93
    %p97 = scmp.eq.s32.totalorder %s10, 0
    %p98 = por %p96, %p97
    %p99 = scmp.ne.s32.totalorder %s91, %s93
    %p100 = scmp.eq.s32.totalorder %s15, 1
    %p101 = por %p99, %p100
    %p102 = scmp.ne.s32.totalorder %s93, %s94
    %p103 = scmp.eq.s32.totalorder %s15, 0
    %p104 = por %p102, %p103
    %p105 = scmp.ne.s32.totalorder %s93, %s94
    %p106 = scmp.eq.s32.totalorder %s16, 1
    %p107 = por %p105, %p106
    %p109 = scmp.ne.s32.totalorder %s94, %s108
    %p110 = scmp.eq.s32.totalorder %s16, 0
    %p111 = por %p109, %p110
    %s112 = ssub.s32 %s10, %s17
    %p113 = scmp.eq.s32.totalorder %s112, 0
    %s115 = sadd.s32 %s114, 1
    %s116 = scalar_select %p113, %s114, %s115
    %p119 = pneg %p113
    %p120 = scmp.eq.s32.totalorder %s10, 1
    %p121 = por %p119, %p120
    %p122 = scmp.ne.s32.totalorder %s114, %s117
    %p123 = scmp.eq.s32.totalorder %s10, 0
    %p124 = por %p122, %p123
    %p125 = scmp.ne.s32.totalorder %s114, %s117
    %p126 = scmp.eq.s32.totalorder %s15, 1
    %p127 = por %p125, %p126
    %p128 = scmp.ne.s32.totalorder %s117, %s118
    %p129 = scmp.eq.s32.totalorder %s15, 0
    %p130 = por %p128, %p129
    %p131 = scmp.ne.s32.totalorder %s117, %s118
    %p132 = scmp.eq.s32.totalorder %s16, 1
    %p133 = por %p131, %p132
    %p135 = scmp.ne.s32.totalorder %s118, %s134
    %p136 = scmp.eq.s32.totalorder %s16, 0
    %p137 = por %p135, %p136
    %p138 = scmp.le.s32.totalorder 1, %s10
    %p139 = scmp.lt.s32.totalorder %s10, 3
    %p140 = pnand %p138, %p139
    %p141 = pneg %p140
    // Predicated region
    $region9: #{residual_block_forward.7} parent=5 // pred_check
      _
    $region10: #{residual_block_forward.7} parent=5 // pred_check_branch
      %143 = sbr.rel (%p140) target = $region12
    $region11: #{residual_block_forward.7} parent=5 // pred_region
      %s144 = ssub.s32 %s10, 1
      // Predicated region
      $region13: #{residual_block_forward.7} parent=11 // pred_check
        %p145 = pneg %p83
      $region14: #{residual_block_forward.7} parent=11 // pred_check_branch
        %147 = sbr.rel (%p145) target = $region16
      $region15: #{residual_block_forward.7} parent=11 // pred_region
        _
      $region16: #{residual_block_forward.7} parent=11 // pred_fallthru
        _
      // Predicated region
      $region17: #{residual_block_forward.7} parent=11 // pred_check
        %p148 = pneg %p104
      $region18: #{residual_block_forward.7} parent=11 // pred_check_branch
        %150 = sbr.rel (%p148) target = $region20
      $region19: #{residual_block_forward.7} parent=11 // pred_region
        _
      $region20: #{residual_block_forward.7} parent=11 // pred_fallthru
        _
    $region12: #{residual_block_forward.7} parent=5 // pred_fallthru
      _
    %p151 = scmp.lt.s32.totalorder %s10, 2
    // Predicated region
    $region21: #{residual_block_forward.7} parent=5 // pred_check
      %p152 = pneg %p151
    $region22: #{residual_block_forward.7} parent=5 // pred_check_branch
      %154 = sbr.rel (%p152) target = $region24
    $region23: #{residual_block_forward.7} parent=5 // pred_region
      // Predicated region
      $region25: #{residual_block_forward.7} parent=23 // pred_check
        %p155 = pneg %p30
      $region26: #{residual_block_forward.7} parent=23 // pred_check_branch
        %157 = sbr.rel (%p155) target = $region28
      $region27: #{residual_block_forward.7} parent=23 // pred_region
        %s158 = smul.u32 32, %s10
        %p159 = scmp.lt.s32.totalorder %s158, 63
        %s160 = scalar_select %p159, %s158, 63
        %s161 = smul.addr %s160, 8
        %s162 = scalar_lea.vmem %s0, %s161
        %s163 = smul.u32 32, %s10
      $region28: #{residual_block_forward.7} parent=23 // pred_fallthru
        _
      // Predicated region
      $region29: #{residual_block_forward.7} parent=23 // pred_check
        %p164 = pneg %p56
      $region30: #{residual_block_forward.7} parent=23 // pred_check_branch
        %166 = sbr.rel (%p164) target = $region32
      $region31: #{residual_block_forward.7} parent=23 // pred_region
        %s167 = smul.u32 32, %s10
        %p168 = scmp.lt.s32.totalorder %s167, 63
        %s169 = scalar_select %p168, %s167, 63
        %s170 = smul.addr %s169, 8
        %s171 = scalar_lea.vmem %s1, %s170
        %s172 = smul.u32 32, %s10
      $region32: #{residual_block_forward.7} parent=23 // pred_fallthru
        _
    $region24: #{residual_block_forward.7} parent=5 // pred_fallthru
      _
    %p173 = scmp.le.s32.totalorder 1, %s10
    %p174 = scmp.lt.s32.totalorder %s10, 3
    %p175 = pnand %p173, %p174
    %p176 = pneg %p175
    // Predicated region
    $region33: #{residual_block_forward.7} parent=5 // pred_check
      _
    $region34: #{residual_block_forward.7} parent=5 // pred_check_branch
      %178 = sbr.rel (%p175) target = $region36
    $region35: #{residual_block_forward.7} parent=5 // pred_region
      %s179 = ssub.s32 %s10, 1
      %s180 = smul.u32 32, %s15
      %p181 = scmp.lt.s32.totalorder %s180, 63
      %s182 = scalar_select %p181, %s180, 63
      %s183 = smul.addr %s182, 8
      %s184 = scalar_lea.vmem %s0, %s183
      %p185 = pneg %p36
      %p186 = pneg %p33
      %s187 = smul.u32 32, %s15
      %p188 = scmp.lt.s32.totalorder %s187, 63
      %s189 = scalar_select %p188, %s187, 63
      %s190 = smul.addr %s189, 8
      %s191 = scalar_lea.vmem %s1, %s190
      %p192 = pneg %p62
      %p193 = pneg %p59
      %p194 = pneg %p83
      %p195 = pneg %p80
      %p196 = pneg %p104
      %p197 = pneg %p101
      %p198 = pneg %p130
      %p199 = pneg %p127
      %s200 = smul.u32 32, %s15
      %p201 = scmp.lt.s32.totalorder %s200, 63
      %s202 = scalar_select %p201, %s200, 63
      %s203 = smul.addr %s202, 8
      %s204 = scalar_lea.vmem %s4, %s203
      %s205 = smul.u32 32, %s15
      %p206 = scmp.lt.s32.totalorder %s205, 63
      %s207 = scalar_select %p206, %s205, 63
      %s208 = smul.addr %s207, 8
      %s209 = scalar_lea.vmem %s0, %s208
      %s210 = smul.u32 32, %s15
      %s211 = smul.u32 32, %s15
      %p212 = scmp.lt.s32.totalorder %s211, 63
      %s213 = scalar_select %p212, %s211, 63
      %s214 = smul.addr %s213, 8
      %s215 = scalar_lea.vmem %s1, %s214
      %s216 = smul.u32 32, %s15
      %s217 = smul.u32 32, %s15
      %p218 = scmp.lt.s32.totalorder %s217, 63
      %s219 = scalar_select %p218, %s217, 63
      %s220 = smul.addr %s219, 8
      %s221 = scalar_lea.vmem %s4, %s220
      %s222 = smul.u32 32, %s15
      %v223 = vld [vmem:[%s209] sm:$0xff]
      %v224 = vld [vmem:[%s209 + $0x8] sm:$0xff]
      %v225 = vld [vmem:[%s209 + $0x10] sm:$0xff]
      %v226 = vld [vmem:[%s209 + $0x18] sm:$0xff]
      %v227 = vld [vmem:[%s209 + $0x20] sm:$0xff]
      %v228 = vld [vmem:[%s209 + $0x28] sm:$0xff]
      %v229 = vld [vmem:[%s209 + $0x30] sm:$0xff]
      %v230 = vld [vmem:[%s209 + $0x38] sm:$0xff]
      %v231 = vld [vmem:[%s209 + $0x40] sm:$0xff]
      %v232 = vld [vmem:[%s209 + $0x48] sm:$0xff]
      %v233 = vld [vmem:[%s209 + $0x50] sm:$0xff]
      %v234 = vld [vmem:[%s209 + $0x58] sm:$0xff]
      %v235 = vld [vmem:[%s209 + $0x60] sm:$0xff]
      %v236 = vld [vmem:[%s209 + $0x68] sm:$0xff]
      %v237 = vld [vmem:[%s209 + $0x70] sm:$0xff]
      %v238 = vld [vmem:[%s209 + $0x78] sm:$0xff]
      %v239 = vld [vmem:[%s209 + $0x80] sm:$0xff]
      %v240 = vld [vmem:[%s209 + $0x88] sm:$0xff]
      %v241 = vld [vmem:[%s209 + $0x90] sm:$0xff]
      %v242 = vld [vmem:[%s209 + $0x98] sm:$0xff]
      %v243 = vld [vmem:[%s209 + $0xa0] sm:$0xff]
      %v244 = vld [vmem:[%s209 + $0xa8] sm:$0xff]
      %v245 = vld [vmem:[%s209 + $0xb0] sm:$0xff]
      %v246 = vld [vmem:[%s209 + $0xb8] sm:$0xff]
      %v247 = vld [vmem:[%s209 + $0xc0] sm:$0xff]
      %v248 = vld [vmem:[%s209 + $0xc8] sm:$0xff]
      %v249 = vld [vmem:[%s209 + $0xd0] sm:$0xff]
      %v250 = vld [vmem:[%s209 + $0xd8] sm:$0xff]
      %v251 = vld [vmem:[%s209 + $0xe0] sm:$0xff]
      %v252 = vld [vmem:[%s209 + $0xe8] sm:$0xff]
      %v253 = vld [vmem:[%s209 + $0xf0] sm:$0xff]
      %v254 = vld [vmem:[%s209 + $0xf8] sm:$0xff]
      %v255 = vld [vmem:[%s2] sm:$0x1]
      %v257 = vperm.slane %v255, 0
      %v259 = vmul.f32 %v223, %v257
      %v260 = vmul.f32 %v224, %v257
      %v261 = vmul.f32 %v225, %v257
      %v262 = vmul.f32 %v226, %v257
      %v263 = vmul.f32 %v227, %v257
      %v264 = vmul.f32 %v228, %v257
      %v265 = vmul.f32 %v229, %v257
      %v266 = vmul.f32 %v230, %v257
      %v267 = vmul.f32 %v231, %v257
      %v268 = vmul.f32 %v232, %v257
      %v269 = vmul.f32 %v233, %v257
      %v270 = vmul.f32 %v234, %v257
      %v271 = vmul.f32 %v235, %v257
      %v272 = vmul.f32 %v236, %v257
      %v273 = vmul.f32 %v237, %v257
      %v274 = vmul.f32 %v238, %v257
      %v275 = vmul.f32 %v239, %v257
      %v276 = vmul.f32 %v240, %v257
      %v277 = vmul.f32 %v241, %v257
      %v278 = vmul.f32 %v242, %v257
      %v279 = vmul.f32 %v243, %v257
      %v280 = vmul.f32 %v244, %v257
      %v281 = vmul.f32 %v245, %v257
      %v282 = vmul.f32 %v246, %v257
      %v283 = vmul.f32 %v247, %v257
      %v284 = vmul.f32 %v248, %v257
      %v285 = vmul.f32 %v249, %v257
      %v286 = vmul.f32 %v250, %v257
      %v287 = vmul.f32 %v251, %v257
      %v288 = vmul.f32 %v252, %v257
      %v289 = vmul.f32 %v253, %v257
      %v290 = vmul.f32 %v254, %v257
      %v291 = vld [vmem:[%s3] sm:$0x1]
      %v293 = vperm.slane %v291, 0
      %v295 = vadd.f32 %v259, %v293
      %v296 = vadd.f32 %v260, %v293
      %v297 = vadd.f32 %v261, %v293
      %v298 = vadd.f32 %v262, %v293
      %v299 = vadd.f32 %v263, %v293
      %v300 = vadd.f32 %v264, %v293
      %v301 = vadd.f32 %v265, %v293
      %v302 = vadd.f32 %v266, %v293
      %v303 = vadd.f32 %v267, %v293
      %v304 = vadd.f32 %v268, %v293
      %v305 = vadd.f32 %v269, %v293
      %v306 = vadd.f32 %v270, %v293
      %v307 = vadd.f32 %v271, %v293
      %v308 = vadd.f32 %v272, %v293
      %v309 = vadd.f32 %v273, %v293
      %v310 = vadd.f32 %v274, %v293
      %v311 = vadd.f32 %v275, %v293
      %v312 = vadd.f32 %v276, %v293
      %v313 = vadd.f32 %v277, %v293
      %v314 = vadd.f32 %v278, %v293
      %v315 = vadd.f32 %v279, %v293
      %v316 = vadd.f32 %v280, %v293
      %v317 = vadd.f32 %v281, %v293
      %v318 = vadd.f32 %v282, %v293
      %v319 = vadd.f32 %v283, %v293
      %v320 = vadd.f32 %v284, %v293
      %v321 = vadd.f32 %v285, %v293
      %v322 = vadd.f32 %v286, %v293
      %v323 = vadd.f32 %v287, %v293
      %v324 = vadd.f32 %v288, %v293
      %v325 = vadd.f32 %v289, %v293
      %v326 = vadd.f32 %v290, %v293
      %v327 = vld [vmem:[%s215] sm:$0xff]
      %v328 = vld [vmem:[%s215 + $0x8] sm:$0xff]
      %v329 = vld [vmem:[%s215 + $0x10] sm:$0xff]
      %v330 = vld [vmem:[%s215 + $0x18] sm:$0xff]
      %v331 = vld [vmem:[%s215 + $0x20] sm:$0xff]
      %v332 = vld [vmem:[%s215 + $0x28] sm:$0xff]
      %v333 = vld [vmem:[%s215 + $0x30] sm:$0xff]
      %v334 = vld [vmem:[%s215 + $0x38] sm:$0xff]
      %v335 = vld [vmem:[%s215 + $0x40] sm:$0xff]
      %v336 = vld [vmem:[%s215 + $0x48] sm:$0xff]
      %v337 = vld [vmem:[%s215 + $0x50] sm:$0xff]
      %v338 = vld [vmem:[%s215 + $0x58] sm:$0xff]
      %v339 = vld [vmem:[%s215 + $0x60] sm:$0xff]
      %v340 = vld [vmem:[%s215 + $0x68] sm:$0xff]
      %v341 = vld [vmem:[%s215 + $0x70] sm:$0xff]
      %v342 = vld [vmem:[%s215 + $0x78] sm:$0xff]
      %v343 = vld [vmem:[%s215 + $0x80] sm:$0xff]
      %v344 = vld [vmem:[%s215 + $0x88] sm:$0xff]
      %v345 = vld [vmem:[%s215 + $0x90] sm:$0xff]
      %v346 = vld [vmem:[%s215 + $0x98] sm:$0xff]
      %v347 = vld [vmem:[%s215 + $0xa0] sm:$0xff]
      %v348 = vld [vmem:[%s215 + $0xa8] sm:$0xff]
      %v349 = vld [vmem:[%s215 + $0xb0] sm:$0xff]
      %v350 = vld [vmem:[%s215 + $0xb8] sm:$0xff]
      %v351 = vld [vmem:[%s215 + $0xc0] sm:$0xff]
      %v352 = vld [vmem:[%s215 + $0xc8] sm:$0xff]
      %v353 = vld [vmem:[%s215 + $0xd0] sm:$0xff]
      %v354 = vld [vmem:[%s215 + $0xd8] sm:$0xff]
      %v355 = vld [vmem:[%s215 + $0xe0] sm:$0xff]
      %v356 = vld [vmem:[%s215 + $0xe8] sm:$0xff]
      %v357 = vld [vmem:[%s215 + $0xf0] sm:$0xff]
      %v358 = vld [vmem:[%s215 + $0xf8] sm:$0xff]
      %v359 = vadd.f32 %v295, %v327
      %v360 = vadd.f32 %v296, %v328
      %v361 = vadd.f32 %v297, %v329
      %v362 = vadd.f32 %v298, %v330
      %v363 = vadd.f32 %v299, %v331
      %v364 = vadd.f32 %v300, %v332
      %v365 = vadd.f32 %v301, %v333
      %v366 = vadd.f32 %v302, %v334
      %v367 = vadd.f32 %v303, %v335
      %v368 = vadd.f32 %v304, %v336
      %v369 = vadd.f32 %v305, %v337
      %v370 = vadd.f32 %v306, %v338
      %v371 = vadd.f32 %v307, %v339
      %v372 = vadd.f32 %v308, %v340
      %v373 = vadd.f32 %v309, %v341
      %v374 = vadd.f32 %v310, %v342
      %v375 = vadd.f32 %v311, %v343
      %v376 = vadd.f32 %v312, %v344
      %v377 = vadd.f32 %v313, %v345
      %v378 = vadd.f32 %v314, %v346
      %v379 = vadd.f32 %v315, %v347
      %v380 = vadd.f32 %v316, %v348
      %v381 = vadd.f32 %v317, %v349
      %v382 = vadd.f32 %v318, %v350
      %v383 = vadd.f32 %v319, %v351
      %v384 = vadd.f32 %v320, %v352
      %v385 = vadd.f32 %v321, %v353
      %v386 = vadd.f32 %v322, %v354
      %v387 = vadd.f32 %v323, %v355
      %v388 = vadd.f32 %v324, %v356
      %v389 = vadd.f32 %v325, %v357
      %v390 = vadd.f32 %v326, %v358
      %v391 = vmax.f32 %v359, 0.0
      %v392 = vmax.f32 %v360, 0.0
      %v393 = vmax.f32 %v361, 0.0
      %v394 = vmax.f32 %v362, 0.0
      %v395 = vmax.f32 %v363, 0.0
      %v396 = vmax.f32 %v364, 0.0
      %v397 = vmax.f32 %v365, 0.0
      %v398 = vmax.f32 %v366, 0.0
      %v399 = vmax.f32 %v367, 0.0
      %v400 = vmax.f32 %v368, 0.0
      %v401 = vmax.f32 %v369, 0.0
      %v402 = vmax.f32 %v370, 0.0
      %v403 = vmax.f32 %v371, 0.0
      %v404 = vmax.f32 %v372, 0.0
      %v405 = vmax.f32 %v373, 0.0
      %v406 = vmax.f32 %v374, 0.0
      %v407 = vmax.f32 %v375, 0.0
      %v408 = vmax.f32 %v376, 0.0
      %v409 = vmax.f32 %v377, 0.0
      %v410 = vmax.f32 %v378, 0.0
      %v411 = vmax.f32 %v379, 0.0
      %v412 = vmax.f32 %v380, 0.0
      %v413 = vmax.f32 %v381, 0.0
      %v414 = vmax.f32 %v382, 0.0
      %v415 = vmax.f32 %v383, 0.0
      %v416 = vmax.f32 %v384, 0.0
      %v417 = vmax.f32 %v385, 0.0
      %v418 = vmax.f32 %v386, 0.0
      %v419 = vmax.f32 %v387, 0.0
      %v420 = vmax.f32 %v388, 0.0
      %v421 = vmax.f32 %v389, 0.0
      %v422 = vmax.f32 %v390, 0.0
      %423 = vst [vmem:[%s221] sm:$0xff] %v391
      %424 = vst [vmem:[%s221 + $0x8] sm:$0xff] %v392
      %425 = vst [vmem:[%s221 + $0x10] sm:$0xff] %v393
      %426 = vst [vmem:[%s221 + $0x18] sm:$0xff] %v394
      %427 = vst [vmem:[%s221 + $0x20] sm:$0xff] %v395
      %428 = vst [vmem:[%s221 + $0x28] sm:$0xff] %v396
      %429 = vst [vmem:[%s221 + $0x30] sm:$0xff] %v397
      %430 = vst [vmem:[%s221 + $0x38] sm:$0xff] %v398
      %431 = vst [vmem:[%s221 + $0x40] sm:$0xff] %v399
      %432 = vst [vmem:[%s221 + $0x48] sm:$0xff] %v400
      %433 = vst [vmem:[%s221 + $0x50] sm:$0xff] %v401
      %434 = vst [vmem:[%s221 + $0x58] sm:$0xff] %v402
      %435 = vst [vmem:[%s221 + $0x60] sm:$0xff] %v403
      %436 = vst [vmem:[%s221 + $0x68] sm:$0xff] %v404
      %437 = vst [vmem:[%s221 + $0x70] sm:$0xff] %v405
      %438 = vst [vmem:[%s221 + $0x78] sm:$0xff] %v406
      %439 = vst [vmem:[%s221 + $0x80] sm:$0xff] %v407
      %440 = vst [vmem:[%s221 + $0x88] sm:$0xff] %v408
      %441 = vst [vmem:[%s221 + $0x90] sm:$0xff] %v409
      %442 = vst [vmem:[%s221 + $0x98] sm:$0xff] %v410
      %443 = vst [vmem:[%s221 + $0xa0] sm:$0xff] %v411
      %444 = vst [vmem:[%s221 + $0xa8] sm:$0xff] %v412
      %445 = vst [vmem:[%s221 + $0xb0] sm:$0xff] %v413
      %446 = vst [vmem:[%s221 + $0xb8] sm:$0xff] %v414
      %447 = vst [vmem:[%s221 + $0xc0] sm:$0xff] %v415
      %448 = vst [vmem:[%s221 + $0xc8] sm:$0xff] %v416
      %449 = vst [vmem:[%s221 + $0xd0] sm:$0xff] %v417
      %450 = vst [vmem:[%s221 + $0xd8] sm:$0xff] %v418
      %451 = vst [vmem:[%s221 + $0xe0] sm:$0xff] %v419
      %452 = vst [vmem:[%s221 + $0xe8] sm:$0xff] %v420
      %453 = vst [vmem:[%s221 + $0xf0] sm:$0xff] %v421
      %454 = vst [vmem:[%s221 + $0xf8] sm:$0xff] %v422
      %s455 = smul.u32 32, %s15
      %p456 = scmp.lt.s32.totalorder %s455, 63
      %s457 = scalar_select %p456, %s455, 63
      %s458 = smul.addr %s457, 8
      %s459 = scalar_lea.vmem %s4, %s458
      // Predicated region
      $region37: #{residual_block_forward.7} parent=35 // pred_check
        %p460 = pneg %p127
      $region38: #{residual_block_forward.7} parent=35 // pred_check_branch
        %462 = sbr.rel (%p460) target = $region40
      $region39: #{residual_block_forward.7} parent=35 // pred_region
        %s463 = smul.u32 32, %s15
      $region40: #{residual_block_forward.7} parent=35 // pred_fallthru
        _
    $region36: #{residual_block_forward.7} parent=5 // pred_fallthru
      _
    %p464 = scmp.le.s32.totalorder 2, %s10
    // Predicated region
    $region41: #{residual_block_forward.7} parent=5 // pred_check
      %p465 = pneg %p464
    $region42: #{residual_block_forward.7} parent=5 // pred_check_branch
      %467 = sbr.rel (%p465) target = $region44
    $region43: #{residual_block_forward.7} parent=5 // pred_region
      %s468 = ssub.s32 %s10, 2
      // Predicated region
      $region45: #{residual_block_forward.7} parent=43 // pred_check
        %p469 = pneg %p133
      $region46: #{residual_block_forward.7} parent=43 // pred_check_branch
        %471 = sbr.rel (%p469) target = $region48
      $region47: #{residual_block_forward.7} parent=43 // pred_region
        %s472 = smul.u32 32, %s16
        %p473 = scmp.lt.s32.totalorder %s472, 63
        %s474 = scalar_select %p473, %s472, 63
        %s475 = smul.addr %s474, 8
        %s476 = scalar_lea.vmem %s4, %s475
      $region48: #{residual_block_forward.7} parent=43 // pred_fallthru
        _
    $region44: #{residual_block_forward.7} parent=5 // pred_fallthru
      _
  $region6: #{residual_block_forward.7} parent=0 // loop_footer
    %s14 = sadd.s32 1, %s10
  $region7: #{residual_block_forward.7} parent=0 // loop_footer_branch
    %9 = sbr.rel target = $region3
  $region8: #{residual_block_forward.7} parent=0 // loop_exit
    _

// kernel: residual_block_forward.6
$region0: #{residual_block_forward.6}
  #allocation0 [shape = 'u32[]', space=smem, size = 0x4, offset = 0x4, fixed_abs, tag = 'smem constant byte address 0x4 - core index']
  #allocation1 [shape = 'u32[72,128]{1,0:T(1,128)}', space=vmem, size = 0x9000, scoped, tag = 'internal scratch']
  %s0 = inlined_call_operand.vmem [shape: bf16[512,128], index: 0, kind: input, shape index: {}]
  %s1 = inlined_call_operand.vmem [shape: f32[1,128], index: 1, kind: input, shape index: {}]
  %s2 = inlined_call_operand.vmem [shape: f32[1,128], index: 2, kind: input, shape index: {}]
  %s3 = inlined_call_operand.vmem [shape: bf16[128,128], index: 3, kind: input, shape index: {}]
  %s4 = inlined_call_operand.vmem [shape: f32[512,128], index: 4, kind: output, shape index: {0}]
  %s5 = inlined_call_operand.vmem [shape: f32[16,128], index: 5, kind: output, shape index: {1}]
  %6 = xla_tuple %s4, %s5
  %s7 = sld [smem:[#allocation0]]
  $region61: #{residual_block_forward.6} parent=0
    _
  %s9 = ssub.s32 1, %s7
  %s10 = scalar_select 0, %s9, %s7
  loop: start=0, step=1, limit=4
  $region2: #{residual_block_forward.6} parent=0 // loop_pre_header
    _
  $region3: #{residual_block_forward.6} parent=0 // loop_header
    %s12 = sphi 0, %s16
    %p13 = scmp.ge.s32.totalorder %s12, 4
    %s19 = sphi 0, %s31
    %s20 = sphi 0, %s27
    %s21 = sphi 0, %s19
    %s22 = sphi 0, %s20
    %s23 = sphi 0, %s21
    %s24 = sphi 0, %s22
    %s36 = sphi 0, %s38
    %s39 = sphi 0, %s36
    %s40 = sphi 0, %s39
    %s56 = sphi 0, %s40
    %s60 = sphi 0, %s60
    %s62 = sphi 0, %s60
    %s63 = sphi 0, %s62
    %s77 = sphi 0, %s63
    %s81 = sphi 0, %s81
    %s83 = sphi 0, %s81
    %s84 = sphi 0, %s83
    %s98 = sphi 0, %s84
    %s102 = sphi 0, %s102
    %s104 = sphi 0, %s102
    %s105 = sphi 0, %s104
    %s119 = sphi 0, %s105
    %s127 = sphi 0, %s129
    %s130 = sphi 0, %s127
    %s131 = sphi 0, %s130
    %s147 = sphi 0, %s131
    %s153 = sphi 0, %s155
    %s156 = sphi 0, %s153
    %s157 = sphi 0, %s156
    %s173 = sphi 0, %s157
  $region4: #{residual_block_forward.6} parent=0 // loop_header_branch
    %15 = sbr.rel (%p13) target = $region8
  $region5: #{residual_block_forward.6} parent=0 // loop_body
    %s17 = ssub.s32 %s12, 1
    %s18 = ssub.s32 %s12, 2
    %s25 = sadd.s32 1, %s20
    %p26 = scmp.ge.s32.totalorder %s25, 1
    %s27 = scalar_select %p26, 0, %s25
    %s28 = sadd.s32 1, %s19
    %s29 = scalar_select %p26, %s28, %s19
    %p30 = scmp.ge.s32.totalorder %s29, 2
    %s31 = scalar_select %p30, 0, %s29
    %s32 = sadd.s32 %s19, %s20
    %s33 = sadd.s32 %s31, %s27
    %s34 = ssub.s32 %s32, %s33
    %p35 = scmp.eq.s32.totalorder %s34, 0
    %s37 = sadd.s32 %s36, 1
    %s38 = scalar_select %p35, %s36, %s37
    %p41 = pneg %p35
    %p42 = scmp.eq.s32.totalorder %s12, 1
    %p43 = por %p41, %p42
    %p44 = scmp.ne.s32.totalorder %s36, %s39
    %p45 = scmp.eq.s32.totalorder %s12, 0
    %p46 = por %p44, %p45
    %p47 = scmp.ne.s32.totalorder %s36, %s39
    %p48 = scmp.eq.s32.totalorder %s17, 1
    %p49 = por %p47, %p48
    %p50 = scmp.ne.s32.totalorder %s39, %s40
    %p51 = scmp.eq.s32.totalorder %s17, 0
    %p52 = por %p50, %p51
    %p53 = scmp.ne.s32.totalorder %s39, %s40
    %p54 = scmp.eq.s32.totalorder %s18, 1
    %p55 = por %p53, %p54
    %p57 = scmp.ne.s32.totalorder %s40, %s56
    %p58 = scmp.eq.s32.totalorder %s18, 0
    %p59 = por %p57, %p58
    %s61 = sadd.s32 %s60, 1
    %p64 = scmp.eq.s32.totalorder %s12, 1
    %p65 = scmp.ne.s32.totalorder %s60, %s62
    %p66 = scmp.eq.s32.totalorder %s12, 0
    %p67 = por %p65, %p66
    %p68 = scmp.ne.s32.totalorder %s60, %s62
    %p69 = scmp.eq.s32.totalorder %s17, 1
    %p70 = por %p68, %p69
    %p71 = scmp.ne.s32.totalorder %s62, %s63
    %p72 = scmp.eq.s32.totalorder %s17, 0
    %p73 = por %p71, %p72
    %p74 = scmp.ne.s32.totalorder %s62, %s63
    %p75 = scmp.eq.s32.totalorder %s18, 1
    %p76 = por %p74, %p75
    %p78 = scmp.ne.s32.totalorder %s63, %s77
    %p79 = scmp.eq.s32.totalorder %s18, 0
    %p80 = por %p78, %p79
    %s82 = sadd.s32 %s81, 1
    %p85 = scmp.eq.s32.totalorder %s12, 1
    %p86 = scmp.ne.s32.totalorder %s81, %s83
    %p87 = scmp.eq.s32.totalorder %s12, 0
    %p88 = por %p86, %p87
    %p89 = scmp.ne.s32.totalorder %s81, %s83
    %p90 = scmp.eq.s32.totalorder %s17, 1
    %p91 = por %p89, %p90
    %p92 = scmp.ne.s32.totalorder %s83, %s84
    %p93 = scmp.eq.s32.totalorder %s17, 0
    %p94 = por %p92, %p93
    %p95 = scmp.ne.s32.totalorder %s83, %s84
    %p96 = scmp.eq.s32.totalorder %s18, 1
    %p97 = por %p95, %p96
    %p99 = scmp.ne.s32.totalorder %s84, %s98
    %p100 = scmp.eq.s32.totalorder %s18, 0
    %p101 = por %p99, %p100
    %s103 = sadd.s32 %s102, 1
    %p106 = scmp.eq.s32.totalorder %s12, 1
    %p107 = scmp.ne.s32.totalorder %s102, %s104
    %p108 = scmp.eq.s32.totalorder %s12, 0
    %p109 = por %p107, %p108
    %p110 = scmp.ne.s32.totalorder %s102, %s104
    %p111 = scmp.eq.s32.totalorder %s17, 1
    %p112 = por %p110, %p111
    %p113 = scmp.ne.s32.totalorder %s104, %s105
    %p114 = scmp.eq.s32.totalorder %s17, 0
    %p115 = por %p113, %p114
    %p116 = scmp.ne.s32.totalorder %s104, %s105
    %p117 = scmp.eq.s32.totalorder %s18, 1
    %p118 = por %p116, %p117
    %p120 = scmp.ne.s32.totalorder %s105, %s119
    %p121 = scmp.eq.s32.totalorder %s18, 0
    %p122 = por %p120, %p121
    %s123 = sadd.s32 %s19, %s20
    %s124 = sadd.s32 %s31, %s27
    %s125 = ssub.s32 %s123, %s124
    %p126 = scmp.eq.s32.totalorder %s125, 0
    %s128 = sadd.s32 %s127, 1
    %s129 = scalar_select %p126, %s127, %s128
    %p132 = pneg %p126
    %p133 = scmp.eq.s32.totalorder %s12, 1
    %p134 = por %p132, %p133
    %p135 = scmp.ne.s32.totalorder %s127, %s130
    %p136 = scmp.eq.s32.totalorder %s12, 0
    %p137 = por %p135, %p136
    %p138 = scmp.ne.s32.totalorder %s127, %s130
    %p139 = scmp.eq.s32.totalorder %s17, 1
    %p140 = por %p138, %p139
    %p141 = scmp.ne.s32.totalorder %s130, %s131
    %p142 = scmp.eq.s32.totalorder %s17, 0
    %p143 = por %p141, %p142
    %p144 = scmp.ne.s32.totalorder %s130, %s131
    %p145 = scmp.eq.s32.totalorder %s18, 1
    %p146 = por %p144, %p145
    %p148 = scmp.ne.s32.totalorder %s131, %s147
    %p149 = scmp.eq.s32.totalorder %s18, 0
    %p150 = por %p148, %p149
    %s151 = ssub.s32 %s19, %s31
    %p152 = scmp.eq.s32.totalorder %s151, 0
    %s154 = sadd.s32 %s153, 1
    %s155 = scalar_select %p152, %s153, %s154
    %p158 = pneg %p152
    %p159 = scmp.eq.s32.totalorder %s12, 1
    %p160 = por %p158, %p159
    %p161 = scmp.ne.s32.totalorder %s153, %s156
    %p162 = scmp.eq.s32.totalorder %s12, 0
    %p163 = por %p161, %p162
    %p164 = scmp.ne.s32.totalorder %s153, %s156
    %p165 = scmp.eq.s32.totalorder %s17, 1
    %p166 = por %p164, %p165
    %p167 = scmp.ne.s32.totalorder %s156, %s157
    %p168 = scmp.eq.s32.totalorder %s17, 0
    %p169 = por %p167, %p168
    %p170 = scmp.ne.s32.totalorder %s156, %s157
    %p171 = scmp.eq.s32.totalorder %s18, 1
    %p172 = por %p170, %p171
    %p174 = scmp.ne.s32.totalorder %s157, %s173
    %p175 = scmp.eq.s32.totalorder %s18, 0
    %p176 = por %p174, %p175
    %p177 = scmp.le.s32.totalorder 1, %s12
    %p178 = scmp.lt.s32.totalorder %s12, 3
    %p179 = pnand %p177, %p178
    %p180 = pneg %p179
    // Predicated region
    $region9: #{residual_block_forward.6} parent=5 // pred_check
      _
    $region10: #{residual_block_forward.6} parent=5 // pred_check_branch
      %182 = sbr.rel (%p179) target = $region12
    $region11: #{residual_block_forward.6} parent=5 // pred_region
      %s183 = ssub.s32 %s12, 1
      // Predicated region
      $region13: #{residual_block_forward.6} parent=11 // pred_check
        %p184 = pneg %p73
      $region14: #{residual_block_forward.6} parent=11 // pred_check_branch
        %186 = sbr.rel (%p184) target = $region16
      $region15: #{residual_block_forward.6} parent=11 // pred_region
        _
      $region16: #{residual_block_forward.6} parent=11 // pred_fallthru
        _
      // Predicated region
      $region17: #{residual_block_forward.6} parent=11 // pred_check
        %p187 = pneg %p94
      $region18: #{residual_block_forward.6} parent=11 // pred_check_branch
        %189 = sbr.rel (%p187) target = $region20
      $region19: #{residual_block_forward.6} parent=11 // pred_region
        _
      $region20: #{residual_block_forward.6} parent=11 // pred_fallthru
        _
      // Predicated region
      $region21: #{residual_block_forward.6} parent=11 // pred_check
        %p190 = pneg %p115
      $region22: #{residual_block_forward.6} parent=11 // pred_check_branch
        %192 = sbr.rel (%p190) target = $region24
      $region23: #{residual_block_forward.6} parent=11 // pred_region
        _
      $region24: #{residual_block_forward.6} parent=11 // pred_fallthru
        _
    $region12: #{residual_block_forward.6} parent=5 // pred_fallthru
      _
    %p193 = scmp.lt.s32.totalorder %s12, 2
    // Predicated region
    $region25: #{residual_block_forward.6} parent=5 // pred_check
      %p194 = pneg %p193
    $region26: #{residual_block_forward.6} parent=5 // pred_check_branch
      %196 = sbr.rel (%p194) target = $region28
    $region27: #{residual_block_forward.6} parent=5 // pred_region
      // Predicated region
      $region29: #{residual_block_forward.6} parent=27 // pred_check
        %p197 = pneg %p46
      $region30: #{residual_block_forward.6} parent=27 // pred_check_branch
        %199 = sbr.rel (%p197) target = $region32
      $region31: #{residual_block_forward.6} parent=27 // pred_region
        %s200 = sadd.s32 %s19, %s20
        %s201 = smul.u32 32, %s200
        %p202 = scmp.lt.s32.totalorder %s201, 63
        %s203 = scalar_select %p202, %s201, 63
        %s204 = smul.addr %s203, 4
        %s205 = scalar_lea.vmem %s0, %s204
        %s206 = sadd.s32 %s19, %s20
        %s207 = smul.u32 32, %s206
      $region32: #{residual_block_forward.6} parent=27 // pred_fallthru
        _
    $region28: #{residual_block_forward.6} parent=5 // pred_fallthru
      _
    %p208 = scmp.le.s32.totalorder 1, %s12
    %p209 = scmp.lt.s32.totalorder %s12, 3
    %p210 = pnand %p208, %p209
    %p211 = pneg %p210
    // Predicated region
    $region33: #{residual_block_forward.6} parent=5 // pred_check
      _
    $region34: #{residual_block_forward.6} parent=5 // pred_check_branch
      %213 = sbr.rel (%p210) target = $region36
    $region35: #{residual_block_forward.6} parent=5 // pred_region
      %s214 = ssub.s32 %s12, 1
      %s215 = sadd.s32 %s21, %s22
      %s216 = smul.u32 32, %s215
      %p217 = scmp.lt.s32.totalorder %s216, 63
      %s218 = scalar_select %p217, %s216, 63
      %s219 = smul.addr %s218, 4
      %s220 = scalar_lea.vmem %s0, %s219
      %p221 = pneg %p52
      %p222 = pneg %p49
      %p223 = pneg %p73
      %p224 = pneg %p70
      %p225 = pneg %p94
      %p226 = pneg %p91
      %p227 = pneg %p115
      %p228 = pneg %p112
      %p229 = pneg %p143
      %p230 = pneg %p140
      %s231 = sadd.s32 %s21, %s22
      %s232 = smul.u32 32, %s231
      %p233 = scmp.lt.s32.totalorder %s232, 63
      %s234 = scalar_select %p233, %s232, 63
      %s235 = smul.addr %s234, 8
      %s236 = scalar_lea.vmem %s4, %s235
      %p237 = pneg %p169
      %p238 = pneg %p166
      %p239 = scmp.lt.s32.totalorder %s21, 1
      %s240 = scalar_select %p239, %s21, 1
      %s241 = smul.addr %s240, 8
      %s242 = scalar_lea.vmem %s5, %s241
      %s243 = sadd.s32 %s21, %s22
      %s244 = smul.u32 32, %s243
      %p245 = scmp.lt.s32.totalorder %s244, 63
      %s246 = scalar_select %p245, %s244, 63
      %s247 = smul.addr %s246, 4
      %s248 = scalar_lea.vmem %s0, %s247
      %s249 = sadd.s32 %s21, %s22
      %s250 = smul.u32 32, %s249
      %s251 = sadd.s32 %s21, %s22
      %s252 = smul.u32 32, %s251
      %p253 = scmp.lt.s32.totalorder %s252, 63
      %s254 = scalar_select %p253, %s252, 63
      %s255 = smul.addr %s254, 8
      %s256 = scalar_lea.vmem %s4, %s255
      %s257 = sadd.s32 %s21, %s22
      %s258 = smul.u32 32, %s257
      %p259 = scmp.lt.s32.totalorder %s21, 1
      %s260 = scalar_select %p259, %s21, 1
      %s261 = smul.addr %s260, 8
      %s262 = scalar_lea.vmem %s5, %s261
      %v263 = vld [vmem:[%s248] sm:$0xf]
      %v264 = vld [vmem:[%s248 + $0x4] sm:$0xf]
      %v265 = vld [vmem:[%s248 + $0x8] sm:$0xf]
      %v266 = vld [vmem:[%s248 + $0xc] sm:$0xf]
      %v267 = vld [vmem:[%s248 + $0x10] sm:$0xf]
      %v268 = vld [vmem:[%s248 + $0x14] sm:$0xf]
      %v269 = vld [vmem:[%s248 + $0x18] sm:$0xf]
      %v270 = vld [vmem:[%s248 + $0x1c] sm:$0xf]
      %v271 = vld [vmem:[%s248 + $0x20] sm:$0xf]
      %v272 = vld [vmem:[%s248 + $0x24] sm:$0xf]
      %v273 = vld [vmem:[%s248 + $0x28] sm:$0xf]
      %v274 = vld [vmem:[%s248 + $0x2c] sm:$0xf]
      %v275 = vld [vmem:[%s248 + $0x30] sm:$0xf]
      %v276 = vld [vmem:[%s248 + $0x34] sm:$0xf]
      %v277 = vld [vmem:[%s248 + $0x38] sm:$0xf]
      %v278 = vld [vmem:[%s248 + $0x3c] sm:$0xf]
      %v279 = vld [vmem:[%s248 + $0x40] sm:$0xf]
      %v280 = vld [vmem:[%s248 + $0x44] sm:$0xf]
      %v281 = vld [vmem:[%s248 + $0x48] sm:$0xf]
      %v282 = vld [vmem:[%s248 + $0x4c] sm:$0xf]
      %v283 = vld [vmem:[%s248 + $0x50] sm:$0xf]
      %v284 = vld [vmem:[%s248 + $0x54] sm:$0xf]
      %v285 = vld [vmem:[%s248 + $0x58] sm:$0xf]
      %v286 = vld [vmem:[%s248 + $0x5c] sm:$0xf]
      %v287 = vld [vmem:[%s248 + $0x60] sm:$0xf]
      %v288 = vld [vmem:[%s248 + $0x64] sm:$0xf]
      %v289 = vld [vmem:[%s248 + $0x68] sm:$0xf]
      %v290 = vld [vmem:[%s248 + $0x6c] sm:$0xf]
      %v291 = vld [vmem:[%s248 + $0x70] sm:$0xf]
      %v292 = vld [vmem:[%s248 + $0x74] sm:$0xf]
      %v293 = vld [vmem:[%s248 + $0x78] sm:$0xf]
      %v294 = vld [vmem:[%s248 + $0x7c] sm:$0xf]
      %v295 = vunpack.c.l.bf16 %v263
      %v296 = vunpack.c.l.bf16 %v264
      %v297 = vunpack.c.l.bf16 %v265
      %v298 = vunpack.c.l.bf16 %v266
      %v299 = vunpack.c.l.bf16 %v267
      %v300 = vunpack.c.l.bf16 %v268
      %v301 = vunpack.c.l.bf16 %v269
      %v302 = vunpack.c.l.bf16 %v270
      %v303 = vunpack.c.l.bf16 %v271
      %v304 = vunpack.c.l.bf16 %v272
      %v305 = vunpack.c.l.bf16 %v273
      %v306 = vunpack.c.l.bf16 %v274
      %v307 = vunpack.c.l.bf16 %v275
      %v308 = vunpack.c.l.bf16 %v276
      %v309 = vunpack.c.l.bf16 %v277
      %v310 = vunpack.c.l.bf16 %v278
      %v311 = vunpack.c.l.bf16 %v279
      %v312 = vunpack.c.l.bf16 %v280
      %v313 = vunpack.c.l.bf16 %v281
      %v314 = vunpack.c.l.bf16 %v282
      %v315 = vunpack.c.l.bf16 %v283
      %v316 = vunpack.c.l.bf16 %v284
      %v317 = vunpack.c.l.bf16 %v285
      %v318 = vunpack.c.l.bf16 %v286
      %v319 = vunpack.c.l.bf16 %v287
      %v320 = vunpack.c.l.bf16 %v288
      %v321 = vunpack.c.l.bf16 %v289
      %v322 = vunpack.c.l.bf16 %v290
      %v323 = vunpack.c.l.bf16 %v291
      %v324 = vunpack.c.l.bf16 %v292
      %v325 = vunpack.c.l.bf16 %v293
      %v326 = vunpack.c.l.bf16 %v294
      %v327 = vld [vmem:[%s1] sm:$0x1]
      %v329 = vperm.slane %v327, 0
      %v331 = vmul.f32 %v295, %v329
      %v332 = vmul.f32 %v296, %v329
      %v333 = vmul.f32 %v297, %v329
      %v334 = vmul.f32 %v298, %v329
      %v335 = vmul.f32 %v299, %v329
      %v336 = vmul.f32 %v300, %v329
      %v337 = vmul.f32 %v301, %v329
      %v338 = vmul.f32 %v302, %v329
      %v339 = vmul.f32 %v303, %v329
      %v340 = vmul.f32 %v304, %v329
      %v341 = vmul.f32 %v305, %v329
      %v342 = vmul.f32 %v306, %v329
      %v343 = vmul.f32 %v307, %v329
      %v344 = vmul.f32 %v308, %v329
      %v345 = vmul.f32 %v309, %v329
      %v346 = vmul.f32 %v310, %v329
      %v347 = vmul.f32 %v311, %v329
      %v348 = vmul.f32 %v312, %v329
      %v349 = vmul.f32 %v313, %v329
      %v350 = vmul.f32 %v314, %v329
      %v351 = vmul.f32 %v315, %v329
      %v352 = vmul.f32 %v316, %v329
      %v353 = vmul.f32 %v317, %v329
      %v354 = vmul.f32 %v318, %v329
      %v355 = vmul.f32 %v319, %v329
      %v356 = vmul.f32 %v320, %v329
      %v357 = vmul.f32 %v321, %v329
      %v358 = vmul.f32 %v322, %v329
      %v359 = vmul.f32 %v323, %v329
      %v360 = vmul.f32 %v324, %v329
      %v361 = vmul.f32 %v325, %v329
      %v362 = vmul.f32 %v326, %v329
      %v363 = vld [vmem:[%s2] sm:$0x1]
      %v365 = vperm.slane %v363, 0
      %v367 = vadd.f32 %v331, %v365
      %v368 = vadd.f32 %v332, %v365
      %v369 = vadd.f32 %v333, %v365
      %v370 = vadd.f32 %v334, %v365
      %v371 = vadd.f32 %v335, %v365
      %v372 = vadd.f32 %v336, %v365
      %v373 = vadd.f32 %v337, %v365
      %v374 = vadd.f32 %v338, %v365
      %v375 = vadd.f32 %v339, %v365
      %v376 = vadd.f32 %v340, %v365
      %v377 = vadd.f32 %v341, %v365
      %v378 = vadd.f32 %v342, %v365
      %v379 = vadd.f32 %v343, %v365
      %v380 = vadd.f32 %v344, %v365
      %v381 = vadd.f32 %v345, %v365
      %v382 = vadd.f32 %v346, %v365
      %v383 = vadd.f32 %v347, %v365
      %v384 = vadd.f32 %v348, %v365
      %v385 = vadd.f32 %v349, %v365
      %v386 = vadd.f32 %v350, %v365
      %v387 = vadd.f32 %v351, %v365
      %v388 = vadd.f32 %v352, %v365
      %v389 = vadd.f32 %v353, %v365
      %v390 = vadd.f32 %v354, %v365
      %v391 = vadd.f32 %v355, %v365
      %v392 = vadd.f32 %v356, %v365
      %v393 = vadd.f32 %v357, %v365
      %v394 = vadd.f32 %v358, %v365
      %v395 = vadd.f32 %v359, %v365
      %v396 = vadd.f32 %v360, %v365
      %v397 = vadd.f32 %v361, %v365
      %v398 = vadd.f32 %v362, %v365
      %v399 = vmax.f32 %v367, 0.0
      %v400 = vmax.f32 %v368, 0.0
      %v401 = vmax.f32 %v369, 0.0
      %v402 = vmax.f32 %v370, 0.0
      %v403 = vmax.f32 %v371, 0.0
      %v404 = vmax.f32 %v372, 0.0
      %v405 = vmax.f32 %v373, 0.0
      %v406 = vmax.f32 %v374, 0.0
      %v407 = vmax.f32 %v375, 0.0
      %v408 = vmax.f32 %v376, 0.0
      %v409 = vmax.f32 %v377, 0.0
      %v410 = vmax.f32 %v378, 0.0
      %v411 = vmax.f32 %v379, 0.0
      %v412 = vmax.f32 %v380, 0.0
      %v413 = vmax.f32 %v381, 0.0
      %v414 = vmax.f32 %v382, 0.0
      %v415 = vmax.f32 %v383, 0.0
      %v416 = vmax.f32 %v384, 0.0
      %v417 = vmax.f32 %v385, 0.0
      %v418 = vmax.f32 %v386, 0.0
      %v419 = vmax.f32 %v387, 0.0
      %v420 = vmax.f32 %v388, 0.0
      %v421 = vmax.f32 %v389, 0.0
      %v422 = vmax.f32 %v390, 0.0
      %v423 = vmax.f32 %v391, 0.0
      %v424 = vmax.f32 %v392, 0.0
      %v425 = vmax.f32 %v393, 0.0
      %v426 = vmax.f32 %v394, 0.0
      %v427 = vmax.f32 %v395, 0.0
      %v428 = vmax.f32 %v396, 0.0
      %v429 = vmax.f32 %v397, 0.0
      %v430 = vmax.f32 %v398, 0.0
      %v431 = vpack.c.bf16 %v400, %v399
      %v432 = vpack.c.bf16 %v402, %v401
      %v433 = vpack.c.bf16 %v404, %v403
      %v434 = vpack.c.bf16 %v406, %v405
      %v435 = vpack.c.bf16 %v408, %v407
      %v436 = vpack.c.bf16 %v410, %v409
      %v437 = vpack.c.bf16 %v412, %v411
      %v438 = vpack.c.bf16 %v414, %v413
      %v439 = vpack.c.bf16 %v416, %v415
      %v440 = vpack.c.bf16 %v418, %v417
      %v441 = vpack.c.bf16 %v420, %v419
      %v442 = vpack.c.bf16 %v422, %v421
      %v443 = vpack.c.bf16 %v424, %v423
      %v444 = vpack.c.bf16 %v426, %v425
      %v445 = vpack.c.bf16 %v428, %v427
      %v446 = vpack.c.bf16 %v430, %v429
      %v447 = vld [vmem:[%s3] sm:$0xf]
      %v448 = vld [vmem:[%s3 + $0x4] sm:$0xf]
      %v449 = vld [vmem:[%s3 + $0x8] sm:$0xf]
      %v450 = vld [vmem:[%s3 + $0xc] sm:$0xf]
      %v451 = vld [vmem:[%s3 + $0x10] sm:$0xf]
      %v452 = vld [vmem:[%s3 + $0x14] sm:$0xf]
      %v453 = vld [vmem:[%s3 + $0x18] sm:$0xf]
      %v454 = vld [vmem:[%s3 + $0x1c] sm:$0xf]
      %v455 = vld [vmem:[%s3 + $0x20] sm:$0xf]
      %v456 = vld [vmem:[%s3 + $0x24] sm:$0xf]
      %v457 = vld [vmem:[%s3 + $0x28] sm:$0xf]
      %v458 = vld [vmem:[%s3 + $0x2c] sm:$0xf]
      %v459 = vld [vmem:[%s3 + $0x30] sm:$0xf]
      %v460 = vld [vmem:[%s3 + $0x34] sm:$0xf]
      %v461 = vld [vmem:[%s3 + $0x38] sm:$0xf]
      %v462 = vld [vmem:[%s3 + $0x3c] sm:$0xf]
      %v479 = vunpack.c.l.b16 %v447
      %v480 = vunpack.c.l.b16 %v448
      %v481 = vunpack.c.l.b16 %v449
      %v482 = vunpack.c.l.b16 %v450
      %v483 = vunpack.c.l.b16 %v451
      %v484 = vunpack.c.l.b16 %v452
      %v485 = vunpack.c.l.b16 %v453
      %v486 = vunpack.c.l.b16 %v454
      %v487 = vunpack.c.l.b16 %v455
      %v488 = vunpack.c.l.b16 %v456
      %v489 = vunpack.c.l.b16 %v457
      %v490 = vunpack.c.l.b16 %v458
      %v491 = vunpack.c.l.b16 %v459
      %v492 = vunpack.c.l.b16 %v460
      %v493 = vunpack.c.l.b16 %v461
      %v494 = vunpack.c.l.b16 %v462
      %v495 = vpack.c.b16 %v480, %v479
      %v496 = vpack.c.b16 %v482, %v481
      %v497 = vpack.c.b16 %v484, %v483
      %v498 = vpack.c.b16 %v486, %v485
      %v499 = vpack.c.b16 %v488, %v487
      %v500 = vpack.c.b16 %v490, %v489
      %v501 = vpack.c.b16 %v492, %v491
      %v502 = vpack.c.b16 %v494, %v493
      %511 = vmatpush.bf16.msra.mxu0 %v502
      %512 = vmatpush.bf16.msra.mxu0 %v501
      %513 = vmatpush.bf16.msra.mxu0 %v500
      %514 = vmatpush.bf16.msra.mxu0 %v499
      %515 = vmatpush.bf16.msra.mxu0 %v498
      %516 = vmatpush.bf16.msra.mxu0 %v497
      %517 = vmatpush.bf16.msra.mxu0 %v496
      %518 = vmatpush.bf16.msra.mxu0 %v495
      %519 = vmatmul.bf16.gmra.mxu0 %v431
      %v520 = vpop.f32.mrf.mxu0
      %v521 = vadd.f32 0.0, %v520
      %v522 = vpop.f32.mrf.mxu0
      %v523 = vadd.f32 0.0, %v522
      %524 = vmatmul.bf16.gmra.mxu0 %v432
      %v525 = vpop.f32.mrf.mxu0
      %v526 = vadd.f32 0.0, %v525
      %v527 = vpop.f32.mrf.mxu0
      %v528 = vadd.f32 0.0, %v527
      %529 = vmatmul.bf16.gmra.mxu0 %v433
      %v530 = vpop.f32.mrf.mxu0
      %v531 = vadd.f32 0.0, %v530
      %v532 = vpop.f32.mrf.mxu0
      %v533 = vadd.f32 0.0, %v532
      %534 = vmatmul.bf16.gmra.mxu0 %v434
      %v535 = vpop.f32.mrf.mxu0
      %v536 = vadd.f32 0.0, %v535
      %v537 = vpop.f32.mrf.mxu0
      %v538 = vadd.f32 0.0, %v537
      %539 = vmatmul.bf16.gmra.mxu0 %v435
      %v540 = vpop.f32.mrf.mxu0
      %v541 = vadd.f32 0.0, %v540
      %v542 = vpop.f32.mrf.mxu0
      %v543 = vadd.f32 0.0, %v542
      %544 = vmatmul.bf16.gmra.mxu0 %v436
      %v545 = vpop.f32.mrf.mxu0
      %v546 = vadd.f32 0.0, %v545
      %v547 = vpop.f32.mrf.mxu0
      %v548 = vadd.f32 0.0, %v547
      %549 = vmatmul.bf16.gmra.mxu0 %v437
      %v550 = vpop.f32.mrf.mxu0
      %v551 = vadd.f32 0.0, %v550
      %v552 = vpop.f32.mrf.mxu0
      %v553 = vadd.f32 0.0, %v552
      %554 = vmatmul.bf16.gmra.mxu0 %v438
      %v555 = vpop.f32.mrf.mxu0
      %v556 = vadd.f32 0.0, %v555
      %v557 = vpop.f32.mrf.mxu0
      %v558 = vadd.f32 0.0, %v557
      %559 = vmatmul.bf16.gmra.mxu0 %v439
      %v560 = vpop.f32.mrf.mxu0
      %v561 = vadd.f32 0.0, %v560
      %v562 = vpop.f32.mrf.mxu0
      %v563 = vadd.f32 0.0, %v562
      %564 = vmatmul.bf16.gmra.mxu0 %v440
      %v565 = vpop.f32.mrf.mxu0
      %v566 = vadd.f32 0.0, %v565
      %v567 = vpop.f32.mrf.mxu0
      %v568 = vadd.f32 0.0, %v567
      %569 = vmatmul.bf16.gmra.mxu0 %v441
      %v570 = vpop.f32.mrf.mxu0
      %v571 = vadd.f32 0.0, %v570
      %v572 = vpop.f32.mrf.mxu0
      %v573 = vadd.f32 0.0, %v572
      %574 = vmatmul.bf16.gmra.mxu0 %v442
      %v575 = vpop.f32.mrf.mxu0
      %v576 = vadd.f32 0.0, %v575
      %v577 = vpop.f32.mrf.mxu0
      %v578 = vadd.f32 0.0, %v577
      %579 = vmatmul.bf16.gmra.mxu0 %v443
      %v580 = vpop.f32.mrf.mxu0
      %v581 = vadd.f32 0.0, %v580
      %v582 = vpop.f32.mrf.mxu0
      %v583 = vadd.f32 0.0, %v582
      %584 = vmatmul.bf16.gmra.mxu0 %v444
      %v585 = vpop.f32.mrf.mxu0
      %v586 = vadd.f32 0.0, %v585
      %v587 = vpop.f32.mrf.mxu0
      %v588 = vadd.f32 0.0, %v587
      %589 = vmatmul.bf16.gmra.mxu0 %v445
      %v590 = vpop.f32.mrf.mxu0
      %v591 = vadd.f32 0.0, %v590
      %v592 = vpop.f32.mrf.mxu0
      %v593 = vadd.f32 0.0, %v592
      %594 = vmatmul.bf16.gmra.mxu0 %v446
      %v595 = vpop.f32.mrf.mxu0
      %v596 = vadd.f32 0.0, %v595
      %v597 = vpop.f32.mrf.mxu0
      %v598 = vadd.f32 0.0, %v597
      %599 = vdwg.mxu0
      %600 = vst [vmem:[%s256] sm:$0xff] %v521
      %601 = vst [vmem:[%s256 + $0x8] sm:$0xff] %v523
      %602 = vst [vmem:[%s256 + $0x10] sm:$0xff] %v526
      %603 = vst [vmem:[%s256 + $0x18] sm:$0xff] %v528
      %604 = vst [vmem:[%s256 + $0x20] sm:$0xff] %v531
      %605 = vst [vmem:[%s256 + $0x28] sm:$0xff] %v533
      %606 = vst [vmem:[%s256 + $0x30] sm:$0xff] %v536
      %607 = vst [vmem:[%s256 + $0x38] sm:$0xff] %v538
      %608 = vst [vmem:[%s256 + $0x40] sm:$0xff] %v541
      %609 = vst [vmem:[%s256 + $0x48] sm:$0xff] %v543
      %610 = vst [vmem:[%s256 + $0x50] sm:$0xff] %v546
      %611 = vst [vmem:[%s256 + $0x58] sm:$0xff] %v548
      %612 = vst [vmem:[%s256 + $0x60] sm:$0xff] %v551
      %613 = vst [vmem:[%s256 + $0x68] sm:$0xff] %v553
      %614 = vst [vmem:[%s256 + $0x70] sm:$0xff] %v556
      %615 = vst [vmem:[%s256 + $0x78] sm:$0xff] %v558
      %616 = vst [vmem:[%s256 + $0x80] sm:$0xff] %v561
      %617 = vst [vmem:[%s256 + $0x88] sm:$0xff] %v563
      %618 = vst [vmem:[%s256 + $0x90] sm:$0xff] %v566
      %619 = vst [vmem:[%s256 + $0x98] sm:$0xff] %v568
      %620 = vst [vmem:[%s256 + $0xa0] sm:$0xff] %v571
      %621 = vst [vmem:[%s256 + $0xa8] sm:$0xff] %v573
      %622 = vst [vmem:[%s256 + $0xb0] sm:$0xff] %v576
      %623 = vst [vmem:[%s256 + $0xb8] sm:$0xff] %v578
      %624 = vst [vmem:[%s256 + $0xc0] sm:$0xff] %v581
      %625 = vst [vmem:[%s256 + $0xc8] sm:$0xff] %v583
      %626 = vst [vmem:[%s256 + $0xd0] sm:$0xff] %v586
      %627 = vst [vmem:[%s256 + $0xd8] sm:$0xff] %v588
      %628 = vst [vmem:[%s256 + $0xe0] sm:$0xff] %v591
      %629 = vst [vmem:[%s256 + $0xe8] sm:$0xff] %v593
      %630 = vst [vmem:[%s256 + $0xf0] sm:$0xff] %v596
      %631 = vst [vmem:[%s256 + $0xf8] sm:$0xff] %v598
      %p632 = scmp.eq.s32.totalorder %s22, 0
      // Predicated region
      $region37: #{residual_block_forward.6} parent=35 // pred_check
        %p633 = pneg %p632
      $region38: #{residual_block_forward.6} parent=35 // pred_check_branch
        %635 = sbr.rel (%p633) target = $region40
      $region39: #{residual_block_forward.6} parent=35 // pred_region
        %636 = vst [vmem:[%s262] sm:$0xff] 0.0
      $region40: #{residual_block_forward.6} parent=35 // pred_fallthru
        _
      %v637 = vld [vmem:[%s262] sm:$0x1]
      %v638 = vadd.f32 %v521, %v523
      %v639 = vadd.f32 %v638, %v526
      %v640 = vadd.f32 %v639, %v528
      %v641 = vadd.f32 %v640, %v531
      %v642 = vadd.f32 %v641, %v533
      %v643 = vadd.f32 %v642, %v536
      %v644 = vadd.f32 %v643, %v538
      %v645 = vadd.f32 %v644, %v541
      %v646 = vadd.f32 %v645, %v543
      %v647 = vadd.f32 %v646, %v546
      %v648 = vadd.f32 %v647, %v548
      %v649 = vadd.f32 %v648, %v551
      %v650 = vadd.f32 %v649, %v553
      %v651 = vadd.f32 %v650, %v556
      %v652 = vadd.f32 %v651, %v558
      %v653 = vadd.f32 %v652, %v561
      %v654 = vadd.f32 %v653, %v563
      %v655 = vadd.f32 %v654, %v566
      %v656 = vadd.f32 %v655, %v568
      %v657 = vadd.f32 %v656, %v571
      %v658 = vadd.f32 %v657, %v573
      %v659 = vadd.f32 %v658, %v576
      %v660 = vadd.f32 %v659, %v578
      %v661 = vadd.f32 %v660, %v581
      %v662 = vadd.f32 %v661, %v583
      %v663 = vadd.f32 %v662, %v586
      %v664 = vadd.f32 %v663, %v588
      %v665 = vadd.f32 %v664, %v591
      %v666 = vadd.f32 %v665, %v593
      %v667 = vadd.f32 %v666, %v596
      %v668 = vadd.f32 %v667, %v598
      %v669 = vrot.slane %v668, 4
      %v670 = vadd.f32 %v668, %v669
      %v671 = vrot.slane %v670, 2
      %v672 = vadd.f32 %v670, %v671
      %v673 = vrot.slane %v672, 1
      %v674 = vadd.f32 %v672, %v673
      %v675 = vadd.f32 %v637, %v674
      %676 = vst [vmem:[%s262] sm:$0x1] %v675
      %v677 = vld [vmem:[%s262 + $0x1] sm:$0x1]
      %v678 = vmul.f32 %v521, %v521
      %v679 = vmul.f32 %v523, %v523
      %v680 = vmul.f32 %v526, %v526
      %v681 = vmul.f32 %v528, %v528
      %v682 = vmul.f32 %v531, %v531
      %v683 = vmul.f32 %v533, %v533
      %v684 = vmul.f32 %v536, %v536
      %v685 = vmul.f32 %v538, %v538
      %v686 = vmul.f32 %v541, %v541
      %v687 = vmul.f32 %v543, %v543
      %v688 = vmul.f32 %v546, %v546
      %v689 = vmul.f32 %v548, %v548
      %v690 = vmul.f32 %v551, %v551
      %v691 = vmul.f32 %v553, %v553
      %v692 = vmul.f32 %v556, %v556
      %v693 = vmul.f32 %v558, %v558
      %v694 = vmul.f32 %v561, %v561
      %v695 = vmul.f32 %v563, %v563
      %v696 = vmul.f32 %v566, %v566
      %v697 = vmul.f32 %v568, %v568
      %v698 = vmul.f32 %v571, %v571
      %v699 = vmul.f32 %v573, %v573
      %v700 = vmul.f32 %v576, %v576
      %v701 = vmul.f32 %v578, %v578
      %v702 = vmul.f32 %v581, %v581
      %v703 = vmul.f32 %v583, %v583
      %v704 = vmul.f32 %v586, %v586
      %v705 = vmul.f32 %v588, %v588
      %v706 = vmul.f32 %v591, %v591
      %v707 = vmul.f32 %v593, %v593
      %v708 = vmul.f32 %v596, %v596
      %v709 = vmul.f32 %v598, %v598
      %v710 = vadd.f32 %v678, %v679
      %v711 = vadd.f32 %v710, %v680
      %v712 = vadd.f32 %v711, %v681
      %v713 = vadd.f32 %v712, %v682
      %v714 = vadd.f32 %v713, %v683
      %v715 = vadd.f32 %v714, %v684
      %v716 = vadd.f32 %v715, %v685
      %v717 = vadd.f32 %v716, %v686
      %v718 = vadd.f32 %v717, %v687
      %v719 = vadd.f32 %v718, %v688
      %v720 = vadd.f32 %v719, %v689
      %v721 = vadd.f32 %v720, %v690
      %v722 = vadd.f32 %v721, %v691
      %v723 = vadd.f32 %v722, %v692
      %v724 = vadd.f32 %v723, %v693
      %v725 = vadd.f32 %v724, %v694
      %v726 = vadd.f32 %v725, %v695
      %v727 = vadd.f32 %v726, %v696
      %v728 = vadd.f32 %v727, %v697
      %v729 = vadd.f32 %v728, %v698
      %v730 = vadd.f32 %v729, %v699
      %v731 = vadd.f32 %v730, %v700
      %v732 = vadd.f32 %v731, %v701
      %v733 = vadd.f32 %v732, %v702
      %v734 = vadd.f32 %v733, %v703
      %v735 = vadd.f32 %v734, %v704
      %v736 = vadd.f32 %v735, %v705
      %v737 = vadd.f32 %v736, %v706
      %v738 = vadd.f32 %v737, %v707
      %v739 = vadd.f32 %v738, %v708
      %v740 = vadd.f32 %v739, %v709
      %v741 = vrot.slane %v740, 4
      %v742 = vadd.f32 %v740, %v741
      %v743 = vrot.slane %v742, 2
      %v744 = vadd.f32 %v742, %v743
      %v745 = vrot.slane %v744, 1
      %v746 = vadd.f32 %v744, %v745
      %v747 = vadd.f32 %v677, %v746
      %748 = vst [vmem:[%s262 + $0x1] sm:$0x1] %v747
      %s749 = sadd.s32 %s21, %s22
      %s750 = smul.u32 32, %s749
      %p751 = scmp.lt.s32.totalorder %s750, 63
      %s752 = scalar_select %p751, %s750, 63
      %s753 = smul.addr %s752, 8
      %s754 = scalar_lea.vmem %s4, %s753
      %p755 = scmp.lt.s32.totalorder %s21, 1
      %s756 = scalar_select %p755, %s21, 1
      %s757 = smul.addr %s756, 8
      %s758 = scalar_lea.vmem %s5, %s757
      // Predicated region
      $region41: #{residual_block_forward.6} parent=35 // pred_check
        %p759 = pneg %p140
      $region42: #{residual_block_forward.6} parent=35 // pred_check_branch
        %761 = sbr.rel (%p759) target = $region44
      $region43: #{residual_block_forward.6} parent=35 // pred_region
        %s762 = sadd.s32 %s21, %s22
        %s763 = smul.u32 32, %s762
      $region44: #{residual_block_forward.6} parent=35 // pred_fallthru
        _
      // Predicated region
      $region45: #{residual_block_forward.6} parent=35 // pred_check
        %p764 = pneg %p166
      $region46: #{residual_block_forward.6} parent=35 // pred_check_branch
        %766 = sbr.rel (%p764) target = $region48
      $region47: #{residual_block_forward.6} parent=35 // pred_region
        _
      $region48: #{residual_block_forward.6} parent=35 // pred_fallthru
        _
    $region36: #{residual_block_forward.6} parent=5 // pred_fallthru
      _
    %p767 = scmp.le.s32.totalorder 2, %s12
    // Predicated region
    $region49: #{residual_block_forward.6} parent=5 // pred_check
      %p768 = pneg %p767
    $region50: #{residual_block_forward.6} parent=5 // pred_check_branch
      %770 = sbr.rel (%p768) target = $region52
    $region51: #{residual_block_forward.6} parent=5 // pred_region
      %s771 = ssub.s32 %s12, 2
      // Predicated region
      $region53: #{residual_block_forward.6} parent=51 // pred_check
        %p772 = pneg %p146
      $region54: #{residual_block_forward.6} parent=51 // pred_check_branch
        %774 = sbr.rel (%p772) target = $region56
      $region55: #{residual_block_forward.6} parent=51 // pred_region
        %s775 = sadd.s32 %s23, %s24
        %s776 = smul.u32 32, %s775
        %p777 = scmp.lt.s32.totalorder %s776, 63
        %s778 = scalar_select %p777, %s776, 63
        %s779 = smul.addr %s778, 8
        %s780 = scalar_lea.vmem %s4, %s779
      $region56: #{residual_block_forward.6} parent=51 // pred_fallthru
        _
      // Predicated region
      $region57: #{residual_block_forward.6} parent=51 // pred_check
        %p781 = pneg %p172
      $region58: #{residual_block_forward.6} parent=51 // pred_check_branch
        %783 = sbr.rel (%p781) target = $region60
      $region59: #{residual_block_forward.6} parent=51 // pred_region
        %p784 = scmp.lt.s32.totalorder %s23, 1
        %s785 = scalar_select %p784, %s23, 1
        %s786 = smul.addr %s785, 8
        %s787 = scalar_lea.vmem %s5, %s786
      $region60: #{residual_block_forward.6} parent=51 // pred_fallthru
        _
    $region52: #{residual_block_forward.6} parent=5 // pred_fallthru
      _
  $region6: #{residual_block_forward.6} parent=0 // loop_footer
    %s16 = sadd.s32 1, %s12
  $region7: #{residual_block_forward.6} parent=0 // loop_footer_branch
    %11 = sbr.rel target = $region3
  $region8: #{residual_block_forward.6} parent=0 // loop_exit
    _

// kernel: residual_block_forward.5
$region0: #{residual_block_forward.5}
  #allocation0 [shape = 'u32[]', space=smem, size = 0x4, offset = 0x4, fixed_abs, tag = 'smem constant byte address 0x4 - core index']
  #allocation1 [shape = 'u32[72,128]{1,0:T(1,128)}', space=vmem, size = 0x9000, scoped, tag = 'internal scratch']
  #allocation2 [shape = 'bf16[256,1152]{1,0:T(8,128)(2,1)}', space=vmem, size = 0x90000, scoped, tag = 'scratch operand']
  %s0 = inlined_call_operand.vmem [shape: bf16[512,128], index: 0, kind: input, shape index: {}]
  %s1 = inlined_call_operand.vmem [shape: f32[1,128], index: 1, kind: input, shape index: {}]
  %s2 = inlined_call_operand.vmem [shape: f32[1,128], index: 2, kind: input, shape index: {}]
  %s3 = inlined_call_operand.vmem [shape: bf16[1152,128], index: 3, kind: input, shape index: {}]
  %s4 = inlined_call_operand.vmem [shape: bf16[512,128], index: 4, kind: output, shape index: {0}]
  %s5 = inlined_call_operand.vmem [shape: f32[16,128], index: 5, kind: output, shape index: {1}]
  %6 = xla_tuple %s4, %s5
  %s7 = sld [smem:[#allocation0]]
  $region61: #{residual_block_forward.5} parent=0
    _
  %s9 = ssub.s32 1, %s7
  %s10 = scalar_select 0, %s9, %s7
  loop: start=0, step=1, limit=4
  $region2: #{residual_block_forward.5} parent=0 // loop_pre_header
    _
  $region3: #{residual_block_forward.5} parent=0 // loop_header
    %s12 = sphi 0, %s16
    %p13 = scmp.ge.s32.totalorder %s12, 4
    %s19 = sphi 0, %s31
    %s20 = sphi 0, %s27
    %s21 = sphi 0, %s19
    %s22 = sphi 0, %s20
    %s23 = sphi 0, %s21
    %s24 = sphi 0, %s22
    %s36 = sphi 0, %s38
    %s39 = sphi 0, %s36
    %s40 = sphi 0, %s39
    %s56 = sphi 0, %s40
    %s60 = sphi 0, %s60
    %s62 = sphi 0, %s60
    %s63 = sphi 0, %s62
    %s77 = sphi 0, %s63
    %s81 = sphi 0, %s81
    %s83 = sphi 0, %s81
    %s84 = sphi 0, %s83
    %s98 = sphi 0, %s84
    %s102 = sphi 0, %s102
    %s104 = sphi 0, %s102
    %s105 = sphi 0, %s104
    %s119 = sphi 0, %s105
    %s127 = sphi 0, %s129
    %s130 = sphi 0, %s127
    %s131 = sphi 0, %s130
    %s147 = sphi 0, %s131
    %s153 = sphi 0, %s155
    %s156 = sphi 0, %s153
    %s157 = sphi 0, %s156
    %s173 = sphi 0, %s157
  $region4: #{residual_block_forward.5} parent=0 // loop_header_branch
    %15 = sbr.rel (%p13) target = $region8
  $region5: #{residual_block_forward.5} parent=0 // loop_body
    %s17 = ssub.s32 %s12, 1
    %s18 = ssub.s32 %s12, 2
    %s25 = sadd.s32 1, %s20
    %p26 = scmp.ge.s32.totalorder %s25, 1
    %s27 = scalar_select %p26, 0, %s25
    %s28 = sadd.s32 1, %s19
    %s29 = scalar_select %p26, %s28, %s19
    %p30 = scmp.ge.s32.totalorder %s29, 2
    %s31 = scalar_select %p30, 0, %s29
    %s32 = sadd.s32 %s19, %s20
    %s33 = sadd.s32 %s31, %s27
    %s34 = ssub.s32 %s32, %s33
    %p35 = scmp.eq.s32.totalorder %s34, 0
    %s37 = sadd.s32 %s36, 1
    %s38 = scalar_select %p35, %s36, %s37
    %p41 = pneg %p35
    %p42 = scmp.eq.s32.totalorder %s12, 1
    %p43 = por %p41, %p42
    %p44 = scmp.ne.s32.totalorder %s36, %s39
    %p45 = scmp.eq.s32.totalorder %s12, 0
    %p46 = por %p44, %p45
    %p47 = scmp.ne.s32.totalorder %s36, %s39
    %p48 = scmp.eq.s32.totalorder %s17, 1
    %p49 = por %p47, %p48
    %p50 = scmp.ne.s32.totalorder %s39, %s40
    %p51 = scmp.eq.s32.totalorder %s17, 0
    %p52 = por %p50, %p51
    %p53 = scmp.ne.s32.totalorder %s39, %s40
    %p54 = scmp.eq.s32.totalorder %s18, 1
    %p55 = por %p53, %p54
    %p57 = scmp.ne.s32.totalorder %s40, %s56
    %p58 = scmp.eq.s32.totalorder %s18, 0
    %p59 = por %p57, %p58
    %s61 = sadd.s32 %s60, 1
    %p64 = scmp.eq.s32.totalorder %s12, 1
    %p65 = scmp.ne.s32.totalorder %s60, %s62
    %p66 = scmp.eq.s32.totalorder %s12, 0
    %p67 = por %p65, %p66
    %p68 = scmp.ne.s32.totalorder %s60, %s62
    %p69 = scmp.eq.s32.totalorder %s17, 1
    %p70 = por %p68, %p69
    %p71 = scmp.ne.s32.totalorder %s62, %s63
    %p72 = scmp.eq.s32.totalorder %s17, 0
    %p73 = por %p71, %p72
    %p74 = scmp.ne.s32.totalorder %s62, %s63
    %p75 = scmp.eq.s32.totalorder %s18, 1
    %p76 = por %p74, %p75
    %p78 = scmp.ne.s32.totalorder %s63, %s77
    %p79 = scmp.eq.s32.totalorder %s18, 0
    %p80 = por %p78, %p79
    %s82 = sadd.s32 %s81, 1
    %p85 = scmp.eq.s32.totalorder %s12, 1
    %p86 = scmp.ne.s32.totalorder %s81, %s83
    %p87 = scmp.eq.s32.totalorder %s12, 0
    %p88 = por %p86, %p87
    %p89 = scmp.ne.s32.totalorder %s81, %s83
    %p90 = scmp.eq.s32.totalorder %s17, 1
    %p91 = por %p89, %p90
    %p92 = scmp.ne.s32.totalorder %s83, %s84
    %p93 = scmp.eq.s32.totalorder %s17, 0
    %p94 = por %p92, %p93
    %p95 = scmp.ne.s32.totalorder %s83, %s84
    %p96 = scmp.eq.s32.totalorder %s18, 1
    %p97 = por %p95, %p96
    %p99 = scmp.ne.s32.totalorder %s84, %s98
    %p100 = scmp.eq.s32.totalorder %s18, 0
    %p101 = por %p99, %p100
    %s103 = sadd.s32 %s102, 1
    %p106 = scmp.eq.s32.totalorder %s12, 1
    %p107 = scmp.ne.s32.totalorder %s102, %s104
    %p108 = scmp.eq.s32.totalorder %s12, 0
    %p109 = por %p107, %p108
    %p110 = scmp.ne.s32.totalorder %s102, %s104
    %p111 = scmp.eq.s32.totalorder %s17, 1
    %p112 = por %p110, %p111
    %p113 = scmp.ne.s32.totalorder %s104, %s105
    %p114 = scmp.eq.s32.totalorder %s17, 0
    %p115 = por %p113, %p114
    %p116 = scmp.ne.s32.totalorder %s104, %s105
    %p117 = scmp.eq.s32.totalorder %s18, 1
    %p118 = por %p116, %p117
    %p120 = scmp.ne.s32.totalorder %s105, %s119
    %p121 = scmp.eq.s32.totalorder %s18, 0
    %p122 = por %p120, %p121
    %s123 = sadd.s32 %s19, %s20
    %s124 = sadd.s32 %s31, %s27
    %s125 = ssub.s32 %s123, %s124
    %p126 = scmp.eq.s32.totalorder %s125, 0
    %s128 = sadd.s32 %s127, 1
    %s129 = scalar_select %p126, %s127, %s128
    %p132 = pneg %p126
    %p133 = scmp.eq.s32.totalorder %s12, 1
    %p134 = por %p132, %p133
    %p135 = scmp.ne.s32.totalorder %s127, %s130
    %p136 = scmp.eq.s32.totalorder %s12, 0
    %p137 = por %p135, %p136
    %p138 = scmp.ne.s32.totalorder %s127, %s130
    %p139 = scmp.eq.s32.totalorder %s17, 1
    %p140 = por %p138, %p139
    %p141 = scmp.ne.s32.totalorder %s130, %s131
    %p142 = scmp.eq.s32.totalorder %s17, 0
    %p143 = por %p141, %p142
    %p144 = scmp.ne.s32.totalorder %s130, %s131
    %p145 = scmp.eq.s32.totalorder %s18, 1
    %p146 = por %p144, %p145
    %p148 = scmp.ne.s32.totalorder %s131, %s147
    %p149 = scmp.eq.s32.totalorder %s18, 0
    %p150 = por %p148, %p149
    %s151 = ssub.s32 %s19, %s31
    %p152 = scmp.eq.s32.totalorder %s151, 0
    %s154 = sadd.s32 %s153, 1
    %s155 = scalar_select %p152, %s153, %s154
    %p158 = pneg %p152
    %p159 = scmp.eq.s32.totalorder %s12, 1
    %p160 = por %p158, %p159
    %p161 = scmp.ne.s32.totalorder %s153, %s156
    %p162 = scmp.eq.s32.totalorder %s12, 0
    %p163 = por %p161, %p162
    %p164 = scmp.ne.s32.totalorder %s153, %s156
    %p165 = scmp.eq.s32.totalorder %s17, 1
    %p166 = por %p164, %p165
    %p167 = scmp.ne.s32.totalorder %s156, %s157
    %p168 = scmp.eq.s32.totalorder %s17, 0
    %p169 = por %p167, %p168
    %p170 = scmp.ne.s32.totalorder %s156, %s157
    %p171 = scmp.eq.s32.totalorder %s18, 1
    %p172 = por %p170, %p171
    %p174 = scmp.ne.s32.totalorder %s157, %s173
    %p175 = scmp.eq.s32.totalorder %s18, 0
    %p176 = por %p174, %p175
    %p177 = scmp.le.s32.totalorder 1, %s12
    %p178 = scmp.lt.s32.totalorder %s12, 3
    %p179 = pnand %p177, %p178
    %p180 = pneg %p179
    // Predicated region
    $region9: #{residual_block_forward.5} parent=5 // pred_check
      _
    $region10: #{residual_block_forward.5} parent=5 // pred_check_branch
      %182 = sbr.rel (%p179) target = $region12
    $region11: #{residual_block_forward.5} parent=5 // pred_region
      %s183 = ssub.s32 %s12, 1
      // Predicated region
      $region13: #{residual_block_forward.5} parent=11 // pred_check
        %p184 = pneg %p73
      $region14: #{residual_block_forward.5} parent=11 // pred_check_branch
        %186 = sbr.rel (%p184) target = $region16
      $region15: #{residual_block_forward.5} parent=11 // pred_region
        _
      $region16: #{residual_block_forward.5} parent=11 // pred_fallthru
        _
      // Predicated region
      $region17: #{residual_block_forward.5} parent=11 // pred_check
        %p187 = pneg %p94
      $region18: #{residual_block_forward.5} parent=11 // pred_check_branch
        %189 = sbr.rel (%p187) target = $region20
      $region19: #{residual_block_forward.5} parent=11 // pred_region
        _
      $region20: #{residual_block_forward.5} parent=11 // pred_fallthru
        _
      // Predicated region
      $region21: #{residual_block_forward.5} parent=11 // pred_check
        %p190 = pneg %p115
      $region22: #{residual_block_forward.5} parent=11 // pred_check_branch
        %192 = sbr.rel (%p190) target = $region24
      $region23: #{residual_block_forward.5} parent=11 // pred_region
        _
      $region24: #{residual_block_forward.5} parent=11 // pred_fallthru
        _
    $region12: #{residual_block_forward.5} parent=5 // pred_fallthru
      _
    %p193 = scmp.lt.s32.totalorder %s12, 2
    // Predicated region
    $region25: #{residual_block_forward.5} parent=5 // pred_check
      %p194 = pneg %p193
    $region26: #{residual_block_forward.5} parent=5 // pred_check_branch
      %196 = sbr.rel (%p194) target = $region28
    $region27: #{residual_block_forward.5} parent=5 // pred_region
      // Predicated region
      $region29: #{residual_block_forward.5} parent=27 // pred_check
        %p197 = pneg %p46
      $region30: #{residual_block_forward.5} parent=27 // pred_check_branch
        %199 = sbr.rel (%p197) target = $region32
      $region31: #{residual_block_forward.5} parent=27 // pred_region
        %s200 = sadd.s32 %s19, %s20
        %s201 = smul.u32 32, %s200
        %p202 = scmp.lt.s32.totalorder %s201, 63
        %s203 = scalar_select %p202, %s201, 63
        %s204 = smul.addr %s203, 4
        %s205 = scalar_lea.vmem %s0, %s204
        %s206 = sadd.s32 %s19, %s20
        %s207 = smul.u32 32, %s206
      $region32: #{residual_block_forward.5} parent=27 // pred_fallthru
        _
    $region28: #{residual_block_forward.5} parent=5 // pred_fallthru
      _
    %p208 = scmp.le.s32.totalorder 1, %s12
    %p209 = scmp.lt.s32.totalorder %s12, 3
    %p210 = pnand %p208, %p209
    %p211 = pneg %p210
    // Predicated region
    $region33: #{residual_block_forward.5} parent=5 // pred_check
      _
    $region34: #{residual_block_forward.5} parent=5 // pred_check_branch
      %213 = sbr.rel (%p210) target = $region36
    $region35: #{residual_block_forward.5} parent=5 // pred_region
      %s214 = ssub.s32 %s12, 1
      %s215 = sadd.s32 %s21, %s22
      %s216 = smul.u32 32, %s215
      %p217 = scmp.lt.s32.totalorder %s216, 63
      %s218 = scalar_select %p217, %s216, 63
      %s219 = smul.addr %s218, 4
      %s220 = scalar_lea.vmem %s0, %s219
      %p221 = pneg %p52
      %p222 = pneg %p49
      %p223 = pneg %p73
      %p224 = pneg %p70
      %p225 = pneg %p94
      %p226 = pneg %p91
      %p227 = pneg %p115
      %p228 = pneg %p112
      %p229 = pneg %p143
      %p230 = pneg %p140
      %s231 = sadd.s32 %s21, %s22
      %s232 = smul.u32 32, %s231
      %p233 = scmp.lt.s32.totalorder %s232, 63
      %s234 = scalar_select %p233, %s232, 63
      %s235 = smul.addr %s234, 4
      %s236 = scalar_lea.vmem %s4, %s235
      %p237 = pneg %p169
      %p238 = pneg %p166
      %p239 = scmp.lt.s32.totalorder %s21, 1
      %s240 = scalar_select %p239, %s21, 1
      %s241 = smul.addr %s240, 8
      %s242 = scalar_lea.vmem %s5, %s241
      %s243 = sadd.s32 %s21, %s22
      %s244 = smul.u32 32, %s243
      %p245 = scmp.lt.s32.totalorder %s244, 63
      %s246 = scalar_select %p245, %s244, 63
      %s247 = smul.addr %s246, 4
      %s248 = scalar_lea.vmem %s0, %s247
      %s249 = sadd.s32 %s21, %s22
      %s250 = smul.u32 32, %s249
      %s251 = sadd.s32 %s21, %s22
      %s252 = smul.u32 32, %s251
      %p253 = scmp.lt.s32.totalorder %s252, 63
      %s254 = scalar_select %p253, %s252, 63
      %s255 = smul.addr %s254, 4
      %s256 = scalar_lea.vmem %s4, %s255
      %s257 = sadd.s32 %s21, %s22
      %s258 = smul.u32 32, %s257
      %p259 = scmp.lt.s32.totalorder %s21, 1
      %s260 = scalar_select %p259, %s21, 1
      %s261 = smul.addr %s260, 8
      %s262 = scalar_lea.vmem %s5, %s261
      %v264 = vld [vmem:[%s248] sm:$0xf]
      %v265 = vld [vmem:[%s248 + $0x4] sm:$0xf]
      %v266 = vld [vmem:[%s248 + $0x8] sm:$0xf]
      %v267 = vld [vmem:[%s248 + $0xc] sm:$0xf]
      %v268 = vld [vmem:[%s248 + $0x10] sm:$0xf]
      %v269 = vld [vmem:[%s248 + $0x14] sm:$0xf]
      %v270 = vld [vmem:[%s248 + $0x18] sm:$0xf]
      %v271 = vld [vmem:[%s248 + $0x1c] sm:$0xf]
      %v272 = vld [vmem:[%s248 + $0x20] sm:$0xf]
      %v273 = vld [vmem:[%s248 + $0x24] sm:$0xf]
      %v274 = vld [vmem:[%s248 + $0x28] sm:$0xf]
      %v275 = vld [vmem:[%s248 + $0x2c] sm:$0xf]
      %v276 = vld [vmem:[%s248 + $0x30] sm:$0xf]
      %v277 = vld [vmem:[%s248 + $0x34] sm:$0xf]
      %v278 = vld [vmem:[%s248 + $0x38] sm:$0xf]
      %v279 = vld [vmem:[%s248 + $0x3c] sm:$0xf]
      %v280 = vld [vmem:[%s248 + $0x40] sm:$0xf]
      %v281 = vld [vmem:[%s248 + $0x44] sm:$0xf]
      %v282 = vld [vmem:[%s248 + $0x48] sm:$0xf]
      %v283 = vld [vmem:[%s248 + $0x4c] sm:$0xf]
      %v284 = vld [vmem:[%s248 + $0x50] sm:$0xf]
      %v285 = vld [vmem:[%s248 + $0x54] sm:$0xf]
      %v286 = vld [vmem:[%s248 + $0x58] sm:$0xf]
      %v287 = vld [vmem:[%s248 + $0x5c] sm:$0xf]
      %v288 = vld [vmem:[%s248 + $0x60] sm:$0xf]
      %v289 = vld [vmem:[%s248 + $0x64] sm:$0xf]
      %v290 = vld [vmem:[%s248 + $0x68] sm:$0xf]
      %v291 = vld [vmem:[%s248 + $0x6c] sm:$0xf]
      %v292 = vld [vmem:[%s248 + $0x70] sm:$0xf]
      %v293 = vld [vmem:[%s248 + $0x74] sm:$0xf]
      %v294 = vld [vmem:[%s248 + $0x78] sm:$0xf]
      %v295 = vld [vmem:[%s248 + $0x7c] sm:$0xf]
      %v296 = vunpack.c.l.bf16 %v264
      %v297 = vunpack.c.l.bf16 %v265
      %v298 = vunpack.c.l.bf16 %v266
      %v299 = vunpack.c.l.bf16 %v267
      %v300 = vunpack.c.l.bf16 %v268
      %v301 = vunpack.c.l.bf16 %v269
      %v302 = vunpack.c.l.bf16 %v270
      %v303 = vunpack.c.l.bf16 %v271
      %v304 = vunpack.c.l.bf16 %v272
      %v305 = vunpack.c.l.bf16 %v273
      %v306 = vunpack.c.l.bf16 %v274
      %v307 = vunpack.c.l.bf16 %v275
      %v308 = vunpack.c.l.bf16 %v276
      %v309 = vunpack.c.l.bf16 %v277
      %v310 = vunpack.c.l.bf16 %v278
      %v311 = vunpack.c.l.bf16 %v279
      %v312 = vunpack.c.l.bf16 %v280
      %v313 = vunpack.c.l.bf16 %v281
      %v314 = vunpack.c.l.bf16 %v282
      %v315 = vunpack.c.l.bf16 %v283
      %v316 = vunpack.c.l.bf16 %v284
      %v317 = vunpack.c.l.bf16 %v285
      %v318 = vunpack.c.l.bf16 %v286
      %v319 = vunpack.c.l.bf16 %v287
      %v320 = vunpack.c.l.bf16 %v288
      %v321 = vunpack.c.l.bf16 %v289
      %v322 = vunpack.c.l.bf16 %v290
      %v323 = vunpack.c.l.bf16 %v291
      %v324 = vunpack.c.l.bf16 %v292
      %v325 = vunpack.c.l.bf16 %v293
      %v326 = vunpack.c.l.bf16 %v294
      %v327 = vunpack.c.l.bf16 %v295
      %v328 = vld [vmem:[%s1] sm:$0x1]
      %v330 = vperm.slane %v328, 0
      %v332 = vmul.f32 %v296, %v330
      %v333 = vmul.f32 %v297, %v330
      %v334 = vmul.f32 %v298, %v330
      %v335 = vmul.f32 %v299, %v330
      %v336 = vmul.f32 %v300, %v330
      %v337 = vmul.f32 %v301, %v330
      %v338 = vmul.f32 %v302, %v330
      %v339 = vmul.f32 %v303, %v330
      %v340 = vmul.f32 %v304, %v330
      %v341 = vmul.f32 %v305, %v330
      %v342 = vmul.f32 %v306, %v330
      %v343 = vmul.f32 %v307, %v330
      %v344 = vmul.f32 %v308, %v330
      %v345 = vmul.f32 %v309, %v330
      %v346 = vmul.f32 %v310, %v330
      %v347 = vmul.f32 %v311, %v330
      %v348 = vmul.f32 %v312, %v330
      %v349 = vmul.f32 %v313, %v330
      %v350 = vmul.f32 %v314, %v330
      %v351 = vmul.f32 %v315, %v330
      %v352 = vmul.f32 %v316, %v330
      %v353 = vmul.f32 %v317, %v330
      %v354 = vmul.f32 %v318, %v330
      %v355 = vmul.f32 %v319, %v330
      %v356 = vmul.f32 %v320, %v330
      %v357 = vmul.f32 %v321, %v330
      %v358 = vmul.f32 %v322, %v330
      %v359 = vmul.f32 %v323, %v330
      %v360 = vmul.f32 %v324, %v330
      %v361 = vmul.f32 %v325, %v330
      %v362 = vmul.f32 %v326, %v330
      %v363 = vmul.f32 %v327, %v330
      %v364 = vld [vmem:[%s2] sm:$0x1]
      %v366 = vperm.slane %v364, 0
      %v368 = vadd.f32 %v332, %v366
      %v369 = vadd.f32 %v333, %v366
      %v370 = vadd.f32 %v334, %v366
      %v371 = vadd.f32 %v335, %v366
      %v372 = vadd.f32 %v336, %v366
      %v373 = vadd.f32 %v337, %v366
      %v374 = vadd.f32 %v338, %v366
      %v375 = vadd.f32 %v339, %v366
      %v376 = vadd.f32 %v340, %v366
      %v377 = vadd.f32 %v341, %v366
      %v378 = vadd.f32 %v342, %v366
      %v379 = vadd.f32 %v343, %v366
      %v380 = vadd.f32 %v344, %v366
      %v381 = vadd.f32 %v345, %v366
      %v382 = vadd.f32 %v346, %v366
      %v383 = vadd.f32 %v347, %v366
      %v384 = vadd.f32 %v348, %v366
      %v385 = vadd.f32 %v349, %v366
      %v386 = vadd.f32 %v350, %v366
      %v387 = vadd.f32 %v351, %v366
      %v388 = vadd.f32 %v352, %v366
      %v389 = vadd.f32 %v353, %v366
      %v390 = vadd.f32 %v354, %v366
      %v391 = vadd.f32 %v355, %v366
      %v392 = vadd.f32 %v356, %v366
      %v393 = vadd.f32 %v357, %v366
      %v394 = vadd.f32 %v358, %v366
      %v395 = vadd.f32 %v359, %v366
      %v396 = vadd.f32 %v360, %v366
      %v397 = vadd.f32 %v361, %v366
      %v398 = vadd.f32 %v362, %v366
      %v399 = vadd.f32 %v363, %v366
      %v400 = vmax.f32 %v368, 0.0
      %v401 = vmax.f32 %v369, 0.0
      %v402 = vmax.f32 %v370, 0.0
      %v403 = vmax.f32 %v371, 0.0
      %v404 = vmax.f32 %v372, 0.0
      %v405 = vmax.f32 %v373, 0.0
      %v406 = vmax.f32 %v374, 0.0
      %v407 = vmax.f32 %v375, 0.0
      %v408 = vmax.f32 %v376, 0.0
      %v409 = vmax.f32 %v377, 0.0
      %v410 = vmax.f32 %v378, 0.0
      %v411 = vmax.f32 %v379, 0.0
      %v412 = vmax.f32 %v380, 0.0
      %v413 = vmax.f32 %v381, 0.0
      %v414 = vmax.f32 %v382, 0.0
      %v415 = vmax.f32 %v383, 0.0
      %v416 = vmax.f32 %v384, 0.0
      %v417 = vmax.f32 %v385, 0.0
      %v418 = vmax.f32 %v386, 0.0
      %v419 = vmax.f32 %v387, 0.0
      %v420 = vmax.f32 %v388, 0.0
      %v421 = vmax.f32 %v389, 0.0
      %v422 = vmax.f32 %v390, 0.0
      %v423 = vmax.f32 %v391, 0.0
      %v424 = vmax.f32 %v392, 0.0
      %v425 = vmax.f32 %v393, 0.0
      %v426 = vmax.f32 %v394, 0.0
      %v427 = vmax.f32 %v395, 0.0
      %v428 = vmax.f32 %v396, 0.0
      %v429 = vmax.f32 %v397, 0.0
      %v430 = vmax.f32 %v398, 0.0
      %v431 = vmax.f32 %v399, 0.0
      %v432 = vlaneseq
      %v433 = vshrl.u32 %v432, 7
      %v434 = vadd.s32 %v433, 8
      %v435 = vadd.s32 %v433, 16
      %v436 = vadd.s32 %v433, 24
      %v437 = vadd.s32 %v433, 32
      %v438 = vadd.s32 %v433, 40
      %v439 = vadd.s32 %v433, 48
      %v440 = vadd.s32 %v433, 56
      %v441 = vadd.s32 %v433, 64
      %v442 = vadd.s32 %v433, 72
      %v443 = vadd.s32 %v433, 80
      %v444 = vadd.s32 %v433, 88
      %v445 = vadd.s32 %v433, 96
      %v446 = vadd.s32 %v433, 104
      %v447 = vadd.s32 %v433, 112
      %v448 = vadd.s32 %v433, 120
      %v449 = vadd.s32 %v433, 128
      %v450 = vadd.s32 %v433, 136
      %v451 = vadd.s32 %v433, 144
      %v452 = vadd.s32 %v433, 152
      %v453 = vadd.s32 %v433, 160
      %v454 = vadd.s32 %v433, 168
      %v455 = vadd.s32 %v433, 176
      %v456 = vadd.s32 %v433, 184
      %v457 = vadd.s32 %v433, 192
      %v458 = vadd.s32 %v433, 200
      %v459 = vadd.s32 %v433, 208
      %v460 = vadd.s32 %v433, 216
      %v461 = vadd.s32 %v433, 224
      %v462 = vadd.s32 %v433, 232
      %v463 = vadd.s32 %v433, 240
      %v464 = vadd.s32 %v433, 248
      %vm465 = vcmp.lt.s32.totalorder %v433, 0
      %v466 = vsub.s32 0, %v433
      %v467 = vsel %vm465, %v466, %v433
      %v468 = vshrl.u32 %v467, 4
      %v469 = vand.u32 %v467, 15
      %v470 = vsub.s32 0, %v469
      %v471 = vsel %vm465, %v470, %v469
      %vm472 = vcmp.lt.s32.totalorder %v434, 0
      %v473 = vsub.s32 0, %v434
      %v474 = vsel %vm472, %v473, %v434
      %v475 = vshrl.u32 %v474, 4
      %v476 = vand.u32 %v474, 15
      %v477 = vsub.s32 0, %v476
      %v478 = vsel %vm472, %v477, %v476
      %vm479 = vcmp.lt.s32.totalorder %v435, 0
      %v480 = vsub.s32 0, %v435
      %v481 = vsel %vm479, %v480, %v435
      %v482 = vshrl.u32 %v481, 4
      %v483 = vand.u32 %v481, 15
      %v484 = vsub.s32 0, %v483
      %v485 = vsel %vm479, %v484, %v483
      %vm486 = vcmp.lt.s32.totalorder %v436, 0
      %v487 = vsub.s32 0, %v436
      %v488 = vsel %vm486, %v487, %v436
      %v489 = vshrl.u32 %v488, 4
      %v490 = vand.u32 %v488, 15
      %v491 = vsub.s32 0, %v490
      %v492 = vsel %vm486, %v491, %v490
      %vm493 = vcmp.lt.s32.totalorder %v437, 0
      %v494 = vsub.s32 0, %v437
      %v495 = vsel %vm493, %v494, %v437
      %v496 = vshrl.u32 %v495, 4
      %v497 = vand.u32 %v495, 15
      %v498 = vsub.s32 0, %v497
      %v499 = vsel %vm493, %v498, %v497
      %vm500 = vcmp.lt.s32.totalorder %v438, 0
      %v501 = vsub.s32 0, %v438
      %v502 = vsel %vm500, %v501, %v438
      %v503 = vshrl.u32 %v502, 4
      %v504 = vand.u32 %v502, 15
      %v505 = vsub.s32 0, %v504
      %v506 = vsel %vm500, %v505, %v504
      %vm507 = vcmp.lt.s32.totalorder %v439, 0
      %v508 = vsub.s32 0, %v439
      %v509 = vsel %vm507, %v508, %v439
      %v510 = vshrl.u32 %v509, 4
      %v511 = vand.u32 %v509, 15
      %v512 = vsub.s32 0, %v511
      %v513 = vsel %vm507, %v512, %v511
      %vm514 = vcmp.lt.s32.totalorder %v440, 0
      %v515 = vsub.s32 0, %v440
      %v516 = vsel %vm514, %v515, %v440
      %v517 = vshrl.u32 %v516, 4
      %v518 = vand.u32 %v516, 15
      %v519 = vsub.s32 0, %v518
      %v520 = vsel %vm514, %v519, %v518
      %vm521 = vcmp.lt.s32.totalorder %v441, 0
      %v522 = vsub.s32 0, %v441
      %v523 = vsel %vm521, %v522, %v441
      %v524 = vshrl.u32 %v523, 4
      %v525 = vand.u32 %v523, 15
      %v526 = vsub.s32 0, %v525
      %v527 = vsel %vm521, %v526, %v525
      %vm528 = vcmp.lt.s32.totalorder %v442, 0
      %v529 = vsub.s32 0, %v442
      %v530 = vsel %vm528, %v529, %v442
      %v531 = vshrl.u32 %v530, 4
      %v532 = vand.u32 %v530, 15
      %v533 = vsub.s32 0, %v532
      %v534 = vsel %vm528, %v533, %v532
      %vm535 = vcmp.lt.s32.totalorder %v443, 0
      %v536 = vsub.s32 0, %v443
      %v537 = vsel %vm535, %v536, %v443
      %v538 = vshrl.u32 %v537, 4
      %v539 = vand.u32 %v537, 15
      %v540 = vsub.s32 0, %v539
      %v541 = vsel %vm535, %v540, %v539
      %vm542 = vcmp.lt.s32.totalorder %v444, 0
      %v543 = vsub.s32 0, %v444
      %v544 = vsel %vm542, %v543, %v444
      %v545 = vshrl.u32 %v544, 4
      %v546 = vand.u32 %v544, 15
      %v547 = vsub.s32 0, %v546
      %v548 = vsel %vm542, %v547, %v546
      %vm549 = vcmp.lt.s32.totalorder %v445, 0
      %v550 = vsub.s32 0, %v445
      %v551 = vsel %vm549, %v550, %v445
      %v552 = vshrl.u32 %v551, 4
      %v553 = vand.u32 %v551, 15
      %v554 = vsub.s32 0, %v553
      %v555 = vsel %vm549, %v554, %v553
      %vm556 = vcmp.lt.s32.totalorder %v446, 0
      %v557 = vsub.s32 0, %v446
      %v558 = vsel %vm556, %v557, %v446
      %v559 = vshrl.u32 %v558, 4
      %v560 = vand.u32 %v558, 15
      %v561 = vsub.s32 0, %v560
      %v562 = vsel %vm556, %v561, %v560
      %vm563 = vcmp.lt.s32.totalorder %v447, 0
      %v564 = vsub.s32 0, %v447
      %v565 = vsel %vm563, %v564, %v447
      %v566 = vshrl.u32 %v565, 4
      %v567 = vand.u32 %v565, 15
      %v568 = vsub.s32 0, %v567
      %v569 = vsel %vm563, %v568, %v567
      %vm570 = vcmp.lt.s32.totalorder %v448, 0
      %v571 = vsub.s32 0, %v448
      %v572 = vsel %vm570, %v571, %v448
      %v573 = vshrl.u32 %v572, 4
      %v574 = vand.u32 %v572, 15
      %v575 = vsub.s32 0, %v574
      %v576 = vsel %vm570, %v575, %v574
      %vm577 = vcmp.lt.s32.totalorder %v449, 0
      %v578 = vsub.s32 0, %v449
      %v579 = vsel %vm577, %v578, %v449
      %v580 = vshrl.u32 %v579, 4
      %v581 = vand.u32 %v579, 15
      %v582 = vsub.s32 0, %v581
      %v583 = vsel %vm577, %v582, %v581
      %vm584 = vcmp.lt.s32.totalorder %v450, 0
      %v585 = vsub.s32 0, %v450
      %v586 = vsel %vm584, %v585, %v450
      %v587 = vshrl.u32 %v586, 4
      %v588 = vand.u32 %v586, 15
      %v589 = vsub.s32 0, %v588
      %v590 = vsel %vm584, %v589, %v588
      %vm591 = vcmp.lt.s32.totalorder %v451, 0
      %v592 = vsub.s32 0, %v451
      %v593 = vsel %vm591, %v592, %v451
      %v594 = vshrl.u32 %v593, 4
      %v595 = vand.u32 %v593, 15
      %v596 = vsub.s32 0, %v595
      %v597 = vsel %vm591, %v596, %v595
      %vm598 = vcmp.lt.s32.totalorder %v452, 0
      %v599 = vsub.s32 0, %v452
      %v600 = vsel %vm598, %v599, %v452
      %v601 = vshrl.u32 %v600, 4
      %v602 = vand.u32 %v600, 15
      %v603 = vsub.s32 0, %v602
      %v604 = vsel %vm598, %v603, %v602
      %vm605 = vcmp.lt.s32.totalorder %v453, 0
      %v606 = vsub.s32 0, %v453
      %v607 = vsel %vm605, %v606, %v453
      %v608 = vshrl.u32 %v607, 4
      %v609 = vand.u32 %v607, 15
      %v610 = vsub.s32 0, %v609
      %v611 = vsel %vm605, %v610, %v609
      %vm612 = vcmp.lt.s32.totalorder %v454, 0
      %v613 = vsub.s32 0, %v454
      %v614 = vsel %vm612, %v613, %v454
      %v615 = vshrl.u32 %v614, 4
      %v616 = vand.u32 %v614, 15
      %v617 = vsub.s32 0, %v616
      %v618 = vsel %vm612, %v617, %v616
      %vm619 = vcmp.lt.s32.totalorder %v455, 0
      %v620 = vsub.s32 0, %v455
      %v621 = vsel %vm619, %v620, %v455
      %v622 = vshrl.u32 %v621, 4
      %v623 = vand.u32 %v621, 15
      %v624 = vsub.s32 0, %v623
      %v625 = vsel %vm619, %v624, %v623
      %vm626 = vcmp.lt.s32.totalorder %v456, 0
      %v627 = vsub.s32 0, %v456
      %v628 = vsel %vm626, %v627, %v456
      %v629 = vshrl.u32 %v628, 4
      %v630 = vand.u32 %v628, 15
      %v631 = vsub.s32 0, %v630
      %v632 = vsel %vm626, %v631, %v630
      %vm633 = vcmp.lt.s32.totalorder %v457, 0
      %v634 = vsub.s32 0, %v457
      %v635 = vsel %vm633, %v634, %v457
      %v636 = vshrl.u32 %v635, 4
      %v637 = vand.u32 %v635, 15
      %v638 = vsub.s32 0, %v637
      %v639 = vsel %vm633, %v638, %v637
      %vm640 = vcmp.lt.s32.totalorder %v458, 0
      %v641 = vsub.s32 0, %v458
      %v642 = vsel %vm640, %v641, %v458
      %v643 = vshrl.u32 %v642, 4
      %v644 = vand.u32 %v642, 15
      %v645 = vsub.s32 0, %v644
      %v646 = vsel %vm640, %v645, %v644
      %vm647 = vcmp.lt.s32.totalorder %v459, 0
      %v648 = vsub.s32 0, %v459
      %v649 = vsel %vm647, %v648, %v459
      %v650 = vshrl.u32 %v649, 4
      %v651 = vand.u32 %v649, 15
      %v652 = vsub.s32 0, %v651
      %v653 = vsel %vm647, %v652, %v651
      %vm654 = vcmp.lt.s32.totalorder %v460, 0
      %v655 = vsub.s32 0, %v460
      %v656 = vsel %vm654, %v655, %v460
      %v657 = vshrl.u32 %v656, 4
      %v658 = vand.u32 %v656, 15
      %v659 = vsub.s32 0, %v658
      %v660 = vsel %vm654, %v659, %v658
      %vm661 = vcmp.lt.s32.totalorder %v461, 0
      %v662 = vsub.s32 0, %v461
      %v663 = vsel %vm661, %v662, %v461
      %v664 = vshrl.u32 %v663, 4
      %v665 = vand.u32 %v663, 15
      %v666 = vsub.s32 0, %v665
      %v667 = vsel %vm661, %v666, %v665
      %vm668 = vcmp.lt.s32.totalorder %v462, 0
      %v669 = vsub.s32 0, %v462
      %v670 = vsel %vm668, %v669, %v462
      %v671 = vshrl.u32 %v670, 4
      %v672 = vand.u32 %v670, 15
      %v673 = vsub.s32 0, %v672
      %v674 = vsel %vm668, %v673, %v672
      %vm675 = vcmp.lt.s32.totalorder %v463, 0
      %v676 = vsub.s32 0, %v463
      %v677 = vsel %vm675, %v676, %v463
      %v678 = vshrl.u32 %v677, 4
      %v679 = vand.u32 %v677, 15
      %v680 = vsub.s32 0, %v679
      %v681 = vsel %vm675, %v680, %v679
      %vm682 = vcmp.lt.s32.totalorder %v464, 0
      %v683 = vsub.s32 0, %v464
      %v684 = vsel %vm682, %v683, %v464
      %v685 = vshrl.u32 %v684, 4
      %v686 = vand.u32 %v684, 15
      %v687 = vsub.s32 0, %v686
      %v688 = vsel %vm682, %v687, %v686
      %vm689 = vcmp.ne.s32.totalorder %v471, 0
      %vm690 = vcmp.ne.s32.totalorder %v478, 0
      %vm691 = vcmp.ne.s32.totalorder %v485, 0
      %vm692 = vcmp.ne.s32.totalorder %v492, 0
      %vm693 = vcmp.ne.s32.totalorder %v499, 0
      %vm694 = vcmp.ne.s32.totalorder %v506, 0
      %vm695 = vcmp.ne.s32.totalorder %v513, 0
      %vm696 = vcmp.ne.s32.totalorder %v520, 0
      %vm697 = vcmp.ne.s32.totalorder %v527, 0
      %vm698 = vcmp.ne.s32.totalorder %v534, 0
      %vm699 = vcmp.ne.s32.totalorder %v541, 0
      %vm700 = vcmp.ne.s32.totalorder %v548, 0
      %vm701 = vcmp.ne.s32.totalorder %v555, 0
      %vm702 = vcmp.ne.s32.totalorder %v562, 0
      %vm703 = vcmp.ne.s32.totalorder %v569, 0
      %vm704 = vcmp.ne.s32.totalorder %v576, 0
      %vm705 = vcmp.ne.s32.totalorder %v583, 0
      %vm706 = vcmp.ne.s32.totalorder %v590, 0
      %vm707 = vcmp.ne.s32.totalorder %v597, 0
      %vm708 = vcmp.ne.s32.totalorder %v604, 0
      %vm709 = vcmp.ne.s32.totalorder %v611, 0
      %vm710 = vcmp.ne.s32.totalorder %v618, 0
      %vm711 = vcmp.ne.s32.totalorder %v625, 0
      %vm712 = vcmp.ne.s32.totalorder %v632, 0
      %vm713 = vcmp.ne.s32.totalorder %v639, 0
      %vm714 = vcmp.ne.s32.totalorder %v646, 0
      %vm715 = vcmp.ne.s32.totalorder %v653, 0
      %vm716 = vcmp.ne.s32.totalorder %v660, 0
      %vm717 = vcmp.ne.s32.totalorder %v667, 0
      %vm718 = vcmp.ne.s32.totalorder %v674, 0
      %vm719 = vcmp.ne.s32.totalorder %v681, 0
      %vm720 = vcmp.ne.s32.totalorder %v688, 0
      %vm721 = vcmp.lt.s32.totalorder %v471, 0
      %vm722 = vcmp.lt.s32.totalorder %v478, 0
      %vm723 = vcmp.lt.s32.totalorder %v485, 0
      %vm724 = vcmp.lt.s32.totalorder %v492, 0
      %vm725 = vcmp.lt.s32.totalorder %v499, 0
      %vm726 = vcmp.lt.s32.totalorder %v506, 0
      %vm727 = vcmp.lt.s32.totalorder %v513, 0
      %vm728 = vcmp.lt.s32.totalorder %v520, 0
      %vm729 = vcmp.lt.s32.totalorder %v527, 0
      %vm730 = vcmp.lt.s32.totalorder %v534, 0
      %vm731 = vcmp.lt.s32.totalorder %v541, 0
      %vm732 = vcmp.lt.s32.totalorder %v548, 0
      %vm733 = vcmp.lt.s32.totalorder %v555, 0
      %vm734 = vcmp.lt.s32.totalorder %v562, 0
      %vm735 = vcmp.lt.s32.totalorder %v569, 0
      %vm736 = vcmp.lt.s32.totalorder %v576, 0
      %vm737 = vcmp.lt.s32.totalorder %v583, 0
      %vm738 = vcmp.lt.s32.totalorder %v590, 0
      %vm739 = vcmp.lt.s32.totalorder %v597, 0
      %vm740 = vcmp.lt.s32.totalorder %v604, 0
      %vm741 = vcmp.lt.s32.totalorder %v611, 0
      %vm742 = vcmp.lt.s32.totalorder %v618, 0
      %vm743 = vcmp.lt.s32.totalorder %v625, 0
      %vm744 = vcmp.lt.s32.totalorder %v632, 0
      %vm745 = vcmp.lt.s32.totalorder %v639, 0
      %vm746 = vcmp.lt.s32.totalorder %v646, 0
      %vm747 = vcmp.lt.s32.totalorder %v653, 0
      %vm748 = vcmp.lt.s32.totalorder %v660, 0
      %vm749 = vcmp.lt.s32.totalorder %v667, 0
      %vm750 = vcmp.lt.s32.totalorder %v674, 0
      %vm751 = vcmp.lt.s32.totalorder %v681, 0
      %vm752 = vcmp.lt.s32.totalorder %v688, 0
      %vm753 = vmand %vm721, %vm689
      %vm754 = vmand %vm722, %vm690
      %vm755 = vmand %vm723, %vm691
      %vm756 = vmand %vm724, %vm692
      %vm757 = vmand %vm725, %vm693
      %vm758 = vmand %vm726, %vm694
      %vm759 = vmand %vm727, %vm695
      %vm760 = vmand %vm728, %vm696
      %vm761 = vmand %vm729, %vm697
      %vm762 = vmand %vm730, %vm698
      %vm763 = vmand %vm731, %vm699
      %vm764 = vmand %vm732, %vm700
      %vm765 = vmand %vm733, %vm701
      %vm766 = vmand %vm734, %vm702
      %vm767 = vmand %vm735, %vm703
      %vm768 = vmand %vm736, %vm704
      %vm769 = vmand %vm737, %vm705
      %vm770 = vmand %vm738, %vm706
      %vm771 = vmand %vm739, %vm707
      %vm772 = vmand %vm740, %vm708
      %vm773 = vmand %vm741, %vm709
      %vm774 = vmand %vm742, %vm710
      %vm775 = vmand %vm743, %vm711
      %vm776 = vmand %vm744, %vm712
      %vm777 = vmand %vm745, %vm713
      %vm778 = vmand %vm746, %vm714
      %vm779 = vmand %vm747, %vm715
      %vm780 = vmand %vm748, %vm716
      %vm781 = vmand %vm749, %vm717
      %vm782 = vmand %vm750, %vm718
      %vm783 = vmand %vm751, %vm719
      %vm784 = vmand %vm752, %vm720
      %v785 = vadd.s32 %v471, 16
      %v786 = vadd.s32 %v478, 16
      %v787 = vadd.s32 %v485, 16
      %v788 = vadd.s32 %v492, 16
      %v789 = vadd.s32 %v499, 16
      %v790 = vadd.s32 %v506, 16
      %v791 = vadd.s32 %v513, 16
      %v792 = vadd.s32 %v520, 16
      %v793 = vadd.s32 %v527, 16
      %v794 = vadd.s32 %v534, 16
      %v795 = vadd.s32 %v541, 16
      %v796 = vadd.s32 %v548, 16
      %v797 = vadd.s32 %v555, 16
      %v798 = vadd.s32 %v562, 16
      %v799 = vadd.s32 %v569, 16
      %v800 = vadd.s32 %v576, 16
      %v801 = vadd.s32 %v583, 16
      %v802 = vadd.s32 %v590, 16
      %v803 = vadd.s32 %v597, 16
      %v804 = vadd.s32 %v604, 16
      %v805 = vadd.s32 %v611, 16
      %v806 = vadd.s32 %v618, 16
      %v807 = vadd.s32 %v625, 16
      %v808 = vadd.s32 %v632, 16
      %v809 = vadd.s32 %v639, 16
      %v810 = vadd.s32 %v646, 16
      %v811 = vadd.s32 %v653, 16
      %v812 = vadd.s32 %v660, 16
      %v813 = vadd.s32 %v667, 16
      %v814 = vadd.s32 %v674, 16
      %v815 = vadd.s32 %v681, 16
      %v816 = vadd.s32 %v688, 16
      %v817 = vsel %vm753, %v785, %v471
      %v818 = vsel %vm754, %v786, %v478
      %v819 = vsel %vm755, %v787, %v485
      %v820 = vsel %vm756, %v788, %v492
      %v821 = vsel %vm757, %v789, %v499
      %v822 = vsel %vm758, %v790, %v506
      %v823 = vsel %vm759, %v791, %v513
      %v824 = vsel %vm760, %v792, %v520
      %v825 = vsel %vm761, %v793, %v527
      %v826 = vsel %vm762, %v794, %v534
      %v827 = vsel %vm763, %v795, %v541
      %v828 = vsel %vm764, %v796, %v548
      %v829 = vsel %vm765, %v797, %v555
      %v830 = vsel %vm766, %v798, %v562
      %v831 = vsel %vm767, %v799, %v569
      %v832 = vsel %vm768, %v800, %v576
      %v833 = vsel %vm769, %v801, %v583
      %v834 = vsel %vm770, %v802, %v590
      %v835 = vsel %vm771, %v803, %v597
      %v836 = vsel %vm772, %v804, %v604
      %v837 = vsel %vm773, %v805, %v611
      %v838 = vsel %vm774, %v806, %v618
      %v839 = vsel %vm775, %v807, %v625
      %v840 = vsel %vm776, %v808, %v632
      %v841 = vsel %vm777, %v809, %v639
      %v842 = vsel %vm778, %v810, %v646
      %v843 = vsel %vm779, %v811, %v653
      %v844 = vsel %vm780, %v812, %v660
      %v845 = vsel %vm781, %v813, %v667
      %v846 = vsel %vm782, %v814, %v674
      %v847 = vsel %vm783, %v815, %v681
      %v848 = vsel %vm784, %v816, %v688
      %v849 = vpack.c.bf16 %v400, %v400
      %v850 = vpack.c.bf16 %v401, %v401
      %v851 = vpack.c.bf16 %v402, %v402
      %v852 = vpack.c.bf16 %v403, %v403
      %v853 = vpack.c.bf16 %v404, %v404
      %v854 = vpack.c.bf16 %v405, %v405
      %v855 = vpack.c.bf16 %v406, %v406
      %v856 = vpack.c.bf16 %v407, %v407
      %v857 = vpack.c.bf16 %v408, %v408
      %v858 = vpack.c.bf16 %v409, %v409
      %v859 = vpack.c.bf16 %v410, %v410
      %v860 = vpack.c.bf16 %v411, %v411
      %v861 = vpack.c.bf16 %v412, %v412
      %v862 = vpack.c.bf16 %v413, %v413
      %v863 = vpack.c.bf16 %v414, %v414
      %v864 = vpack.c.bf16 %v415, %v415
      %v865 = vpack.c.bf16 %v416, %v416
      %v866 = vpack.c.bf16 %v417, %v417
      %v867 = vpack.c.bf16 %v418, %v418
      %v868 = vpack.c.bf16 %v419, %v419
      %v869 = vpack.c.bf16 %v420, %v420
      %v870 = vpack.c.bf16 %v421, %v421
      %v871 = vpack.c.bf16 %v422, %v422
      %v872 = vpack.c.bf16 %v423, %v423
      %v873 = vpack.c.bf16 %v424, %v424
      %v874 = vpack.c.bf16 %v425, %v425
      %v875 = vpack.c.bf16 %v426, %v426
      %v876 = vpack.c.bf16 %v427, %v427
      %v877 = vpack.c.bf16 %v428, %v428
      %v878 = vpack.c.bf16 %v429, %v429
      %v879 = vpack.c.bf16 %v430, %v430
      %v880 = vpack.c.bf16 %v431, %v431
      %vm881 = vcmp.eq.s32.totalorder %v817, 15
      %vm882 = vcmp.eq.s32.totalorder %v818, 15
      %vm883 = vcmp.eq.s32.totalorder %v819, 15
      %vm884 = vcmp.eq.s32.totalorder %v820, 15
      %vm885 = vcmp.eq.s32.totalorder %v821, 15
      %vm886 = vcmp.eq.s32.totalorder %v822, 15
      %vm887 = vcmp.eq.s32.totalorder %v823, 15
      %vm888 = vcmp.eq.s32.totalorder %v824, 15
      %vm889 = vcmp.eq.s32.totalorder %v825, 15
      %vm890 = vcmp.eq.s32.totalorder %v826, 15
      %vm891 = vcmp.eq.s32.totalorder %v827, 15
      %vm892 = vcmp.eq.s32.totalorder %v828, 15
      %vm893 = vcmp.eq.s32.totalorder %v829, 15
      %vm894 = vcmp.eq.s32.totalorder %v830, 15
      %vm895 = vcmp.eq.s32.totalorder %v831, 15
      %vm896 = vcmp.eq.s32.totalorder %v832, 15
      %vm897 = vcmp.eq.s32.totalorder %v833, 15
      %vm898 = vcmp.eq.s32.totalorder %v834, 15
      %vm899 = vcmp.eq.s32.totalorder %v835, 15
      %vm900 = vcmp.eq.s32.totalorder %v836, 15
      %vm901 = vcmp.eq.s32.totalorder %v837, 15
      %vm902 = vcmp.eq.s32.totalorder %v838, 15
      %vm903 = vcmp.eq.s32.totalorder %v839, 15
      %vm904 = vcmp.eq.s32.totalorder %v840, 15
      %vm905 = vcmp.eq.s32.totalorder %v841, 15
      %vm906 = vcmp.eq.s32.totalorder %v842, 15
      %vm907 = vcmp.eq.s32.totalorder %v843, 15
      %vm908 = vcmp.eq.s32.totalorder %v844, 15
      %vm909 = vcmp.eq.s32.totalorder %v845, 15
      %vm910 = vcmp.eq.s32.totalorder %v846, 15
      %vm911 = vcmp.eq.s32.totalorder %v847, 15
      %vm912 = vcmp.eq.s32.totalorder %v848, 15
      %v913 = vsel %vm881, 1, 0
      %v914 = vsel %vm882, 1, 0
      %v915 = vsel %vm883, 1, 0
      %v916 = vsel %vm884, 1, 0
      %v917 = vsel %vm885, 1, 0
      %v918 = vsel %vm886, 1, 0
      %v919 = vsel %vm887, 1, 0
      %v920 = vsel %vm888, 1, 0
      %v921 = vsel %vm889, 1, 0
      %v922 = vsel %vm890, 1, 0
      %v923 = vsel %vm891, 1, 0
      %v924 = vsel %vm892, 1, 0
      %v925 = vsel %vm893, 1, 0
      %v926 = vsel %vm894, 1, 0
      %v927 = vsel %vm895, 1, 0
      %v928 = vsel %vm896, 1, 0
      %v929 = vsel %vm897, 1, 0
      %v930 = vsel %vm898, 1, 0
      %v931 = vsel %vm899, 1, 0
      %v932 = vsel %vm900, 1, 0
      %v933 = vsel %vm901, 1, 0
      %v934 = vsel %vm902, 1, 0
      %v935 = vsel %vm903, 1, 0
      %v936 = vsel %vm904, 1, 0
      %v937 = vsel %vm905, 1, 0
      %v938 = vsel %vm906, 1, 0
      %v939 = vsel %vm907, 1, 0
      %v940 = vsel %vm908, 1, 0
      %v941 = vsel %vm909, 1, 0
      %v942 = vsel %vm910, 1, 0
      %v943 = vsel %vm911, 1, 0
      %v944 = vsel %vm912, 1, 0
      %vm945 = vcmp.eq.s32.totalorder %v913, 1
      %vm946 = vcmp.eq.s32.totalorder %v914, 1
      %vm947 = vcmp.eq.s32.totalorder %v915, 1
      %vm948 = vcmp.eq.s32.totalorder %v916, 1
      %vm949 = vcmp.eq.s32.totalorder %v917, 1
      %vm950 = vcmp.eq.s32.totalorder %v918, 1
      %vm951 = vcmp.eq.s32.totalorder %v919, 1
      %vm952 = vcmp.eq.s32.totalorder %v920, 1
      %vm953 = vcmp.eq.s32.totalorder %v921, 1
      %vm954 = vcmp.eq.s32.totalorder %v922, 1
      %vm955 = vcmp.eq.s32.totalorder %v923, 1
      %vm956 = vcmp.eq.s32.totalorder %v924, 1
      %vm957 = vcmp.eq.s32.totalorder %v925, 1
      %vm958 = vcmp.eq.s32.totalorder %v926, 1
      %vm959 = vcmp.eq.s32.totalorder %v927, 1
      %vm960 = vcmp.eq.s32.totalorder %v928, 1
      %vm961 = vcmp.eq.s32.totalorder %v929, 1
      %vm962 = vcmp.eq.s32.totalorder %v930, 1
      %vm963 = vcmp.eq.s32.totalorder %v931, 1
      %vm964 = vcmp.eq.s32.totalorder %v932, 1
      %vm965 = vcmp.eq.s32.totalorder %v933, 1
      %vm966 = vcmp.eq.s32.totalorder %v934, 1
      %vm967 = vcmp.eq.s32.totalorder %v935, 1
      %vm968 = vcmp.eq.s32.totalorder %v936, 1
      %vm969 = vcmp.eq.s32.totalorder %v937, 1
      %vm970 = vcmp.eq.s32.totalorder %v938, 1
      %vm971 = vcmp.eq.s32.totalorder %v939, 1
      %vm972 = vcmp.eq.s32.totalorder %v940, 1
      %vm973 = vcmp.eq.s32.totalorder %v941, 1
      %vm974 = vcmp.eq.s32.totalorder %v942, 1
      %vm975 = vcmp.eq.s32.totalorder %v943, 1
      %vm976 = vcmp.eq.s32.totalorder %v944, 1
      %v977 = vsel %vm945, 0.0, %v400
      %v978 = vsel %vm946, 0.0, %v401
      %v979 = vsel %vm947, 0.0, %v402
      %v980 = vsel %vm948, 0.0, %v403
      %v981 = vsel %vm949, 0.0, %v404
      %v982 = vsel %vm950, 0.0, %v405
      %v983 = vsel %vm951, 0.0, %v406
      %v984 = vsel %vm952, 0.0, %v407
      %v985 = vsel %vm953, 0.0, %v408
      %v986 = vsel %vm954, 0.0, %v409
      %v987 = vsel %vm955, 0.0, %v410
      %v988 = vsel %vm956, 0.0, %v411
      %v989 = vsel %vm957, 0.0, %v412
      %v990 = vsel %vm958, 0.0, %v413
      %v991 = vsel %vm959, 0.0, %v414
      %v992 = vsel %vm960, 0.0, %v415
      %v993 = vsel %vm961, 0.0, %v416
      %v994 = vsel %vm962, 0.0, %v417
      %v995 = vsel %vm963, 0.0, %v418
      %v996 = vsel %vm964, 0.0, %v419
      %v997 = vsel %vm965, 0.0, %v420
      %v998 = vsel %vm966, 0.0, %v421
      %v999 = vsel %vm967, 0.0, %v422
      %v1000 = vsel %vm968, 0.0, %v423
      %v1001 = vsel %vm969, 0.0, %v424
      %v1002 = vsel %vm970, 0.0, %v425
      %v1003 = vsel %vm971, 0.0, %v426
      %v1004 = vsel %vm972, 0.0, %v427
      %v1005 = vsel %vm973, 0.0, %v428
      %v1006 = vsel %vm974, 0.0, %v429
      %v1007 = vsel %vm975, 0.0, %v430
      %v1008 = vsel %vm976, 0.0, %v431
      %v1009 = vpack.c.bf16 %v977, %v977
      %v1010 = vpack.c.bf16 %v978, %v978
      %v1011 = vpack.c.bf16 %v979, %v979
      %v1012 = vpack.c.bf16 %v980, %v980
      %v1013 = vpack.c.bf16 %v981, %v981
      %v1014 = vpack.c.bf16 %v982, %v982
      %v1015 = vpack.c.bf16 %v983, %v983
      %v1016 = vpack.c.bf16 %v984, %v984
      %v1017 = vpack.c.bf16 %v985, %v985
      %v1018 = vpack.c.bf16 %v986, %v986
      %v1019 = vpack.c.bf16 %v987, %v987
      %v1020 = vpack.c.bf16 %v988, %v988
      %v1021 = vpack.c.bf16 %v989, %v989
      %v1022 = vpack.c.bf16 %v990, %v990
      %v1023 = vpack.c.bf16 %v991, %v991
      %v1024 = vpack.c.bf16 %v992, %v992
      %v1025 = vpack.c.bf16 %v993, %v993
      %v1026 = vpack.c.bf16 %v994, %v994
      %v1027 = vpack.c.bf16 %v995, %v995
      %v1028 = vpack.c.bf16 %v996, %v996
      %v1029 = vpack.c.bf16 %v997, %v997
      %v1030 = vpack.c.bf16 %v998, %v998
      %v1031 = vpack.c.bf16 %v999, %v999
      %v1032 = vpack.c.bf16 %v1000, %v1000
      %v1033 = vpack.c.bf16 %v1001, %v1001
      %v1034 = vpack.c.bf16 %v1002, %v1002
      %v1035 = vpack.c.bf16 %v1003, %v1003
      %v1036 = vpack.c.bf16 %v1004, %v1004
      %v1037 = vpack.c.bf16 %v1005, %v1005
      %v1038 = vpack.c.bf16 %v1006, %v1006
      %v1039 = vpack.c.bf16 %v1007, %v1007
      %v1040 = vpack.c.bf16 %v1008, %v1008
      %vm1041 = vcmp.eq.s32.totalorder %v817, 0
      %vm1042 = vcmp.eq.s32.totalorder %v818, 0
      %vm1043 = vcmp.eq.s32.totalorder %v819, 0
      %vm1044 = vcmp.eq.s32.totalorder %v820, 0
      %vm1045 = vcmp.eq.s32.totalorder %v821, 0
      %vm1046 = vcmp.eq.s32.totalorder %v822, 0
      %vm1047 = vcmp.eq.s32.totalorder %v823, 0
      %vm1048 = vcmp.eq.s32.totalorder %v824, 0
      %vm1049 = vcmp.eq.s32.totalorder %v825, 0
      %vm1050 = vcmp.eq.s32.totalorder %v826, 0
      %vm1051 = vcmp.eq.s32.totalorder %v827, 0
      %vm1052 = vcmp.eq.s32.totalorder %v828, 0
      %vm1053 = vcmp.eq.s32.totalorder %v829, 0
      %vm1054 = vcmp.eq.s32.totalorder %v830, 0
      %vm1055 = vcmp.eq.s32.totalorder %v831, 0
      %vm1056 = vcmp.eq.s32.totalorder %v832, 0
      %vm1057 = vcmp.eq.s32.totalorder %v833, 0
      %vm1058 = vcmp.eq.s32.totalorder %v834, 0
      %vm1059 = vcmp.eq.s32.totalorder %v835, 0
      %vm1060 = vcmp.eq.s32.totalorder %v836, 0
      %vm1061 = vcmp.eq.s32.totalorder %v837, 0
      %vm1062 = vcmp.eq.s32.totalorder %v838, 0
      %vm1063 = vcmp.eq.s32.totalorder %v839, 0
      %vm1064 = vcmp.eq.s32.totalorder %v840, 0
      %vm1065 = vcmp.eq.s32.totalorder %v841, 0
      %vm1066 = vcmp.eq.s32.totalorder %v842, 0
      %vm1067 = vcmp.eq.s32.totalorder %v843, 0
      %vm1068 = vcmp.eq.s32.totalorder %v844, 0
      %vm1069 = vcmp.eq.s32.totalorder %v845, 0
      %vm1070 = vcmp.eq.s32.totalorder %v846, 0
      %vm1071 = vcmp.eq.s32.totalorder %v847, 0
      %vm1072 = vcmp.eq.s32.totalorder %v848, 0
      %v1073 = vsel %vm1041, 1, 0
      %v1074 = vsel %vm1042, 1, 0
      %v1075 = vsel %vm1043, 1, 0
      %v1076 = vsel %vm1044, 1, 0
      %v1077 = vsel %vm1045, 1, 0
      %v1078 = vsel %vm1046, 1, 0
      %v1079 = vsel %vm1047, 1, 0
      %v1080 = vsel %vm1048, 1, 0
      %v1081 = vsel %vm1049, 1, 0
      %v1082 = vsel %vm1050, 1, 0
      %v1083 = vsel %vm1051, 1, 0
      %v1084 = vsel %vm1052, 1, 0
      %v1085 = vsel %vm1053, 1, 0
      %v1086 = vsel %vm1054, 1, 0
      %v1087 = vsel %vm1055, 1, 0
      %v1088 = vsel %vm1056, 1, 0
      %v1089 = vsel %vm1057, 1, 0
      %v1090 = vsel %vm1058, 1, 0
      %v1091 = vsel %vm1059, 1, 0
      %v1092 = vsel %vm1060, 1, 0
      %v1093 = vsel %vm1061, 1, 0
      %v1094 = vsel %vm1062, 1, 0
      %v1095 = vsel %vm1063, 1, 0
      %v1096 = vsel %vm1064, 1, 0
      %v1097 = vsel %vm1065, 1, 0
      %v1098 = vsel %vm1066, 1, 0
      %v1099 = vsel %vm1067, 1, 0
      %v1100 = vsel %vm1068, 1, 0
      %v1101 = vsel %vm1069, 1, 0
      %v1102 = vsel %vm1070, 1, 0
      %v1103 = vsel %vm1071, 1, 0
      %v1104 = vsel %vm1072, 1, 0
      %vm1105 = vcmp.eq.s32.totalorder %v1073, 1
      %vm1106 = vcmp.eq.s32.totalorder %v1074, 1
      %vm1107 = vcmp.eq.s32.totalorder %v1075, 1
      %vm1108 = vcmp.eq.s32.totalorder %v1076, 1
      %vm1109 = vcmp.eq.s32.totalorder %v1077, 1
      %vm1110 = vcmp.eq.s32.totalorder %v1078, 1
      %vm1111 = vcmp.eq.s32.totalorder %v1079, 1
      %vm1112 = vcmp.eq.s32.totalorder %v1080, 1
      %vm1113 = vcmp.eq.s32.totalorder %v1081, 1
      %vm1114 = vcmp.eq.s32.totalorder %v1082, 1
      %vm1115 = vcmp.eq.s32.totalorder %v1083, 1
      %vm1116 = vcmp.eq.s32.totalorder %v1084, 1
      %vm1117 = vcmp.eq.s32.totalorder %v1085, 1
      %vm1118 = vcmp.eq.s32.totalorder %v1086, 1
      %vm1119 = vcmp.eq.s32.totalorder %v1087, 1
      %vm1120 = vcmp.eq.s32.totalorder %v1088, 1
      %vm1121 = vcmp.eq.s32.totalorder %v1089, 1
      %vm1122 = vcmp.eq.s32.totalorder %v1090, 1
      %vm1123 = vcmp.eq.s32.totalorder %v1091, 1
      %vm1124 = vcmp.eq.s32.totalorder %v1092, 1
      %vm1125 = vcmp.eq.s32.totalorder %v1093, 1
      %vm1126 = vcmp.eq.s32.totalorder %v1094, 1
      %vm1127 = vcmp.eq.s32.totalorder %v1095, 1
      %vm1128 = vcmp.eq.s32.totalorder %v1096, 1
      %vm1129 = vcmp.eq.s32.totalorder %v1097, 1
      %vm1130 = vcmp.eq.s32.totalorder %v1098, 1
      %vm1131 = vcmp.eq.s32.totalorder %v1099, 1
      %vm1132 = vcmp.eq.s32.totalorder %v1100, 1
      %vm1133 = vcmp.eq.s32.totalorder %v1101, 1
      %vm1134 = vcmp.eq.s32.totalorder %v1102, 1
      %vm1135 = vcmp.eq.s32.totalorder %v1103, 1
      %vm1136 = vcmp.eq.s32.totalorder %v1104, 1
      %v1137 = vsel %vm1105, 0.0, %v400
      %v1138 = vsel %vm1106, 0.0, %v401
      %v1139 = vsel %vm1107, 0.0, %v402
      %v1140 = vsel %vm1108, 0.0, %v403
      %v1141 = vsel %vm1109, 0.0, %v404
      %v1142 = vsel %vm1110, 0.0, %v405
      %v1143 = vsel %vm1111, 0.0, %v406
      %v1144 = vsel %vm1112, 0.0, %v407
      %v1145 = vsel %vm1113, 0.0, %v408
      %v1146 = vsel %vm1114, 0.0, %v409
      %v1147 = vsel %vm1115, 0.0, %v410
      %v1148 = vsel %vm1116, 0.0, %v411
      %v1149 = vsel %vm1117, 0.0, %v412
      %v1150 = vsel %vm1118, 0.0, %v413
      %v1151 = vsel %vm1119, 0.0, %v414
      %v1152 = vsel %vm1120, 0.0, %v415
      %v1153 = vsel %vm1121, 0.0, %v416
      %v1154 = vsel %vm1122, 0.0, %v417
      %v1155 = vsel %vm1123, 0.0, %v418
      %v1156 = vsel %vm1124, 0.0, %v419
      %v1157 = vsel %vm1125, 0.0, %v420
      %v1158 = vsel %vm1126, 0.0, %v421
      %v1159 = vsel %vm1127, 0.0, %v422
      %v1160 = vsel %vm1128, 0.0, %v423
      %v1161 = vsel %vm1129, 0.0, %v424
      %v1162 = vsel %vm1130, 0.0, %v425
      %v1163 = vsel %vm1131, 0.0, %v426
      %v1164 = vsel %vm1132, 0.0, %v427
      %v1165 = vsel %vm1133, 0.0, %v428
      %v1166 = vsel %vm1134, 0.0, %v429
      %v1167 = vsel %vm1135, 0.0, %v430
      %v1168 = vsel %vm1136, 0.0, %v431
      %v1169 = vpack.c.bf16 %v1137, %v1137
      %v1170 = vpack.c.bf16 %v1138, %v1138
      %v1171 = vpack.c.bf16 %v1139, %v1139
      %v1172 = vpack.c.bf16 %v1140, %v1140
      %v1173 = vpack.c.bf16 %v1141, %v1141
      %v1174 = vpack.c.bf16 %v1142, %v1142
      %v1175 = vpack.c.bf16 %v1143, %v1143
      %v1176 = vpack.c.bf16 %v1144, %v1144
      %v1177 = vpack.c.bf16 %v1145, %v1145
      %v1178 = vpack.c.bf16 %v1146, %v1146
      %v1179 = vpack.c.bf16 %v1147, %v1147
      %v1180 = vpack.c.bf16 %v1148, %v1148
      %v1181 = vpack.c.bf16 %v1149, %v1149
      %v1182 = vpack.c.bf16 %v1150, %v1150
      %v1183 = vpack.c.bf16 %v1151, %v1151
      %v1184 = vpack.c.bf16 %v1152, %v1152
      %v1185 = vpack.c.bf16 %v1153, %v1153
      %v1186 = vpack.c.bf16 %v1154, %v1154
      %v1187 = vpack.c.bf16 %v1155, %v1155
      %v1188 = vpack.c.bf16 %v1156, %v1156
      %v1189 = vpack.c.bf16 %v1157, %v1157
      %v1190 = vpack.c.bf16 %v1158, %v1158
      %v1191 = vpack.c.bf16 %v1159, %v1159
      %v1192 = vpack.c.bf16 %v1160, %v1160
      %v1193 = vpack.c.bf16 %v1161, %v1161
      %v1194 = vpack.c.bf16 %v1162, %v1162
      %v1195 = vpack.c.bf16 %v1163, %v1163
      %v1196 = vpack.c.bf16 %v1164, %v1164
      %v1197 = vpack.c.bf16 %v1165, %v1165
      %v1198 = vpack.c.bf16 %v1166, %v1166
      %v1199 = vpack.c.bf16 %v1167, %v1167
      %v1200 = vpack.c.bf16 %v1168, %v1168
      %1201 = vst [vmem:[#allocation2] sm:$0xf] 0
      %1202 = vst [vmem:[#allocation2 + $0x24] sm:$0xf] 0
      %vm1203 = vcmask 1040384
      %vm1204 = vsmask.f32 256
      %vm1205 = vmand %vm1203, %vm1204
      %v1206 = vld [vmem:[#allocation2 + $0x48] sm:$0x1]
      %v1207 = vsel %vm1205, 0, %v1206
      %1208 = vst [vmem:[#allocation2 + $0x48] sm:$0x1] %v1207
      %vm1209 = vsmask.f32 4368
      %vm1210 = vmor %vm1204, %vm1209
      %v1212 = vshrl.u32 %v1009, 16
      %v1214 = vrot.slane %v1212, 7
      %v1215 = vshll.u32 %v1009, 16
      %v1217 = vor.u32 %v1214, %v1215
      %v1218 = vrot.slane %v1214, 4
      %v1220 = vshrl.u32 %v1010, 16
      %v1222 = vrot.slane %v1220, 7
      %v1223 = vshll.u32 %v1010, 16
      %v1225 = vor.u32 %v1222, %v1223
      %v1226 = vsel %vm1210, %v1218, %v1225
      %v1227 = vrot.slane %v1222, 4
      %v1229 = vshrl.u32 %v1011, 16
      %v1231 = vrot.slane %v1229, 7
      %v1232 = vshll.u32 %v1011, 16
      %v1234 = vor.u32 %v1231, %v1232
      %v1235 = vsel %vm1210, %v1227, %v1234
      %v1236 = vrot.slane %v1231, 4
      %v1238 = vshrl.u32 %v1012, 16
      %v1240 = vrot.slane %v1238, 7
      %v1241 = vshll.u32 %v1012, 16
      %v1243 = vor.u32 %v1240, %v1241
      %v1244 = vsel %vm1210, %v1236, %v1243
      %v1245 = vrot.slane %v1240, 4
      %v1247 = vshrl.u32 %v1013, 16
      %v1249 = vrot.slane %v1247, 7
      %v1250 = vshll.u32 %v1013, 16
      %v1252 = vor.u32 %v1249, %v1250
      %v1253 = vsel %vm1210, %v1245, %v1252
      %v1254 = vrot.slane %v1249, 4
      %v1256 = vshrl.u32 %v1014, 16
      %v1258 = vrot.slane %v1256, 7
      %v1259 = vshll.u32 %v1014, 16
      %v1261 = vor.u32 %v1258, %v1259
      %v1262 = vsel %vm1210, %v1254, %v1261
      %v1263 = vrot.slane %v1258, 4
      %v1265 = vshrl.u32 %v1015, 16
      %v1267 = vrot.slane %v1265, 7
      %v1268 = vshll.u32 %v1015, 16
      %v1270 = vor.u32 %v1267, %v1268
      %v1271 = vsel %vm1210, %v1263, %v1270
      %v1272 = vrot.slane %v1267, 4
      %v1274 = vshrl.u32 %v1016, 16
      %v1276 = vrot.slane %v1274, 7
      %v1277 = vshll.u32 %v1016, 16
      %v1279 = vor.u32 %v1276, %v1277
      %v1280 = vsel %vm1210, %v1272, %v1279
      %v1281 = vrot.slane %v1276, 4
      %v1283 = vshrl.u32 %v1017, 16
      %v1285 = vrot.slane %v1283, 7
      %v1286 = vshll.u32 %v1017, 16
      %v1288 = vor.u32 %v1285, %v1286
      %v1289 = vsel %vm1210, %v1281, %v1288
      %v1290 = vrot.slane %v1285, 4
      %v1292 = vshrl.u32 %v1018, 16
      %v1294 = vrot.slane %v1292, 7
      %v1295 = vshll.u32 %v1018, 16
      %v1297 = vor.u32 %v1294, %v1295
      %v1298 = vsel %vm1210, %v1290, %v1297
      %v1299 = vrot.slane %v1294, 4
      %v1301 = vshrl.u32 %v1019, 16
      %v1303 = vrot.slane %v1301, 7
      %v1304 = vshll.u32 %v1019, 16
      %v1306 = vor.u32 %v1303, %v1304
      %v1307 = vsel %vm1210, %v1299, %v1306
      %v1308 = vrot.slane %v1303, 4
      %v1310 = vshrl.u32 %v1020, 16
      %v1312 = vrot.slane %v1310, 7
      %v1313 = vshll.u32 %v1020, 16
      %v1315 = vor.u32 %v1312, %v1313
      %v1316 = vsel %vm1210, %v1308, %v1315
      %v1317 = vrot.slane %v1312, 4
      %v1319 = vshrl.u32 %v1021, 16
      %v1321 = vrot.slane %v1319, 7
      %v1322 = vshll.u32 %v1021, 16
      %v1324 = vor.u32 %v1321, %v1322
      %v1325 = vsel %vm1210, %v1317, %v1324
      %v1326 = vrot.slane %v1321, 4
      %v1328 = vshrl.u32 %v1022, 16
      %v1330 = vrot.slane %v1328, 7
      %v1331 = vshll.u32 %v1022, 16
      %v1333 = vor.u32 %v1330, %v1331
      %v1334 = vsel %vm1210, %v1326, %v1333
      %v1335 = vrot.slane %v1330, 4
      %v1337 = vshrl.u32 %v1023, 16
      %v1339 = vrot.slane %v1337, 7
      %v1340 = vshll.u32 %v1023, 16
      %v1342 = vor.u32 %v1339, %v1340
      %v1343 = vsel %vm1210, %v1335, %v1342
      %v1344 = vrot.slane %v1339, 4
      %v1346 = vshrl.u32 %v1024, 16
      %v1348 = vrot.slane %v1346, 7
      %v1349 = vshll.u32 %v1024, 16
      %v1351 = vor.u32 %v1348, %v1349
      %v1352 = vsel %vm1210, %v1344, %v1351
      %v1353 = vrot.slane %v1348, 4
      %v1355 = vshrl.u32 %v1025, 16
      %v1357 = vrot.slane %v1355, 7
      %v1358 = vshll.u32 %v1025, 16
      %v1360 = vor.u32 %v1357, %v1358
      %v1361 = vsel %vm1210, %v1353, %v1360
      %v1362 = vrot.slane %v1357, 4
      %v1364 = vshrl.u32 %v1026, 16
      %v1366 = vrot.slane %v1364, 7
      %v1367 = vshll.u32 %v1026, 16
      %v1369 = vor.u32 %v1366, %v1367
      %v1370 = vsel %vm1210, %v1362, %v1369
      %v1371 = vrot.slane %v1366, 4
      %v1373 = vshrl.u32 %v1027, 16
      %v1375 = vrot.slane %v1373, 7
      %v1376 = vshll.u32 %v1027, 16
      %v1378 = vor.u32 %v1375, %v1376
      %v1379 = vsel %vm1210, %v1371, %v1378
      %v1380 = vrot.slane %v1375, 4
      %v1382 = vshrl.u32 %v1028, 16
      %v1384 = vrot.slane %v1382, 7
      %v1385 = vshll.u32 %v1028, 16
      %v1387 = vor.u32 %v1384, %v1385
      %v1388 = vsel %vm1210, %v1380, %v1387
      %v1389 = vrot.slane %v1384, 4
      %v1391 = vshrl.u32 %v1029, 16
      %v1393 = vrot.slane %v1391, 7
      %v1394 = vshll.u32 %v1029, 16
      %v1396 = vor.u32 %v1393, %v1394
      %v1397 = vsel %vm1210, %v1389, %v1396
      %v1398 = vrot.slane %v1393, 4
      %v1400 = vshrl.u32 %v1030, 16
      %v1402 = vrot.slane %v1400, 7
      %v1403 = vshll.u32 %v1030, 16
      %v1405 = vor.u32 %v1402, %v1403
      %v1406 = vsel %vm1210, %v1398, %v1405
      %v1407 = vrot.slane %v1402, 4
      %v1409 = vshrl.u32 %v1031, 16
      %v1411 = vrot.slane %v1409, 7
      %v1412 = vshll.u32 %v1031, 16
      %v1414 = vor.u32 %v1411, %v1412
      %v1415 = vsel %vm1210, %v1407, %v1414
      %v1416 = vrot.slane %v1411, 4
      %v1418 = vshrl.u32 %v1032, 16
      %v1420 = vrot.slane %v1418, 7
      %v1421 = vshll.u32 %v1032, 16
      %v1423 = vor.u32 %v1420, %v1421
      %v1424 = vsel %vm1210, %v1416, %v1423
      %v1425 = vrot.slane %v1420, 4
      %v1427 = vshrl.u32 %v1033, 16
      %v1429 = vrot.slane %v1427, 7
      %v1430 = vshll.u32 %v1033, 16
      %v1432 = vor.u32 %v1429, %v1430
      %v1433 = vsel %vm1210, %v1425, %v1432
      %v1434 = vrot.slane %v1429, 4
      %v1436 = vshrl.u32 %v1034, 16
      %v1438 = vrot.slane %v1436, 7
      %v1439 = vshll.u32 %v1034, 16
      %v1441 = vor.u32 %v1438, %v1439
      %v1442 = vsel %vm1210, %v1434, %v1441
      %v1443 = vrot.slane %v1438, 4
      %v1445 = vshrl.u32 %v1035, 16
      %v1447 = vrot.slane %v1445, 7
      %v1448 = vshll.u32 %v1035, 16
      %v1450 = vor.u32 %v1447, %v1448
      %v1451 = vsel %vm1210, %v1443, %v1450
      %v1452 = vrot.slane %v1447, 4
      %v1454 = vshrl.u32 %v1036, 16
      %v1456 = vrot.slane %v1454, 7
      %v1457 = vshll.u32 %v1036, 16
      %v1459 = vor.u32 %v1456, %v1457
      %v1460 = vsel %vm1210, %v1452, %v1459
      %v1461 = vrot.slane %v1456, 4
      %v1463 = vshrl.u32 %v1037, 16
      %v1465 = vrot.slane %v1463, 7
      %v1466 = vshll.u32 %v1037, 16
      %v1468 = vor.u32 %v1465, %v1466
      %v1469 = vsel %vm1210, %v1461, %v1468
      %v1470 = vrot.slane %v1465, 4
      %v1472 = vshrl.u32 %v1038, 16
      %v1474 = vrot.slane %v1472, 7
      %v1475 = vshll.u32 %v1038, 16
      %v1477 = vor.u32 %v1474, %v1475
      %v1478 = vsel %vm1210, %v1470, %v1477
      %vm1509 = vcmask 1043456
      %vm1510 = vsmask.f32 7938
      %vm1511 = vmand %vm1509, %vm1510
      %v1512 = vld [vmem:[#allocation2 + $0x48] sm:$0xf]
      %v1513 = vsel %vm1511, %v1217, %v1512
      %1514 = vst [vmem:[#allocation2 + $0x48] sm:$0xf] %v1513
      %1515 = vst [vmem:[#allocation2 + $0x6c] sm:$0xf] %v1226
      %1516 = vst [vmem:[#allocation2 + $0x90] sm:$0xf] %v1235
      %1517 = vst [vmem:[#allocation2 + $0xb4] sm:$0xf] %v1244
      %1518 = vst [vmem:[#allocation2 + $0xd8] sm:$0xf] %v1253
      %1519 = vst [vmem:[#allocation2 + $0xfc] sm:$0xf] %v1262
      %1520 = vst [vmem:[#allocation2 + $0x120] sm:$0xf] %v1271
      %1521 = vst [vmem:[#allocation2 + $0x144] sm:$0xf] %v1280
      %1522 = vst [vmem:[#allocation2 + $0x168] sm:$0xf] %v1289
      %1523 = vst [vmem:[#allocation2 + $0x18c] sm:$0xf] %v1298
      %1524 = vst [vmem:[#allocation2 + $0x1b0] sm:$0xf] %v1307
      %1525 = vst [vmem:[#allocation2 + $0x1d4] sm:$0xf] %v1316
      %1526 = vst [vmem:[#allocation2 + $0x1f8] sm:$0xf] %v1325
      %1527 = vst [vmem:[#allocation2 + $0x21c] sm:$0xf] %v1334
      %1528 = vst [vmem:[#allocation2 + $0x240] sm:$0xf] %v1343
      %1529 = vst [vmem:[#allocation2 + $0x264] sm:$0xf] %v1352
      %1530 = vst [vmem:[#allocation2 + $0x288] sm:$0xf] %v1361
      %1531 = vst [vmem:[#allocation2 + $0x2ac] sm:$0xf] %v1370
      %1532 = vst [vmem:[#allocation2 + $0x2d0] sm:$0xf] %v1379
      %1533 = vst [vmem:[#allocation2 + $0x2f4] sm:$0xf] %v1388
      %1534 = vst [vmem:[#allocation2 + $0x318] sm:$0xf] %v1397
      %1535 = vst [vmem:[#allocation2 + $0x33c] sm:$0xf] %v1406
      %1536 = vst [vmem:[#allocation2 + $0x360] sm:$0xf] %v1415
      %1537 = vst [vmem:[#allocation2 + $0x384] sm:$0xf] %v1424
      %1538 = vst [vmem:[#allocation2 + $0x3a8] sm:$0xf] %v1433
      %1539 = vst [vmem:[#allocation2 + $0x3cc] sm:$0xf] %v1442
      %1540 = vst [vmem:[#allocation2 + $0x3f0] sm:$0xf] %v1451
      %1541 = vst [vmem:[#allocation2 + $0x414] sm:$0xf] %v1460
      %1542 = vst [vmem:[#allocation2 + $0x438] sm:$0xf] %v1469
      %1543 = vst [vmem:[#allocation2 + $0x45c] sm:$0xf] %v1478
      %1544 = vst [vmem:[#allocation2 + $0x4] sm:$0xf] 0
      %1545 = vst [vmem:[#allocation2 + $0x28] sm:$0xf] 0
      %1546 = vst [vmem:[#allocation2 + $0x4c] sm:$0xf] %v849
      %1547 = vst [vmem:[#allocation2 + $0x70] sm:$0xf] %v850
      %1548 = vst [vmem:[#allocation2 + $0x94] sm:$0xf] %v851
      %1549 = vst [vmem:[#allocation2 + $0xb8] sm:$0xf] %v852
      %1550 = vst [vmem:[#allocation2 + $0xdc] sm:$0xf] %v853
      %1551 = vst [vmem:[#allocation2 + $0x100] sm:$0xf] %v854
      %1552 = vst [vmem:[#allocation2 + $0x124] sm:$0xf] %v855
      %1553 = vst [vmem:[#allocation2 + $0x148] sm:$0xf] %v856
      %1554 = vst [vmem:[#allocation2 + $0x16c] sm:$0xf] %v857
      %1555 = vst [vmem:[#allocation2 + $0x190] sm:$0xf] %v858
      %1556 = vst [vmem:[#allocation2 + $0x1b4] sm:$0xf] %v859
      %1557 = vst [vmem:[#allocation2 + $0x1d8] sm:$0xf] %v860
      %1558 = vst [vmem:[#allocation2 + $0x1fc] sm:$0xf] %v861
      %1559 = vst [vmem:[#allocation2 + $0x220] sm:$0xf] %v862
      %1560 = vst [vmem:[#allocation2 + $0x244] sm:$0xf] %v863
      %1561 = vst [vmem:[#allocation2 + $0x268] sm:$0xf] %v864
      %1562 = vst [vmem:[#allocation2 + $0x28c] sm:$0xf] %v865
      %1563 = vst [vmem:[#allocation2 + $0x2b0] sm:$0xf] %v866
      %1564 = vst [vmem:[#allocation2 + $0x2d4] sm:$0xf] %v867
      %1565 = vst [vmem:[#allocation2 + $0x2f8] sm:$0xf] %v868
      %1566 = vst [vmem:[#allocation2 + $0x31c] sm:$0xf] %v869
      %1567 = vst [vmem:[#allocation2 + $0x340] sm:$0xf] %v870
      %1568 = vst [vmem:[#allocation2 + $0x364] sm:$0xf] %v871
      %1569 = vst [vmem:[#allocation2 + $0x388] sm:$0xf] %v872
      %1570 = vst [vmem:[#allocation2 + $0x3ac] sm:$0xf] %v873
      %1571 = vst [vmem:[#allocation2 + $0x3d0] sm:$0xf] %v874
      %1572 = vst [vmem:[#allocation2 + $0x3f4] sm:$0xf] %v875
      %1573 = vst [vmem:[#allocation2 + $0x418] sm:$0xf] %v876
      %1574 = vst [vmem:[#allocation2 + $0x43c] sm:$0xf] %v877
      %1575 = vst [vmem:[#allocation2 + $0x460] sm:$0xf] %v878
      %1576 = vst [vmem:[#allocation2 + $0x8] sm:$0xf] 0
      %vm1577 = vsmask.f32 3328
      %vm1578 = vmand %vm1509, %vm1577
      %v1579 = vld [vmem:[#allocation2 + $0x2c] sm:$0xf]
      %v1580 = vsel %vm1578, 0, %v1579
      %1581 = vst [vmem:[#allocation2 + $0x2c] sm:$0xf] %v1580
      %vm1582 = vsmask.f32 7440
      %vm1583 = vmor %vm1577, %vm1582
      %v1585 = vshll.u32 %v1169, 16
      %v1587 = vrot.slane %v1585, 5
      %v1588 = vshrl.u32 %v1169, 16
      %v1590 = vrot.slane %v1588, 4
      %v1591 = vor.u32 %v1590, %v1587
      %v1592 = vrot.slane %v1591, 4
      %v1594 = vshll.u32 %v1170, 16
      %v1596 = vrot.slane %v1594, 5
      %v1597 = vsel %vm1583, %v1592, %v1596
      %v1598 = vshrl.u32 %v1170, 16
      %v1600 = vrot.slane %v1598, 4
      %v1601 = vor.u32 %v1600, %v1596
      %v1602 = vrot.slane %v1601, 4
      %v1604 = vshll.u32 %v1171, 16
      %v1606 = vrot.slane %v1604, 5
      %v1607 = vsel %vm1583, %v1602, %v1606
      %v1608 = vshrl.u32 %v1171, 16
      %v1610 = vrot.slane %v1608, 4
      %v1611 = vor.u32 %v1610, %v1606
      %v1612 = vrot.slane %v1611, 4
      %v1614 = vshll.u32 %v1172, 16
      %v1616 = vrot.slane %v1614, 5
      %v1617 = vsel %vm1583, %v1612, %v1616
      %v1618 = vshrl.u32 %v1172, 16
      %v1620 = vrot.slane %v1618, 4
      %v1621 = vor.u32 %v1620, %v1616
      %v1622 = vrot.slane %v1621, 4
      %v1624 = vshll.u32 %v1173, 16
      %v1626 = vrot.slane %v1624, 5
      %v1627 = vsel %vm1583, %v1622, %v1626
      %v1628 = vshrl.u32 %v1173, 16
      %v1630 = vrot.slane %v1628, 4
      %v1631 = vor.u32 %v1630, %v1626
      %v1632 = vrot.slane %v1631, 4
      %v1634 = vshll.u32 %v1174, 16
      %v1636 = vrot.slane %v1634, 5
      %v1637 = vsel %vm1583, %v1632, %v1636
      %v1638 = vshrl.u32 %v1174, 16
      %v1640 = vrot.slane %v1638, 4
      %v1641 = vor.u32 %v1640, %v1636
      %v1642 = vrot.slane %v1641, 4
      %v1644 = vshll.u32 %v1175, 16
      %v1646 = vrot.slane %v1644, 5
      %v1647 = vsel %vm1583, %v1642, %v1646
      %v1648 = vshrl.u32 %v1175, 16
      %v1650 = vrot.slane %v1648, 4
      %v1651 = vor.u32 %v1650, %v1646
      %v1652 = vrot.slane %v1651, 4
      %v1654 = vshll.u32 %v1176, 16
      %v1656 = vrot.slane %v1654, 5
      %v1657 = vsel %vm1583, %v1652, %v1656
      %v1658 = vshrl.u32 %v1176, 16
      %v1660 = vrot.slane %v1658, 4
      %v1661 = vor.u32 %v1660, %v1656
      %v1662 = vrot.slane %v1661, 4
      %v1664 = vshll.u32 %v1177, 16
      %v1666 = vrot.slane %v1664, 5
      %v1667 = vsel %vm1583, %v1662, %v1666
      %v1668 = vshrl.u32 %v1177, 16
      %v1670 = vrot.slane %v1668, 4
      %v1671 = vor.u32 %v1670, %v1666
      %v1672 = vrot.slane %v1671, 4
      %v1674 = vshll.u32 %v1178, 16
      %v1676 = vrot.slane %v1674, 5
      %v1677 = vsel %vm1583, %v1672, %v1676
      %v1678 = vshrl.u32 %v1178, 16
      %v1680 = vrot.slane %v1678, 4
      %v1681 = vor.u32 %v1680, %v1676
      %v1682 = vrot.slane %v1681, 4
      %v1684 = vshll.u32 %v1179, 16
      %v1686 = vrot.slane %v1684, 5
      %v1687 = vsel %vm1583, %v1682, %v1686
      %v1688 = vshrl.u32 %v1179, 16
      %v1690 = vrot.slane %v1688, 4
      %v1691 = vor.u32 %v1690, %v1686
      %v1692 = vrot.slane %v1691, 4
      %v1694 = vshll.u32 %v1180, 16
      %v1696 = vrot.slane %v1694, 5
      %v1697 = vsel %vm1583, %v1692, %v1696
      %v1698 = vshrl.u32 %v1180, 16
      %v1700 = vrot.slane %v1698, 4
      %v1701 = vor.u32 %v1700, %v1696
      %v1702 = vrot.slane %v1701, 4
      %v1704 = vshll.u32 %v1181, 16
      %v1706 = vrot.slane %v1704, 5
      %v1707 = vsel %vm1583, %v1702, %v1706
      %v1708 = vshrl.u32 %v1181, 16
      %v1710 = vrot.slane %v1708, 4
      %v1711 = vor.u32 %v1710, %v1706
      %v1712 = vrot.slane %v1711, 4
      %v1714 = vshll.u32 %v1182, 16
      %v1716 = vrot.slane %v1714, 5
      %v1717 = vsel %vm1583, %v1712, %v1716
      %v1718 = vshrl.u32 %v1182, 16
      %v1720 = vrot.slane %v1718, 4
      %v1721 = vor.u32 %v1720, %v1716
      %v1722 = vrot.slane %v1721, 4
      %v1724 = vshll.u32 %v1183, 16
      %v1726 = vrot.slane %v1724, 5
      %v1727 = vsel %vm1583, %v1722, %v1726
      %v1728 = vshrl.u32 %v1183, 16
      %v1730 = vrot.slane %v1728, 4
      %v1731 = vor.u32 %v1730, %v1726
      %v1732 = vrot.slane %v1731, 4
      %v1734 = vshll.u32 %v1184, 16
      %v1736 = vrot.slane %v1734, 5
      %v1737 = vsel %vm1583, %v1732, %v1736
      %v1738 = vshrl.u32 %v1184, 16
      %v1740 = vrot.slane %v1738, 4
      %v1741 = vor.u32 %v1740, %v1736
      %v1742 = vrot.slane %v1741, 4
      %v1744 = vshll.u32 %v1185, 16
      %v1746 = vrot.slane %v1744, 5
      %v1747 = vsel %vm1583, %v1742, %v1746
      %v1748 = vshrl.u32 %v1185, 16
      %v1750 = vrot.slane %v1748, 4
      %v1751 = vor.u32 %v1750, %v1746
      %v1752 = vrot.slane %v1751, 4
      %v1754 = vshll.u32 %v1186, 16
      %v1756 = vrot.slane %v1754, 5
      %v1757 = vsel %vm1583, %v1752, %v1756
      %v1758 = vshrl.u32 %v1186, 16
      %v1760 = vrot.slane %v1758, 4
      %v1761 = vor.u32 %v1760, %v1756
      %v1762 = vrot.slane %v1761, 4
      %v1764 = vshll.u32 %v1187, 16
      %v1766 = vrot.slane %v1764, 5
      %v1767 = vsel %vm1583, %v1762, %v1766
      %v1768 = vshrl.u32 %v1187, 16
      %v1770 = vrot.slane %v1768, 4
      %v1771 = vor.u32 %v1770, %v1766
      %v1772 = vrot.slane %v1771, 4
      %v1774 = vshll.u32 %v1188, 16
      %v1776 = vrot.slane %v1774, 5
      %v1777 = vsel %vm1583, %v1772, %v1776
      %v1778 = vshrl.u32 %v1188, 16
      %v1780 = vrot.slane %v1778, 4
      %v1781 = vor.u32 %v1780, %v1776
      %v1782 = vrot.slane %v1781, 4
      %v1784 = vshll.u32 %v1189, 16
      %v1786 = vrot.slane %v1784, 5
      %v1787 = vsel %vm1583, %v1782, %v1786
      %v1788 = vshrl.u32 %v1189, 16
      %v1790 = vrot.slane %v1788, 4
      %v1791 = vor.u32 %v1790, %v1786
      %v1792 = vrot.slane %v1791, 4
      %v1794 = vshll.u32 %v1190, 16
      %v1796 = vrot.slane %v1794, 5
      %v1797 = vsel %vm1583, %v1792, %v1796
      %v1798 = vshrl.u32 %v1190, 16
      %v1800 = vrot.slane %v1798, 4
      %v1801 = vor.u32 %v1800, %v1796
      %v1802 = vrot.slane %v1801, 4
      %v1804 = vshll.u32 %v1191, 16
      %v1806 = vrot.slane %v1804, 5
      %v1807 = vsel %vm1583, %v1802, %v1806
      %v1808 = vshrl.u32 %v1191, 16
      %v1810 = vrot.slane %v1808, 4
      %v1811 = vor.u32 %v1810, %v1806
      %v1812 = vrot.slane %v1811, 4
      %v1814 = vshll.u32 %v1192, 16
      %v1816 = vrot.slane %v1814, 5
      %v1817 = vsel %vm1583, %v1812, %v1816
      %v1818 = vshrl.u32 %v1192, 16
      %v1820 = vrot.slane %v1818, 4
      %v1821 = vor.u32 %v1820, %v1816
      %v1822 = vrot.slane %v1821, 4
      %v1824 = vshll.u32 %v1193, 16
      %v1826 = vrot.slane %v1824, 5
      %v1827 = vsel %vm1583, %v1822, %v1826
      %v1828 = vshrl.u32 %v1193, 16
      %v1830 = vrot.slane %v1828, 4
      %v1831 = vor.u32 %v1830, %v1826
      %v1832 = vrot.slane %v1831, 4
      %v1834 = vshll.u32 %v1194, 16
      %v1836 = vrot.slane %v1834, 5
      %v1837 = vsel %vm1583, %v1832, %v1836
      %v1838 = vshrl.u32 %v1194, 16
      %v1840 = vrot.slane %v1838, 4
      %v1841 = vor.u32 %v1840, %v1836
      %v1842 = vrot.slane %v1841, 4
      %v1844 = vshll.u32 %v1195, 16
      %v1846 = vrot.slane %v1844, 5
      %v1847 = vsel %vm1583, %v1842, %v1846
      %v1848 = vshrl.u32 %v1195, 16
      %v1850 = vrot.slane %v1848, 4
      %v1851 = vor.u32 %v1850, %v1846
      %v1852 = vrot.slane %v1851, 4
      %v1854 = vshll.u32 %v1196, 16
      %v1856 = vrot.slane %v1854, 5
      %v1857 = vsel %vm1583, %v1852, %v1856
      %v1858 = vshrl.u32 %v1196, 16
      %v1860 = vrot.slane %v1858, 4
      %v1861 = vor.u32 %v1860, %v1856
      %v1862 = vrot.slane %v1861, 4
      %v1864 = vshll.u32 %v1197, 16
      %v1866 = vrot.slane %v1864, 5
      %v1867 = vsel %vm1583, %v1862, %v1866
      %v1868 = vshrl.u32 %v1197, 16
      %v1870 = vrot.slane %v1868, 4
      %v1871 = vor.u32 %v1870, %v1866
      %v1872 = vrot.slane %v1871, 4
      %v1874 = vshll.u32 %v1198, 16
      %v1876 = vrot.slane %v1874, 5
      %v1877 = vsel %vm1583, %v1872, %v1876
      %v1878 = vshrl.u32 %v1198, 16
      %v1880 = vrot.slane %v1878, 4
      %v1881 = vor.u32 %v1880, %v1876
      %v1882 = vrot.slane %v1881, 4
      %v1884 = vshll.u32 %v1199, 16
      %v1886 = vrot.slane %v1884, 5
      %v1887 = vsel %vm1583, %v1882, %v1886
      %vm1919 = vcmask 1043459
      %vm1920 = vsmask.f32 7950
      %vm1921 = vmand %vm1919, %vm1920
      %v1922 = vld [vmem:[#allocation2 + $0x2c] sm:$0x8]
      %v1923 = vsel %vm1921, %v1587, %v1922
      %1924 = vst [vmem:[#allocation2 + $0x2c] sm:$0x8] %v1923
      %1925 = vst [vmem:[#allocation2 + $0x50] sm:$0xf] %v1597
      %1926 = vst [vmem:[#allocation2 + $0x74] sm:$0xf] %v1607
      %1927 = vst [vmem:[#allocation2 + $0x98] sm:$0xf] %v1617
      %1928 = vst [vmem:[#allocation2 + $0xbc] sm:$0xf] %v1627
      %1929 = vst [vmem:[#allocation2 + $0xe0] sm:$0xf] %v1637
      %1930 = vst [vmem:[#allocation2 + $0x104] sm:$0xf] %v1647
      %1931 = vst [vmem:[#allocation2 + $0x128] sm:$0xf] %v1657
      %1932 = vst [vmem:[#allocation2 + $0x14c] sm:$0xf] %v1667
      %1933 = vst [vmem:[#allocation2 + $0x170] sm:$0xf] %v1677
      %1934 = vst [vmem:[#allocation2 + $0x194] sm:$0xf] %v1687
      %1935 = vst [vmem:[#allocation2 + $0x1b8] sm:$0xf] %v1697
      %1936 = vst [vmem:[#allocation2 + $0x1dc] sm:$0xf] %v1707
      %1937 = vst [vmem:[#allocation2 + $0x200] sm:$0xf] %v1717
      %1938 = vst [vmem:[#allocation2 + $0x224] sm:$0xf] %v1727
      %1939 = vst [vmem:[#allocation2 + $0x248] sm:$0xf] %v1737
      %1940 = vst [vmem:[#allocation2 + $0x26c] sm:$0xf] %v1747
      %1941 = vst [vmem:[#allocation2 + $0x290] sm:$0xf] %v1757
      %1942 = vst [vmem:[#allocation2 + $0x2b4] sm:$0xf] %v1767
      %1943 = vst [vmem:[#allocation2 + $0x2d8] sm:$0xf] %v1777
      %1944 = vst [vmem:[#allocation2 + $0x2fc] sm:$0xf] %v1787
      %1945 = vst [vmem:[#allocation2 + $0x320] sm:$0xf] %v1797
      %1946 = vst [vmem:[#allocation2 + $0x344] sm:$0xf] %v1807
      %1947 = vst [vmem:[#allocation2 + $0x368] sm:$0xf] %v1817
      %1948 = vst [vmem:[#allocation2 + $0x38c] sm:$0xf] %v1827
      %1949 = vst [vmem:[#allocation2 + $0x3b0] sm:$0xf] %v1837
      %1950 = vst [vmem:[#allocation2 + $0x3d4] sm:$0xf] %v1847
      %1951 = vst [vmem:[#allocation2 + $0x3f8] sm:$0xf] %v1857
      %1952 = vst [vmem:[#allocation2 + $0x41c] sm:$0xf] %v1867
      %1953 = vst [vmem:[#allocation2 + $0x440] sm:$0xf] %v1877
      %1954 = vst [vmem:[#allocation2 + $0x464] sm:$0xf] %v1887
      %v1955 = vld [vmem:[#allocation2 + $0xc] sm:$0x1]
      %v1956 = vsel %vm1205, 0, %v1955
      %1957 = vst [vmem:[#allocation2 + $0xc] sm:$0x1] %v1956
      %v1958 = vrot.slane %v1474, 4
      %v1960 = vshrl.u32 %v1039, 16
      %v1962 = vrot.slane %v1960, 7
      %v1963 = vshll.u32 %v1039, 16
      %v1965 = vor.u32 %v1962, %v1963
      %v1966 = vsel %vm1210, %v1958, %v1965
      %v1967 = vrot.slane %v1962, 4
      %v1969 = vshrl.u32 %v1040, 16
      %v1971 = vrot.slane %v1969, 7
      %v1972 = vshll.u32 %v1040, 16
      %v1974 = vor.u32 %v1971, %v1972
      %v1975 = vsel %vm1210, %v1967, %v1974
      %v1978 = vld [vmem:[#allocation2 + $0xc] sm:$0xf]
      %v1979 = vsel %vm1511, %v1217, %v1978
      %1980 = vst [vmem:[#allocation2 + $0xc] sm:$0xf] %v1979
      %1981 = vst [vmem:[#allocation2 + $0x30] sm:$0xf] %v1226
      %1982 = vst [vmem:[#allocation2 + $0x54] sm:$0xf] %v1235
      %1983 = vst [vmem:[#allocation2 + $0x78] sm:$0xf] %v1244
      %1984 = vst [vmem:[#allocation2 + $0x9c] sm:$0xf] %v1253
      %1985 = vst [vmem:[#allocation2 + $0xc0] sm:$0xf] %v1262
      %1986 = vst [vmem:[#allocation2 + $0xe4] sm:$0xf] %v1271
      %1987 = vst [vmem:[#allocation2 + $0x108] sm:$0xf] %v1280
      %1988 = vst [vmem:[#allocation2 + $0x12c] sm:$0xf] %v1289
      %1989 = vst [vmem:[#allocation2 + $0x150] sm:$0xf] %v1298
      %1990 = vst [vmem:[#allocation2 + $0x174] sm:$0xf] %v1307
      %1991 = vst [vmem:[#allocation2 + $0x198] sm:$0xf] %v1316
      %1992 = vst [vmem:[#allocation2 + $0x1bc] sm:$0xf] %v1325
      %1993 = vst [vmem:[#allocation2 + $0x1e0] sm:$0xf] %v1334
      %1994 = vst [vmem:[#allocation2 + $0x204] sm:$0xf] %v1343
      %1995 = vst [vmem:[#allocation2 + $0x228] sm:$0xf] %v1352
      %1996 = vst [vmem:[#allocation2 + $0x24c] sm:$0xf] %v1361
      %1997 = vst [vmem:[#allocation2 + $0x270] sm:$0xf] %v1370
      %1998 = vst [vmem:[#allocation2 + $0x294] sm:$0xf] %v1379
      %1999 = vst [vmem:[#allocation2 + $0x2b8] sm:$0xf] %v1388
      %2000 = vst [vmem:[#allocation2 + $0x2dc] sm:$0xf] %v1397
      %2001 = vst [vmem:[#allocation2 + $0x300] sm:$0xf] %v1406
      %2002 = vst [vmem:[#allocation2 + $0x324] sm:$0xf] %v1415
      %2003 = vst [vmem:[#allocation2 + $0x348] sm:$0xf] %v1424
      %2004 = vst [vmem:[#allocation2 + $0x36c] sm:$0xf] %v1433
      %2005 = vst [vmem:[#allocation2 + $0x390] sm:$0xf] %v1442
      %2006 = vst [vmem:[#allocation2 + $0x3b4] sm:$0xf] %v1451
      %2007 = vst [vmem:[#allocation2 + $0x3d8] sm:$0xf] %v1460
      %2008 = vst [vmem:[#allocation2 + $0x3fc] sm:$0xf] %v1469
      %2009 = vst [vmem:[#allocation2 + $0x420] sm:$0xf] %v1478
      %2010 = vst [vmem:[#allocation2 + $0x444] sm:$0xf] %v1966
      %2011 = vst [vmem:[#allocation2 + $0x468] sm:$0xf] %v1975
      %2012 = vst [vmem:[#allocation2 + $0x10] sm:$0xf] %v849
      %2013 = vst [vmem:[#allocation2 + $0x34] sm:$0xf] %v850
      %2014 = vst [vmem:[#allocation2 + $0x58] sm:$0xf] %v851
      %2015 = vst [vmem:[#allocation2 + $0x7c] sm:$0xf] %v852
      %2016 = vst [vmem:[#allocation2 + $0xa0] sm:$0xf] %v853
      %2017 = vst [vmem:[#allocation2 + $0xc4] sm:$0xf] %v854
      %2018 = vst [vmem:[#allocation2 + $0xe8] sm:$0xf] %v855
      %2019 = vst [vmem:[#allocation2 + $0x10c] sm:$0xf] %v856
      %2020 = vst [vmem:[#allocation2 + $0x130] sm:$0xf] %v857
      %2021 = vst [vmem:[#allocation2 + $0x154] sm:$0xf] %v858
      %2022 = vst [vmem:[#allocation2 + $0x178] sm:$0xf] %v859
      %2023 = vst [vmem:[#allocation2 + $0x19c] sm:$0xf] %v860
      %2024 = vst [vmem:[#allocation2 + $0x1c0] sm:$0xf] %v861
      %2025 = vst [vmem:[#allocation2 + $0x1e4] sm:$0xf] %v862
      %2026 = vst [vmem:[#allocation2 + $0x208] sm:$0xf] %v863
      %2027 = vst [vmem:[#allocation2 + $0x22c] sm:$0xf] %v864
      %2028 = vst [vmem:[#allocation2 + $0x250] sm:$0xf] %v865
      %2029 = vst [vmem:[#allocation2 + $0x274] sm:$0xf] %v866
      %2030 = vst [vmem:[#allocation2 + $0x298] sm:$0xf] %v867
      %2031 = vst [vmem:[#allocation2 + $0x2bc] sm:$0xf] %v868
      %2032 = vst [vmem:[#allocation2 + $0x2e0] sm:$0xf] %v869
      %2033 = vst [vmem:[#allocation2 + $0x304] sm:$0xf] %v870
      %2034 = vst [vmem:[#allocation2 + $0x328] sm:$0xf] %v871
      %2035 = vst [vmem:[#allocation2 + $0x34c] sm:$0xf] %v872
      %2036 = vst [vmem:[#allocation2 + $0x370] sm:$0xf] %v873
      %2037 = vst [vmem:[#allocation2 + $0x394] sm:$0xf] %v874
      %2038 = vst [vmem:[#allocation2 + $0x3b8] sm:$0xf] %v875
      %2039 = vst [vmem:[#allocation2 + $0x3dc] sm:$0xf] %v876
      %2040 = vst [vmem:[#allocation2 + $0x400] sm:$0xf] %v877
      %2041 = vst [vmem:[#allocation2 + $0x424] sm:$0xf] %v878
      %2042 = vst [vmem:[#allocation2 + $0x448] sm:$0xf] %v879
      %2043 = vst [vmem:[#allocation2 + $0x46c] sm:$0xf] %v880
      %v2044 = vshrl.u32 %v1199, 16
      %v2046 = vrot.slane %v2044, 4
      %v2047 = vor.u32 %v2046, %v1886
      %v2048 = vrot.slane %v2047, 4
      %v2050 = vshll.u32 %v1200, 16
      %v2052 = vrot.slane %v2050, 5
      %v2053 = vsel %vm1583, %v2048, %v2052
      %v2054 = vshrl.u32 %v1200, 16
      %v2056 = vrot.slane %v2054, 4
      %v2057 = vor.u32 %v2056, %v2052
      %v2058 = vrot.slane %v2057, 4
      %2061 = vst [vmem:[#allocation2 + $0x14] sm:$0xf] %v1597
      %2062 = vst [vmem:[#allocation2 + $0x38] sm:$0xf] %v1607
      %2063 = vst [vmem:[#allocation2 + $0x5c] sm:$0xf] %v1617
      %2064 = vst [vmem:[#allocation2 + $0x80] sm:$0xf] %v1627
      %2065 = vst [vmem:[#allocation2 + $0xa4] sm:$0xf] %v1637
      %2066 = vst [vmem:[#allocation2 + $0xc8] sm:$0xf] %v1647
      %2067 = vst [vmem:[#allocation2 + $0xec] sm:$0xf] %v1657
      %2068 = vst [vmem:[#allocation2 + $0x110] sm:$0xf] %v1667
      %2069 = vst [vmem:[#allocation2 + $0x134] sm:$0xf] %v1677
      %2070 = vst [vmem:[#allocation2 + $0x158] sm:$0xf] %v1687
      %2071 = vst [vmem:[#allocation2 + $0x17c] sm:$0xf] %v1697
      %2072 = vst [vmem:[#allocation2 + $0x1a0] sm:$0xf] %v1707
      %2073 = vst [vmem:[#allocation2 + $0x1c4] sm:$0xf] %v1717
      %2074 = vst [vmem:[#allocation2 + $0x1e8] sm:$0xf] %v1727
      %2075 = vst [vmem:[#allocation2 + $0x20c] sm:$0xf] %v1737
      %2076 = vst [vmem:[#allocation2 + $0x230] sm:$0xf] %v1747
      %2077 = vst [vmem:[#allocation2 + $0x254] sm:$0xf] %v1757
      %2078 = vst [vmem:[#allocation2 + $0x278] sm:$0xf] %v1767
      %2079 = vst [vmem:[#allocation2 + $0x29c] sm:$0xf] %v1777
      %2080 = vst [vmem:[#allocation2 + $0x2c0] sm:$0xf] %v1787
      %2081 = vst [vmem:[#allocation2 + $0x2e4] sm:$0xf] %v1797
      %2082 = vst [vmem:[#allocation2 + $0x308] sm:$0xf] %v1807
      %2083 = vst [vmem:[#allocation2 + $0x32c] sm:$0xf] %v1817
      %2084 = vst [vmem:[#allocation2 + $0x350] sm:$0xf] %v1827
      %2085 = vst [vmem:[#allocation2 + $0x374] sm:$0xf] %v1837
      %2086 = vst [vmem:[#allocation2 + $0x398] sm:$0xf] %v1847
      %2087 = vst [vmem:[#allocation2 + $0x3bc] sm:$0xf] %v1857
      %2088 = vst [vmem:[#allocation2 + $0x3e0] sm:$0xf] %v1867
      %2089 = vst [vmem:[#allocation2 + $0x404] sm:$0xf] %v1877
      %2090 = vst [vmem:[#allocation2 + $0x428] sm:$0xf] %v1887
      %2091 = vst [vmem:[#allocation2 + $0x44c] sm:$0xf] %v2053
      %v2092 = vld [vmem:[#allocation2 + $0x470] sm:$0xf]
      %v2093 = vsel %vm1578, %v2058, %v2092
      %2094 = vst [vmem:[#allocation2 + $0x470] sm:$0xf] %v2093
      %v2095 = vld [vmem:[#allocation2 + $0x470] sm:$0x8]
      %v2096 = vsel %vm1921, 0, %v2095
      %2097 = vst [vmem:[#allocation2 + $0x470] sm:$0x8] %v2096
      %v2098 = vrot.slane %v1971, 4
      %2100 = vst [vmem:[#allocation2 + $0x18] sm:$0xf] %v1235
      %2101 = vst [vmem:[#allocation2 + $0x3c] sm:$0xf] %v1244
      %2102 = vst [vmem:[#allocation2 + $0x60] sm:$0xf] %v1253
      %2103 = vst [vmem:[#allocation2 + $0x84] sm:$0xf] %v1262
      %2104 = vst [vmem:[#allocation2 + $0xa8] sm:$0xf] %v1271
      %2105 = vst [vmem:[#allocation2 + $0xcc] sm:$0xf] %v1280
      %2106 = vst [vmem:[#allocation2 + $0xf0] sm:$0xf] %v1289
      %2107 = vst [vmem:[#allocation2 + $0x114] sm:$0xf] %v1298
      %2108 = vst [vmem:[#allocation2 + $0x138] sm:$0xf] %v1307
      %2109 = vst [vmem:[#allocation2 + $0x15c] sm:$0xf] %v1316
      %2110 = vst [vmem:[#allocation2 + $0x180] sm:$0xf] %v1325
      %2111 = vst [vmem:[#allocation2 + $0x1a4] sm:$0xf] %v1334
      %2112 = vst [vmem:[#allocation2 + $0x1c8] sm:$0xf] %v1343
      %2113 = vst [vmem:[#allocation2 + $0x1ec] sm:$0xf] %v1352
      %2114 = vst [vmem:[#allocation2 + $0x210] sm:$0xf] %v1361
      %2115 = vst [vmem:[#allocation2 + $0x234] sm:$0xf] %v1370
      %2116 = vst [vmem:[#allocation2 + $0x258] sm:$0xf] %v1379
      %2117 = vst [vmem:[#allocation2 + $0x27c] sm:$0xf] %v1388
      %2118 = vst [vmem:[#allocation2 + $0x2a0] sm:$0xf] %v1397
      %2119 = vst [vmem:[#allocation2 + $0x2c4] sm:$0xf] %v1406
      %2120 = vst [vmem:[#allocation2 + $0x2e8] sm:$0xf] %v1415
      %2121 = vst [vmem:[#allocation2 + $0x30c] sm:$0xf] %v1424
      %2122 = vst [vmem:[#allocation2 + $0x330] sm:$0xf] %v1433
      %2123 = vst [vmem:[#allocation2 + $0x354] sm:$0xf] %v1442
      %2124 = vst [vmem:[#allocation2 + $0x378] sm:$0xf] %v1451
      %2125 = vst [vmem:[#allocation2 + $0x39c] sm:$0xf] %v1460
      %2126 = vst [vmem:[#allocation2 + $0x3c0] sm:$0xf] %v1469
      %2127 = vst [vmem:[#allocation2 + $0x3e4] sm:$0xf] %v1478
      %2128 = vst [vmem:[#allocation2 + $0x408] sm:$0xf] %v1966
      %2129 = vst [vmem:[#allocation2 + $0x42c] sm:$0xf] %v1975
      %v2130 = vld [vmem:[#allocation2 + $0x450] sm:$0x1]
      %v2131 = vsel %vm1205, %v2098, %v2130
      %2132 = vst [vmem:[#allocation2 + $0x450] sm:$0x1] %v2131
      %v2133 = vld [vmem:[#allocation2 + $0x450] sm:$0xf]
      %v2134 = vsel %vm1511, 0, %v2133
      %2135 = vst [vmem:[#allocation2 + $0x450] sm:$0xf] %v2134
      %2136 = vst [vmem:[#allocation2 + $0x474] sm:$0xf] 0
      %2137 = vst [vmem:[#allocation2 + $0x1c] sm:$0xf] %v851
      %2138 = vst [vmem:[#allocation2 + $0x40] sm:$0xf] %v852
      %2139 = vst [vmem:[#allocation2 + $0x64] sm:$0xf] %v853
      %2140 = vst [vmem:[#allocation2 + $0x88] sm:$0xf] %v854
      %2141 = vst [vmem:[#allocation2 + $0xac] sm:$0xf] %v855
      %2142 = vst [vmem:[#allocation2 + $0xd0] sm:$0xf] %v856
      %2143 = vst [vmem:[#allocation2 + $0xf4] sm:$0xf] %v857
      %2144 = vst [vmem:[#allocation2 + $0x118] sm:$0xf] %v858
      %2145 = vst [vmem:[#allocation2 + $0x13c] sm:$0xf] %v859
      %2146 = vst [vmem:[#allocation2 + $0x160] sm:$0xf] %v860
      %2147 = vst [vmem:[#allocation2 + $0x184] sm:$0xf] %v861
      %2148 = vst [vmem:[#allocation2 + $0x1a8] sm:$0xf] %v862
      %2149 = vst [vmem:[#allocation2 + $0x1cc] sm:$0xf] %v863
      %2150 = vst [vmem:[#allocation2 + $0x1f0] sm:$0xf] %v864
      %2151 = vst [vmem:[#allocation2 + $0x214] sm:$0xf] %v865
      %2152 = vst [vmem:[#allocation2 + $0x238] sm:$0xf] %v866
      %2153 = vst [vmem:[#allocation2 + $0x25c] sm:$0xf] %v867
      %2154 = vst [vmem:[#allocation2 + $0x280] sm:$0xf] %v868
      %2155 = vst [vmem:[#allocation2 + $0x2a4] sm:$0xf] %v869
      %2156 = vst [vmem:[#allocation2 + $0x2c8] sm:$0xf] %v870
      %2157 = vst [vmem:[#allocation2 + $0x2ec] sm:$0xf] %v871
      %2158 = vst [vmem:[#allocation2 + $0x310] sm:$0xf] %v872
      %2159 = vst [vmem:[#allocation2 + $0x334] sm:$0xf] %v873
      %2160 = vst [vmem:[#allocation2 + $0x358] sm:$0xf] %v874
      %2161 = vst [vmem:[#allocation2 + $0x37c] sm:$0xf] %v875
      %2162 = vst [vmem:[#allocation2 + $0x3a0] sm:$0xf] %v876
      %2163 = vst [vmem:[#allocation2 + $0x3c4] sm:$0xf] %v877
      %2164 = vst [vmem:[#allocation2 + $0x3e8] sm:$0xf] %v878
      %2165 = vst [vmem:[#allocation2 + $0x40c] sm:$0xf] %v879
      %2166 = vst [vmem:[#allocation2 + $0x430] sm:$0xf] %v880
      %2167 = vst [vmem:[#allocation2 + $0x454] sm:$0xf] 0
      %2168 = vst [vmem:[#allocation2 + $0x478] sm:$0xf] 0
      %2169 = vst [vmem:[#allocation2 + $0x20] sm:$0xf] %v1617
      %2170 = vst [vmem:[#allocation2 + $0x44] sm:$0xf] %v1627
      %2171 = vst [vmem:[#allocation2 + $0x68] sm:$0xf] %v1637
      %2172 = vst [vmem:[#allocation2 + $0x8c] sm:$0xf] %v1647
      %2173 = vst [vmem:[#allocation2 + $0xb0] sm:$0xf] %v1657
      %2174 = vst [vmem:[#allocation2 + $0xd4] sm:$0xf] %v1667
      %2175 = vst [vmem:[#allocation2 + $0xf8] sm:$0xf] %v1677
      %2176 = vst [vmem:[#allocation2 + $0x11c] sm:$0xf] %v1687
      %2177 = vst [vmem:[#allocation2 + $0x140] sm:$0xf] %v1697
      %2178 = vst [vmem:[#allocation2 + $0x164] sm:$0xf] %v1707
      %2179 = vst [vmem:[#allocation2 + $0x188] sm:$0xf] %v1717
      %2180 = vst [vmem:[#allocation2 + $0x1ac] sm:$0xf] %v1727
      %2181 = vst [vmem:[#allocation2 + $0x1d0] sm:$0xf] %v1737
      %2182 = vst [vmem:[#allocation2 + $0x1f4] sm:$0xf] %v1747
      %2183 = vst [vmem:[#allocation2 + $0x218] sm:$0xf] %v1757
      %2184 = vst [vmem:[#allocation2 + $0x23c] sm:$0xf] %v1767
      %2185 = vst [vmem:[#allocation2 + $0x260] sm:$0xf] %v1777
      %2186 = vst [vmem:[#allocation2 + $0x284] sm:$0xf] %v1787
      %2187 = vst [vmem:[#allocation2 + $0x2a8] sm:$0xf] %v1797
      %2188 = vst [vmem:[#allocation2 + $0x2cc] sm:$0xf] %v1807
      %2189 = vst [vmem:[#allocation2 + $0x2f0] sm:$0xf] %v1817
      %2190 = vst [vmem:[#allocation2 + $0x314] sm:$0xf] %v1827
      %2191 = vst [vmem:[#allocation2 + $0x338] sm:$0xf] %v1837
      %2192 = vst [vmem:[#allocation2 + $0x35c] sm:$0xf] %v1847
      %2193 = vst [vmem:[#allocation2 + $0x380] sm:$0xf] %v1857
      %2194 = vst [vmem:[#allocation2 + $0x3a4] sm:$0xf] %v1867
      %2195 = vst [vmem:[#allocation2 + $0x3c8] sm:$0xf] %v1877
      %2196 = vst [vmem:[#allocation2 + $0x3ec] sm:$0xf] %v1887
      %2197 = vst [vmem:[#allocation2 + $0x410] sm:$0xf] %v2053
      %v2198 = vld [vmem:[#allocation2 + $0x434] sm:$0xf]
      %v2199 = vsel %vm1578, %v2058, %v2198
      %2200 = vst [vmem:[#allocation2 + $0x434] sm:$0xf] %v2199
      %v2201 = vld [vmem:[#allocation2 + $0x434] sm:$0x8]
      %v2202 = vsel %vm1921, 0, %v2201
      %2203 = vst [vmem:[#allocation2 + $0x434] sm:$0x8] %v2202
      %2204 = vst [vmem:[#allocation2 + $0x458] sm:$0xf] 0
      %2205 = vst [vmem:[#allocation2 + $0x47c] sm:$0xf] 0
      %v2206 = vld [vmem:[#allocation2] sm:$0xff]
      %v2207 = vld [vmem:[#allocation2 + $0x8] sm:$0xff]
      %v2208 = vld [vmem:[#allocation2 + $0x10] sm:$0xff]
      %v2209 = vld [vmem:[#allocation2 + $0x18] sm:$0xff]
      %v2210 = vld [vmem:[#allocation2 + $0x20] sm:$0xf]
      %v2211 = vld [vmem:[#allocation2 + $0x24] sm:$0xff]
      %v2212 = vld [vmem:[#allocation2 + $0x2c] sm:$0xff]
      %v2213 = vld [vmem:[#allocation2 + $0x34] sm:$0xff]
      %v2214 = vld [vmem:[#allocation2 + $0x3c] sm:$0xff]
      %v2215 = vld [vmem:[#allocation2 + $0x44] sm:$0xf]
      %v2216 = vld [vmem:[#allocation2 + $0x48] sm:$0xff]
      %v2217 = vld [vmem:[#allocation2 + $0x50] sm:$0xff]
      %v2218 = vld [vmem:[#allocation2 + $0x58] sm:$0xff]
      %v2219 = vld [vmem:[#allocation2 + $0x60] sm:$0xff]
      %v2220 = vld [vmem:[#allocation2 + $0x68] sm:$0xf]
      %v2221 = vld [vmem:[#allocation2 + $0x6c] sm:$0xff]
      %v2222 = vld [vmem:[#allocation2 + $0x74] sm:$0xff]
      %v2223 = vld [vmem:[#allocation2 + $0x7c] sm:$0xff]
      %v2224 = vld [vmem:[#allocation2 + $0x84] sm:$0xff]
      %v2225 = vld [vmem:[#allocation2 + $0x8c] sm:$0xf]
      %v2226 = vld [vmem:[#allocation2 + $0x90] sm:$0xff]
      %v2227 = vld [vmem:[#allocation2 + $0x98] sm:$0xff]
      %v2228 = vld [vmem:[#allocation2 + $0xa0] sm:$0xff]
      %v2229 = vld [vmem:[#allocation2 + $0xa8] sm:$0xff]
      %v2230 = vld [vmem:[#allocation2 + $0xb0] sm:$0xf]
      %v2231 = vld [vmem:[#allocation2 + $0xb4] sm:$0xff]
      %v2232 = vld [vmem:[#allocation2 + $0xbc] sm:$0xff]
      %v2233 = vld [vmem:[#allocation2 + $0xc4] sm:$0xff]
      %v2234 = vld [vmem:[#allocation2 + $0xcc] sm:$0xff]
      %v2235 = vld [vmem:[#allocation2 + $0xd4] sm:$0xf]
      %v2236 = vld [vmem:[#allocation2 + $0xd8] sm:$0xff]
      %v2237 = vld [vmem:[#allocation2 + $0xe0] sm:$0xff]
      %v2238 = vld [vmem:[#allocation2 + $0xe8] sm:$0xff]
      %v2239 = vld [vmem:[#allocation2 + $0xf0] sm:$0xff]
      %v2240 = vld [vmem:[#allocation2 + $0xf8] sm:$0xf]
      %v2241 = vld [vmem:[#allocation2 + $0xfc] sm:$0xff]
      %v2242 = vld [vmem:[#allocation2 + $0x104] sm:$0xff]
      %v2243 = vld [vmem:[#allocation2 + $0x10c] sm:$0xff]
      %v2244 = vld [vmem:[#allocation2 + $0x114] sm:$0xff]
      %v2245 = vld [vmem:[#allocation2 + $0x11c] sm:$0xf]
      %v2246 = vld [vmem:[#allocation2 + $0x120] sm:$0xff]
      %v2247 = vld [vmem:[#allocation2 + $0x128] sm:$0xff]
      %v2248 = vld [vmem:[#allocation2 + $0x130] sm:$0xff]
      %v2249 = vld [vmem:[#allocation2 + $0x138] sm:$0xff]
      %v2250 = vld [vmem:[#allocation2 + $0x140] sm:$0xf]
      %v2251 = vld [vmem:[#allocation2 + $0x144] sm:$0xff]
      %v2252 = vld [vmem:[#allocation2 + $0x14c] sm:$0xff]
      %v2253 = vld [vmem:[#allocation2 + $0x154] sm:$0xff]
      %v2254 = vld [vmem:[#allocation2 + $0x15c] sm:$0xff]
      %v2255 = vld [vmem:[#allocation2 + $0x164] sm:$0xf]
      %v2256 = vld [vmem:[#allocation2 + $0x168] sm:$0xff]
      %v2257 = vld [vmem:[#allocation2 + $0x170] sm:$0xff]
      %v2258 = vld [vmem:[#allocation2 + $0x178] sm:$0xff]
      %v2259 = vld [vmem:[#allocation2 + $0x180] sm:$0xff]
      %v2260 = vld [vmem:[#allocation2 + $0x188] sm:$0xf]
      %v2261 = vld [vmem:[#allocation2 + $0x18c] sm:$0xff]
      %v2262 = vld [vmem:[#allocation2 + $0x194] sm:$0xff]
      %v2263 = vld [vmem:[#allocation2 + $0x19c] sm:$0xff]
      %v2264 = vld [vmem:[#allocation2 + $0x1a4] sm:$0xff]
      %v2265 = vld [vmem:[#allocation2 + $0x1ac] sm:$0xf]
      %v2266 = vld [vmem:[#allocation2 + $0x1b0] sm:$0xff]
      %v2267 = vld [vmem:[#allocation2 + $0x1b8] sm:$0xff]
      %v2268 = vld [vmem:[#allocation2 + $0x1c0] sm:$0xff]
      %v2269 = vld [vmem:[#allocation2 + $0x1c8] sm:$0xff]
      %v2270 = vld [vmem:[#allocation2 + $0x1d0] sm:$0xf]
      %v2271 = vld [vmem:[#allocation2 + $0x1d4] sm:$0xff]
      %v2272 = vld [vmem:[#allocation2 + $0x1dc] sm:$0xff]
      %v2273 = vld [vmem:[#allocation2 + $0x1e4] sm:$0xff]
      %v2274 = vld [vmem:[#allocation2 + $0x1ec] sm:$0xff]
      %v2275 = vld [vmem:[#allocation2 + $0x1f4] sm:$0xf]
      %v2276 = vld [vmem:[#allocation2 + $0x1f8] sm:$0xff]
      %v2277 = vld [vmem:[#allocation2 + $0x200] sm:$0xff]
      %v2278 = vld [vmem:[#allocation2 + $0x208] sm:$0xff]
      %v2279 = vld [vmem:[#allocation2 + $0x210] sm:$0xff]
      %v2280 = vld [vmem:[#allocation2 + $0x218] sm:$0xf]
      %v2281 = vld [vmem:[#allocation2 + $0x21c] sm:$0xff]
      %v2282 = vld [vmem:[#allocation2 + $0x224] sm:$0xff]
      %v2283 = vld [vmem:[#allocation2 + $0x22c] sm:$0xff]
      %v2284 = vld [vmem:[#allocation2 + $0x234] sm:$0xff]
      %v2285 = vld [vmem:[#allocation2 + $0x23c] sm:$0xf]
      %v2286 = vld [vmem:[#allocation2 + $0x240] sm:$0xff]
      %v2287 = vld [vmem:[#allocation2 + $0x248] sm:$0xff]
      %v2288 = vld [vmem:[#allocation2 + $0x250] sm:$0xff]
      %v2289 = vld [vmem:[#allocation2 + $0x258] sm:$0xff]
      %v2290 = vld [vmem:[#allocation2 + $0x260] sm:$0xf]
      %v2291 = vld [vmem:[#allocation2 + $0x264] sm:$0xff]
      %v2292 = vld [vmem:[#allocation2 + $0x26c] sm:$0xff]
      %v2293 = vld [vmem:[#allocation2 + $0x274] sm:$0xff]
      %v2294 = vld [vmem:[#allocation2 + $0x27c] sm:$0xff]
      %v2295 = vld [vmem:[#allocation2 + $0x284] sm:$0xf]
      %v2296 = vld [vmem:[#allocation2 + $0x288] sm:$0xff]
      %v2297 = vld [vmem:[#allocation2 + $0x290] sm:$0xff]
      %v2298 = vld [vmem:[#allocation2 + $0x298] sm:$0xff]
      %v2299 = vld [vmem:[#allocation2 + $0x2a0] sm:$0xff]
      %v2300 = vld [vmem:[#allocation2 + $0x2a8] sm:$0xf]
      %v2301 = vld [vmem:[#allocation2 + $0x2ac] sm:$0xff]
      %v2302 = vld [vmem:[#allocation2 + $0x2b4] sm:$0xff]
      %v2303 = vld [vmem:[#allocation2 + $0x2bc] sm:$0xff]
      %v2304 = vld [vmem:[#allocation2 + $0x2c4] sm:$0xff]
      %v2305 = vld [vmem:[#allocation2 + $0x2cc] sm:$0xf]
      %v2306 = vld [vmem:[#allocation2 + $0x2d0] sm:$0xff]
      %v2307 = vld [vmem:[#allocation2 + $0x2d8] sm:$0xff]
      %v2308 = vld [vmem:[#allocation2 + $0x2e0] sm:$0xff]
      %v2309 = vld [vmem:[#allocation2 + $0x2e8] sm:$0xff]
      %v2310 = vld [vmem:[#allocation2 + $0x2f0] sm:$0xf]
      %v2311 = vld [vmem:[#allocation2 + $0x2f4] sm:$0xff]
      %v2312 = vld [vmem:[#allocation2 + $0x2fc] sm:$0xff]
      %v2313 = vld [vmem:[#allocation2 + $0x304] sm:$0xff]
      %v2314 = vld [vmem:[#allocation2 + $0x30c] sm:$0xff]
      %v2315 = vld [vmem:[#allocation2 + $0x314] sm:$0xf]
      %v2316 = vld [vmem:[#allocation2 + $0x318] sm:$0xff]
      %v2317 = vld [vmem:[#allocation2 + $0x320] sm:$0xff]
      %v2318 = vld [vmem:[#allocation2 + $0x328] sm:$0xff]
      %v2319 = vld [vmem:[#allocation2 + $0x330] sm:$0xff]
      %v2320 = vld [vmem:[#allocation2 + $0x338] sm:$0xf]
      %v2321 = vld [vmem:[#allocation2 + $0x33c] sm:$0xff]
      %v2322 = vld [vmem:[#allocation2 + $0x344] sm:$0xff]
      %v2323 = vld [vmem:[#allocation2 + $0x34c] sm:$0xff]
      %v2324 = vld [vmem:[#allocation2 + $0x354] sm:$0xff]
      %v2325 = vld [vmem:[#allocation2 + $0x35c] sm:$0xf]
      %v2326 = vld [vmem:[#allocation2 + $0x360] sm:$0xff]
      %v2327 = vld [vmem:[#allocation2 + $0x368] sm:$0xff]
      %v2328 = vld [vmem:[#allocation2 + $0x370] sm:$0xff]
      %v2329 = vld [vmem:[#allocation2 + $0x378] sm:$0xff]
      %v2330 = vld [vmem:[#allocation2 + $0x380] sm:$0xf]
      %v2331 = vld [vmem:[#allocation2 + $0x384] sm:$0xff]
      %v2332 = vld [vmem:[#allocation2 + $0x38c] sm:$0xff]
      %v2333 = vld [vmem:[#allocation2 + $0x394] sm:$0xff]
      %v2334 = vld [vmem:[#allocation2 + $0x39c] sm:$0xff]
      %v2335 = vld [vmem:[#allocation2 + $0x3a4] sm:$0xf]
      %v2336 = vld [vmem:[#allocation2 + $0x3a8] sm:$0xff]
      %v2337 = vld [vmem:[#allocation2 + $0x3b0] sm:$0xff]
      %v2338 = vld [vmem:[#allocation2 + $0x3b8] sm:$0xff]
      %v2339 = vld [vmem:[#allocation2 + $0x3c0] sm:$0xff]
      %v2340 = vld [vmem:[#allocation2 + $0x3c8] sm:$0xf]
      %v2341 = vld [vmem:[#allocation2 + $0x3cc] sm:$0xff]
      %v2342 = vld [vmem:[#allocation2 + $0x3d4] sm:$0xff]
      %v2343 = vld [vmem:[#allocation2 + $0x3dc] sm:$0xff]
      %v2344 = vld [vmem:[#allocation2 + $0x3e4] sm:$0xff]
      %v2345 = vld [vmem:[#allocation2 + $0x3ec] sm:$0xf]
      %v2346 = vld [vmem:[#allocation2 + $0x3f0] sm:$0xff]
      %v2347 = vld [vmem:[#allocation2 + $0x3f8] sm:$0xff]
      %v2348 = vld [vmem:[#allocation2 + $0x400] sm:$0xff]
      %v2349 = vld [vmem:[#allocation2 + $0x408] sm:$0xff]
      %v2350 = vld [vmem:[#allocation2 + $0x410] sm:$0xf]
      %v2351 = vld [vmem:[#allocation2 + $0x414] sm:$0xff]
      %v2352 = vld [vmem:[#allocation2 + $0x41c] sm:$0xff]
      %v2353 = vld [vmem:[#allocation2 + $0x424] sm:$0xff]
      %v2354 = vld [vmem:[#allocation2 + $0x42c] sm:$0xff]
      %v2355 = vld [vmem:[#allocation2 + $0x434] sm:$0xf]
      %v2356 = vld [vmem:[#allocation2 + $0x438] sm:$0xff]
      %v2357 = vld [vmem:[#allocation2 + $0x440] sm:$0xff]
      %v2358 = vld [vmem:[#allocation2 + $0x448] sm:$0xff]
      %v2359 = vld [vmem:[#allocation2 + $0x450] sm:$0xff]
      %v2360 = vld [vmem:[#allocation2 + $0x458] sm:$0xf]
      %v2361 = vld [vmem:[#allocation2 + $0x45c] sm:$0xff]
      %v2362 = vld [vmem:[#allocation2 + $0x464] sm:$0xff]
      %v2363 = vld [vmem:[#allocation2 + $0x46c] sm:$0xff]
      %v2364 = vld [vmem:[#allocation2 + $0x474] sm:$0xff]
      %v2365 = vld [vmem:[#allocation2 + $0x47c] sm:$0xf]
      %v2366 = vld [vmem:[%s3] sm:$0xf]
      %v2367 = vld [vmem:[%s3 + $0x4] sm:$0xf]
      %v2368 = vld [vmem:[%s3 + $0x8] sm:$0xf]
      %v2369 = vld [vmem:[%s3 + $0xc] sm:$0xf]
      %v2370 = vld [vmem:[%s3 + $0x10] sm:$0xf]
      %v2371 = vld [vmem:[%s3 + $0x14] sm:$0xf]
      %v2372 = vld [vmem:[%s3 + $0x18] sm:$0xf]
      %v2373 = vld [vmem:[%s3 + $0x1c] sm:$0xf]
      %v2374 = vld [vmem:[%s3 + $0x20] sm:$0xf]
      %v2375 = vld [vmem:[%s3 + $0x24] sm:$0xf]
      %v2376 = vld [vmem:[%s3 + $0x28] sm:$0xf]
      %v2377 = vld [vmem:[%s3 + $0x2c] sm:$0xf]
      %v2378 = vld [vmem:[%s3 + $0x30] sm:$0xf]
      %v2379 = vld [vmem:[%s3 + $0x34] sm:$0xf]
      %v2380 = vld [vmem:[%s3 + $0x38] sm:$0xf]
      %v2381 = vld [vmem:[%s3 + $0x3c] sm:$0xf]
      %v2382 = vld [vmem:[%s3 + $0x40] sm:$0xf]
      %v2383 = vld [vmem:[%s3 + $0x44] sm:$0xf]
      %v2384 = vld [vmem:[%s3 + $0x48] sm:$0xf]
      %v2385 = vld [vmem:[%s3 + $0x4c] sm:$0xf]
      %v2386 = vld [vmem:[%s3 + $0x50] sm:$0xf]
      %v2387 = vld [vmem:[%s3 + $0x54] sm:$0xf]
      %v2388 = vld [vmem:[%s3 + $0x58] sm:$0xf]
      %v2389 = vld [vmem:[%s3 + $0x5c] sm:$0xf]
      %v2390 = vld [vmem:[%s3 + $0x60] sm:$0xf]
      %v2391 = vld [vmem:[%s3 + $0x64] sm:$0xf]
      %v2392 = vld [vmem:[%s3 + $0x68] sm:$0xf]
      %v2393 = vld [vmem:[%s3 + $0x6c] sm:$0xf]
      %v2394 = vld [vmem:[%s3 + $0x70] sm:$0xf]
      %v2395 = vld [vmem:[%s3 + $0x74] sm:$0xf]
      %v2396 = vld [vmem:[%s3 + $0x78] sm:$0xf]
      %v2397 = vld [vmem:[%s3 + $0x7c] sm:$0xf]
      %v2398 = vld [vmem:[%s3 + $0x80] sm:$0xf]
      %v2399 = vld [vmem:[%s3 + $0x84] sm:$0xf]
      %v2400 = vld [vmem:[%s3 + $0x88] sm:$0xf]
      %v2401 = vld [vmem:[%s3 + $0x8c] sm:$0xf]
      %v2402 = vld [vmem:[%s3 + $0x90] sm:$0xf]
      %v2403 = vld [vmem:[%s3 + $0x94] sm:$0xf]
      %v2404 = vld [vmem:[%s3 + $0x98] sm:$0xf]
      %v2405 = vld [vmem:[%s3 + $0x9c] sm:$0xf]
      %v2406 = vld [vmem:[%s3 + $0xa0] sm:$0xf]
      %v2407 = vld [vmem:[%s3 + $0xa4] sm:$0xf]
      %v2408 = vld [vmem:[%s3 + $0xa8] sm:$0xf]
      %v2409 = vld [vmem:[%s3 + $0xac] sm:$0xf]
      %v2410 = vld [vmem:[%s3 + $0xb0] sm:$0xf]
      %v2411 = vld [vmem:[%s3 + $0xb4] sm:$0xf]
      %v2412 = vld [vmem:[%s3 + $0xb8] sm:$0xf]
      %v2413 = vld [vmem:[%s3 + $0xbc] sm:$0xf]
      %v2414 = vld [vmem:[%s3 + $0xc0] sm:$0xf]
      %v2415 = vld [vmem:[%s3 + $0xc4] sm:$0xf]
      %v2416 = vld [vmem:[%s3 + $0xc8] sm:$0xf]
      %v2417 = vld [vmem:[%s3 + $0xcc] sm:$0xf]
      %v2418 = vld [vmem:[%s3 + $0xd0] sm:$0xf]
      %v2419 = vld [vmem:[%s3 + $0xd4] sm:$0xf]
      %v2420 = vld [vmem:[%s3 + $0xd8] sm:$0xf]
      %v2421 = vld [vmem:[%s3 + $0xdc] sm:$0xf]
      %v2422 = vld [vmem:[%s3 + $0xe0] sm:$0xf]
      %v2423 = vld [vmem:[%s3 + $0xe4] sm:$0xf]
      %v2424 = vld [vmem:[%s3 + $0xe8] sm:$0xf]
      %v2425 = vld [vmem:[%s3 + $0xec] sm:$0xf]
      %v2426 = vld [vmem:[%s3 + $0xf0] sm:$0xf]
      %v2427 = vld [vmem:[%s3 + $0xf4] sm:$0xf]
      %v2428 = vld [vmem:[%s3 + $0xf8] sm:$0xf]
      %v2429 = vld [vmem:[%s3 + $0xfc] sm:$0xf]
      %v2430 = vld [vmem:[%s3 + $0x100] sm:$0xf]
      %v2431 = vld [vmem:[%s3 + $0x104] sm:$0xf]
      %v2432 = vld [vmem:[%s3 + $0x108] sm:$0xf]
      %v2433 = vld [vmem:[%s3 + $0x10c] sm:$0xf]
      %v2434 = vld [vmem:[%s3 + $0x110] sm:$0xf]
      %v2435 = vld [vmem:[%s3 + $0x114] sm:$0xf]
      %v2436 = vld [vmem:[%s3 + $0x118] sm:$0xf]
      %v2437 = vld [vmem:[%s3 + $0x11c] sm:$0xf]
      %v2438 = vld [vmem:[%s3 + $0x120] sm:$0xf]
      %v2439 = vld [vmem:[%s3 + $0x124] sm:$0xf]
      %v2440 = vld [vmem:[%s3 + $0x128] sm:$0xf]
      %v2441 = vld [vmem:[%s3 + $0x12c] sm:$0xf]
      %v2442 = vld [vmem:[%s3 + $0x130] sm:$0xf]
      %v2443 = vld [vmem:[%s3 + $0x134] sm:$0xf]
      %v2444 = vld [vmem:[%s3 + $0x138] sm:$0xf]
      %v2445 = vld [vmem:[%s3 + $0x13c] sm:$0xf]
      %v2446 = vld [vmem:[%s3 + $0x140] sm:$0xf]
      %v2447 = vld [vmem:[%s3 + $0x144] sm:$0xf]
      %v2448 = vld [vmem:[%s3 + $0x148] sm:$0xf]
      %v2449 = vld [vmem:[%s3 + $0x14c] sm:$0xf]
      %v2450 = vld [vmem:[%s3 + $0x150] sm:$0xf]
      %v2451 = vld [vmem:[%s3 + $0x154] sm:$0xf]
      %v2452 = vld [vmem:[%s3 + $0x158] sm:$0xf]
      %v2453 = vld [vmem:[%s3 + $0x15c] sm:$0xf]
      %v2454 = vld [vmem:[%s3 + $0x160] sm:$0xf]
      %v2455 = vld [vmem:[%s3 + $0x164] sm:$0xf]
      %v2456 = vld [vmem:[%s3 + $0x168] sm:$0xf]
      %v2457 = vld [vmem:[%s3 + $0x16c] sm:$0xf]
      %v2458 = vld [vmem:[%s3 + $0x170] sm:$0xf]
      %v2459 = vld [vmem:[%s3 + $0x174] sm:$0xf]
      %v2460 = vld [vmem:[%s3 + $0x178] sm:$0xf]
      %v2461 = vld [vmem:[%s3 + $0x17c] sm:$0xf]
      %v2462 = vld [vmem:[%s3 + $0x180] sm:$0xf]
      %v2463 = vld [vmem:[%s3 + $0x184] sm:$0xf]
      %v2464 = vld [vmem:[%s3 + $0x188] sm:$0xf]
      %v2465 = vld [vmem:[%s3 + $0x18c] sm:$0xf]
      %v2466 = vld [vmem:[%s3 + $0x190] sm:$0xf]
      %v2467 = vld [vmem:[%s3 + $0x194] sm:$0xf]
      %v2468 = vld [vmem:[%s3 + $0x198] sm:$0xf]
      %v2469 = vld [vmem:[%s3 + $0x19c] sm:$0xf]
      %v2470 = vld [vmem:[%s3 + $0x1a0] sm:$0xf]
      %v2471 = vld [vmem:[%s3 + $0x1a4] sm:$0xf]
      %v2472 = vld [vmem:[%s3 + $0x1a8] sm:$0xf]
      %v2473 = vld [vmem:[%s3 + $0x1ac] sm:$0xf]
      %v2474 = vld [vmem:[%s3 + $0x1b0] sm:$0xf]
      %v2475 = vld [vmem:[%s3 + $0x1b4] sm:$0xf]
      %v2476 = vld [vmem:[%s3 + $0x1b8] sm:$0xf]
      %v2477 = vld [vmem:[%s3 + $0x1bc] sm:$0xf]
      %v2478 = vld [vmem:[%s3 + $0x1c0] sm:$0xf]
      %v2479 = vld [vmem:[%s3 + $0x1c4] sm:$0xf]
      %v2480 = vld [vmem:[%s3 + $0x1c8] sm:$0xf]
      %v2481 = vld [vmem:[%s3 + $0x1cc] sm:$0xf]
      %v2482 = vld [vmem:[%s3 + $0x1d0] sm:$0xf]
      %v2483 = vld [vmem:[%s3 + $0x1d4] sm:$0xf]
      %v2484 = vld [vmem:[%s3 + $0x1d8] sm:$0xf]
      %v2485 = vld [vmem:[%s3 + $0x1dc] sm:$0xf]
      %v2486 = vld [vmem:[%s3 + $0x1e0] sm:$0xf]
      %v2487 = vld [vmem:[%s3 + $0x1e4] sm:$0xf]
      %v2488 = vld [vmem:[%s3 + $0x1e8] sm:$0xf]
      %v2489 = vld [vmem:[%s3 + $0x1ec] sm:$0xf]
      %v2490 = vld [vmem:[%s3 + $0x1f0] sm:$0xf]
      %v2491 = vld [vmem:[%s3 + $0x1f4] sm:$0xf]
      %v2492 = vld [vmem:[%s3 + $0x1f8] sm:$0xf]
      %v2493 = vld [vmem:[%s3 + $0x1fc] sm:$0xf]
      %v2494 = vld [vmem:[%s3 + $0x200] sm:$0xf]
      %v2495 = vld [vmem:[%s3 + $0x204] sm:$0xf]
      %v2496 = vld [vmem:[%s3 + $0x208] sm:$0xf]
      %v2497 = vld [vmem:[%s3 + $0x20c] sm:$0xf]
      %v2498 = vld [vmem:[%s3 + $0x210] sm:$0xf]
      %v2499 = vld [vmem:[%s3 + $0x214] sm:$0xf]
      %v2500 = vld [vmem:[%s3 + $0x218] sm:$0xf]
      %v2501 = vld [vmem:[%s3 + $0x21c] sm:$0xf]
      %v2502 = vld [vmem:[%s3 + $0x220] sm:$0xf]
      %v2503 = vld [vmem:[%s3 + $0x224] sm:$0xf]
      %v2504 = vld [vmem:[%s3 + $0x228] sm:$0xf]
      %v2505 = vld [vmem:[%s3 + $0x22c] sm:$0xf]
      %v2506 = vld [vmem:[%s3 + $0x230] sm:$0xf]
      %v2507 = vld [vmem:[%s3 + $0x234] sm:$0xf]
      %v2508 = vld [vmem:[%s3 + $0x238] sm:$0xf]
      %v2509 = vld [vmem:[%s3 + $0x23c] sm:$0xf]
      %v2670 = vunpack.c.l.b16 %v2206
      %v2671 = vunpack.c.h.b16 %v2206
      %v2672 = vunpack.c.l.b16 %v2207
      %v2673 = vunpack.c.h.b16 %v2207
      %v2674 = vunpack.c.l.b16 %v2208
      %v2675 = vunpack.c.h.b16 %v2208
      %v2676 = vunpack.c.l.b16 %v2209
      %v2677 = vunpack.c.h.b16 %v2209
      %v2678 = vunpack.c.l.b16 %v2210
      %v2679 = vunpack.c.l.b16 %v2211
      %v2680 = vunpack.c.h.b16 %v2211
      %v2681 = vunpack.c.l.b16 %v2212
      %v2682 = vunpack.c.h.b16 %v2212
      %v2683 = vunpack.c.l.b16 %v2213
      %v2684 = vunpack.c.h.b16 %v2213
      %v2685 = vunpack.c.l.b16 %v2214
      %v2686 = vunpack.c.h.b16 %v2214
      %v2687 = vunpack.c.l.b16 %v2215
      %v2688 = vunpack.c.l.b16 %v2216
      %v2689 = vunpack.c.h.b16 %v2216
      %v2690 = vunpack.c.l.b16 %v2217
      %v2691 = vunpack.c.h.b16 %v2217
      %v2692 = vunpack.c.l.b16 %v2218
      %v2693 = vunpack.c.h.b16 %v2218
      %v2694 = vunpack.c.l.b16 %v2219
      %v2695 = vunpack.c.h.b16 %v2219
      %v2696 = vunpack.c.l.b16 %v2220
      %v2697 = vunpack.c.l.b16 %v2221
      %v2698 = vunpack.c.h.b16 %v2221
      %v2699 = vunpack.c.l.b16 %v2222
      %v2700 = vunpack.c.h.b16 %v2222
      %v2701 = vunpack.c.l.b16 %v2223
      %v2702 = vunpack.c.h.b16 %v2223
      %v2703 = vunpack.c.l.b16 %v2224
      %v2704 = vunpack.c.h.b16 %v2224
      %v2705 = vunpack.c.l.b16 %v2225
      %v2706 = vunpack.c.l.b16 %v2226
      %v2707 = vunpack.c.h.b16 %v2226
      %v2708 = vunpack.c.l.b16 %v2227
      %v2709 = vunpack.c.h.b16 %v2227
      %v2710 = vunpack.c.l.b16 %v2228
      %v2711 = vunpack.c.h.b16 %v2228
      %v2712 = vunpack.c.l.b16 %v2229
      %v2713 = vunpack.c.h.b16 %v2229
      %v2714 = vunpack.c.l.b16 %v2230
      %v2715 = vunpack.c.l.b16 %v2231
      %v2716 = vunpack.c.h.b16 %v2231
      %v2717 = vunpack.c.l.b16 %v2232
      %v2718 = vunpack.c.h.b16 %v2232
      %v2719 = vunpack.c.l.b16 %v2233
      %v2720 = vunpack.c.h.b16 %v2233
      %v2721 = vunpack.c.l.b16 %v2234
      %v2722 = vunpack.c.h.b16 %v2234
      %v2723 = vunpack.c.l.b16 %v2235
      %v2724 = vunpack.c.l.b16 %v2236
      %v2725 = vunpack.c.h.b16 %v2236
      %v2726 = vunpack.c.l.b16 %v2237
      %v2727 = vunpack.c.h.b16 %v2237
      %v2728 = vunpack.c.l.b16 %v2238
      %v2729 = vunpack.c.h.b16 %v2238
      %v2730 = vunpack.c.l.b16 %v2239
      %v2731 = vunpack.c.h.b16 %v2239
      %v2732 = vunpack.c.l.b16 %v2240
      %v2733 = vunpack.c.l.b16 %v2241
      %v2734 = vunpack.c.h.b16 %v2241
      %v2735 = vunpack.c.l.b16 %v2242
      %v2736 = vunpack.c.h.b16 %v2242
      %v2737 = vunpack.c.l.b16 %v2243
      %v2738 = vunpack.c.h.b16 %v2243
      %v2739 = vunpack.c.l.b16 %v2244
      %v2740 = vunpack.c.h.b16 %v2244
      %v2741 = vunpack.c.l.b16 %v2245
      %v2742 = vunpack.c.l.b16 %v2246
      %v2743 = vunpack.c.h.b16 %v2246
      %v2744 = vunpack.c.l.b16 %v2247
      %v2745 = vunpack.c.h.b16 %v2247
      %v2746 = vunpack.c.l.b16 %v2248
      %v2747 = vunpack.c.h.b16 %v2248
      %v2748 = vunpack.c.l.b16 %v2249
      %v2749 = vunpack.c.h.b16 %v2249
      %v2750 = vunpack.c.l.b16 %v2250
      %v2751 = vunpack.c.l.b16 %v2251
      %v2752 = vunpack.c.h.b16 %v2251
      %v2753 = vunpack.c.l.b16 %v2252
      %v2754 = vunpack.c.h.b16 %v2252
      %v2755 = vunpack.c.l.b16 %v2253
      %v2756 = vunpack.c.h.b16 %v2253
      %v2757 = vunpack.c.l.b16 %v2254
      %v2758 = vunpack.c.h.b16 %v2254
      %v2759 = vunpack.c.l.b16 %v2255
      %v2760 = vunpack.c.l.b16 %v2256
      %v2761 = vunpack.c.h.b16 %v2256
      %v2762 = vunpack.c.l.b16 %v2257
      %v2763 = vunpack.c.h.b16 %v2257
      %v2764 = vunpack.c.l.b16 %v2258
      %v2765 = vunpack.c.h.b16 %v2258
      %v2766 = vunpack.c.l.b16 %v2259
      %v2767 = vunpack.c.h.b16 %v2259
      %v2768 = vunpack.c.l.b16 %v2260
      %v2769 = vunpack.c.l.b16 %v2261
      %v2770 = vunpack.c.h.b16 %v2261
      %v2771 = vunpack.c.l.b16 %v2262
      %v2772 = vunpack.c.h.b16 %v2262
      %v2773 = vunpack.c.l.b16 %v2263
      %v2774 = vunpack.c.h.b16 %v2263
      %v2775 = vunpack.c.l.b16 %v2264
      %v2776 = vunpack.c.h.b16 %v2264
      %v2777 = vunpack.c.l.b16 %v2265
      %v2778 = vunpack.c.l.b16 %v2266
      %v2779 = vunpack.c.h.b16 %v2266
      %v2780 = vunpack.c.l.b16 %v2267
      %v2781 = vunpack.c.h.b16 %v2267
      %v2782 = vunpack.c.l.b16 %v2268
      %v2783 = vunpack.c.h.b16 %v2268
      %v2784 = vunpack.c.l.b16 %v2269
      %v2785 = vunpack.c.h.b16 %v2269
      %v2786 = vunpack.c.l.b16 %v2270
      %v2787 = vunpack.c.l.b16 %v2271
      %v2788 = vunpack.c.h.b16 %v2271
      %v2789 = vunpack.c.l.b16 %v2272
      %v2790 = vunpack.c.h.b16 %v2272
      %v2791 = vunpack.c.l.b16 %v2273
      %v2792 = vunpack.c.h.b16 %v2273
      %v2793 = vunpack.c.l.b16 %v2274
      %v2794 = vunpack.c.h.b16 %v2274
      %v2795 = vunpack.c.l.b16 %v2275
      %v2796 = vunpack.c.l.b16 %v2276
      %v2797 = vunpack.c.h.b16 %v2276
      %v2798 = vunpack.c.l.b16 %v2277
      %v2799 = vunpack.c.h.b16 %v2277
      %v2800 = vunpack.c.l.b16 %v2278
      %v2801 = vunpack.c.h.b16 %v2278
      %v2802 = vunpack.c.l.b16 %v2279
      %v2803 = vunpack.c.h.b16 %v2279
      %v2804 = vunpack.c.l.b16 %v2280
      %v2805 = vunpack.c.l.b16 %v2281
      %v2806 = vunpack.c.h.b16 %v2281
      %v2807 = vunpack.c.l.b16 %v2282
      %v2808 = vunpack.c.h.b16 %v2282
      %v2809 = vunpack.c.l.b16 %v2283
      %v2810 = vunpack.c.h.b16 %v2283
      %v2811 = vunpack.c.l.b16 %v2284
      %v2812 = vunpack.c.h.b16 %v2284
      %v2813 = vunpack.c.l.b16 %v2285
      %v2814 = vunpack.c.l.b16 %v2286
      %v2815 = vunpack.c.h.b16 %v2286
      %v2816 = vunpack.c.l.b16 %v2287
      %v2817 = vunpack.c.h.b16 %v2287
      %v2818 = vunpack.c.l.b16 %v2288
      %v2819 = vunpack.c.h.b16 %v2288
      %v2820 = vunpack.c.l.b16 %v2289
      %v2821 = vunpack.c.h.b16 %v2289
      %v2822 = vunpack.c.l.b16 %v2290
      %v2823 = vunpack.c.l.b16 %v2291
      %v2824 = vunpack.c.h.b16 %v2291
      %v2825 = vunpack.c.l.b16 %v2292
      %v2826 = vunpack.c.h.b16 %v2292
      %v2827 = vunpack.c.l.b16 %v2293
      %v2828 = vunpack.c.h.b16 %v2293
      %v2829 = vunpack.c.l.b16 %v2294
      %v2830 = vunpack.c.h.b16 %v2294
      %v2831 = vunpack.c.l.b16 %v2295
      %v2832 = vunpack.c.l.b16 %v2296
      %v2833 = vunpack.c.h.b16 %v2296
      %v2834 = vunpack.c.l.b16 %v2297
      %v2835 = vunpack.c.h.b16 %v2297
      %v2836 = vunpack.c.l.b16 %v2298
      %v2837 = vunpack.c.h.b16 %v2298
      %v2838 = vunpack.c.l.b16 %v2299
      %v2839 = vunpack.c.h.b16 %v2299
      %v2840 = vunpack.c.l.b16 %v2300
      %v2841 = vunpack.c.l.b16 %v2301
      %v2842 = vunpack.c.h.b16 %v2301
      %v2843 = vunpack.c.l.b16 %v2302
      %v2844 = vunpack.c.h.b16 %v2302
      %v2845 = vunpack.c.l.b16 %v2303
      %v2846 = vunpack.c.h.b16 %v2303
      %v2847 = vunpack.c.l.b16 %v2304
      %v2848 = vunpack.c.h.b16 %v2304
      %v2849 = vunpack.c.l.b16 %v2305
      %v2850 = vunpack.c.l.b16 %v2306
      %v2851 = vunpack.c.h.b16 %v2306
      %v2852 = vunpack.c.l.b16 %v2307
      %v2853 = vunpack.c.h.b16 %v2307
      %v2854 = vunpack.c.l.b16 %v2308
      %v2855 = vunpack.c.h.b16 %v2308
      %v2856 = vunpack.c.l.b16 %v2309
      %v2857 = vunpack.c.h.b16 %v2309
      %v2858 = vunpack.c.l.b16 %v2310
      %v2859 = vunpack.c.l.b16 %v2311
      %v2860 = vunpack.c.h.b16 %v2311
      %v2861 = vunpack.c.l.b16 %v2312
      %v2862 = vunpack.c.h.b16 %v2312
      %v2863 = vunpack.c.l.b16 %v2313
      %v2864 = vunpack.c.h.b16 %v2313
      %v2865 = vunpack.c.l.b16 %v2314
      %v2866 = vunpack.c.h.b16 %v2314
      %v2867 = vunpack.c.l.b16 %v2315
      %v2868 = vunpack.c.l.b16 %v2316
      %v2869 = vunpack.c.h.b16 %v2316
      %v2870 = vunpack.c.l.b16 %v2317
      %v2871 = vunpack.c.h.b16 %v2317
      %v2872 = vunpack.c.l.b16 %v2318
      %v2873 = vunpack.c.h.b16 %v2318
      %v2874 = vunpack.c.l.b16 %v2319
      %v2875 = vunpack.c.h.b16 %v2319
      %v2876 = vunpack.c.l.b16 %v2320
      %v2877 = vunpack.c.l.b16 %v2321
      %v2878 = vunpack.c.h.b16 %v2321
      %v2879 = vunpack.c.l.b16 %v2322
      %v2880 = vunpack.c.h.b16 %v2322
      %v2881 = vunpack.c.l.b16 %v2323
      %v2882 = vunpack.c.h.b16 %v2323
      %v2883 = vunpack.c.l.b16 %v2324
      %v2884 = vunpack.c.h.b16 %v2324
      %v2885 = vunpack.c.l.b16 %v2325
      %v2886 = vunpack.c.l.b16 %v2326
      %v2887 = vunpack.c.h.b16 %v2326
      %v2888 = vunpack.c.l.b16 %v2327
      %v2889 = vunpack.c.h.b16 %v2327
      %v2890 = vunpack.c.l.b16 %v2328
      %v2891 = vunpack.c.h.b16 %v2328
      %v2892 = vunpack.c.l.b16 %v2329
      %v2893 = vunpack.c.h.b16 %v2329
      %v2894 = vunpack.c.l.b16 %v2330
      %v2895 = vunpack.c.l.b16 %v2331
      %v2896 = vunpack.c.h.b16 %v2331
      %v2897 = vunpack.c.l.b16 %v2332
      %v2898 = vunpack.c.h.b16 %v2332
      %v2899 = vunpack.c.l.b16 %v2333
      %v2900 = vunpack.c.h.b16 %v2333
      %v2901 = vunpack.c.l.b16 %v2334
      %v2902 = vunpack.c.h.b16 %v2334
      %v2903 = vunpack.c.l.b16 %v2335
      %v2904 = vunpack.c.l.b16 %v2336
      %v2905 = vunpack.c.h.b16 %v2336
      %v2906 = vunpack.c.l.b16 %v2337
      %v2907 = vunpack.c.h.b16 %v2337
      %v2908 = vunpack.c.l.b16 %v2338
      %v2909 = vunpack.c.h.b16 %v2338
      %v2910 = vunpack.c.l.b16 %v2339
      %v2911 = vunpack.c.h.b16 %v2339
      %v2912 = vunpack.c.l.b16 %v2340
      %v2913 = vunpack.c.l.b16 %v2341
      %v2914 = vunpack.c.h.b16 %v2341
      %v2915 = vunpack.c.l.b16 %v2342
      %v2916 = vunpack.c.h.b16 %v2342
      %v2917 = vunpack.c.l.b16 %v2343
      %v2918 = vunpack.c.h.b16 %v2343
      %v2919 = vunpack.c.l.b16 %v2344
      %v2920 = vunpack.c.h.b16 %v2344
      %v2921 = vunpack.c.l.b16 %v2345
      %v2922 = vunpack.c.l.b16 %v2346
      %v2923 = vunpack.c.h.b16 %v2346
      %v2924 = vunpack.c.l.b16 %v2347
      %v2925 = vunpack.c.h.b16 %v2347
      %v2926 = vunpack.c.l.b16 %v2348
      %v2927 = vunpack.c.h.b16 %v2348
      %v2928 = vunpack.c.l.b16 %v2349
      %v2929 = vunpack.c.h.b16 %v2349
      %v2930 = vunpack.c.l.b16 %v2350
      %v2931 = vunpack.c.l.b16 %v2351
      %v2932 = vunpack.c.h.b16 %v2351
      %v2933 = vunpack.c.l.b16 %v2352
      %v2934 = vunpack.c.h.b16 %v2352
      %v2935 = vunpack.c.l.b16 %v2353
      %v2936 = vunpack.c.h.b16 %v2353
      %v2937 = vunpack.c.l.b16 %v2354
      %v2938 = vunpack.c.h.b16 %v2354
      %v2939 = vunpack.c.l.b16 %v2355
      %v2940 = vunpack.c.l.b16 %v2356
      %v2941 = vunpack.c.h.b16 %v2356
      %v2942 = vunpack.c.l.b16 %v2357
      %v2943 = vunpack.c.h.b16 %v2357
      %v2944 = vunpack.c.l.b16 %v2358
      %v2945 = vunpack.c.h.b16 %v2358
      %v2946 = vunpack.c.l.b16 %v2359
      %v2947 = vunpack.c.h.b16 %v2359
      %v2948 = vunpack.c.l.b16 %v2360
      %v2949 = vunpack.c.l.b16 %v2361
      %v2950 = vunpack.c.h.b16 %v2361
      %v2951 = vunpack.c.l.b16 %v2362
      %v2952 = vunpack.c.h.b16 %v2362
      %v2953 = vunpack.c.l.b16 %v2363
      %v2954 = vunpack.c.h.b16 %v2363
      %v2955 = vunpack.c.l.b16 %v2364
      %v2956 = vunpack.c.h.b16 %v2364
      %v2957 = vunpack.c.l.b16 %v2365
      %v2958 = vpack.c.b16 %v2679, %v2670
      %v2959 = vpack.c.b16 %v2680, %v2671
      %v2960 = vpack.c.b16 %v2681, %v2672
      %v2961 = vpack.c.b16 %v2682, %v2673
      %v2962 = vpack.c.b16 %v2683, %v2674
      %v2963 = vpack.c.b16 %v2684, %v2675
      %v2964 = vpack.c.b16 %v2685, %v2676
      %v2965 = vpack.c.b16 %v2686, %v2677
      %v2966 = vpack.c.b16 %v2687, %v2678
      %v2967 = vpack.c.b16 %v2697, %v2688
      %v2968 = vpack.c.b16 %v2698, %v2689
      %v2969 = vpack.c.b16 %v2699, %v2690
      %v2970 = vpack.c.b16 %v2700, %v2691
      %v2971 = vpack.c.b16 %v2701, %v2692
      %v2972 = vpack.c.b16 %v2702, %v2693
      %v2973 = vpack.c.b16 %v2703, %v2694
      %v2974 = vpack.c.b16 %v2704, %v2695
      %v2975 = vpack.c.b16 %v2705, %v2696
      %v2976 = vpack.c.b16 %v2715, %v2706
      %v2977 = vpack.c.b16 %v2716, %v2707
      %v2978 = vpack.c.b16 %v2717, %v2708
      %v2979 = vpack.c.b16 %v2718, %v2709
      %v2980 = vpack.c.b16 %v2719, %v2710
      %v2981 = vpack.c.b16 %v2720, %v2711
      %v2982 = vpack.c.b16 %v2721, %v2712
      %v2983 = vpack.c.b16 %v2722, %v2713
      %v2984 = vpack.c.b16 %v2723, %v2714
      %v2985 = vpack.c.b16 %v2733, %v2724
      %v2986 = vpack.c.b16 %v2734, %v2725
      %v2987 = vpack.c.b16 %v2735, %v2726
      %v2988 = vpack.c.b16 %v2736, %v2727
      %v2989 = vpack.c.b16 %v2737, %v2728
      %v2990 = vpack.c.b16 %v2738, %v2729
      %v2991 = vpack.c.b16 %v2739, %v2730
      %v2992 = vpack.c.b16 %v2740, %v2731
      %v2993 = vpack.c.b16 %v2741, %v2732
      %v2994 = vpack.c.b16 %v2751, %v2742
      %v2995 = vpack.c.b16 %v2752, %v2743
      %v2996 = vpack.c.b16 %v2753, %v2744
      %v2997 = vpack.c.b16 %v2754, %v2745
      %v2998 = vpack.c.b16 %v2755, %v2746
      %v2999 = vpack.c.b16 %v2756, %v2747
      %v3000 = vpack.c.b16 %v2757, %v2748
      %v3001 = vpack.c.b16 %v2758, %v2749
      %v3002 = vpack.c.b16 %v2759, %v2750
      %v3003 = vpack.c.b16 %v2769, %v2760
      %v3004 = vpack.c.b16 %v2770, %v2761
      %v3005 = vpack.c.b16 %v2771, %v2762
      %v3006 = vpack.c.b16 %v2772, %v2763
      %v3007 = vpack.c.b16 %v2773, %v2764
      %v3008 = vpack.c.b16 %v2774, %v2765
      %v3009 = vpack.c.b16 %v2775, %v2766
      %v3010 = vpack.c.b16 %v2776, %v2767
      %v3011 = vpack.c.b16 %v2777, %v2768
      %v3012 = vpack.c.b16 %v2787, %v2778
      %v3013 = vpack.c.b16 %v2788, %v2779
      %v3014 = vpack.c.b16 %v2789, %v2780
      %v3015 = vpack.c.b16 %v2790, %v2781
      %v3016 = vpack.c.b16 %v2791, %v2782
      %v3017 = vpack.c.b16 %v2792, %v2783
      %v3018 = vpack.c.b16 %v2793, %v2784
      %v3019 = vpack.c.b16 %v2794, %v2785
      %v3020 = vpack.c.b16 %v2795, %v2786
      %v3021 = vpack.c.b16 %v2805, %v2796
      %v3022 = vpack.c.b16 %v2806, %v2797
      %v3023 = vpack.c.b16 %v2807, %v2798
      %v3024 = vpack.c.b16 %v2808, %v2799
      %v3025 = vpack.c.b16 %v2809, %v2800
      %v3026 = vpack.c.b16 %v2810, %v2801
      %v3027 = vpack.c.b16 %v2811, %v2802
      %v3028 = vpack.c.b16 %v2812, %v2803
      %v3029 = vpack.c.b16 %v2813, %v2804
      %v3030 = vpack.c.b16 %v2823, %v2814
      %v3031 = vpack.c.b16 %v2824, %v2815
      %v3032 = vpack.c.b16 %v2825, %v2816
      %v3033 = vpack.c.b16 %v2826, %v2817
      %v3034 = vpack.c.b16 %v2827, %v2818
      %v3035 = vpack.c.b16 %v2828, %v2819
      %v3036 = vpack.c.b16 %v2829, %v2820
      %v3037 = vpack.c.b16 %v2830, %v2821
      %v3038 = vpack.c.b16 %v2831, %v2822
      %v3039 = vpack.c.b16 %v2841, %v2832
      %v3040 = vpack.c.b16 %v2842, %v2833
      %v3041 = vpack.c.b16 %v2843, %v2834
      %v3042 = vpack.c.b16 %v2844, %v2835
      %v3043 = vpack.c.b16 %v2845, %v2836
      %v3044 = vpack.c.b16 %v2846, %v2837
      %v3045 = vpack.c.b16 %v2847, %v2838
      %v3046 = vpack.c.b16 %v2848, %v2839
      %v3047 = vpack.c.b16 %v2849, %v2840
      %v3048 = vpack.c.b16 %v2859, %v2850
      %v3049 = vpack.c.b16 %v2860, %v2851
      %v3050 = vpack.c.b16 %v2861, %v2852
      %v3051 = vpack.c.b16 %v2862, %v2853
      %v3052 = vpack.c.b16 %v2863, %v2854
      %v3053 = vpack.c.b16 %v2864, %v2855
      %v3054 = vpack.c.b16 %v2865, %v2856
      %v3055 = vpack.c.b16 %v2866, %v2857
      %v3056 = vpack.c.b16 %v2867, %v2858
      %v3057 = vpack.c.b16 %v2877, %v2868
      %v3058 = vpack.c.b16 %v2878, %v2869
      %v3059 = vpack.c.b16 %v2879, %v2870
      %v3060 = vpack.c.b16 %v2880, %v2871
      %v3061 = vpack.c.b16 %v2881, %v2872
      %v3062 = vpack.c.b16 %v2882, %v2873
      %v3063 = vpack.c.b16 %v2883, %v2874
      %v3064 = vpack.c.b16 %v2884, %v2875
      %v3065 = vpack.c.b16 %v2885, %v2876
      %v3066 = vpack.c.b16 %v2895, %v2886
      %v3067 = vpack.c.b16 %v2896, %v2887
      %v3068 = vpack.c.b16 %v2897, %v2888
      %v3069 = vpack.c.b16 %v2898, %v2889
      %v3070 = vpack.c.b16 %v2899, %v2890
      %v3071 = vpack.c.b16 %v2900, %v2891
      %v3072 = vpack.c.b16 %v2901, %v2892
      %v3073 = vpack.c.b16 %v2902, %v2893
      %v3074 = vpack.c.b16 %v2903, %v2894
      %v3075 = vpack.c.b16 %v2913, %v2904
      %v3076 = vpack.c.b16 %v2914, %v2905
      %v3077 = vpack.c.b16 %v2915, %v2906
      %v3078 = vpack.c.b16 %v2916, %v2907
      %v3079 = vpack.c.b16 %v2917, %v2908
      %v3080 = vpack.c.b16 %v2918, %v2909
      %v3081 = vpack.c.b16 %v2919, %v2910
      %v3082 = vpack.c.b16 %v2920, %v2911
      %v3083 = vpack.c.b16 %v2921, %v2912
      %v3084 = vpack.c.b16 %v2931, %v2922
      %v3085 = vpack.c.b16 %v2932, %v2923
      %v3086 = vpack.c.b16 %v2933, %v2924
      %v3087 = vpack.c.b16 %v2934, %v2925
      %v3088 = vpack.c.b16 %v2935, %v2926
      %v3089 = vpack.c.b16 %v2936, %v2927
      %v3090 = vpack.c.b16 %v2937, %v2928
      %v3091 = vpack.c.b16 %v2938, %v2929
      %v3092 = vpack.c.b16 %v2939, %v2930
      %v3093 = vpack.c.b16 %v2949, %v2940
      %v3094 = vpack.c.b16 %v2950, %v2941
      %v3095 = vpack.c.b16 %v2951, %v2942
      %v3096 = vpack.c.b16 %v2952, %v2943
      %v3097 = vpack.c.b16 %v2953, %v2944
      %v3098 = vpack.c.b16 %v2954, %v2945
      %v3099 = vpack.c.b16 %v2955, %v2946
      %v3100 = vpack.c.b16 %v2956, %v2947
      %v3101 = vpack.c.b16 %v2957, %v2948
      %v3390 = vunpack.c.l.b16 %v2366
      %v3391 = vunpack.c.l.b16 %v2367
      %v3392 = vunpack.c.l.b16 %v2368
      %v3393 = vunpack.c.l.b16 %v2369
      %v3394 = vunpack.c.l.b16 %v2370
      %v3395 = vunpack.c.l.b16 %v2371
      %v3396 = vunpack.c.l.b16 %v2372
      %v3397 = vunpack.c.l.b16 %v2373
      %v3398 = vunpack.c.l.b16 %v2374
      %v3399 = vunpack.c.l.b16 %v2375
      %v3400 = vunpack.c.l.b16 %v2376
      %v3401 = vunpack.c.l.b16 %v2377
      %v3402 = vunpack.c.l.b16 %v2378
      %v3403 = vunpack.c.l.b16 %v2379
      %v3404 = vunpack.c.l.b16 %v2380
      %v3405 = vunpack.c.l.b16 %v2381
      %v3406 = vunpack.c.l.b16 %v2382
      %v3407 = vunpack.c.l.b16 %v2383
      %v3408 = vunpack.c.l.b16 %v2384
      %v3409 = vunpack.c.l.b16 %v2385
      %v3410 = vunpack.c.l.b16 %v2386
      %v3411 = vunpack.c.l.b16 %v2387
      %v3412 = vunpack.c.l.b16 %v2388
      %v3413 = vunpack.c.l.b16 %v2389
      %v3414 = vunpack.c.l.b16 %v2390
      %v3415 = vunpack.c.l.b16 %v2391
      %v3416 = vunpack.c.l.b16 %v2392
      %v3417 = vunpack.c.l.b16 %v2393
      %v3418 = vunpack.c.l.b16 %v2394
      %v3419 = vunpack.c.l.b16 %v2395
      %v3420 = vunpack.c.l.b16 %v2396
      %v3421 = vunpack.c.l.b16 %v2397
      %v3422 = vunpack.c.l.b16 %v2398
      %v3423 = vunpack.c.l.b16 %v2399
      %v3424 = vunpack.c.l.b16 %v2400
      %v3425 = vunpack.c.l.b16 %v2401
      %v3426 = vunpack.c.l.b16 %v2402
      %v3427 = vunpack.c.l.b16 %v2403
      %v3428 = vunpack.c.l.b16 %v2404
      %v3429 = vunpack.c.l.b16 %v2405
      %v3430 = vunpack.c.l.b16 %v2406
      %v3431 = vunpack.c.l.b16 %v2407
      %v3432 = vunpack.c.l.b16 %v2408
      %v3433 = vunpack.c.l.b16 %v2409
      %v3434 = vunpack.c.l.b16 %v2410
      %v3435 = vunpack.c.l.b16 %v2411
      %v3436 = vunpack.c.l.b16 %v2412
      %v3437 = vunpack.c.l.b16 %v2413
      %v3438 = vunpack.c.l.b16 %v2414
      %v3439 = vunpack.c.l.b16 %v2415
      %v3440 = vunpack.c.l.b16 %v2416
      %v3441 = vunpack.c.l.b16 %v2417
      %v3442 = vunpack.c.l.b16 %v2418
      %v3443 = vunpack.c.l.b16 %v2419
      %v3444 = vunpack.c.l.b16 %v2420
      %v3445 = vunpack.c.l.b16 %v2421
      %v3446 = vunpack.c.l.b16 %v2422
      %v3447 = vunpack.c.l.b16 %v2423
      %v3448 = vunpack.c.l.b16 %v2424
      %v3449 = vunpack.c.l.b16 %v2425
      %v3450 = vunpack.c.l.b16 %v2426
      %v3451 = vunpack.c.l.b16 %v2427
      %v3452 = vunpack.c.l.b16 %v2428
      %v3453 = vunpack.c.l.b16 %v2429
      %v3454 = vunpack.c.l.b16 %v2430
      %v3455 = vunpack.c.l.b16 %v2431
      %v3456 = vunpack.c.l.b16 %v2432
      %v3457 = vunpack.c.l.b16 %v2433
      %v3458 = vunpack.c.l.b16 %v2434
      %v3459 = vunpack.c.l.b16 %v2435
      %v3460 = vunpack.c.l.b16 %v2436
      %v3461 = vunpack.c.l.b16 %v2437
      %v3462 = vunpack.c.l.b16 %v2438
      %v3463 = vunpack.c.l.b16 %v2439
      %v3464 = vunpack.c.l.b16 %v2440
      %v3465 = vunpack.c.l.b16 %v2441
      %v3466 = vunpack.c.l.b16 %v2442
      %v3467 = vunpack.c.l.b16 %v2443
      %v3468 = vunpack.c.l.b16 %v2444
      %v3469 = vunpack.c.l.b16 %v2445
      %v3470 = vunpack.c.l.b16 %v2446
      %v3471 = vunpack.c.l.b16 %v2447
      %v3472 = vunpack.c.l.b16 %v2448
      %v3473 = vunpack.c.l.b16 %v2449
      %v3474 = vunpack.c.l.b16 %v2450
      %v3475 = vunpack.c.l.b16 %v2451
      %v3476 = vunpack.c.l.b16 %v2452
      %v3477 = vunpack.c.l.b16 %v2453
      %v3478 = vunpack.c.l.b16 %v2454
      %v3479 = vunpack.c.l.b16 %v2455
      %v3480 = vunpack.c.l.b16 %v2456
      %v3481 = vunpack.c.l.b16 %v2457
      %v3482 = vunpack.c.l.b16 %v2458
      %v3483 = vunpack.c.l.b16 %v2459
      %v3484 = vunpack.c.l.b16 %v2460
      %v3485 = vunpack.c.l.b16 %v2461
      %v3486 = vunpack.c.l.b16 %v2462
      %v3487 = vunpack.c.l.b16 %v2463
      %v3488 = vunpack.c.l.b16 %v2464
      %v3489 = vunpack.c.l.b16 %v2465
      %v3490 = vunpack.c.l.b16 %v2466
      %v3491 = vunpack.c.l.b16 %v2467
      %v3492 = vunpack.c.l.b16 %v2468
      %v3493 = vunpack.c.l.b16 %v2469
      %v3494 = vunpack.c.l.b16 %v2470
      %v3495 = vunpack.c.l.b16 %v2471
      %v3496 = vunpack.c.l.b16 %v2472
      %v3497 = vunpack.c.l.b16 %v2473
      %v3498 = vunpack.c.l.b16 %v2474
      %v3499 = vunpack.c.l.b16 %v2475
      %v3500 = vunpack.c.l.b16 %v2476
      %v3501 = vunpack.c.l.b16 %v2477
      %v3502 = vunpack.c.l.b16 %v2478
      %v3503 = vunpack.c.l.b16 %v2479
      %v3504 = vunpack.c.l.b16 %v2480
      %v3505 = vunpack.c.l.b16 %v2481
      %v3506 = vunpack.c.l.b16 %v2482
      %v3507 = vunpack.c.l.b16 %v2483
      %v3508 = vunpack.c.l.b16 %v2484
      %v3509 = vunpack.c.l.b16 %v2485
      %v3510 = vunpack.c.l.b16 %v2486
      %v3511 = vunpack.c.l.b16 %v2487
      %v3512 = vunpack.c.l.b16 %v2488
      %v3513 = vunpack.c.l.b16 %v2489
      %v3514 = vunpack.c.l.b16 %v2490
      %v3515 = vunpack.c.l.b16 %v2491
      %v3516 = vunpack.c.l.b16 %v2492
      %v3517 = vunpack.c.l.b16 %v2493
      %v3518 = vunpack.c.l.b16 %v2494
      %v3519 = vunpack.c.l.b16 %v2495
      %v3520 = vunpack.c.l.b16 %v2496
      %v3521 = vunpack.c.l.b16 %v2497
      %v3522 = vunpack.c.l.b16 %v2498
      %v3523 = vunpack.c.l.b16 %v2499
      %v3524 = vunpack.c.l.b16 %v2500
      %v3525 = vunpack.c.l.b16 %v2501
      %v3526 = vunpack.c.l.b16 %v2502
      %v3527 = vunpack.c.l.b16 %v2503
      %v3528 = vunpack.c.l.b16 %v2504
      %v3529 = vunpack.c.l.b16 %v2505
      %v3530 = vunpack.c.l.b16 %v2506
      %v3531 = vunpack.c.l.b16 %v2507
      %v3532 = vunpack.c.l.b16 %v2508
      %v3533 = vunpack.c.l.b16 %v2509
      %v3534 = vpack.c.b16 %v3391, %v3390
      %v3535 = vpack.c.b16 %v3393, %v3392
      %v3536 = vpack.c.b16 %v3395, %v3394
      %v3537 = vpack.c.b16 %v3397, %v3396
      %v3538 = vpack.c.b16 %v3399, %v3398
      %v3539 = vpack.c.b16 %v3401, %v3400
      %v3540 = vpack.c.b16 %v3403, %v3402
      %v3541 = vpack.c.b16 %v3405, %v3404
      %v3542 = vpack.c.b16 %v3407, %v3406
      %v3543 = vpack.c.b16 %v3409, %v3408
      %v3544 = vpack.c.b16 %v3411, %v3410
      %v3545 = vpack.c.b16 %v3413, %v3412
      %v3546 = vpack.c.b16 %v3415, %v3414
      %v3547 = vpack.c.b16 %v3417, %v3416
      %v3548 = vpack.c.b16 %v3419, %v3418
      %v3549 = vpack.c.b16 %v3421, %v3420
      %v3550 = vpack.c.b16 %v3423, %v3422
      %v3551 = vpack.c.b16 %v3425, %v3424
      %v3552 = vpack.c.b16 %v3427, %v3426
      %v3553 = vpack.c.b16 %v3429, %v3428
      %v3554 = vpack.c.b16 %v3431, %v3430
      %v3555 = vpack.c.b16 %v3433, %v3432
      %v3556 = vpack.c.b16 %v3435, %v3434
      %v3557 = vpack.c.b16 %v3437, %v3436
      %v3558 = vpack.c.b16 %v3439, %v3438
      %v3559 = vpack.c.b16 %v3441, %v3440
      %v3560 = vpack.c.b16 %v3443, %v3442
      %v3561 = vpack.c.b16 %v3445, %v3444
      %v3562 = vpack.c.b16 %v3447, %v3446
      %v3563 = vpack.c.b16 %v3449, %v3448
      %v3564 = vpack.c.b16 %v3451, %v3450
      %v3565 = vpack.c.b16 %v3453, %v3452
      %v3566 = vpack.c.b16 %v3455, %v3454
      %v3567 = vpack.c.b16 %v3457, %v3456
      %v3568 = vpack.c.b16 %v3459, %v3458
      %v3569 = vpack.c.b16 %v3461, %v3460
      %v3570 = vpack.c.b16 %v3463, %v3462
      %v3571 = vpack.c.b16 %v3465, %v3464
      %v3572 = vpack.c.b16 %v3467, %v3466
      %v3573 = vpack.c.b16 %v3469, %v3468
      %v3574 = vpack.c.b16 %v3471, %v3470
      %v3575 = vpack.c.b16 %v3473, %v3472
      %v3576 = vpack.c.b16 %v3475, %v3474
      %v3577 = vpack.c.b16 %v3477, %v3476
      %v3578 = vpack.c.b16 %v3479, %v3478
      %v3579 = vpack.c.b16 %v3481, %v3480
      %v3580 = vpack.c.b16 %v3483, %v3482
      %v3581 = vpack.c.b16 %v3485, %v3484
      %v3582 = vpack.c.b16 %v3487, %v3486
      %v3583 = vpack.c.b16 %v3489, %v3488
      %v3584 = vpack.c.b16 %v3491, %v3490
      %v3585 = vpack.c.b16 %v3493, %v3492
      %v3586 = vpack.c.b16 %v3495, %v3494
      %v3587 = vpack.c.b16 %v3497, %v3496
      %v3588 = vpack.c.b16 %v3499, %v3498
      %v3589 = vpack.c.b16 %v3501, %v3500
      %v3590 = vpack.c.b16 %v3503, %v3502
      %v3591 = vpack.c.b16 %v3505, %v3504
      %v3592 = vpack.c.b16 %v3507, %v3506
      %v3593 = vpack.c.b16 %v3509, %v3508
      %v3594 = vpack.c.b16 %v3511, %v3510
      %v3595 = vpack.c.b16 %v3513, %v3512
      %v3596 = vpack.c.b16 %v3515, %v3514
      %v3597 = vpack.c.b16 %v3517, %v3516
      %v3598 = vpack.c.b16 %v3519, %v3518
      %v3599 = vpack.c.b16 %v3521, %v3520
      %v3600 = vpack.c.b16 %v3523, %v3522
      %v3601 = vpack.c.b16 %v3525, %v3524
      %v3602 = vpack.c.b16 %v3527, %v3526
      %v3603 = vpack.c.b16 %v3529, %v3528
      %v3604 = vpack.c.b16 %v3531, %v3530
      %v3605 = vpack.c.b16 %v3533, %v3532
      %3678 = vmatpush.bf16.msra.mxu0 %v3541
      %3679 = vmatpush.bf16.msra.mxu0 %v3540
      %3680 = vmatpush.bf16.msra.mxu0 %v3539
      %3681 = vmatpush.bf16.msra.mxu0 %v3538
      %3682 = vmatpush.bf16.msra.mxu0 %v3537
      %3683 = vmatpush.bf16.msra.mxu0 %v3536
      %3684 = vmatpush.bf16.msra.mxu0 %v3535
      %3685 = vmatpush.bf16.msra.mxu0 %v3534
      %3686 = vmatmul.bf16.gmra.mxu0 %v2958
      %v3687 = vpop.f32.mrf.mxu0
      %v3688 = vadd.f32 0.0, %v3687
      %v3689 = vpop.f32.mrf.mxu0
      %v3690 = vadd.f32 0.0, %v3689
      %3691 = vmatmul.bf16.gmra.mxu0 %v2967
      %v3692 = vpop.f32.mrf.mxu0
      %v3693 = vadd.f32 0.0, %v3692
      %v3694 = vpop.f32.mrf.mxu0
      %v3695 = vadd.f32 0.0, %v3694
      %3696 = vmatmul.bf16.gmra.mxu0 %v2976
      %v3697 = vpop.f32.mrf.mxu0
      %v3698 = vadd.f32 0.0, %v3697
      %v3699 = vpop.f32.mrf.mxu0
      %v3700 = vadd.f32 0.0, %v3699
      %3701 = vmatmul.bf16.gmra.mxu0 %v2985
      %v3702 = vpop.f32.mrf.mxu0
      %v3703 = vadd.f32 0.0, %v3702
      %v3704 = vpop.f32.mrf.mxu0
      %v3705 = vadd.f32 0.0, %v3704
      %3706 = vmatmul.bf16.gmra.mxu0 %v2994
      %v3707 = vpop.f32.mrf.mxu0
      %v3708 = vadd.f32 0.0, %v3707
      %v3709 = vpop.f32.mrf.mxu0
      %v3710 = vadd.f32 0.0, %v3709
      %3711 = vmatmul.bf16.gmra.mxu0 %v3003
      %v3712 = vpop.f32.mrf.mxu0
      %v3713 = vadd.f32 0.0, %v3712
      %v3714 = vpop.f32.mrf.mxu0
      %v3715 = vadd.f32 0.0, %v3714
      %3716 = vmatmul.bf16.gmra.mxu0 %v3012
      %v3717 = vpop.f32.mrf.mxu0
      %v3718 = vadd.f32 0.0, %v3717
      %v3719 = vpop.f32.mrf.mxu0
      %v3720 = vadd.f32 0.0, %v3719
      %3721 = vmatmul.bf16.gmra.mxu0 %v3021
      %v3722 = vpop.f32.mrf.mxu0
      %v3723 = vadd.f32 0.0, %v3722
      %v3724 = vpop.f32.mrf.mxu0
      %v3725 = vadd.f32 0.0, %v3724
      %3726 = vmatmul.bf16.gmra.mxu0 %v3030
      %v3727 = vpop.f32.mrf.mxu0
      %v3728 = vadd.f32 0.0, %v3727
      %v3729 = vpop.f32.mrf.mxu0
      %v3730 = vadd.f32 0.0, %v3729
      %3731 = vmatmul.bf16.gmra.mxu0 %v3039
      %v3732 = vpop.f32.mrf.mxu0
      %v3733 = vadd.f32 0.0, %v3732
      %v3734 = vpop.f32.mrf.mxu0
      %v3735 = vadd.f32 0.0, %v3734
      %3736 = vmatmul.bf16.gmra.mxu0 %v3048
      %v3737 = vpop.f32.mrf.mxu0
      %v3738 = vadd.f32 0.0, %v3737
      %v3739 = vpop.f32.mrf.mxu0
      %v3740 = vadd.f32 0.0, %v3739
      %3741 = vmatmul.bf16.gmra.mxu0 %v3057
      %v3742 = vpop.f32.mrf.mxu0
      %v3743 = vadd.f32 0.0, %v3742
      %v3744 = vpop.f32.mrf.mxu0
      %v3745 = vadd.f32 0.0, %v3744
      %3746 = vmatmul.bf16.gmra.mxu0 %v3066
      %v3747 = vpop.f32.mrf.mxu0
      %v3748 = vadd.f32 0.0, %v3747
      %v3749 = vpop.f32.mrf.mxu0
      %v3750 = vadd.f32 0.0, %v3749
      %3751 = vmatmul.bf16.gmra.mxu0 %v3075
      %v3752 = vpop.f32.mrf.mxu0
      %v3753 = vadd.f32 0.0, %v3752
      %v3754 = vpop.f32.mrf.mxu0
      %v3755 = vadd.f32 0.0, %v3754
      %3756 = vmatmul.bf16.gmra.mxu0 %v3084
      %v3757 = vpop.f32.mrf.mxu0
      %v3758 = vadd.f32 0.0, %v3757
      %v3759 = vpop.f32.mrf.mxu0
      %v3760 = vadd.f32 0.0, %v3759
      %3761 = vmatmul.bf16.gmra.mxu0 %v3093
      %v3762 = vpop.f32.mrf.mxu0
      %v3763 = vadd.f32 0.0, %v3762
      %v3764 = vpop.f32.mrf.mxu0
      %v3765 = vadd.f32 0.0, %v3764
      %3766 = vdwg.mxu0
      %3767 = vmatpush.bf16.msra.mxu0 %v3549
      %3768 = vmatpush.bf16.msra.mxu0 %v3548
      %3769 = vmatpush.bf16.msra.mxu0 %v3547
      %3770 = vmatpush.bf16.msra.mxu0 %v3546
      %3771 = vmatpush.bf16.msra.mxu0 %v3545
      %3772 = vmatpush.bf16.msra.mxu0 %v3544
      %3773 = vmatpush.bf16.msra.mxu0 %v3543
      %3774 = vmatpush.bf16.msra.mxu0 %v3542
      %3775 = vmatmul.bf16.gmra.mxu0 %v2959
      %v3776 = vpop.f32.mrf.mxu0
      %v3777 = vadd.f32 %v3688, %v3776
      %v3778 = vpop.f32.mrf.mxu0
      %v3779 = vadd.f32 %v3690, %v3778
      %3780 = vmatmul.bf16.gmra.mxu0 %v2968
      %v3781 = vpop.f32.mrf.mxu0
      %v3782 = vadd.f32 %v3693, %v3781
      %v3783 = vpop.f32.mrf.mxu0
      %v3784 = vadd.f32 %v3695, %v3783
      %3785 = vmatmul.bf16.gmra.mxu0 %v2977
      %v3786 = vpop.f32.mrf.mxu0
      %v3787 = vadd.f32 %v3698, %v3786
      %v3788 = vpop.f32.mrf.mxu0
      %v3789 = vadd.f32 %v3700, %v3788
      %3790 = vmatmul.bf16.gmra.mxu0 %v2986
      %v3791 = vpop.f32.mrf.mxu0
      %v3792 = vadd.f32 %v3703, %v3791
      %v3793 = vpop.f32.mrf.mxu0
      %v3794 = vadd.f32 %v3705, %v3793
      %3795 = vmatmul.bf16.gmra.mxu0 %v2995
      %v3796 = vpop.f32.mrf.mxu0
      %v3797 = vadd.f32 %v3708, %v3796
      %v3798 = vpop.f32.mrf.mxu0
      %v3799 = vadd.f32 %v3710, %v3798
      %3800 = vmatmul.bf16.gmra.mxu0 %v3004
      %v3801 = vpop.f32.mrf.mxu0
      %v3802 = vadd.f32 %v3713, %v3801
      %v3803 = vpop.f32.mrf.mxu0
      %v3804 = vadd.f32 %v3715, %v3803
      %3805 = vmatmul.bf16.gmra.mxu0 %v3013
      %v3806 = vpop.f32.mrf.mxu0
      %v3807 = vadd.f32 %v3718, %v3806
      %v3808 = vpop.f32.mrf.mxu0
      %v3809 = vadd.f32 %v3720, %v3808
      %3810 = vmatmul.bf16.gmra.mxu0 %v3022
      %v3811 = vpop.f32.mrf.mxu0
      %v3812 = vadd.f32 %v3723, %v3811
      %v3813 = vpop.f32.mrf.mxu0
      %v3814 = vadd.f32 %v3725, %v3813
      %3815 = vmatmul.bf16.gmra.mxu0 %v3031
      %v3816 = vpop.f32.mrf.mxu0
      %v3817 = vadd.f32 %v3728, %v3816
      %v3818 = vpop.f32.mrf.mxu0
      %v3819 = vadd.f32 %v3730, %v3818
      %3820 = vmatmul.bf16.gmra.mxu0 %v3040
      %v3821 = vpop.f32.mrf.mxu0
      %v3822 = vadd.f32 %v3733, %v3821
      %v3823 = vpop.f32.mrf.mxu0
      %v3824 = vadd.f32 %v3735, %v3823
      %3825 = vmatmul.bf16.gmra.mxu0 %v3049
      %v3826 = vpop.f32.mrf.mxu0
      %v3827 = vadd.f32 %v3738, %v3826
      %v3828 = vpop.f32.mrf.mxu0
      %v3829 = vadd.f32 %v3740, %v3828
      %3830 = vmatmul.bf16.gmra.mxu0 %v3058
      %v3831 = vpop.f32.mrf.mxu0
      %v3832 = vadd.f32 %v3743, %v3831
      %v3833 = vpop.f32.mrf.mxu0
      %v3834 = vadd.f32 %v3745, %v3833
      %3835 = vmatmul.bf16.gmra.mxu0 %v3067
      %v3836 = vpop.f32.mrf.mxu0
      %v3837 = vadd.f32 %v3748, %v3836
      %v3838 = vpop.f32.mrf.mxu0
      %v3839 = vadd.f32 %v3750, %v3838
      %3840 = vmatmul.bf16.gmra.mxu0 %v3076
      %v3841 = vpop.f32.mrf.mxu0
      %v3842 = vadd.f32 %v3753, %v3841
      %v3843 = vpop.f32.mrf.mxu0
      %v3844 = vadd.f32 %v3755, %v3843
      %3845 = vmatmul.bf16.gmra.mxu0 %v3085
      %v3846 = vpop.f32.mrf.mxu0
      %v3847 = vadd.f32 %v3758, %v3846
      %v3848 = vpop.f32.mrf.mxu0
      %v3849 = vadd.f32 %v3760, %v3848
      %3850 = vmatmul.bf16.gmra.mxu0 %v3094
      %v3851 = vpop.f32.mrf.mxu0
      %v3852 = vadd.f32 %v3763, %v3851
      %v3853 = vpop.f32.mrf.mxu0
      %v3854 = vadd.f32 %v3765, %v3853
      %3855 = vdwg.mxu0
      %3856 = vmatpush.bf16.msra.mxu0 %v3557
      %3857 = vmatpush.bf16.msra.mxu0 %v3556
      %3858 = vmatpush.bf16.msra.mxu0 %v3555
      %3859 = vmatpush.bf16.msra.mxu0 %v3554
      %3860 = vmatpush.bf16.msra.mxu0 %v3553
      %3861 = vmatpush.bf16.msra.mxu0 %v3552
      %3862 = vmatpush.bf16.msra.mxu0 %v3551
      %3863 = vmatpush.bf16.msra.mxu0 %v3550
      %3864 = vmatmul.bf16.gmra.mxu0 %v2960
      %v3865 = vpop.f32.mrf.mxu0
      %v3866 = vadd.f32 %v3777, %v3865
      %v3867 = vpop.f32.mrf.mxu0
      %v3868 = vadd.f32 %v3779, %v3867
      %3869 = vmatmul.bf16.gmra.mxu0 %v2969
      %v3870 = vpop.f32.mrf.mxu0
      %v3871 = vadd.f32 %v3782, %v3870
      %v3872 = vpop.f32.mrf.mxu0
      %v3873 = vadd.f32 %v3784, %v3872
      %3874 = vmatmul.bf16.gmra.mxu0 %v2978
      %v3875 = vpop.f32.mrf.mxu0
      %v3876 = vadd.f32 %v3787, %v3875
      %v3877 = vpop.f32.mrf.mxu0
      %v3878 = vadd.f32 %v3789, %v3877
      %3879 = vmatmul.bf16.gmra.mxu0 %v2987
      %v3880 = vpop.f32.mrf.mxu0
      %v3881 = vadd.f32 %v3792, %v3880
      %v3882 = vpop.f32.mrf.mxu0
      %v3883 = vadd.f32 %v3794, %v3882
      %3884 = vmatmul.bf16.gmra.mxu0 %v2996
      %v3885 = vpop.f32.mrf.mxu0
      %v3886 = vadd.f32 %v3797, %v3885
      %v3887 = vpop.f32.mrf.mxu0
      %v3888 = vadd.f32 %v3799, %v3887
      %3889 = vmatmul.bf16.gmra.mxu0 %v3005
      %v3890 = vpop.f32.mrf.mxu0
      %v3891 = vadd.f32 %v3802, %v3890
      %v3892 = vpop.f32.mrf.mxu0
      %v3893 = vadd.f32 %v3804, %v3892
      %3894 = vmatmul.bf16.gmra.mxu0 %v3014
      %v3895 = vpop.f32.mrf.mxu0
      %v3896 = vadd.f32 %v3807, %v3895
      %v3897 = vpop.f32.mrf.mxu0
      %v3898 = vadd.f32 %v3809, %v3897
      %3899 = vmatmul.bf16.gmra.mxu0 %v3023
      %v3900 = vpop.f32.mrf.mxu0
      %v3901 = vadd.f32 %v3812, %v3900
      %v3902 = vpop.f32.mrf.mxu0
      %v3903 = vadd.f32 %v3814, %v3902
      %3904 = vmatmul.bf16.gmra.mxu0 %v3032
      %v3905 = vpop.f32.mrf.mxu0
      %v3906 = vadd.f32 %v3817, %v3905
      %v3907 = vpop.f32.mrf.mxu0
      %v3908 = vadd.f32 %v3819, %v3907
      %3909 = vmatmul.bf16.gmra.mxu0 %v3041
      %v3910 = vpop.f32.mrf.mxu0
      %v3911 = vadd.f32 %v3822, %v3910
      %v3912 = vpop.f32.mrf.mxu0
      %v3913 = vadd.f32 %v3824, %v3912
      %3914 = vmatmul.bf16.gmra.mxu0 %v3050
      %v3915 = vpop.f32.mrf.mxu0
      %v3916 = vadd.f32 %v3827, %v3915
      %v3917 = vpop.f32.mrf.mxu0
      %v3918 = vadd.f32 %v3829, %v3917
      %3919 = vmatmul.bf16.gmra.mxu0 %v3059
      %v3920 = vpop.f32.mrf.mxu0
      %v3921 = vadd.f32 %v3832, %v3920
      %v3922 = vpop.f32.mrf.mxu0
      %v3923 = vadd.f32 %v3834, %v3922
      %3924 = vmatmul.bf16.gmra.mxu0 %v3068
      %v3925 = vpop.f32.mrf.mxu0
      %v3926 = vadd.f32 %v3837, %v3925
      %v3927 = vpop.f32.mrf.mxu0
      %v3928 = vadd.f32 %v3839, %v3927
      %3929 = vmatmul.bf16.gmra.mxu0 %v3077
      %v3930 = vpop.f32.mrf.mxu0
      %v3931 = vadd.f32 %v3842, %v3930
      %v3932 = vpop.f32.mrf.mxu0
      %v3933 = vadd.f32 %v3844, %v3932
      %3934 = vmatmul.bf16.gmra.mxu0 %v3086
      %v3935 = vpop.f32.mrf.mxu0
      %v3936 = vadd.f32 %v3847, %v3935
      %v3937 = vpop.f32.mrf.mxu0
      %v3938 = vadd.f32 %v3849, %v3937
      %3939 = vmatmul.bf16.gmra.mxu0 %v3095
      %v3940 = vpop.f32.mrf.mxu0
      %v3941 = vadd.f32 %v3852, %v3940
      %v3942 = vpop.f32.mrf.mxu0
      %v3943 = vadd.f32 %v3854, %v3942
      %3944 = vdwg.mxu0
      %3945 = vmatpush.bf16.msra.mxu0 %v3565
      %3946 = vmatpush.bf16.msra.mxu0 %v3564
      %3947 = vmatpush.bf16.msra.mxu0 %v3563
      %3948 = vmatpush.bf16.msra.mxu0 %v3562
      %3949 = vmatpush.bf16.msra.mxu0 %v3561
      %3950 = vmatpush.bf16.msra.mxu0 %v3560
      %3951 = vmatpush.bf16.msra.mxu0 %v3559
      %3952 = vmatpush.bf16.msra.mxu0 %v3558
      %3953 = vmatmul.bf16.gmra.mxu0 %v2961
      %v3954 = vpop.f32.mrf.mxu0
      %v3955 = vadd.f32 %v3866, %v3954
      %v3956 = vpop.f32.mrf.mxu0
      %v3957 = vadd.f32 %v3868, %v3956
      %3958 = vmatmul.bf16.gmra.mxu0 %v2970
      %v3959 = vpop.f32.mrf.mxu0
      %v3960 = vadd.f32 %v3871, %v3959
      %v3961 = vpop.f32.mrf.mxu0
      %v3962 = vadd.f32 %v3873, %v3961
      %3963 = vmatmul.bf16.gmra.mxu0 %v2979
      %v3964 = vpop.f32.mrf.mxu0
      %v3965 = vadd.f32 %v3876, %v3964
      %v3966 = vpop.f32.mrf.mxu0
      %v3967 = vadd.f32 %v3878, %v3966
      %3968 = vmatmul.bf16.gmra.mxu0 %v2988
      %v3969 = vpop.f32.mrf.mxu0
      %v3970 = vadd.f32 %v3881, %v3969
      %v3971 = vpop.f32.mrf.mxu0
      %v3972 = vadd.f32 %v3883, %v3971
      %3973 = vmatmul.bf16.gmra.mxu0 %v2997
      %v3974 = vpop.f32.mrf.mxu0
      %v3975 = vadd.f32 %v3886, %v3974
      %v3976 = vpop.f32.mrf.mxu0
      %v3977 = vadd.f32 %v3888, %v3976
      %3978 = vmatmul.bf16.gmra.mxu0 %v3006
      %v3979 = vpop.f32.mrf.mxu0
      %v3980 = vadd.f32 %v3891, %v3979
      %v3981 = vpop.f32.mrf.mxu0
      %v3982 = vadd.f32 %v3893, %v3981
      %3983 = vmatmul.bf16.gmra.mxu0 %v3015
      %v3984 = vpop.f32.mrf.mxu0
      %v3985 = vadd.f32 %v3896, %v3984
      %v3986 = vpop.f32.mrf.mxu0
      %v3987 = vadd.f32 %v3898, %v3986
      %3988 = vmatmul.bf16.gmra.mxu0 %v3024
      %v3989 = vpop.f32.mrf.mxu0
      %v3990 = vadd.f32 %v3901, %v3989
      %v3991 = vpop.f32.mrf.mxu0
      %v3992 = vadd.f32 %v3903, %v3991
      %3993 = vmatmul.bf16.gmra.mxu0 %v3033
      %v3994 = vpop.f32.mrf.mxu0
      %v3995 = vadd.f32 %v3906, %v3994
      %v3996 = vpop.f32.mrf.mxu0
      %v3997 = vadd.f32 %v3908, %v3996
      %3998 = vmatmul.bf16.gmra.mxu0 %v3042
      %v3999 = vpop.f32.mrf.mxu0
      %v4000 = vadd.f32 %v3911, %v3999
      %v4001 = vpop.f32.mrf.mxu0
      %v4002 = vadd.f32 %v3913, %v4001
      %4003 = vmatmul.bf16.gmra.mxu0 %v3051
      %v4004 = vpop.f32.mrf.mxu0
      %v4005 = vadd.f32 %v3916, %v4004
      %v4006 = vpop.f32.mrf.mxu0
      %v4007 = vadd.f32 %v3918, %v4006
      %4008 = vmatmul.bf16.gmra.mxu0 %v3060
      %v4009 = vpop.f32.mrf.mxu0
      %v4010 = vadd.f32 %v3921, %v4009
      %v4011 = vpop.f32.mrf.mxu0
      %v4012 = vadd.f32 %v3923, %v4011
      %4013 = vmatmul.bf16.gmra.mxu0 %v3069
      %v4014 = vpop.f32.mrf.mxu0
      %v4015 = vadd.f32 %v3926, %v4014
      %v4016 = vpop.f32.mrf.mxu0
      %v4017 = vadd.f32 %v3928, %v4016
      %4018 = vmatmul.bf16.gmra.mxu0 %v3078
      %v4019 = vpop.f32.mrf.mxu0
      %v4020 = vadd.f32 %v3931, %v4019
      %v4021 = vpop.f32.mrf.mxu0
      %v4022 = vadd.f32 %v3933, %v4021
      %4023 = vmatmul.bf16.gmra.mxu0 %v3087
      %v4024 = vpop.f32.mrf.mxu0
      %v4025 = vadd.f32 %v3936, %v4024
      %v4026 = vpop.f32.mrf.mxu0
      %v4027 = vadd.f32 %v3938, %v4026
      %4028 = vmatmul.bf16.gmra.mxu0 %v3096
      %v4029 = vpop.f32.mrf.mxu0
      %v4030 = vadd.f32 %v3941, %v4029
      %v4031 = vpop.f32.mrf.mxu0
      %v4032 = vadd.f32 %v3943, %v4031
      %4033 = vdwg.mxu0
      %4034 = vmatpush.bf16.msra.mxu0 %v3573
      %4035 = vmatpush.bf16.msra.mxu0 %v3572
      %4036 = vmatpush.bf16.msra.mxu0 %v3571
      %4037 = vmatpush.bf16.msra.mxu0 %v3570
      %4038 = vmatpush.bf16.msra.mxu0 %v3569
      %4039 = vmatpush.bf16.msra.mxu0 %v3568
      %4040 = vmatpush.bf16.msra.mxu0 %v3567
      %4041 = vmatpush.bf16.msra.mxu0 %v3566
      %4042 = vmatmul.bf16.gmra.mxu0 %v2962
      %v4043 = vpop.f32.mrf.mxu0
      %v4044 = vadd.f32 %v3955, %v4043
      %v4045 = vpop.f32.mrf.mxu0
      %v4046 = vadd.f32 %v3957, %v4045
      %4047 = vmatmul.bf16.gmra.mxu0 %v2971
      %v4048 = vpop.f32.mrf.mxu0
      %v4049 = vadd.f32 %v3960, %v4048
      %v4050 = vpop.f32.mrf.mxu0
      %v4051 = vadd.f32 %v3962, %v4050
      %4052 = vmatmul.bf16.gmra.mxu0 %v2980
      %v4053 = vpop.f32.mrf.mxu0
      %v4054 = vadd.f32 %v3965, %v4053
      %v4055 = vpop.f32.mrf.mxu0
      %v4056 = vadd.f32 %v3967, %v4055
      %4057 = vmatmul.bf16.gmra.mxu0 %v2989
      %v4058 = vpop.f32.mrf.mxu0
      %v4059 = vadd.f32 %v3970, %v4058
      %v4060 = vpop.f32.mrf.mxu0
      %v4061 = vadd.f32 %v3972, %v4060
      %4062 = vmatmul.bf16.gmra.mxu0 %v2998
      %v4063 = vpop.f32.mrf.mxu0
      %v4064 = vadd.f32 %v3975, %v4063
      %v4065 = vpop.f32.mrf.mxu0
      %v4066 = vadd.f32 %v3977, %v4065
      %4067 = vmatmul.bf16.gmra.mxu0 %v3007
      %v4068 = vpop.f32.mrf.mxu0
      %v4069 = vadd.f32 %v3980, %v4068
      %v4070 = vpop.f32.mrf.mxu0
      %v4071 = vadd.f32 %v3982, %v4070
      %4072 = vmatmul.bf16.gmra.mxu0 %v3016
      %v4073 = vpop.f32.mrf.mxu0
      %v4074 = vadd.f32 %v3985, %v4073
      %v4075 = vpop.f32.mrf.mxu0
      %v4076 = vadd.f32 %v3987, %v4075
      %4077 = vmatmul.bf16.gmra.mxu0 %v3025
      %v4078 = vpop.f32.mrf.mxu0
      %v4079 = vadd.f32 %v3990, %v4078
      %v4080 = vpop.f32.mrf.mxu0
      %v4081 = vadd.f32 %v3992, %v4080
      %4082 = vmatmul.bf16.gmra.mxu0 %v3034
      %v4083 = vpop.f32.mrf.mxu0
      %v4084 = vadd.f32 %v3995, %v4083
      %v4085 = vpop.f32.mrf.mxu0
      %v4086 = vadd.f32 %v3997, %v4085
      %4087 = vmatmul.bf16.gmra.mxu0 %v3043
      %v4088 = vpop.f32.mrf.mxu0
      %v4089 = vadd.f32 %v4000, %v4088
      %v4090 = vpop.f32.mrf.mxu0
      %v4091 = vadd.f32 %v4002, %v4090
      %4092 = vmatmul.bf16.gmra.mxu0 %v3052
      %v4093 = vpop.f32.mrf.mxu0
      %v4094 = vadd.f32 %v4005, %v4093
      %v4095 = vpop.f32.mrf.mxu0
      %v4096 = vadd.f32 %v4007, %v4095
      %4097 = vmatmul.bf16.gmra.mxu0 %v3061
      %v4098 = vpop.f32.mrf.mxu0
      %v4099 = vadd.f32 %v4010, %v4098
      %v4100 = vpop.f32.mrf.mxu0
      %v4101 = vadd.f32 %v4012, %v4100
      %4102 = vmatmul.bf16.gmra.mxu0 %v3070
      %v4103 = vpop.f32.mrf.mxu0
      %v4104 = vadd.f32 %v4015, %v4103
      %v4105 = vpop.f32.mrf.mxu0
      %v4106 = vadd.f32 %v4017, %v4105
      %4107 = vmatmul.bf16.gmra.mxu0 %v3079
      %v4108 = vpop.f32.mrf.mxu0
      %v4109 = vadd.f32 %v4020, %v4108
      %v4110 = vpop.f32.mrf.mxu0
      %v4111 = vadd.f32 %v4022, %v4110
      %4112 = vmatmul.bf16.gmra.mxu0 %v3088
      %v4113 = vpop.f32.mrf.mxu0
      %v4114 = vadd.f32 %v4025, %v4113
      %v4115 = vpop.f32.mrf.mxu0
      %v4116 = vadd.f32 %v4027, %v4115
      %4117 = vmatmul.bf16.gmra.mxu0 %v3097
      %v4118 = vpop.f32.mrf.mxu0
      %v4119 = vadd.f32 %v4030, %v4118
      %v4120 = vpop.f32.mrf.mxu0
      %v4121 = vadd.f32 %v4032, %v4120
      %4122 = vdwg.mxu0
      %4123 = vmatpush.bf16.msra.mxu0 %v3581
      %4124 = vmatpush.bf16.msra.mxu0 %v3580
      %4125 = vmatpush.bf16.msra.mxu0 %v3579
      %4126 = vmatpush.bf16.msra.mxu0 %v3578
      %4127 = vmatpush.bf16.msra.mxu0 %v3577
      %4128 = vmatpush.bf16.msra.mxu0 %v3576
      %4129 = vmatpush.bf16.msra.mxu0 %v3575
      %4130 = vmatpush.bf16.msra.mxu0 %v3574
      %4131 = vmatmul.bf16.gmra.mxu0 %v2963
      %v4132 = vpop.f32.mrf.mxu0
      %v4133 = vadd.f32 %v4044, %v4132
      %v4134 = vpop.f32.mrf.mxu0
      %v4135 = vadd.f32 %v4046, %v4134
      %4136 = vmatmul.bf16.gmra.mxu0 %v2972
      %v4137 = vpop.f32.mrf.mxu0
      %v4138 = vadd.f32 %v4049, %v4137
      %v4139 = vpop.f32.mrf.mxu0
      %v4140 = vadd.f32 %v4051, %v4139
      %4141 = vmatmul.bf16.gmra.mxu0 %v2981
      %v4142 = vpop.f32.mrf.mxu0
      %v4143 = vadd.f32 %v4054, %v4142
      %v4144 = vpop.f32.mrf.mxu0
      %v4145 = vadd.f32 %v4056, %v4144
      %4146 = vmatmul.bf16.gmra.mxu0 %v2990
      %v4147 = vpop.f32.mrf.mxu0
      %v4148 = vadd.f32 %v4059, %v4147
      %v4149 = vpop.f32.mrf.mxu0
      %v4150 = vadd.f32 %v4061, %v4149
      %4151 = vmatmul.bf16.gmra.mxu0 %v2999
      %v4152 = vpop.f32.mrf.mxu0
      %v4153 = vadd.f32 %v4064, %v4152
      %v4154 = vpop.f32.mrf.mxu0
      %v4155 = vadd.f32 %v4066, %v4154
      %4156 = vmatmul.bf16.gmra.mxu0 %v3008
      %v4157 = vpop.f32.mrf.mxu0
      %v4158 = vadd.f32 %v4069, %v4157
      %v4159 = vpop.f32.mrf.mxu0
      %v4160 = vadd.f32 %v4071, %v4159
      %4161 = vmatmul.bf16.gmra.mxu0 %v3017
      %v4162 = vpop.f32.mrf.mxu0
      %v4163 = vadd.f32 %v4074, %v4162
      %v4164 = vpop.f32.mrf.mxu0
      %v4165 = vadd.f32 %v4076, %v4164
      %4166 = vmatmul.bf16.gmra.mxu0 %v3026
      %v4167 = vpop.f32.mrf.mxu0
      %v4168 = vadd.f32 %v4079, %v4167
      %v4169 = vpop.f32.mrf.mxu0
      %v4170 = vadd.f32 %v4081, %v4169
      %4171 = vmatmul.bf16.gmra.mxu0 %v3035
      %v4172 = vpop.f32.mrf.mxu0
      %v4173 = vadd.f32 %v4084, %v4172
      %v4174 = vpop.f32.mrf.mxu0
      %v4175 = vadd.f32 %v4086, %v4174
      %4176 = vmatmul.bf16.gmra.mxu0 %v3044
      %v4177 = vpop.f32.mrf.mxu0
      %v4178 = vadd.f32 %v4089, %v4177
      %v4179 = vpop.f32.mrf.mxu0
      %v4180 = vadd.f32 %v4091, %v4179
      %4181 = vmatmul.bf16.gmra.mxu0 %v3053
      %v4182 = vpop.f32.mrf.mxu0
      %v4183 = vadd.f32 %v4094, %v4182
      %v4184 = vpop.f32.mrf.mxu0
      %v4185 = vadd.f32 %v4096, %v4184
      %4186 = vmatmul.bf16.gmra.mxu0 %v3062
      %v4187 = vpop.f32.mrf.mxu0
      %v4188 = vadd.f32 %v4099, %v4187
      %v4189 = vpop.f32.mrf.mxu0
      %v4190 = vadd.f32 %v4101, %v4189
      %4191 = vmatmul.bf16.gmra.mxu0 %v3071
      %v4192 = vpop.f32.mrf.mxu0
      %v4193 = vadd.f32 %v4104, %v4192
      %v4194 = vpop.f32.mrf.mxu0
      %v4195 = vadd.f32 %v4106, %v4194
      %4196 = vmatmul.bf16.gmra.mxu0 %v3080
      %v4197 = vpop.f32.mrf.mxu0
      %v4198 = vadd.f32 %v4109, %v4197
      %v4199 = vpop.f32.mrf.mxu0
      %v4200 = vadd.f32 %v4111, %v4199
      %4201 = vmatmul.bf16.gmra.mxu0 %v3089
      %v4202 = vpop.f32.mrf.mxu0
      %v4203 = vadd.f32 %v4114, %v4202
      %v4204 = vpop.f32.mrf.mxu0
      %v4205 = vadd.f32 %v4116, %v4204
      %4206 = vmatmul.bf16.gmra.mxu0 %v3098
      %v4207 = vpop.f32.mrf.mxu0
      %v4208 = vadd.f32 %v4119, %v4207
      %v4209 = vpop.f32.mrf.mxu0
      %v4210 = vadd.f32 %v4121, %v4209
      %4211 = vdwg.mxu0
      %4212 = vmatpush.bf16.msra.mxu0 %v3589
      %4213 = vmatpush.bf16.msra.mxu0 %v3588
      %4214 = vmatpush.bf16.msra.mxu0 %v3587
      %4215 = vmatpush.bf16.msra.mxu0 %v3586
      %4216 = vmatpush.bf16.msra.mxu0 %v3585
      %4217 = vmatpush.bf16.msra.mxu0 %v3584
      %4218 = vmatpush.bf16.msra.mxu0 %v3583
      %4219 = vmatpush.bf16.msra.mxu0 %v3582
      %4220 = vmatmul.bf16.gmra.mxu0 %v2964
      %v4221 = vpop.f32.mrf.mxu0
      %v4222 = vadd.f32 %v4133, %v4221
      %v4223 = vpop.f32.mrf.mxu0
      %v4224 = vadd.f32 %v4135, %v4223
      %4225 = vmatmul.bf16.gmra.mxu0 %v2973
      %v4226 = vpop.f32.mrf.mxu0
      %v4227 = vadd.f32 %v4138, %v4226
      %v4228 = vpop.f32.mrf.mxu0
      %v4229 = vadd.f32 %v4140, %v4228
      %4230 = vmatmul.bf16.gmra.mxu0 %v2982
      %v4231 = vpop.f32.mrf.mxu0
      %v4232 = vadd.f32 %v4143, %v4231
      %v4233 = vpop.f32.mrf.mxu0
      %v4234 = vadd.f32 %v4145, %v4233
      %4235 = vmatmul.bf16.gmra.mxu0 %v2991
      %v4236 = vpop.f32.mrf.mxu0
      %v4237 = vadd.f32 %v4148, %v4236
      %v4238 = vpop.f32.mrf.mxu0
      %v4239 = vadd.f32 %v4150, %v4238
      %4240 = vmatmul.bf16.gmra.mxu0 %v3000
      %v4241 = vpop.f32.mrf.mxu0
      %v4242 = vadd.f32 %v4153, %v4241
      %v4243 = vpop.f32.mrf.mxu0
      %v4244 = vadd.f32 %v4155, %v4243
      %4245 = vmatmul.bf16.gmra.mxu0 %v3009
      %v4246 = vpop.f32.mrf.mxu0
      %v4247 = vadd.f32 %v4158, %v4246
      %v4248 = vpop.f32.mrf.mxu0
      %v4249 = vadd.f32 %v4160, %v4248
      %4250 = vmatmul.bf16.gmra.mxu0 %v3018
      %v4251 = vpop.f32.mrf.mxu0
      %v4252 = vadd.f32 %v4163, %v4251
      %v4253 = vpop.f32.mrf.mxu0
      %v4254 = vadd.f32 %v4165, %v4253
      %4255 = vmatmul.bf16.gmra.mxu0 %v3027
      %v4256 = vpop.f32.mrf.mxu0
      %v4257 = vadd.f32 %v4168, %v4256
      %v4258 = vpop.f32.mrf.mxu0
      %v4259 = vadd.f32 %v4170, %v4258
      %4260 = vmatmul.bf16.gmra.mxu0 %v3036
      %v4261 = vpop.f32.mrf.mxu0
      %v4262 = vadd.f32 %v4173, %v4261
      %v4263 = vpop.f32.mrf.mxu0
      %v4264 = vadd.f32 %v4175, %v4263
      %4265 = vmatmul.bf16.gmra.mxu0 %v3045
      %v4266 = vpop.f32.mrf.mxu0
      %v4267 = vadd.f32 %v4178, %v4266
      %v4268 = vpop.f32.mrf.mxu0
      %v4269 = vadd.f32 %v4180, %v4268
      %4270 = vmatmul.bf16.gmra.mxu0 %v3054
      %v4271 = vpop.f32.mrf.mxu0
      %v4272 = vadd.f32 %v4183, %v4271
      %v4273 = vpop.f32.mrf.mxu0
      %v4274 = vadd.f32 %v4185, %v4273
      %4275 = vmatmul.bf16.gmra.mxu0 %v3063
      %v4276 = vpop.f32.mrf.mxu0
      %v4277 = vadd.f32 %v4188, %v4276
      %v4278 = vpop.f32.mrf.mxu0
      %v4279 = vadd.f32 %v4190, %v4278
      %4280 = vmatmul.bf16.gmra.mxu0 %v3072
      %v4281 = vpop.f32.mrf.mxu0
      %v4282 = vadd.f32 %v4193, %v4281
      %v4283 = vpop.f32.mrf.mxu0
      %v4284 = vadd.f32 %v4195, %v4283
      %4285 = vmatmul.bf16.gmra.mxu0 %v3081
      %v4286 = vpop.f32.mrf.mxu0
      %v4287 = vadd.f32 %v4198, %v4286
      %v4288 = vpop.f32.mrf.mxu0
      %v4289 = vadd.f32 %v4200, %v4288
      %4290 = vmatmul.bf16.gmra.mxu0 %v3090
      %v4291 = vpop.f32.mrf.mxu0
      %v4292 = vadd.f32 %v4203, %v4291
      %v4293 = vpop.f32.mrf.mxu0
      %v4294 = vadd.f32 %v4205, %v4293
      %4295 = vmatmul.bf16.gmra.mxu0 %v3099
      %v4296 = vpop.f32.mrf.mxu0
      %v4297 = vadd.f32 %v4208, %v4296
      %v4298 = vpop.f32.mrf.mxu0
      %v4299 = vadd.f32 %v4210, %v4298
      %4300 = vdwg.mxu0
      %4301 = vmatpush.bf16.msra.mxu0 %v3597
      %4302 = vmatpush.bf16.msra.mxu0 %v3596
      %4303 = vmatpush.bf16.msra.mxu0 %v3595
      %4304 = vmatpush.bf16.msra.mxu0 %v3594
      %4305 = vmatpush.bf16.msra.mxu0 %v3593
      %4306 = vmatpush.bf16.msra.mxu0 %v3592
      %4307 = vmatpush.bf16.msra.mxu0 %v3591
      %4308 = vmatpush.bf16.msra.mxu0 %v3590
      %4309 = vmatmul.bf16.gmra.mxu0 %v2965
      %v4310 = vpop.f32.mrf.mxu0
      %v4311 = vadd.f32 %v4222, %v4310
      %v4312 = vpop.f32.mrf.mxu0
      %v4313 = vadd.f32 %v4224, %v4312
      %4314 = vmatmul.bf16.gmra.mxu0 %v2974
      %v4315 = vpop.f32.mrf.mxu0
      %v4316 = vadd.f32 %v4227, %v4315
      %v4317 = vpop.f32.mrf.mxu0
      %v4318 = vadd.f32 %v4229, %v4317
      %4319 = vmatmul.bf16.gmra.mxu0 %v2983
      %v4320 = vpop.f32.mrf.mxu0
      %v4321 = vadd.f32 %v4232, %v4320
      %v4322 = vpop.f32.mrf.mxu0
      %v4323 = vadd.f32 %v4234, %v4322
      %4324 = vmatmul.bf16.gmra.mxu0 %v2992
      %v4325 = vpop.f32.mrf.mxu0
      %v4326 = vadd.f32 %v4237, %v4325
      %v4327 = vpop.f32.mrf.mxu0
      %v4328 = vadd.f32 %v4239, %v4327
      %4329 = vmatmul.bf16.gmra.mxu0 %v3001
      %v4330 = vpop.f32.mrf.mxu0
      %v4331 = vadd.f32 %v4242, %v4330
      %v4332 = vpop.f32.mrf.mxu0
      %v4333 = vadd.f32 %v4244, %v4332
      %4334 = vmatmul.bf16.gmra.mxu0 %v3010
      %v4335 = vpop.f32.mrf.mxu0
      %v4336 = vadd.f32 %v4247, %v4335
      %v4337 = vpop.f32.mrf.mxu0
      %v4338 = vadd.f32 %v4249, %v4337
      %4339 = vmatmul.bf16.gmra.mxu0 %v3019
      %v4340 = vpop.f32.mrf.mxu0
      %v4341 = vadd.f32 %v4252, %v4340
      %v4342 = vpop.f32.mrf.mxu0
      %v4343 = vadd.f32 %v4254, %v4342
      %4344 = vmatmul.bf16.gmra.mxu0 %v3028
      %v4345 = vpop.f32.mrf.mxu0
      %v4346 = vadd.f32 %v4257, %v4345
      %v4347 = vpop.f32.mrf.mxu0
      %v4348 = vadd.f32 %v4259, %v4347
      %4349 = vmatmul.bf16.gmra.mxu0 %v3037
      %v4350 = vpop.f32.mrf.mxu0
      %v4351 = vadd.f32 %v4262, %v4350
      %v4352 = vpop.f32.mrf.mxu0
      %v4353 = vadd.f32 %v4264, %v4352
      %4354 = vmatmul.bf16.gmra.mxu0 %v3046
      %v4355 = vpop.f32.mrf.mxu0
      %v4356 = vadd.f32 %v4267, %v4355
      %v4357 = vpop.f32.mrf.mxu0
      %v4358 = vadd.f32 %v4269, %v4357
      %4359 = vmatmul.bf16.gmra.mxu0 %v3055
      %v4360 = vpop.f32.mrf.mxu0
      %v4361 = vadd.f32 %v4272, %v4360
      %v4362 = vpop.f32.mrf.mxu0
      %v4363 = vadd.f32 %v4274, %v4362
      %4364 = vmatmul.bf16.gmra.mxu0 %v3064
      %v4365 = vpop.f32.mrf.mxu0
      %v4366 = vadd.f32 %v4277, %v4365
      %v4367 = vpop.f32.mrf.mxu0
      %v4368 = vadd.f32 %v4279, %v4367
      %4369 = vmatmul.bf16.gmra.mxu0 %v3073
      %v4370 = vpop.f32.mrf.mxu0
      %v4371 = vadd.f32 %v4282, %v4370
      %v4372 = vpop.f32.mrf.mxu0
      %v4373 = vadd.f32 %v4284, %v4372
      %4374 = vmatmul.bf16.gmra.mxu0 %v3082
      %v4375 = vpop.f32.mrf.mxu0
      %v4376 = vadd.f32 %v4287, %v4375
      %v4377 = vpop.f32.mrf.mxu0
      %v4378 = vadd.f32 %v4289, %v4377
      %4379 = vmatmul.bf16.gmra.mxu0 %v3091
      %v4380 = vpop.f32.mrf.mxu0
      %v4381 = vadd.f32 %v4292, %v4380
      %v4382 = vpop.f32.mrf.mxu0
      %v4383 = vadd.f32 %v4294, %v4382
      %4384 = vmatmul.bf16.gmra.mxu0 %v3100
      %v4385 = vpop.f32.mrf.mxu0
      %v4386 = vadd.f32 %v4297, %v4385
      %v4387 = vpop.f32.mrf.mxu0
      %v4388 = vadd.f32 %v4299, %v4387
      %4389 = vdwg.mxu0
      %4390 = vmatpush.bf16.msra.mxu0 %v3605
      %4391 = vmatpush.bf16.msra.mxu0 %v3604
      %4392 = vmatpush.bf16.msra.mxu0 %v3603
      %4393 = vmatpush.bf16.msra.mxu0 %v3602
      %4394 = vmatpush.bf16.msra.mxu0 %v3601
      %4395 = vmatpush.bf16.msra.mxu0 %v3600
      %4396 = vmatpush.bf16.msra.mxu0 %v3599
      %4397 = vmatpush.bf16.msra.mxu0 %v3598
      %4398 = vmatmul.bf16.gmra.mxu0 %v2966
      %v4399 = vpop.f32.mrf.mxu0
      %v4400 = vadd.f32 %v4311, %v4399
      %v4401 = vpop.f32.mrf.mxu0
      %v4402 = vadd.f32 %v4313, %v4401
      %4403 = vmatmul.bf16.gmra.mxu0 %v2975
      %v4404 = vpop.f32.mrf.mxu0
      %v4405 = vadd.f32 %v4316, %v4404
      %v4406 = vpop.f32.mrf.mxu0
      %v4407 = vadd.f32 %v4318, %v4406
      %4408 = vmatmul.bf16.gmra.mxu0 %v2984
      %v4409 = vpop.f32.mrf.mxu0
      %v4410 = vadd.f32 %v4321, %v4409
      %v4411 = vpop.f32.mrf.mxu0
      %v4412 = vadd.f32 %v4323, %v4411
      %4413 = vmatmul.bf16.gmra.mxu0 %v2993
      %v4414 = vpop.f32.mrf.mxu0
      %v4415 = vadd.f32 %v4326, %v4414
      %v4416 = vpop.f32.mrf.mxu0
      %v4417 = vadd.f32 %v4328, %v4416
      %4418 = vmatmul.bf16.gmra.mxu0 %v3002
      %v4419 = vpop.f32.mrf.mxu0
      %v4420 = vadd.f32 %v4331, %v4419
      %v4421 = vpop.f32.mrf.mxu0
      %v4422 = vadd.f32 %v4333, %v4421
      %4423 = vmatmul.bf16.gmra.mxu0 %v3011
      %v4424 = vpop.f32.mrf.mxu0
      %v4425 = vadd.f32 %v4336, %v4424
      %v4426 = vpop.f32.mrf.mxu0
      %v4427 = vadd.f32 %v4338, %v4426
      %4428 = vmatmul.bf16.gmra.mxu0 %v3020
      %v4429 = vpop.f32.mrf.mxu0
      %v4430 = vadd.f32 %v4341, %v4429
      %v4431 = vpop.f32.mrf.mxu0
      %v4432 = vadd.f32 %v4343, %v4431
      %4433 = vmatmul.bf16.gmra.mxu0 %v3029
      %v4434 = vpop.f32.mrf.mxu0
      %v4435 = vadd.f32 %v4346, %v4434
      %v4436 = vpop.f32.mrf.mxu0
      %v4437 = vadd.f32 %v4348, %v4436
      %4438 = vmatmul.bf16.gmra.mxu0 %v3038
      %v4439 = vpop.f32.mrf.mxu0
      %v4440 = vadd.f32 %v4351, %v4439
      %v4441 = vpop.f32.mrf.mxu0
      %v4442 = vadd.f32 %v4353, %v4441
      %4443 = vmatmul.bf16.gmra.mxu0 %v3047
      %v4444 = vpop.f32.mrf.mxu0
      %v4445 = vadd.f32 %v4356, %v4444
      %v4446 = vpop.f32.mrf.mxu0
      %v4447 = vadd.f32 %v4358, %v4446
      %4448 = vmatmul.bf16.gmra.mxu0 %v3056
      %v4449 = vpop.f32.mrf.mxu0
      %v4450 = vadd.f32 %v4361, %v4449
      %v4451 = vpop.f32.mrf.mxu0
      %v4452 = vadd.f32 %v4363, %v4451
      %4453 = vmatmul.bf16.gmra.mxu0 %v3065
      %v4454 = vpop.f32.mrf.mxu0
      %v4455 = vadd.f32 %v4366, %v4454
      %v4456 = vpop.f32.mrf.mxu0
      %v4457 = vadd.f32 %v4368, %v4456
      %4458 = vmatmul.bf16.gmra.mxu0 %v3074
      %v4459 = vpop.f32.mrf.mxu0
      %v4460 = vadd.f32 %v4371, %v4459
      %v4461 = vpop.f32.mrf.mxu0
      %v4462 = vadd.f32 %v4373, %v4461
      %4463 = vmatmul.bf16.gmra.mxu0 %v3083
      %v4464 = vpop.f32.mrf.mxu0
      %v4465 = vadd.f32 %v4376, %v4464
      %v4466 = vpop.f32.mrf.mxu0
      %v4467 = vadd.f32 %v4378, %v4466
      %4468 = vmatmul.bf16.gmra.mxu0 %v3092
      %v4469 = vpop.f32.mrf.mxu0
      %v4470 = vadd.f32 %v4381, %v4469
      %v4471 = vpop.f32.mrf.mxu0
      %v4472 = vadd.f32 %v4383, %v4471
      %4473 = vmatmul.bf16.gmra.mxu0 %v3101
      %v4474 = vpop.f32.mrf.mxu0
      %v4475 = vadd.f32 %v4386, %v4474
      %v4476 = vpop.f32.mrf.mxu0
      %v4477 = vadd.f32 %v4388, %v4476
      %4478 = vdwg.mxu0
      %v4479 = vpack.c.bf16 %v4400, %v4400
      %v4480 = vpack.c.bf16 %v4402, %v4402
      %v4481 = vpack.c.bf16 %v4405, %v4405
      %v4482 = vpack.c.bf16 %v4407, %v4407
      %v4483 = vpack.c.bf16 %v4410, %v4410
      %v4484 = vpack.c.bf16 %v4412, %v4412
      %v4485 = vpack.c.bf16 %v4415, %v4415
      %v4486 = vpack.c.bf16 %v4417, %v4417
      %v4487 = vpack.c.bf16 %v4420, %v4420
      %v4488 = vpack.c.bf16 %v4422, %v4422
      %v4489 = vpack.c.bf16 %v4425, %v4425
      %v4490 = vpack.c.bf16 %v4427, %v4427
      %v4491 = vpack.c.bf16 %v4430, %v4430
      %v4492 = vpack.c.bf16 %v4432, %v4432
      %v4493 = vpack.c.bf16 %v4435, %v4435
      %v4494 = vpack.c.bf16 %v4437, %v4437
      %v4495 = vpack.c.bf16 %v4440, %v4440
      %v4496 = vpack.c.bf16 %v4442, %v4442
      %v4497 = vpack.c.bf16 %v4445, %v4445
      %v4498 = vpack.c.bf16 %v4447, %v4447
      %v4499 = vpack.c.bf16 %v4450, %v4450
      %v4500 = vpack.c.bf16 %v4452, %v4452
      %v4501 = vpack.c.bf16 %v4455, %v4455
      %v4502 = vpack.c.bf16 %v4457, %v4457
      %v4503 = vpack.c.bf16 %v4460, %v4460
      %v4504 = vpack.c.bf16 %v4462, %v4462
      %v4505 = vpack.c.bf16 %v4465, %v4465
      %v4506 = vpack.c.bf16 %v4467, %v4467
      %v4507 = vpack.c.bf16 %v4470, %v4470
      %v4508 = vpack.c.bf16 %v4472, %v4472
      %v4509 = vpack.c.bf16 %v4475, %v4475
      %v4510 = vpack.c.bf16 %v4477, %v4477
      %4511 = vst [vmem:[%s256] sm:$0xf] %v4479
      %4512 = vst [vmem:[%s256 + $0x4] sm:$0xf] %v4480
      %4513 = vst [vmem:[%s256 + $0x8] sm:$0xf] %v4481
      %4514 = vst [vmem:[%s256 + $0xc] sm:$0xf] %v4482
      %4515 = vst [vmem:[%s256 + $0x10] sm:$0xf] %v4483
      %4516 = vst [vmem:[%s256 + $0x14] sm:$0xf] %v4484
      %4517 = vst [vmem:[%s256 + $0x18] sm:$0xf] %v4485
      %4518 = vst [vmem:[%s256 + $0x1c] sm:$0xf] %v4486
      %4519 = vst [vmem:[%s256 + $0x20] sm:$0xf] %v4487
      %4520 = vst [vmem:[%s256 + $0x24] sm:$0xf] %v4488
      %4521 = vst [vmem:[%s256 + $0x28] sm:$0xf] %v4489
      %4522 = vst [vmem:[%s256 + $0x2c] sm:$0xf] %v4490
      %4523 = vst [vmem:[%s256 + $0x30] sm:$0xf] %v4491
      %4524 = vst [vmem:[%s256 + $0x34] sm:$0xf] %v4492
      %4525 = vst [vmem:[%s256 + $0x38] sm:$0xf] %v4493
      %4526 = vst [vmem:[%s256 + $0x3c] sm:$0xf] %v4494
      %4527 = vst [vmem:[%s256 + $0x40] sm:$0xf] %v4495
      %4528 = vst [vmem:[%s256 + $0x44] sm:$0xf] %v4496
      %4529 = vst [vmem:[%s256 + $0x48] sm:$0xf] %v4497
      %4530 = vst [vmem:[%s256 + $0x4c] sm:$0xf] %v4498
      %4531 = vst [vmem:[%s256 + $0x50] sm:$0xf] %v4499
      %4532 = vst [vmem:[%s256 + $0x54] sm:$0xf] %v4500
      %4533 = vst [vmem:[%s256 + $0x58] sm:$0xf] %v4501
      %4534 = vst [vmem:[%s256 + $0x5c] sm:$0xf] %v4502
      %4535 = vst [vmem:[%s256 + $0x60] sm:$0xf] %v4503
      %4536 = vst [vmem:[%s256 + $0x64] sm:$0xf] %v4504
      %4537 = vst [vmem:[%s256 + $0x68] sm:$0xf] %v4505
      %4538 = vst [vmem:[%s256 + $0x6c] sm:$0xf] %v4506
      %4539 = vst [vmem:[%s256 + $0x70] sm:$0xf] %v4507
      %4540 = vst [vmem:[%s256 + $0x74] sm:$0xf] %v4508
      %4541 = vst [vmem:[%s256 + $0x78] sm:$0xf] %v4509
      %4542 = vst [vmem:[%s256 + $0x7c] sm:$0xf] %v4510
      %p4543 = scmp.eq.s32.totalorder %s22, 0
      // Predicated region
      $region37: #{residual_block_forward.5} parent=35 // pred_check
        %p4544 = pneg %p4543
      $region38: #{residual_block_forward.5} parent=35 // pred_check_branch
        %4546 = sbr.rel (%p4544) target = $region40
      $region39: #{residual_block_forward.5} parent=35 // pred_region
        %4547 = vst [vmem:[%s262] sm:$0xff] 0.0
      $region40: #{residual_block_forward.5} parent=35 // pred_fallthru
        _
      %v4548 = vld [vmem:[%s262] sm:$0x1]
      %v4549 = vadd.f32 %v4400, %v4402
      %v4550 = vadd.f32 %v4549, %v4405
      %v4551 = vadd.f32 %v4550, %v4407
      %v4552 = vadd.f32 %v4551, %v4410
      %v4553 = vadd.f32 %v4552, %v4412
      %v4554 = vadd.f32 %v4553, %v4415
      %v4555 = vadd.f32 %v4554, %v4417
      %v4556 = vadd.f32 %v4555, %v4420
      %v4557 = vadd.f32 %v4556, %v4422
      %v4558 = vadd.f32 %v4557, %v4425
      %v4559 = vadd.f32 %v4558, %v4427
      %v4560 = vadd.f32 %v4559, %v4430
      %v4561 = vadd.f32 %v4560, %v4432
      %v4562 = vadd.f32 %v4561, %v4435
      %v4563 = vadd.f32 %v4562, %v4437
      %v4564 = vadd.f32 %v4563, %v4440
      %v4565 = vadd.f32 %v4564, %v4442
      %v4566 = vadd.f32 %v4565, %v4445
      %v4567 = vadd.f32 %v4566, %v4447
      %v4568 = vadd.f32 %v4567, %v4450
      %v4569 = vadd.f32 %v4568, %v4452
      %v4570 = vadd.f32 %v4569, %v4455
      %v4571 = vadd.f32 %v4570, %v4457
      %v4572 = vadd.f32 %v4571, %v4460
      %v4573 = vadd.f32 %v4572, %v4462
      %v4574 = vadd.f32 %v4573, %v4465
      %v4575 = vadd.f32 %v4574, %v4467
      %v4576 = vadd.f32 %v4575, %v4470
      %v4577 = vadd.f32 %v4576, %v4472
      %v4578 = vadd.f32 %v4577, %v4475
      %v4579 = vadd.f32 %v4578, %v4477
      %v4580 = vrot.slane %v4579, 4
      %v4581 = vadd.f32 %v4579, %v4580
      %v4582 = vrot.slane %v4581, 2
      %v4583 = vadd.f32 %v4581, %v4582
      %v4584 = vrot.slane %v4583, 1
      %v4585 = vadd.f32 %v4583, %v4584
      %v4586 = vadd.f32 %v4548, %v4585
      %4587 = vst [vmem:[%s262] sm:$0x1] %v4586
      %v4588 = vld [vmem:[%s262 + $0x1] sm:$0x1]
      %v4589 = vmul.f32 %v4400, %v4400
      %v4590 = vmul.f32 %v4402, %v4402
      %v4591 = vmul.f32 %v4405, %v4405
      %v4592 = vmul.f32 %v4407, %v4407
      %v4593 = vmul.f32 %v4410, %v4410
      %v4594 = vmul.f32 %v4412, %v4412
      %v4595 = vmul.f32 %v4415, %v4415
      %v4596 = vmul.f32 %v4417, %v4417
      %v4597 = vmul.f32 %v4420, %v4420
      %v4598 = vmul.f32 %v4422, %v4422
      %v4599 = vmul.f32 %v4425, %v4425
      %v4600 = vmul.f32 %v4427, %v4427
      %v4601 = vmul.f32 %v4430, %v4430
      %v4602 = vmul.f32 %v4432, %v4432
      %v4603 = vmul.f32 %v4435, %v4435
      %v4604 = vmul.f32 %v4437, %v4437
      %v4605 = vmul.f32 %v4440, %v4440
      %v4606 = vmul.f32 %v4442, %v4442
      %v4607 = vmul.f32 %v4445, %v4445
      %v4608 = vmul.f32 %v4447, %v4447
      %v4609 = vmul.f32 %v4450, %v4450
      %v4610 = vmul.f32 %v4452, %v4452
      %v4611 = vmul.f32 %v4455, %v4455
      %v4612 = vmul.f32 %v4457, %v4457
      %v4613 = vmul.f32 %v4460, %v4460
      %v4614 = vmul.f32 %v4462, %v4462
      %v4615 = vmul.f32 %v4465, %v4465
      %v4616 = vmul.f32 %v4467, %v4467
      %v4617 = vmul.f32 %v4470, %v4470
      %v4618 = vmul.f32 %v4472, %v4472
      %v4619 = vmul.f32 %v4475, %v4475
      %v4620 = vmul.f32 %v4477, %v4477
      %v4621 = vadd.f32 %v4589, %v4590
      %v4622 = vadd.f32 %v4621, %v4591
      %v4623 = vadd.f32 %v4622, %v4592
      %v4624 = vadd.f32 %v4623, %v4593
      %v4625 = vadd.f32 %v4624, %v4594
      %v4626 = vadd.f32 %v4625, %v4595
      %v4627 = vadd.f32 %v4626, %v4596
      %v4628 = vadd.f32 %v4627, %v4597
      %v4629 = vadd.f32 %v4628, %v4598
      %v4630 = vadd.f32 %v4629, %v4599
      %v4631 = vadd.f32 %v4630, %v4600
      %v4632 = vadd.f32 %v4631, %v4601
      %v4633 = vadd.f32 %v4632, %v4602
      %v4634 = vadd.f32 %v4633, %v4603
      %v4635 = vadd.f32 %v4634, %v4604
      %v4636 = vadd.f32 %v4635, %v4605
      %v4637 = vadd.f32 %v4636, %v4606
      %v4638 = vadd.f32 %v4637, %v4607
      %v4639 = vadd.f32 %v4638, %v4608
      %v4640 = vadd.f32 %v4639, %v4609
      %v4641 = vadd.f32 %v4640, %v4610
      %v4642 = vadd.f32 %v4641, %v4611
      %v4643 = vadd.f32 %v4642, %v4612
      %v4644 = vadd.f32 %v4643, %v4613
      %v4645 = vadd.f32 %v4644, %v4614
      %v4646 = vadd.f32 %v4645, %v4615
      %v4647 = vadd.f32 %v4646, %v4616
      %v4648 = vadd.f32 %v4647, %v4617
      %v4649 = vadd.f32 %v4648, %v4618
      %v4650 = vadd.f32 %v4649, %v4619
      %v4651 = vadd.f32 %v4650, %v4620
      %v4652 = vrot.slane %v4651, 4
      %v4653 = vadd.f32 %v4651, %v4652
      %v4654 = vrot.slane %v4653, 2
      %v4655 = vadd.f32 %v4653, %v4654
      %v4656 = vrot.slane %v4655, 1
      %v4657 = vadd.f32 %v4655, %v4656
      %v4658 = vadd.f32 %v4588, %v4657
      %4659 = vst [vmem:[%s262 + $0x1] sm:$0x1] %v4658
      %s4660 = sadd.s32 %s21, %s22
      %s4661 = smul.u32 32, %s4660
      %p4662 = scmp.lt.s32.totalorder %s4661, 63
      %s4663 = scalar_select %p4662, %s4661, 63
      %s4664 = smul.addr %s4663, 4
      %s4665 = scalar_lea.vmem %s4, %s4664
      %p4666 = scmp.lt.s32.totalorder %s21, 1
      %s4667 = scalar_select %p4666, %s21, 1
      %s4668 = smul.addr %s4667, 8
      %s4669 = scalar_lea.vmem %s5, %s4668
      // Predicated region
      $region41: #{residual_block_forward.5} parent=35 // pred_check
        %p4670 = pneg %p140
      $region42: #{residual_block_forward.5} parent=35 // pred_check_branch
        %4672 = sbr.rel (%p4670) target = $region44
      $region43: #{residual_block_forward.5} parent=35 // pred_region
        %s4673 = sadd.s32 %s21, %s22
        %s4674 = smul.u32 32, %s4673
      $region44: #{residual_block_forward.5} parent=35 // pred_fallthru
        _
      // Predicated region
      $region45: #{residual_block_forward.5} parent=35 // pred_check
        %p4675 = pneg %p166
      $region46: #{residual_block_forward.5} parent=35 // pred_check_branch
        %4677 = sbr.rel (%p4675) target = $region48
      $region47: #{residual_block_forward.5} parent=35 // pred_region
        _
      $region48: #{residual_block_forward.5} parent=35 // pred_fallthru
        _
    $region36: #{residual_block_forward.5} parent=5 // pred_fallthru
      _
    %p4678 = scmp.le.s32.totalorder 2, %s12
    // Predicated region
    $region49: #{residual_block_forward.5} parent=5 // pred_check
      %p4679 = pneg %p4678
    $region50: #{residual_block_forward.5} parent=5 // pred_check_branch
      %4681 = sbr.rel (%p4679) target = $region52
    $region51: #{residual_block_forward.5} parent=5 // pred_region
      %s4682 = ssub.s32 %s12, 2
      // Predicated region
      $region53: #{residual_block_forward.5} parent=51 // pred_check
        %p4683 = pneg %p146
      $region54: #{residual_block_forward.5} parent=51 // pred_check_branch
        %4685 = sbr.rel (%p4683) target = $region56
      $region55: #{residual_block_forward.5} parent=51 // pred_region
        %s4686 = sadd.s32 %s23, %s24
        %s4687 = smul.u32 32, %s4686
        %p4688 = scmp.lt.s32.totalorder %s4687, 63
        %s4689 = scalar_select %p4688, %s4687, 63
        %s4690 = smul.addr %s4689, 4
        %s4691 = scalar_lea.vmem %s4, %s4690
      $region56: #{residual_block_forward.5} parent=51 // pred_fallthru
        _
      // Predicated region
      $region57: #{residual_block_forward.5} parent=51 // pred_check
        %p4692 = pneg %p172
      $region58: #{residual_block_forward.5} parent=51 // pred_check_branch
        %4694 = sbr.rel (%p4692) target = $region60
      $region59: #{residual_block_forward.5} parent=51 // pred_region
        %p4695 = scmp.lt.s32.totalorder %s23, 1
        %s4696 = scalar_select %p4695, %s23, 1
        %s4697 = smul.addr %s4696, 8
        %s4698 = scalar_lea.vmem %s5, %s4697
      $region60: #{residual_block_forward.5} parent=51 // pred_fallthru
        _
    $region52: #{residual_block_forward.5} parent=5 // pred_fallthru
      _
  $region6: #{residual_block_forward.5} parent=0 // loop_footer
    %s16 = sadd.s32 1, %s12
  $region7: #{residual_block_forward.5} parent=0 // loop_footer_branch
    %11 = sbr.rel target = $region3
  $region8: #{residual_block_forward.5} parent=0 // loop_exit
    _

</llo_original>
